<compile_context>
chip_gen: v5e
topology: v5e:2x2
jax: 0.10.0
libtpu: 0.0.40
codegen_flags: <defaults>
</compile_context>

<pallas_src>
import numpy as np
import jax
import jax.numpy as jnp
from jax import lax
from jax.experimental import pallas as pl
from jax.experimental.pallas import tpu as pltpu

KSIZE = 4  # every layer in autEncD is 4x4, stride 2, padding 1
CHANNELS = [(3, 6), (6, 10), (10, 15), (15, 10), (10, 6), (6, 2)]
NUM_LAYERS = len(CHANNELS)
LANE = 128


def _round_up(x, m):
    return (x + m - 1) // m * m


def _plan(h):
    """Static per-image geometry (channel-major layout: (C, flattened padded grid))."""
    layers = []
    hin = h
    for idx, (cin, cout) in enumerate(CHANNELS):
        enc = idx < 3
        if enc:                       # Conv2d(4, s=2, p=1): stride-1 conv on a pad-1 grid
            hp = hin + 2
            hout = hin // 2
        else:                         # ConvTranspose2d(4, s=2, p=1): stride-1 conv on an
            hp = 2 * hin + 3          # x2 zero-dilated + pad-2 grid with a flipped kernel
            hout = 2 * hin
        m = hp * hp
        # + guard columns so every (static) tap slice stays inside the slab
        pitch = _round_up(m + 3 * hp + KSIZE, LANE)
        layers.append(dict(cin=cin, cout=cout, hin=hin, hout=hout, hp=hp,
                           m=m, pitch=pitch, enc=enc))
        hin = hout
    return layers


# ----------------------------------------------------------------------------
# Constant 0/1 placement / selection matrices (built once per compile on host)
# ----------------------------------------------------------------------------
def _g_input(h, hp0):
    """(H*W, hp0^2): place input pixel (r, c) at padded position (r+1, c+1)."""
    g = np.zeros((h * h, hp0 * hp0), np.float32)
    for r in range(h):
        for c in range(h):
            g[r * h + c, (r + 1) * hp0 + (c + 1)] = 1.0
    return g


def _g_boundary(lyr, nxt):
    """(hp^2, hp_next^2): pick the valid conv outputs of `lyr` (stride-2 subsample
    for encoder layers) and place them -- with zero padding / x2 dilation -- into
    the next layer's padded input grid.  All-zero columns keep the padding 0."""
    hp, hout, hpn = lyr["hp"], lyr["hout"], nxt["hp"]
    g = np.zeros((hp * hp, hpn * hpn), np.float32)
    for a in range(hout):
        for b in range(hout):
            q = (2 * a) * hp + 2 * b if lyr["enc"] else a * hp + b
            p = ((a + 1) * hpn + (b + 1) if nxt["enc"]
                 else (2 * a + 2) * hpn + (2 * b + 2))
            g[q, p] = 1.0
    return g


def _g_output(lyr, h):
    """(hp^2, H*W): gather the valid output pixels of the last layer, row-major."""
    hp = lyr["hp"]
    g = np.zeros((hp * hp, h * h), np.float32)
    for a in range(h):
        for b in range(h):
            g[a * hp + b, a * h + b] = 1.0
    return g


def _prep_selectors(layers, h):
    gs = [jnp.asarray(_g_input(h, layers[0]["hp"]), jnp.bfloat16)]
    for li in range(NUM_LAYERS - 1):
        gs.append(jnp.asarray(_g_boundary(layers[li], layers[li + 1]), jnp.float32))
    gs.append(jnp.asarray(_g_output(layers[-1], h), jnp.float32))
    return gs


def _prep_weights(params):
    """PyTorch layouts -> per-tap (Cout, Cin) matrices, packed as (16, Cout, Cin) bf16."""
    ws, bs = [], []
    for idx, (w, b) in enumerate(params):
        if idx < 3:    # Conv2d weight: (Cout, Cin, kh, kw)
            wt = jnp.transpose(w, (2, 3, 0, 1))
        else:          # ConvTranspose2d: (Cin, Cout, kh, kw) -> flip spatial, swap in/out
            wt = jnp.transpose(jnp.flip(w, axis=(2, 3)), (2, 3, 1, 0))
        cout, cin = wt.shape[2], wt.shape[3]
        ws.append(wt.reshape(KSIZE * KSIZE, cout, cin).astype(jnp.bfloat16))
        bs.append(b.reshape(cout, 1).astype(jnp.float32))
    return ws, bs


# ----------------------------------------------------------------------------
# Fused kernel: one program per image, all six layers, everything VMEM-resident.
# ----------------------------------------------------------------------------
def _make_kernel(layers):
    n_in = 1 + 2 * NUM_LAYERS + (NUM_LAYERS + 1)

    def kernel(*refs):
        x_ref = refs[0]                                    # (3, H*W) bf16, this image
        w_refs = refs[1:1 + NUM_LAYERS]                    # (16, Cout, Cin) bf16 taps
        b_refs = refs[1 + NUM_LAYERS:1 + 2 * NUM_LAYERS]   # (Cout, 1) f32 biases
        g_refs = refs[1 + 2 * NUM_LAYERS:n_in]             # placement/selection matrices
        o_ref = refs[n_in]                                 # (2, H*W) f32 output block
        xs = refs[n_in + 1:]                               # per-layer (Cin, pitch) bf16 slabs

        # Zero the activation slabs once: conv padding, dilation gaps and the tap
        # guard columns must read back as exact zeros.
        for x_s in xs:
            x_s[...] = jnp.zeros(x_s.shape, x_s.dtype)

        # Place this image's input into layer 0's pad-1 grid with ONE matmul
        # (replaces the previous 32 unrolled per-row copies).
        placed = jnp.dot(x_ref[...], g_refs[0][...],
                         preferred_element_type=jnp.float32)
        xs[0][:, 0:layers[0]["m"]] = placed.astype(xs[0].dtype)

        for li in range(NUM_LAYERS):
            lyr = layers[li]
            hp, m = lyr["hp"], lyr["m"]
            x_s = xs[li]
            w_ref = w_refs[li]

            # 16 shifted-matmul taps, fully unrolled with static offsets,
            # accumulated as a register-resident f32 value (tap 0 peeled, so
            # there is no accumulator zero-fill and no VMEM read-modify-write).
            y = None
            for t in range(KSIZE * KSIZE):
                i, j = divmod(t, KSIZE)
                off = i * hp + j
                tap = jnp.dot(w_ref[t], x_s[:, off:off + m],
                              preferred_element_type=jnp.float32)
                y = tap if y is None else y + tap

            z = y + b_refs[li][...]                        # (Cout, 1) bias, lane-broadcast
            g = g_refs[li + 1][...]
            if li < NUM_LAYERS - 1:
                # Fused epilogue: ReLU + stride-2 subsample (encoder) or x2 zero
                # dilation (decoder) + padding placement into the next layer's
                # grid, all via one 0/1 selection matmul; its all-zero columns
                # keep the padding exactly 0, so no mask is needed.
                z = jnp.maximum(z, 0.0)
                sel = jnp.dot(z, g, preferred_element_type=jnp.float32)
                xs[li + 1][:, 0:layers[li + 1]["m"]] = sel.astype(xs[li + 1].dtype)
            else:
                # Final layer: gather the valid pixels into a lane-dense,
                # channel-major (2, H*W) output block (bias only, no ReLU).
                o_ref[...] = jnp.dot(z, g, preferred_element_type=jnp.float32)

    return kernel


def _vmem_limit_bytes(h, layers, ws, bs, gs):
    def padded(shape, dtype):
        shape = tuple(shape)
        if len(shape) == 1:
            shape = (1,) + shape
        lead = int(np.prod(shape[:-2], dtype=np.int64)) if len(shape) > 2 else 1
        return (lead * _round_up(shape[-2], 8) * _round_up(shape[-1], LANE)
                * np.dtype(dtype).itemsize)

    total = 2 * padded((3, h * h), jnp.bfloat16)              # input block, double-buffered
    total += 2 * padded((CHANNELS[-1][1], h * h), jnp.float32)  # output block
    for a in list(ws) + list(bs) + list(gs):
        total += 2 * padded(a.shape, a.dtype)
    for l in layers:
        total += padded((l["cin"], l["pitch"]), jnp.bfloat16)
    total += 8 * 1024 * 1024                                  # headroom for compiler temps
    return int(min(max(total, 32 * 1024 * 1024), 100 * 1024 * 1024))


# ----------------------------------------------------------------------------
# Host wrapper
# ----------------------------------------------------------------------------
@jax.jit
def aut_enc_d_forward(x_nchw, params):
    n, cin, h, w = x_nchw.shape
    assert cin == 3 and h == w and h % 8 == 0
    layers = _plan(h)
    ws, bs = _prep_weights(params)
    gs = _prep_selectors(layers, h)

    # Channel-major image slabs (N, 3, H*W): no NHWC transpose on either end.
    x_cm = x_nchw.reshape(n, 3, h * w).astype(jnp.bfloat16)

    def _full_spec(arr):
        zeros = (0,) * arr.ndim
        return pl.BlockSpec(tuple(arr.shape), lambda b: zeros)

    in_specs = ([pl.BlockSpec((None, 3, h * w), lambda b: (b, 0, 0))]
                + [_full_spec(a) for a in ws]
                + [_full_spec(a) for a in bs]
                + [_full_spec(a) for a in gs])
    out_specs = pl.BlockSpec((None, CHANNELS[-1][1], h * w), lambda b: (b, 0, 0))
    scratch = [pltpu.VMEM((l["cin"], l["pitch"]), jnp.bfloat16) for l in layers]

    out = pl.pallas_call(
        _make_kernel(layers),
        out_shape=jax.ShapeDtypeStruct((n, CHANNELS[-1][1], h * w), jnp.float32),
        grid_spec=pltpu.PrefetchScalarGridSpec(
            num_scalar_prefetch=0,
            grid=(n,),                                # one program per image
            in_specs=in_specs,
            out_specs=out_specs,
            scratch_shapes=scratch),
        compiler_params=pltpu.CompilerParams(
            dimension_semantics=("parallel",),        # v7x: images split across the 2 TCs
            vmem_limit_bytes=_vmem_limit_bytes(h, layers, ws, bs, gs)),
    )(x_cm, *ws, *bs, *gs)

    return out.reshape(n, CHANNELS[-1][1], h, w)      # already NCHW / channel-major


def init_params(key):
    params = []
    # encoder Conv2d: weight (Cout, Cin, 4, 4), bias (Cout,)
    for cout, cin in [(6, 3), (10, 6), (15, 10)]:
        key, kw, kb = jax.random.split(key, 3)
        wgt = 0.1 * jax.random.normal(kw, (cout, cin, 4, 4), jnp.float32)
        b = 0.1 * jax.random.normal(kb, (cout,), jnp.float32)
        params.append((wgt, b))
    # decoder ConvTranspose2d: weight (Cin, Cout, 4, 4), bias (Cout,)
    for cin, cout in [(15, 10), (10, 6), (6, 2)]:
        key, kw, kb = jax.random.split(key, 3)
        wgt = 0.1 * jax.random.normal(kw, (cin, cout, 4, 4), jnp.float32)
        b = 0.1 * jax.random.normal(kb, (cout,), jnp.float32)
        params.append((wgt, b))
    return params


# ----------------------------------------------------------------------------
# Pure-JAX reference (lax conv) used only as a correctness check.
# ----------------------------------------------------------------------------
def reference_forward(x_nchw, params):
    dn = ("NCHW", "OIHW", "NCHW")

    def conv(x, w, b, relu):
        y = lax.conv_general_dilated(
            x, w, (2, 2), ((1, 1), (1, 1)), dimension_numbers=dn
        ) + b[None, :, None, None]
        return jnp.maximum(y, 0.0) if relu else y

    def convt(x, w, b, relu):
        w_conv = jnp.transpose(jnp.flip(w, (2, 3)), (1, 0, 2, 3))
        y = lax.conv_general_dilated(
            x, w_conv, (1, 1), ((2, 2), (2, 2)),
            lhs_dilation=(2, 2), dimension_numbers=dn,
        ) + b[None, :, None, None]
        return jnp.maximum(y, 0.0) if relu else y

    (w1, b1), (w2, b2), (w3, b3), (w4, b4), (w5, b5), (w6, b6) = params
    x = conv(x_nchw, w1, b1, True)
    x = conv(x, w2, b2, True)
    x = conv(x, w3, b3, True)
    x = convt(x, w4, b4, True)
    x = convt(x, w5, b5, True)
    x = convt(x, w6, b6, False)
    return x


if __name__ == "__main__":
    key = jax.random.PRNGKey(0)
    key, kx = jax.random.split(key)
    x = jax.random.normal(kx, (2, 3, 16, 16), jnp.float32)  # NCHW, like PyTorch
    params = init_params(key)

    out = jax.block_until_ready(aut_enc_d_forward(x, params))
    assert out.shape == (2, 2, 16, 16), out.shape

    ref = jax.block_until_ready(reference_forward(x, params))
    max_err = float(jnp.max(jnp.abs(out - ref)))
    # bf16 activations / MXU operands with f32 accumulation -> loose tolerance
    assert jnp.allclose(out, ref, rtol=5e-2, atol=5e-2), max_err

    print("KERNEL_OK")
</pallas_src>

<mosaic_0001>
module attributes {stable_mosaic.version = 11 : i64} {
  func.func @kernel(%arg0: i32, %arg1: memref<1x3x256xbf16, #tpu.memory_space<vmem>>, %arg2: memref<16x6x3xbf16, #tpu.memory_space<vmem>>, %arg3: memref<16x10x6xbf16, #tpu.memory_space<vmem>>, %arg4: memref<16x15x10xbf16, #tpu.memory_space<vmem>>, %arg5: memref<16x10x15xbf16, #tpu.memory_space<vmem>>, %arg6: memref<16x6x10xbf16, #tpu.memory_space<vmem>>, %arg7: memref<16x2x6xbf16, #tpu.memory_space<vmem>>, %arg8: memref<6x1xf32, #tpu.memory_space<vmem>>, %arg9: memref<10x1xf32, #tpu.memory_space<vmem>>, %arg10: memref<15x1xf32, #tpu.memory_space<vmem>>, %arg11: memref<10x1xf32, #tpu.memory_space<vmem>>, %arg12: memref<6x1xf32, #tpu.memory_space<vmem>>, %arg13: memref<2x1xf32, #tpu.memory_space<vmem>>, %arg14: memref<256x324xbf16, #tpu.memory_space<vmem>>, %arg15: memref<324x100xf32, #tpu.memory_space<vmem>>, %arg16: memref<100x36xf32, #tpu.memory_space<vmem>>, %arg17: memref<36x49xf32, #tpu.memory_space<vmem>>, %arg18: memref<49x121xf32, #tpu.memory_space<vmem>>, %arg19: memref<121x361xf32, #tpu.memory_space<vmem>>, %arg20: memref<361x256xf32, #tpu.memory_space<vmem>>, %arg21: memref<1x2x256xf32, #tpu.memory_space<vmem>>, %arg22: memref<3x384xbf16, #tpu.memory_space<vmem>>, %arg23: memref<6x256xbf16, #tpu.memory_space<vmem>>, %arg24: memref<10x128xbf16, #tpu.memory_space<vmem>>, %arg25: memref<15x128xbf16, #tpu.memory_space<vmem>>, %arg26: memref<10x256xbf16, #tpu.memory_space<vmem>>, %arg27: memref<6x512xbf16, #tpu.memory_space<vmem>>) attributes {dimension_semantics = [#tpu.dimension_semantics<parallel>], iteration_bounds = array<i64: 2>, scalar_prefetch = 0 : i64, scratch_operands = 6 : i64, tpu.core_type = #tpu.core_type<tc>, window_params = [{transform_indices = @transform_0, window_bounds = array<i64: 1, 3, 256>}, {pipeline_mode = #tpu.pipeline_mode<synchronous>, transform_indices = @transform_1, window_bounds = array<i64: 16, 6, 3>}, {pipeline_mode = #tpu.pipeline_mode<synchronous>, transform_indices = @transform_2, window_bounds = array<i64: 16, 10, 6>}, {pipeline_mode = #tpu.pipeline_mode<synchronous>, transform_indices = @transform_3, window_bounds = array<i64: 16, 15, 10>}, {pipeline_mode = #tpu.pipeline_mode<synchronous>, transform_indices = @transform_4, window_bounds = array<i64: 16, 10, 15>}, {pipeline_mode = #tpu.pipeline_mode<synchronous>, transform_indices = @transform_5, window_bounds = array<i64: 16, 6, 10>}, {pipeline_mode = #tpu.pipeline_mode<synchronous>, transform_indices = @transform_6, window_bounds = array<i64: 16, 2, 6>}, {pipeline_mode = #tpu.pipeline_mode<synchronous>, transform_indices = @transform_7, window_bounds = array<i64: 6, 1>}, {pipeline_mode = #tpu.pipeline_mode<synchronous>, transform_indices = @transform_8, window_bounds = array<i64: 10, 1>}, {pipeline_mode = #tpu.pipeline_mode<synchronous>, transform_indices = @transform_9, window_bounds = array<i64: 15, 1>}, {pipeline_mode = #tpu.pipeline_mode<synchronous>, transform_indices = @transform_10, window_bounds = array<i64: 10, 1>}, {pipeline_mode = #tpu.pipeline_mode<synchronous>, transform_indices = @transform_11, window_bounds = array<i64: 6, 1>}, {pipeline_mode = #tpu.pipeline_mode<synchronous>, transform_indices = @transform_12, window_bounds = array<i64: 2, 1>}, {pipeline_mode = #tpu.pipeline_mode<synchronous>, transform_indices = @transform_13, window_bounds = array<i64: 256, 324>}, {pipeline_mode = #tpu.pipeline_mode<synchronous>, transform_indices = @transform_14, window_bounds = array<i64: 324, 100>}, {pipeline_mode = #tpu.pipeline_mode<synchronous>, transform_indices = @transform_15, window_bounds = array<i64: 100, 36>}, {pipeline_mode = #tpu.pipeline_mode<synchronous>, transform_indices = @transform_16, window_bounds = array<i64: 36, 49>}, {pipeline_mode = #tpu.pipeline_mode<synchronous>, transform_indices = @transform_17, window_bounds = array<i64: 49, 121>}, {pipeline_mode = #tpu.pipeline_mode<synchronous>, transform_indices = @transform_18, window_bounds = array<i64: 121, 361>}, {pipeline_mode = #tpu.pipeline_mode<synchronous>, transform_indices = @transform_19, window_bounds = array<i64: 361, 256>}, {transform_indices = @transform_20, window_bounds = array<i64: 1, 2, 256>}]} {
    %cst = arith.constant 0.000000e+00 : bf16
    %0 = vector.broadcast %cst : bf16 to vector<3x384xbf16>
    %c0 = arith.constant 0 : index
    %c0_0 = arith.constant 0 : index
    %1 = vector.load %arg22[%c0, %c0_0] : memref<3x384xbf16, #tpu.memory_space<vmem>>, vector<3x384xbf16>
    tpu.vector_store %arg22[%c0, %c0_0], %0 {strides = array<i32>} : memref<3x384xbf16, #tpu.memory_space<vmem>>, vector<3x384xbf16>,
    %cst_1 = arith.constant 0.000000e+00 : bf16
    %2 = vector.broadcast %cst_1 : bf16 to vector<6x256xbf16>
    %c0_2 = arith.constant 0 : index
    %c0_3 = arith.constant 0 : index
    %3 = vector.load %arg23[%c0_2, %c0_3] : memref<6x256xbf16, #tpu.memory_space<vmem>>, vector<6x256xbf16>
    tpu.vector_store %arg23[%c0_2, %c0_3], %2 {strides = array<i32>} : memref<6x256xbf16, #tpu.memory_space<vmem>>, vector<6x256xbf16>,
    %cst_4 = arith.constant 0.000000e+00 : bf16
    %4 = vector.broadcast %cst_4 : bf16 to vector<10x128xbf16>
    %c0_5 = arith.constant 0 : index
    %c0_6 = arith.constant 0 : index
    %5 = vector.load %arg24[%c0_5, %c0_6] : memref<10x128xbf16, #tpu.memory_space<vmem>>, vector<10x128xbf16>
    tpu.vector_store %arg24[%c0_5, %c0_6], %4 {strides = array<i32>} : memref<10x128xbf16, #tpu.memory_space<vmem>>, vector<10x128xbf16>,
    %cst_7 = arith.constant 0.000000e+00 : bf16
    %6 = vector.broadcast %cst_7 : bf16 to vector<15x128xbf16>
    %c0_8 = arith.constant 0 : index
    %c0_9 = arith.constant 0 : index
    %7 = vector.load %arg25[%c0_8, %c0_9] : memref<15x128xbf16, #tpu.memory_space<vmem>>, vector<15x128xbf16>
    tpu.vector_store %arg25[%c0_8, %c0_9], %6 {strides = array<i32>} : memref<15x128xbf16, #tpu.memory_space<vmem>>, vector<15x128xbf16>,
    %cst_10 = arith.constant 0.000000e+00 : bf16
    %8 = vector.broadcast %cst_10 : bf16 to vector<10x256xbf16>
    %c0_11 = arith.constant 0 : index
    %c0_12 = arith.constant 0 : index
    %9 = vector.load %arg26[%c0_11, %c0_12] : memref<10x256xbf16, #tpu.memory_space<vmem>>, vector<10x256xbf16>
    tpu.vector_store %arg26[%c0_11, %c0_12], %8 {strides = array<i32>} : memref<10x256xbf16, #tpu.memory_space<vmem>>, vector<10x256xbf16>,
    %cst_13 = arith.constant 0.000000e+00 : bf16
    %10 = vector.broadcast %cst_13 : bf16 to vector<6x512xbf16>
    %c0_14 = arith.constant 0 : index
    %c0_15 = arith.constant 0 : index
    %11 = vector.load %arg27[%c0_14, %c0_15] : memref<6x512xbf16, #tpu.memory_space<vmem>>, vector<6x512xbf16>
    tpu.vector_store %arg27[%c0_14, %c0_15], %10 {strides = array<i32>} : memref<6x512xbf16, #tpu.memory_space<vmem>>, vector<6x512xbf16>,
    %c0_16 = arith.constant 0 : index
    %c0_17 = arith.constant 0 : index
    %c0_18 = arith.constant 0 : index
    %12 = vector.load %arg1[%c0_16, %c0_17, %c0_18] : memref<1x3x256xbf16, #tpu.memory_space<vmem>>, vector<1x3x256xbf16>
    %13 = vector.shape_cast %12 : vector<1x3x256xbf16> to vector<3x256xbf16>
    %c0_19 = arith.constant 0 : index
    %c0_20 = arith.constant 0 : index
    %14 = vector.load %arg14[%c0_19, %c0_20] : memref<256x324xbf16, #tpu.memory_space<vmem>>, vector<256x324xbf16>
    %cst_21 = arith.constant dense<0.000000e+00> : vector<3x324xf32>
    %15 = tpu.matmul %13, %14, %cst_21 {dimension_numbers = #tpu.dot_dimension_numbers<[1], [0], [0], [1], [0, 0, 1, 1], [], []>} : vector<3x256xbf16>, vector<256x324xbf16>, vector<3x324xf32> -> vector<3x324xf32>
    %16 = arith.truncf %15 : vector<3x324xf32> to vector<3x324xbf16>
    %c0_22 = arith.constant 0 : index
    %c0_23 = arith.constant 0 : index
    %17 = vector.load %arg22[%c0_22, %c0_23] : memref<3x384xbf16, #tpu.memory_space<vmem>>, vector<3x324xbf16>
    tpu.vector_store %arg22[%c0_22, %c0_23], %16 {strides = array<i32>} : memref<3x384xbf16, #tpu.memory_space<vmem>>, vector<3x324xbf16>,
    %c0_24 = arith.constant 0 : index
    %c0_25 = arith.constant 0 : index
    %c0_26 = arith.constant 0 : index
    %18 = vector.load %arg2[%c0_24, %c0_25, %c0_26] : memref<16x6x3xbf16, #tpu.memory_space<vmem>>, vector<1x6x3xbf16>
    %19 = vector.shape_cast %18 : vector<1x6x3xbf16> to vector<6x3xbf16>
    %c0_27 = arith.constant 0 : index
    %c0_28 = arith.constant 0 : index
    %20 = vector.load %arg22[%c0_27, %c0_28] : memref<3x384xbf16, #tpu.memory_space<vmem>>, vector<3x324xbf16>
    %cst_29 = arith.constant dense<0.000000e+00> : vector<6x324xf32>
    %21 = tpu.matmul %19, %20, %cst_29 {dimension_numbers = #tpu.dot_dimension_numbers<[1], [0], [0], [1], [0, 0, 1, 1], [], []>} : vector<6x3xbf16>, vector<3x324xbf16>, vector<6x324xf32> -> vector<6x324xf32>
    %c1 = arith.constant 1 : index
    %c0_30 = arith.constant 0 : index
    %c0_31 = arith.constant 0 : index
    %22 = vector.load %arg2[%c1, %c0_30, %c0_31] : memref<16x6x3xbf16, #tpu.memory_space<vmem>>, vector<1x6x3xbf16>
    %23 = vector.shape_cast %22 : vector<1x6x3xbf16> to vector<6x3xbf16>
    %c0_32 = arith.constant 0 : index
    %c1_33 = arith.constant 1 : index
    %24 = vector.load %arg22[%c0_32, %c1_33] : memref<3x384xbf16, #tpu.memory_space<vmem>>, vector<3x324xbf16>
    %cst_34 = arith.constant dense<0.000000e+00> : vector<6x324xf32>
    %25 = tpu.matmul %23, %24, %cst_34 {dimension_numbers = #tpu.dot_dimension_numbers<[1], [0], [0], [1], [0, 0, 1, 1], [], []>} : vector<6x3xbf16>, vector<3x324xbf16>, vector<6x324xf32> -> vector<6x324xf32>
    %26 = arith.addf %21, %25 : vector<6x324xf32>
    %c2 = arith.constant 2 : index
    %c0_35 = arith.constant 0 : index
    %c0_36 = arith.constant 0 : index
    %27 = vector.load %arg2[%c2, %c0_35, %c0_36] : memref<16x6x3xbf16, #tpu.memory_space<vmem>>, vector<1x6x3xbf16>
    %28 = vector.shape_cast %27 : vector<1x6x3xbf16> to vector<6x3xbf16>
    %c0_37 = arith.constant 0 : index
    %c2_38 = arith.constant 2 : index
    %29 = vector.load %arg22[%c0_37, %c2_38] : memref<3x384xbf16, #tpu.memory_space<vmem>>, vector<3x324xbf16>
    %cst_39 = arith.constant dense<0.000000e+00> : vector<6x324xf32>
    %30 = tpu.matmul %28, %29, %cst_39 {dimension_numbers = #tpu.dot_dimension_numbers<[1], [0], [0], [1], [0, 0, 1, 1], [], []>} : vector<6x3xbf16>, vector<3x324xbf16>, vector<6x324xf32> -> vector<6x324xf32>
    %31 = arith.addf %26, %30 : vector<6x324xf32>
    %c3 = arith.constant 3 : index
    %c0_40 = arith.constant 0 : index
    %c0_41 = arith.constant 0 : index
    %32 = vector.load %arg2[%c3, %c0_40, %c0_41] : memref<16x6x3xbf16, #tpu.memory_space<vmem>>, vector<1x6x3xbf16>
    %33 = vector.shape_cast %32 : vector<1x6x3xbf16> to vector<6x3xbf16>
    %c0_42 = arith.constant 0 : index
    %c3_43 = arith.constant 3 : index
    %34 = vector.load %arg22[%c0_42, %c3_43] : memref<3x384xbf16, #tpu.memory_space<vmem>>, vector<3x324xbf16>
    %cst_44 = arith.constant dense<0.000000e+00> : vector<6x324xf32>
    %35 = tpu.matmul %33, %34, %cst_44 {dimension_numbers = #tpu.dot_dimension_numbers<[1], [0], [0], [1], [0, 0, 1, 1], [], []>} : vector<6x3xbf16>, vector<3x324xbf16>, vector<6x324xf32> -> vector<6x324xf32>
    %36 = arith.addf %31, %35 : vector<6x324xf32>
    %c4 = arith.constant 4 : index
    %c0_45 = arith.constant 0 : index
    %c0_46 = arith.constant 0 : index
    %37 = vector.load %arg2[%c4, %c0_45, %c0_46] : memref<16x6x3xbf16, #tpu.memory_space<vmem>>, vector<1x6x3xbf16>
    %38 = vector.shape_cast %37 : vector<1x6x3xbf16> to vector<6x3xbf16>
    %c0_47 = arith.constant 0 : index
    %c18 = arith.constant 18 : index
    %39 = vector.load %arg22[%c0_47, %c18] : memref<3x384xbf16, #tpu.memory_space<vmem>>, vector<3x324xbf16>
    %cst_48 = arith.constant dense<0.000000e+00> : vector<6x324xf32>
    %40 = tpu.matmul %38, %39, %cst_48 {dimension_numbers = #tpu.dot_dimension_numbers<[1], [0], [0], [1], [0, 0, 1, 1], [], []>} : vector<6x3xbf16>, vector<3x324xbf16>, vector<6x324xf32> -> vector<6x324xf32>
    %41 = arith.addf %36, %40 : vector<6x324xf32>
    %c5 = arith.constant 5 : index
    %c0_49 = arith.constant 0 : index
    %c0_50 = arith.constant 0 : index
    %42 = vector.load %arg2[%c5, %c0_49, %c0_50] : memref<16x6x3xbf16, #tpu.memory_space<vmem>>, vector<1x6x3xbf16>
    %43 = vector.shape_cast %42 : vector<1x6x3xbf16> to vector<6x3xbf16>
    %c0_51 = arith.constant 0 : index
    %c19 = arith.constant 19 : index
    %44 = vector.load %arg22[%c0_51, %c19] : memref<3x384xbf16, #tpu.memory_space<vmem>>, vector<3x324xbf16>
    %cst_52 = arith.constant dense<0.000000e+00> : vector<6x324xf32>
    %45 = tpu.matmul %43, %44, %cst_52 {dimension_numbers = #tpu.dot_dimension_numbers<[1], [0], [0], [1], [0, 0, 1, 1], [], []>} : vector<6x3xbf16>, vector<3x324xbf16>, vector<6x324xf32> -> vector<6x324xf32>
    %46 = arith.addf %41, %45 : vector<6x324xf32>
    %c6 = arith.constant 6 : index
    %c0_53 = arith.constant 0 : index
    %c0_54 = arith.constant 0 : index
    %47 = vector.load %arg2[%c6, %c0_53, %c0_54] : memref<16x6x3xbf16, #tpu.memory_space<vmem>>, vector<1x6x3xbf16>
    %48 = vector.shape_cast %47 : vector<1x6x3xbf16> to vector<6x3xbf16>
    %c0_55 = arith.constant 0 : index
    %c20 = arith.constant 20 : index
    %49 = vector.load %arg22[%c0_55, %c20] : memref<3x384xbf16, #tpu.memory_space<vmem>>, vector<3x324xbf16>
    %cst_56 = arith.constant dense<0.000000e+00> : vector<6x324xf32>
    %50 = tpu.matmul %48, %49, %cst_56 {dimension_numbers = #tpu.dot_dimension_numbers<[1], [0], [0], [1], [0, 0, 1, 1], [], []>} : vector<6x3xbf16>, vector<3x324xbf16>, vector<6x324xf32> -> vector<6x324xf32>
    %51 = arith.addf %46, %50 : vector<6x324xf32>
    %c7 = arith.constant 7 : index
    %c0_57 = arith.constant 0 : index
    %c0_58 = arith.constant 0 : index
    %52 = vector.load %arg2[%c7, %c0_57, %c0_58] : memref<16x6x3xbf16, #tpu.memory_space<vmem>>, vector<1x6x3xbf16>
    %53 = vector.shape_cast %52 : vector<1x6x3xbf16> to vector<6x3xbf16>
    %c0_59 = arith.constant 0 : index
    %c21 = arith.constant 21 : index
    %54 = vector.load %arg22[%c0_59, %c21] : memref<3x384xbf16, #tpu.memory_space<vmem>>, vector<3x324xbf16>
    %cst_60 = arith.constant dense<0.000000e+00> : vector<6x324xf32>
    %55 = tpu.matmul %53, %54, %cst_60 {dimension_numbers = #tpu.dot_dimension_numbers<[1], [0], [0], [1], [0, 0, 1, 1], [], []>} : vector<6x3xbf16>, vector<3x324xbf16>, vector<6x324xf32> -> vector<6x324xf32>
    %56 = arith.addf %51, %55 : vector<6x324xf32>
    %c8 = arith.constant 8 : index
    %c0_61 = arith.constant 0 : index
    %c0_62 = arith.constant 0 : index
    %57 = vector.load %arg2[%c8, %c0_61, %c0_62] : memref<16x6x3xbf16, #tpu.memory_space<vmem>>, vector<1x6x3xbf16>
    %58 = vector.shape_cast %57 : vector<1x6x3xbf16> to vector<6x3xbf16>
    %c0_63 = arith.constant 0 : index
    %c36 = arith.constant 36 : index
    %59 = vector.load %arg22[%c0_63, %c36] : memref<3x384xbf16, #tpu.memory_space<vmem>>, vector<3x324xbf16>
    %cst_64 = arith.constant dense<0.000000e+00> : vector<6x324xf32>
    %60 = tpu.matmul %58, %59, %cst_64 {dimension_numbers = #tpu.dot_dimension_numbers<[1], [0], [0], [1], [0, 0, 1, 1], [], []>} : vector<6x3xbf16>, vector<3x324xbf16>, vector<6x324xf32> -> vector<6x324xf32>
    %61 = arith.addf %56, %60 : vector<6x324xf32>
    %c9 = arith.constant 9 : index
    %c0_65 = arith.constant 0 : index
    %c0_66 = arith.constant 0 : index
    %62 = vector.load %arg2[%c9, %c0_65, %c0_66] : memref<16x6x3xbf16, #tpu.memory_space<vmem>>, vector<1x6x3xbf16>
    %63 = vector.shape_cast %62 : vector<1x6x3xbf16> to vector<6x3xbf16>
    %c0_67 = arith.constant 0 : index
    %c37 = arith.constant 37 : index
    %64 = vector.load %arg22[%c0_67, %c37] : memref<3x384xbf16, #tpu.memory_space<vmem>>, vector<3x324xbf16>
    %cst_68 = arith.constant dense<0.000000e+00> : vector<6x324xf32>
    %65 = tpu.matmul %63, %64, %cst_68 {dimension_numbers = #tpu.dot_dimension_numbers<[1], [0], [0], [1], [0, 0, 1, 1], [], []>} : vector<6x3xbf16>, vector<3x324xbf16>, vector<6x324xf32> -> vector<6x324xf32>
    %66 = arith.addf %61, %65 : vector<6x324xf32>
    %c10 = arith.constant 10 : index
    %c0_69 = arith.constant 0 : index
    %c0_70 = arith.constant 0 : index
    %67 = vector.load %arg2[%c10, %c0_69, %c0_70] : memref<16x6x3xbf16, #tpu.memory_space<vmem>>, vector<1x6x3xbf16>
    %68 = vector.shape_cast %67 : vector<1x6x3xbf16> to vector<6x3xbf16>
    %c0_71 = arith.constant 0 : index
    %c38 = arith.constant 38 : index
    %69 = vector.load %arg22[%c0_71, %c38] : memref<3x384xbf16, #tpu.memory_space<vmem>>, vector<3x324xbf16>
    %cst_72 = arith.constant dense<0.000000e+00> : vector<6x324xf32>
    %70 = tpu.matmul %68, %69, %cst_72 {dimension_numbers = #tpu.dot_dimension_numbers<[1], [0], [0], [1], [0, 0, 1, 1], [], []>} : vector<6x3xbf16>, vector<3x324xbf16>, vector<6x324xf32> -> vector<6x324xf32>
    %71 = arith.addf %66, %70 : vector<6x324xf32>
    %c11 = arith.constant 11 : index
    %c0_73 = arith.constant 0 : index
    %c0_74 = arith.constant 0 : index
    %72 = vector.load %arg2[%c11, %c0_73, %c0_74] : memref<16x6x3xbf16, #tpu.memory_space<vmem>>, vector<1x6x3xbf16>
    %73 = vector.shape_cast %72 : vector<1x6x3xbf16> to vector<6x3xbf16>
    %c0_75 = arith.constant 0 : index
    %c39 = arith.constant 39 : index
    %74 = vector.load %arg22[%c0_75, %c39] : memref<3x384xbf16, #tpu.memory_space<vmem>>, vector<3x324xbf16>
    %cst_76 = arith.constant dense<0.000000e+00> : vector<6x324xf32>
    %75 = tpu.matmul %73, %74, %cst_76 {dimension_numbers = #tpu.dot_dimension_numbers<[1], [0], [0], [1], [0, 0, 1, 1], [], []>} : vector<6x3xbf16>, vector<3x324xbf16>, vector<6x324xf32> -> vector<6x324xf32>
    %76 = arith.addf %71, %75 : vector<6x324xf32>
    %c12 = arith.constant 12 : index
    %c0_77 = arith.constant 0 : index
    %c0_78 = arith.constant 0 : index
    %77 = vector.load %arg2[%c12, %c0_77, %c0_78] : memref<16x6x3xbf16, #tpu.memory_space<vmem>>, vector<1x6x3xbf16>
    %78 = vector.shape_cast %77 : vector<1x6x3xbf16> to vector<6x3xbf16>
    %c0_79 = arith.constant 0 : index
    %c54 = arith.constant 54 : index
    %79 = vector.load %arg22[%c0_79, %c54] : memref<3x384xbf16, #tpu.memory_space<vmem>>, vector<3x324xbf16>
    %cst_80 = arith.constant dense<0.000000e+00> : vector<6x324xf32>
    %80 = tpu.matmul %78, %79, %cst_80 {dimension_numbers = #tpu.dot_dimension_numbers<[1], [0], [0], [1], [0, 0, 1, 1], [], []>} : vector<6x3xbf16>, vector<3x324xbf16>, vector<6x324xf32> -> vector<6x324xf32>
    %81 = arith.addf %76, %80 : vector<6x324xf32>
    %c13 = arith.constant 13 : index
    %c0_81 = arith.constant 0 : index
    %c0_82 = arith.constant 0 : index
    %82 = vector.load %arg2[%c13, %c0_81, %c0_82] : memref<16x6x3xbf16, #tpu.memory_space<vmem>>, vector<1x6x3xbf16>
    %83 = vector.shape_cast %82 : vector<1x6x3xbf16> to vector<6x3xbf16>
    %c0_83 = arith.constant 0 : index
    %c55 = arith.constant 55 : index
    %84 = vector.load %arg22[%c0_83, %c55] : memref<3x384xbf16, #tpu.memory_space<vmem>>, vector<3x324xbf16>
    %cst_84 = arith.constant dense<0.000000e+00> : vector<6x324xf32>
    %85 = tpu.matmul %83, %84, %cst_84 {dimension_numbers = #tpu.dot_dimension_numbers<[1], [0], [0], [1], [0, 0, 1, 1], [], []>} : vector<6x3xbf16>, vector<3x324xbf16>, vector<6x324xf32> -> vector<6x324xf32>
    %86 = arith.addf %81, %85 : vector<6x324xf32>
    %c14 = arith.constant 14 : index
    %c0_85 = arith.constant 0 : index
    %c0_86 = arith.constant 0 : index
    %87 = vector.load %arg2[%c14, %c0_85, %c0_86] : memref<16x6x3xbf16, #tpu.memory_space<vmem>>, vector<1x6x3xbf16>
    %88 = vector.shape_cast %87 : vector<1x6x3xbf16> to vector<6x3xbf16>
    %c0_87 = arith.constant 0 : index
    %c56 = arith.constant 56 : index
    %89 = vector.load %arg22[%c0_87, %c56] : memref<3x384xbf16, #tpu.memory_space<vmem>>, vector<3x324xbf16>
    %cst_88 = arith.constant dense<0.000000e+00> : vector<6x324xf32>
    %90 = tpu.matmul %88, %89, %cst_88 {dimension_numbers = #tpu.dot_dimension_numbers<[1], [0], [0], [1], [0, 0, 1, 1], [], []>} : vector<6x3xbf16>, vector<3x324xbf16>, vector<6x324xf32> -> vector<6x324xf32>
    %91 = arith.addf %86, %90 : vector<6x324xf32>
    %c15 = arith.constant 15 : index
    %c0_89 = arith.constant 0 : index
    %c0_90 = arith.constant 0 : index
    %92 = vector.load %arg2[%c15, %c0_89, %c0_90] : memref<16x6x3xbf16, #tpu.memory_space<vmem>>, vector<1x6x3xbf16>
    %93 = vector.shape_cast %92 : vector<1x6x3xbf16> to vector<6x3xbf16>
    %c0_91 = arith.constant 0 : index
    %c57 = arith.constant 57 : index
    %94 = vector.load %arg22[%c0_91, %c57] : memref<3x384xbf16, #tpu.memory_space<vmem>>, vector<3x324xbf16>
    %cst_92 = arith.constant dense<0.000000e+00> : vector<6x324xf32>
    %95 = tpu.matmul %93, %94, %cst_92 {dimension_numbers = #tpu.dot_dimension_numbers<[1], [0], [0], [1], [0, 0, 1, 1], [], []>} : vector<6x3xbf16>, vector<3x324xbf16>, vector<6x324xf32> -> vector<6x324xf32>
    %96 = arith.addf %91, %95 : vector<6x324xf32>
    %c0_93 = arith.constant 0 : index
    %c0_94 = arith.constant 0 : index
    %97 = vector.load %arg8[%c0_93, %c0_94] : memref<6x1xf32, #tpu.memory_space<vmem>>, vector<6x1xf32>
    %98 = vector.broadcast %97 : vector<6x1xf32> to vector<6x324xf32>
    %99 = arith.addf %96, %98 : vector<6x324xf32>
    %c0_95 = arith.constant 0 : index
    %c0_96 = arith.constant 0 : index
    %100 = vector.load %arg15[%c0_95, %c0_96] : memref<324x100xf32, #tpu.memory_space<vmem>>, vector<324x100xf32>
    %cst_97 = arith.constant 0.000000e+00 : f32
    %101 = vector.broadcast %cst_97 : f32 to vector<6x324xf32>
    %102 = arith.maximumf %99, %101 : vector<6x324xf32>
    %cst_98 = arith.constant dense<0.000000e+00> : vector<6x100xf32>
    %103 = tpu.matmul %102, %100, %cst_98 {dimension_numbers = #tpu.dot_dimension_numbers<[1], [0], [0], [1], [0, 0, 1, 1], [], []>} : vector<6x324xf32>, vector<324x100xf32>, vector<6x100xf32> -> vector<6x100xf32>
    %104 = arith.truncf %103 : vector<6x100xf32> to vector<6x100xbf16>
    %c0_99 = arith.constant 0 : index
    %c0_100 = arith.constant 0 : index
    %105 = vector.load %arg23[%c0_99, %c0_100] : memref<6x256xbf16, #tpu.memory_space<vmem>>, vector<6x100xbf16>
    tpu.vector_store %arg23[%c0_99, %c0_100], %104 {strides = array<i32>} : memref<6x256xbf16, #tpu.memory_space<vmem>>, vector<6x100xbf16>,
    %c0_101 = arith.constant 0 : index
    %c0_102 = arith.constant 0 : index
    %c0_103 = arith.constant 0 : index
    %106 = vector.load %arg3[%c0_101, %c0_102, %c0_103] : memref<16x10x6xbf16, #tpu.memory_space<vmem>>, vector<1x10x6xbf16>
    %107 = vector.shape_cast %106 : vector<1x10x6xbf16> to vector<10x6xbf16>
    %c0_104 = arith.constant 0 : index
    %c0_105 = arith.constant 0 : index
    %108 = vector.load %arg23[%c0_104, %c0_105] : memref<6x256xbf16, #tpu.memory_space<vmem>>, vector<6x100xbf16>
    %cst_106 = arith.constant dense<0.000000e+00> : vector<10x100xf32>
    %109 = tpu.matmul %107, %108, %cst_106 {dimension_numbers = #tpu.dot_dimension_numbers<[1], [0], [0], [1], [0, 0, 1, 1], [], []>} : vector<10x6xbf16>, vector<6x100xbf16>, vector<10x100xf32> -> vector<10x100xf32>
    %c1_107 = arith.constant 1 : index
    %c0_108 = arith.constant 0 : index
    %c0_109 = arith.constant 0 : index
    %110 = vector.load %arg3[%c1_107, %c0_108, %c0_109] : memref<16x10x6xbf16, #tpu.memory_space<vmem>>, vector<1x10x6xbf16>
    %111 = vector.shape_cast %110 : vector<1x10x6xbf16> to vector<10x6xbf16>
    %c0_110 = arith.constant 0 : index
    %c1_111 = arith.constant 1 : index
    %112 = vector.load %arg23[%c0_110, %c1_111] : memref<6x256xbf16, #tpu.memory_space<vmem>>, vector<6x100xbf16>
    %cst_112 = arith.constant dense<0.000000e+00> : vector<10x100xf32>
    %113 = tpu.matmul %111, %112, %cst_112 {dimension_numbers = #tpu.dot_dimension_numbers<[1], [0], [0], [1], [0, 0, 1, 1], [], []>} : vector<10x6xbf16>, vector<6x100xbf16>, vector<10x100xf32> -> vector<10x100xf32>
    %114 = arith.addf %109, %113 : vector<10x100xf32>
    %c2_113 = arith.constant 2 : index
    %c0_114 = arith.constant 0 : index
    %c0_115 = arith.constant 0 : index
    %115 = vector.load %arg3[%c2_113, %c0_114, %c0_115] : memref<16x10x6xbf16, #tpu.memory_space<vmem>>, vector<1x10x6xbf16>
    %116 = vector.shape_cast %115 : vector<1x10x6xbf16> to vector<10x6xbf16>
    %c0_116 = arith.constant 0 : index
    %c2_117 = arith.constant 2 : index
    %117 = vector.load %arg23[%c0_116, %c2_117] : memref<6x256xbf16, #tpu.memory_space<vmem>>, vector<6x100xbf16>
    %cst_118 = arith.constant dense<0.000000e+00> : vector<10x100xf32>
    %118 = tpu.matmul %116, %117, %cst_118 {dimension_numbers = #tpu.dot_dimension_numbers<[1], [0], [0], [1], [0, 0, 1, 1], [], []>} : vector<10x6xbf16>, vector<6x100xbf16>, vector<10x100xf32> -> vector<10x100xf32>
    %119 = arith.addf %114, %118 : vector<10x100xf32>
    %c3_119 = arith.constant 3 : index
    %c0_120 = arith.constant 0 : index
    %c0_121 = arith.constant 0 : index
    %120 = vector.load %arg3[%c3_119, %c0_120, %c0_121] : memref<16x10x6xbf16, #tpu.memory_space<vmem>>, vector<1x10x6xbf16>
    %121 = vector.shape_cast %120 : vector<1x10x6xbf16> to vector<10x6xbf16>
    %c0_122 = arith.constant 0 : index
    %c3_123 = arith.constant 3 : index
    %122 = vector.load %arg23[%c0_122, %c3_123] : memref<6x256xbf16, #tpu.memory_space<vmem>>, vector<6x100xbf16>
    %cst_124 = arith.constant dense<0.000000e+00> : vector<10x100xf32>
    %123 = tpu.matmul %121, %122, %cst_124 {dimension_numbers = #tpu.dot_dimension_numbers<[1], [0], [0], [1], [0, 0, 1, 1], [], []>} : vector<10x6xbf16>, vector<6x100xbf16>, vector<10x100xf32> -> vector<10x100xf32>
    %124 = arith.addf %119, %123 : vector<10x100xf32>
    %c4_125 = arith.constant 4 : index
    %c0_126 = arith.constant 0 : index
    %c0_127 = arith.constant 0 : index
    %125 = vector.load %arg3[%c4_125, %c0_126, %c0_127] : memref<16x10x6xbf16, #tpu.memory_space<vmem>>, vector<1x10x6xbf16>
    %126 = vector.shape_cast %125 : vector<1x10x6xbf16> to vector<10x6xbf16>
    %c0_128 = arith.constant 0 : index
    %c10_129 = arith.constant 10 : index
    %127 = vector.load %arg23[%c0_128, %c10_129] : memref<6x256xbf16, #tpu.memory_space<vmem>>, vector<6x100xbf16>
    %cst_130 = arith.constant dense<0.000000e+00> : vector<10x100xf32>
    %128 = tpu.matmul %126, %127, %cst_130 {dimension_numbers = #tpu.dot_dimension_numbers<[1], [0], [0], [1], [0, 0, 1, 1], [], []>} : vector<10x6xbf16>, vector<6x100xbf16>, vector<10x100xf32> -> vector<10x100xf32>
    %129 = arith.addf %124, %128 : vector<10x100xf32>
    %c5_131 = arith.constant 5 : index
    %c0_132 = arith.constant 0 : index
    %c0_133 = arith.constant 0 : index
    %130 = vector.load %arg3[%c5_131, %c0_132, %c0_133] : memref<16x10x6xbf16, #tpu.memory_space<vmem>>, vector<1x10x6xbf16>
    %131 = vector.shape_cast %130 : vector<1x10x6xbf16> to vector<10x6xbf16>
    %c0_134 = arith.constant 0 : index
    %c11_135 = arith.constant 11 : index
    %132 = vector.load %arg23[%c0_134, %c11_135] : memref<6x256xbf16, #tpu.memory_space<vmem>>, vector<6x100xbf16>
    %cst_136 = arith.constant dense<0.000000e+00> : vector<10x100xf32>
    %133 = tpu.matmul %131, %132, %cst_136 {dimension_numbers = #tpu.dot_dimension_numbers<[1], [0], [0], [1], [0, 0, 1, 1], [], []>} : vector<10x6xbf16>, vector<6x100xbf16>, vector<10x100xf32> -> vector<10x100xf32>
    %134 = arith.addf %129, %133 : vector<10x100xf32>
    %c6_137 = arith.constant 6 : index
    %c0_138 = arith.constant 0 : index
    %c0_139 = arith.constant 0 : index
    %135 = vector.load %arg3[%c6_137, %c0_138, %c0_139] : memref<16x10x6xbf16, #tpu.memory_space<vmem>>, vector<1x10x6xbf16>
    %136 = vector.shape_cast %135 : vector<1x10x6xbf16> to vector<10x6xbf16>
    %c0_140 = arith.constant 0 : index
    %c12_141 = arith.constant 12 : index
    %137 = vector.load %arg23[%c0_140, %c12_141] : memref<6x256xbf16, #tpu.memory_space<vmem>>, vector<6x100xbf16>
    %cst_142 = arith.constant dense<0.000000e+00> : vector<10x100xf32>
    %138 = tpu.matmul %136, %137, %cst_142 {dimension_numbers = #tpu.dot_dimension_numbers<[1], [0], [0], [1], [0, 0, 1, 1], [], []>} : vector<10x6xbf16>, vector<6x100xbf16>, vector<10x100xf32> -> vector<10x100xf32>
    %139 = arith.addf %134, %138 : vector<10x100xf32>
    %c7_143 = arith.constant 7 : index
    %c0_144 = arith.constant 0 : index
    %c0_145 = arith.constant 0 : index
    %140 = vector.load %arg3[%c7_143, %c0_144, %c0_145] : memref<16x10x6xbf16, #tpu.memory_space<vmem>>, vector<1x10x6xbf16>
    %141 = vector.shape_cast %140 : vector<1x10x6xbf16> to vector<10x6xbf16>
    %c0_146 = arith.constant 0 : index
    %c13_147 = arith.constant 13 : index
    %142 = vector.load %arg23[%c0_146, %c13_147] : memref<6x256xbf16, #tpu.memory_space<vmem>>, vector<6x100xbf16>
    %cst_148 = arith.constant dense<0.000000e+00> : vector<10x100xf32>
    %143 = tpu.matmul %141, %142, %cst_148 {dimension_numbers = #tpu.dot_dimension_numbers<[1], [0], [0], [1], [0, 0, 1, 1], [], []>} : vector<10x6xbf16>, vector<6x100xbf16>, vector<10x100xf32> -> vector<10x100xf32>
    %144 = arith.addf %139, %143 : vector<10x100xf32>
    %c8_149 = arith.constant 8 : index
    %c0_150 = arith.constant 0 : index
    %c0_151 = arith.constant 0 : index
    %145 = vector.load %arg3[%c8_149, %c0_150, %c0_151] : memref<16x10x6xbf16, #tpu.memory_space<vmem>>, vector<1x10x6xbf16>
    %146 = vector.shape_cast %145 : vector<1x10x6xbf16> to vector<10x6xbf16>
    %c0_152 = arith.constant 0 : index
    %c20_153 = arith.constant 20 : index
    %147 = vector.load %arg23[%c0_152, %c20_153] : memref<6x256xbf16, #tpu.memory_space<vmem>>, vector<6x100xbf16>
    %cst_154 = arith.constant dense<0.000000e+00> : vector<10x100xf32>
    %148 = tpu.matmul %146, %147, %cst_154 {dimension_numbers = #tpu.dot_dimension_numbers<[1], [0], [0], [1], [0, 0, 1, 1], [], []>} : vector<10x6xbf16>, vector<6x100xbf16>, vector<10x100xf32> -> vector<10x100xf32>
    %149 = arith.addf %144, %148 : vector<10x100xf32>
    %c9_155 = arith.constant 9 : index
    %c0_156 = arith.constant 0 : index
    %c0_157 = arith.constant 0 : index
    %150 = vector.load %arg3[%c9_155, %c0_156, %c0_157] : memref<16x10x6xbf16, #tpu.memory_space<vmem>>, vector<1x10x6xbf16>
    %151 = vector.shape_cast %150 : vector<1x10x6xbf16> to vector<10x6xbf16>
    %c0_158 = arith.constant 0 : index
    %c21_159 = arith.constant 21 : index
    %152 = vector.load %arg23[%c0_158, %c21_159] : memref<6x256xbf16, #tpu.memory_space<vmem>>, vector<6x100xbf16>
    %cst_160 = arith.constant dense<0.000000e+00> : vector<10x100xf32>
    %153 = tpu.matmul %151, %152, %cst_160 {dimension_numbers = #tpu.dot_dimension_numbers<[1], [0], [0], [1], [0, 0, 1, 1], [], []>} : vector<10x6xbf16>, vector<6x100xbf16>, vector<10x100xf32> -> vector<10x100xf32>
    %154 = arith.addf %149, %153 : vector<10x100xf32>
    %c10_161 = arith.constant 10 : index
    %c0_162 = arith.constant 0 : index
    %c0_163 = arith.constant 0 : index
    %155 = vector.load %arg3[%c10_161, %c0_162, %c0_163] : memref<16x10x6xbf16, #tpu.memory_space<vmem>>, vector<1x10x6xbf16>
    %156 = vector.shape_cast %155 : vector<1x10x6xbf16> to vector<10x6xbf16>
    %c0_164 = arith.constant 0 : index
    %c22 = arith.constant 22 : index
    %157 = vector.load %arg23[%c0_164, %c22] : memref<6x256xbf16, #tpu.memory_space<vmem>>, vector<6x100xbf16>
    %cst_165 = arith.constant dense<0.000000e+00> : vector<10x100xf32>
    %158 = tpu.matmul %156, %157, %cst_165 {dimension_numbers = #tpu.dot_dimension_numbers<[1], [0], [0], [1], [0, 0, 1, 1], [], []>} : vector<10x6xbf16>, vector<6x100xbf16>, vector<10x100xf32> -> vector<10x100xf32>
    %159 = arith.addf %154, %158 : vector<10x100xf32>
    %c11_166 = arith.constant 11 : index
    %c0_167 = arith.constant 0 : index
    %c0_168 = arith.constant 0 : index
    %160 = vector.load %arg3[%c11_166, %c0_167, %c0_168] : memref<16x10x6xbf16, #tpu.memory_space<vmem>>, vector<1x10x6xbf16>
    %161 = vector.shape_cast %160 : vector<1x10x6xbf16> to vector<10x6xbf16>
    %c0_169 = arith.constant 0 : index
    %c23 = arith.constant 23 : index
    %162 = vector.load %arg23[%c0_169, %c23] : memref<6x256xbf16, #tpu.memory_space<vmem>>, vector<6x100xbf16>
    %cst_170 = arith.constant dense<0.000000e+00> : vector<10x100xf32>
    %163 = tpu.matmul %161, %162, %cst_170 {dimension_numbers = #tpu.dot_dimension_numbers<[1], [0], [0], [1], [0, 0, 1, 1], [], []>} : vector<10x6xbf16>, vector<6x100xbf16>, vector<10x100xf32> -> vector<10x100xf32>
    %164 = arith.addf %159, %163 : vector<10x100xf32>
    %c12_171 = arith.constant 12 : index
    %c0_172 = arith.constant 0 : index
    %c0_173 = arith.constant 0 : index
    %165 = vector.load %arg3[%c12_171, %c0_172, %c0_173] : memref<16x10x6xbf16, #tpu.memory_space<vmem>>, vector<1x10x6xbf16>
    %166 = vector.shape_cast %165 : vector<1x10x6xbf16> to vector<10x6xbf16>
    %c0_174 = arith.constant 0 : index
    %c30 = arith.constant 30 : index
    %167 = vector.load %arg23[%c0_174, %c30] : memref<6x256xbf16, #tpu.memory_space<vmem>>, vector<6x100xbf16>
    %cst_175 = arith.constant dense<0.000000e+00> : vector<10x100xf32>
    %168 = tpu.matmul %166, %167, %cst_175 {dimension_numbers = #tpu.dot_dimension_numbers<[1], [0], [0], [1], [0, 0, 1, 1], [], []>} : vector<10x6xbf16>, vector<6x100xbf16>, vector<10x100xf32> -> vector<10x100xf32>
    %169 = arith.addf %164, %168 : vector<10x100xf32>
    %c13_176 = arith.constant 13 : index
    %c0_177 = arith.constant 0 : index
    %c0_178 = arith.constant 0 : index
    %170 = vector.load %arg3[%c13_176, %c0_177, %c0_178] : memref<16x10x6xbf16, #tpu.memory_space<vmem>>, vector<1x10x6xbf16>
    %171 = vector.shape_cast %170 : vector<1x10x6xbf16> to vector<10x6xbf16>
    %c0_179 = arith.constant 0 : index
    %c31 = arith.constant 31 : index
    %172 = vector.load %arg23[%c0_179, %c31] : memref<6x256xbf16, #tpu.memory_space<vmem>>, vector<6x100xbf16>
    %cst_180 = arith.constant dense<0.000000e+00> : vector<10x100xf32>
    %173 = tpu.matmul %171, %172, %cst_180 {dimension_numbers = #tpu.dot_dimension_numbers<[1], [0], [0], [1], [0, 0, 1, 1], [], []>} : vector<10x6xbf16>, vector<6x100xbf16>, vector<10x100xf32> -> vector<10x100xf32>
    %174 = arith.addf %169, %173 : vector<10x100xf32>
    %c14_181 = arith.constant 14 : index
    %c0_182 = arith.constant 0 : index
    %c0_183 = arith.constant 0 : index
    %175 = vector.load %arg3[%c14_181, %c0_182, %c0_183] : memref<16x10x6xbf16, #tpu.memory_space<vmem>>, vector<1x10x6xbf16>
    %176 = vector.shape_cast %175 : vector<1x10x6xbf16> to vector<10x6xbf16>
    %c0_184 = arith.constant 0 : index
    %c32 = arith.constant 32 : index
    %177 = vector.load %arg23[%c0_184, %c32] : memref<6x256xbf16, #tpu.memory_space<vmem>>, vector<6x100xbf16>
    %cst_185 = arith.constant dense<0.000000e+00> : vector<10x100xf32>
    %178 = tpu.matmul %176, %177, %cst_185 {dimension_numbers = #tpu.dot_dimension_numbers<[1], [0], [0], [1], [0, 0, 1, 1], [], []>} : vector<10x6xbf16>, vector<6x100xbf16>, vector<10x100xf32> -> vector<10x100xf32>
    %179 = arith.addf %174, %178 : vector<10x100xf32>
    %c15_186 = arith.constant 15 : index
    %c0_187 = arith.constant 0 : index
    %c0_188 = arith.constant 0 : index
    %180 = vector.load %arg3[%c15_186, %c0_187, %c0_188] : memref<16x10x6xbf16, #tpu.memory_space<vmem>>, vector<1x10x6xbf16>
    %181 = vector.shape_cast %180 : vector<1x10x6xbf16> to vector<10x6xbf16>
    %c0_189 = arith.constant 0 : index
    %c33 = arith.constant 33 : index
    %182 = vector.load %arg23[%c0_189, %c33] : memref<6x256xbf16, #tpu.memory_space<vmem>>, vector<6x100xbf16>
    %cst_190 = arith.constant dense<0.000000e+00> : vector<10x100xf32>
    %183 = tpu.matmul %181, %182, %cst_190 {dimension_numbers = #tpu.dot_dimension_numbers<[1], [0], [0], [1], [0, 0, 1, 1], [], []>} : vector<10x6xbf16>, vector<6x100xbf16>, vector<10x100xf32> -> vector<10x100xf32>
    %184 = arith.addf %179, %183 : vector<10x100xf32>
    %c0_191 = arith.constant 0 : index
    %c0_192 = arith.constant 0 : index
    %185 = vector.load %arg9[%c0_191, %c0_192] : memref<10x1xf32, #tpu.memory_space<vmem>>, vector<10x1xf32>
    %186 = vector.broadcast %185 : vector<10x1xf32> to vector<10x100xf32>
    %187 = arith.addf %184, %186 : vector<10x100xf32>
    %c0_193 = arith.constant 0 : index
    %c0_194 = arith.constant 0 : index
    %188 = vector.load %arg16[%c0_193, %c0_194] : memref<100x36xf32, #tpu.memory_space<vmem>>, vector<100x36xf32>
    %cst_195 = arith.constant 0.000000e+00 : f32
    %189 = vector.broadcast %cst_195 : f32 to vector<10x100xf32>
    %190 = arith.maximumf %187, %189 : vector<10x100xf32>
    %cst_196 = arith.constant dense<0.000000e+00> : vector<10x36xf32>
    %191 = tpu.matmul %190, %188, %cst_196 {dimension_numbers = #tpu.dot_dimension_numbers<[1], [0], [0], [1], [0, 0, 1, 1], [], []>} : vector<10x100xf32>, vector<100x36xf32>, vector<10x36xf32> -> vector<10x36xf32>
    %192 = arith.truncf %191 : vector<10x36xf32> to vector<10x36xbf16>
    %c0_197 = arith.constant 0 : index
    %c0_198 = arith.constant 0 : index
    %193 = vector.load %arg24[%c0_197, %c0_198] : memref<10x128xbf16, #tpu.memory_space<vmem>>, vector<10x36xbf16>
    tpu.vector_store %arg24[%c0_197, %c0_198], %192 {strides = array<i32>} : memref<10x128xbf16, #tpu.memory_space<vmem>>, vector<10x36xbf16>,
    %c0_199 = arith.constant 0 : index
    %c0_200 = arith.constant 0 : index
    %c0_201 = arith.constant 0 : index
    %194 = vector.load %arg4[%c0_199, %c0_200, %c0_201] : memref<16x15x10xbf16, #tpu.memory_space<vmem>>, vector<1x15x10xbf16>
    %195 = vector.shape_cast %194 : vector<1x15x10xbf16> to vector<15x10xbf16>
    %c0_202 = arith.constant 0 : index
    %c0_203 = arith.constant 0 : index
    %196 = vector.load %arg24[%c0_202, %c0_203] : memref<10x128xbf16, #tpu.memory_space<vmem>>, vector<10x36xbf16>
    %cst_204 = arith.constant dense<0.000000e+00> : vector<15x36xf32>
    %197 = tpu.matmul %195, %196, %cst_204 {dimension_numbers = #tpu.dot_dimension_numbers<[1], [0], [0], [1], [0, 0, 1, 1], [], []>} : vector<15x10xbf16>, vector<10x36xbf16>, vector<15x36xf32> -> vector<15x36xf32>
    %c1_205 = arith.constant 1 : index
    %c0_206 = arith.constant 0 : index
    %c0_207 = arith.constant 0 : index
    %198 = vector.load %arg4[%c1_205, %c0_206, %c0_207] : memref<16x15x10xbf16, #tpu.memory_space<vmem>>, vector<1x15x10xbf16>
    %199 = vector.shape_cast %198 : vector<1x15x10xbf16> to vector<15x10xbf16>
    %c0_208 = arith.constant 0 : index
    %c1_209 = arith.constant 1 : index
    %200 = vector.load %arg24[%c0_208, %c1_209] : memref<10x128xbf16, #tpu.memory_space<vmem>>, vector<10x36xbf16>
    %cst_210 = arith.constant dense<0.000000e+00> : vector<15x36xf32>
    %201 = tpu.matmul %199, %200, %cst_210 {dimension_numbers = #tpu.dot_dimension_numbers<[1], [0], [0], [1], [0, 0, 1, 1], [], []>} : vector<15x10xbf16>, vector<10x36xbf16>, vector<15x36xf32> -> vector<15x36xf32>
    %202 = arith.addf %197, %201 : vector<15x36xf32>
    %c2_211 = arith.constant 2 : index
    %c0_212 = arith.constant 0 : index
    %c0_213 = arith.constant 0 : index
    %203 = vector.load %arg4[%c2_211, %c0_212, %c0_213] : memref<16x15x10xbf16, #tpu.memory_space<vmem>>, vector<1x15x10xbf16>
    %204 = vector.shape_cast %203 : vector<1x15x10xbf16> to vector<15x10xbf16>
    %c0_214 = arith.constant 0 : index
    %c2_215 = arith.constant 2 : index
    %205 = vector.load %arg24[%c0_214, %c2_215] : memref<10x128xbf16, #tpu.memory_space<vmem>>, vector<10x36xbf16>
    %cst_216 = arith.constant dense<0.000000e+00> : vector<15x36xf32>
    %206 = tpu.matmul %204, %205, %cst_216 {dimension_numbers = #tpu.dot_dimension_numbers<[1], [0], [0], [1], [0, 0, 1, 1], [], []>} : vector<15x10xbf16>, vector<10x36xbf16>, vector<15x36xf32> -> vector<15x36xf32>
    %207 = arith.addf %202, %206 : vector<15x36xf32>
    %c3_217 = arith.constant 3 : index
    %c0_218 = arith.constant 0 : index
    %c0_219 = arith.constant 0 : index
    %208 = vector.load %arg4[%c3_217, %c0_218, %c0_219] : memref<16x15x10xbf16, #tpu.memory_space<vmem>>, vector<1x15x10xbf16>
    %209 = vector.shape_cast %208 : vector<1x15x10xbf16> to vector<15x10xbf16>
    %c0_220 = arith.constant 0 : index
    %c3_221 = arith.constant 3 : index
    %210 = vector.load %arg24[%c0_220, %c3_221] : memref<10x128xbf16, #tpu.memory_space<vmem>>, vector<10x36xbf16>
    %cst_222 = arith.constant dense<0.000000e+00> : vector<15x36xf32>
    %211 = tpu.matmul %209, %210, %cst_222 {dimension_numbers = #tpu.dot_dimension_numbers<[1], [0], [0], [1], [0, 0, 1, 1], [], []>} : vector<15x10xbf16>, vector<10x36xbf16>, vector<15x36xf32> -> vector<15x36xf32>
    %212 = arith.addf %207, %211 : vector<15x36xf32>
    %c4_223 = arith.constant 4 : index
    %c0_224 = arith.constant 0 : index
    %c0_225 = arith.constant 0 : index
    %213 = vector.load %arg4[%c4_223, %c0_224, %c0_225] : memref<16x15x10xbf16, #tpu.memory_space<vmem>>, vector<1x15x10xbf16>
    %214 = vector.shape_cast %213 : vector<1x15x10xbf16> to vector<15x10xbf16>
    %c0_226 = arith.constant 0 : index
    %c6_227 = arith.constant 6 : index
    %215 = vector.load %arg24[%c0_226, %c6_227] : memref<10x128xbf16, #tpu.memory_space<vmem>>, vector<10x36xbf16>
    %cst_228 = arith.constant dense<0.000000e+00> : vector<15x36xf32>
    %216 = tpu.matmul %214, %215, %cst_228 {dimension_numbers = #tpu.dot_dimension_numbers<[1], [0], [0], [1], [0, 0, 1, 1], [], []>} : vector<15x10xbf16>, vector<10x36xbf16>, vector<15x36xf32> -> vector<15x36xf32>
    %217 = arith.addf %212, %216 : vector<15x36xf32>
    %c5_229 = arith.constant 5 : index
    %c0_230 = arith.constant 0 : index
    %c0_231 = arith.constant 0 : index
    %218 = vector.load %arg4[%c5_229, %c0_230, %c0_231] : memref<16x15x10xbf16, #tpu.memory_space<vmem>>, vector<1x15x10xbf16>
    %219 = vector.shape_cast %218 : vector<1x15x10xbf16> to vector<15x10xbf16>
    %c0_232 = arith.constant 0 : index
    %c7_233 = arith.constant 7 : index
    %220 = vector.load %arg24[%c0_232, %c7_233] : memref<10x128xbf16, #tpu.memory_space<vmem>>, vector<10x36xbf16>
    %cst_234 = arith.constant dense<0.000000e+00> : vector<15x36xf32>
    %221 = tpu.matmul %219, %220, %cst_234 {dimension_numbers = #tpu.dot_dimension_numbers<[1], [0], [0], [1], [0, 0, 1, 1], [], []>} : vector<15x10xbf16>, vector<10x36xbf16>, vector<15x36xf32> -> vector<15x36xf32>
    %222 = arith.addf %217, %221 : vector<15x36xf32>
    %c6_235 = arith.constant 6 : index
    %c0_236 = arith.constant 0 : index
    %c0_237 = arith.constant 0 : index
    %223 = vector.load %arg4[%c6_235, %c0_236, %c0_237] : memref<16x15x10xbf16, #tpu.memory_space<vmem>>, vector<1x15x10xbf16>
    %224 = vector.shape_cast %223 : vector<1x15x10xbf16> to vector<15x10xbf16>
    %c0_238 = arith.constant 0 : index
    %c8_239 = arith.constant 8 : index
    %225 = vector.load %arg24[%c0_238, %c8_239] : memref<10x128xbf16, #tpu.memory_space<vmem>>, vector<10x36xbf16>
    %cst_240 = arith.constant dense<0.000000e+00> : vector<15x36xf32>
    %226 = tpu.matmul %224, %225, %cst_240 {dimension_numbers = #tpu.dot_dimension_numbers<[1], [0], [0], [1], [0, 0, 1, 1], [], []>} : vector<15x10xbf16>, vector<10x36xbf16>, vector<15x36xf32> -> vector<15x36xf32>
    %227 = arith.addf %222, %226 : vector<15x36xf32>
    %c7_241 = arith.constant 7 : index
    %c0_242 = arith.constant 0 : index
    %c0_243 = arith.constant 0 : index
    %228 = vector.load %arg4[%c7_241, %c0_242, %c0_243] : memref<16x15x10xbf16, #tpu.memory_space<vmem>>, vector<1x15x10xbf16>
    %229 = vector.shape_cast %228 : vector<1x15x10xbf16> to vector<15x10xbf16>
    %c0_244 = arith.constant 0 : index
    %c9_245 = arith.constant 9 : index
    %230 = vector.load %arg24[%c0_244, %c9_245] : memref<10x128xbf16, #tpu.memory_space<vmem>>, vector<10x36xbf16>
    %cst_246 = arith.constant dense<0.000000e+00> : vector<15x36xf32>
    %231 = tpu.matmul %229, %230, %cst_246 {dimension_numbers = #tpu.dot_dimension_numbers<[1], [0], [0], [1], [0, 0, 1, 1], [], []>} : vector<15x10xbf16>, vector<10x36xbf16>, vector<15x36xf32> -> vector<15x36xf32>
    %232 = arith.addf %227, %231 : vector<15x36xf32>
    %c8_247 = arith.constant 8 : index
    %c0_248 = arith.constant 0 : index
    %c0_249 = arith.constant 0 : index
    %233 = vector.load %arg4[%c8_247, %c0_248, %c0_249] : memref<16x15x10xbf16, #tpu.memory_space<vmem>>, vector<1x15x10xbf16>
    %234 = vector.shape_cast %233 : vector<1x15x10xbf16> to vector<15x10xbf16>
    %c0_250 = arith.constant 0 : index
    %c12_251 = arith.constant 12 : index
    %235 = vector.load %arg24[%c0_250, %c12_251] : memref<10x128xbf16, #tpu.memory_space<vmem>>, vector<10x36xbf16>
    %cst_252 = arith.constant dense<0.000000e+00> : vector<15x36xf32>
    %236 = tpu.matmul %234, %235, %cst_252 {dimension_numbers = #tpu.dot_dimension_numbers<[1], [0], [0], [1], [0, 0, 1, 1], [], []>} : vector<15x10xbf16>, vector<10x36xbf16>, vector<15x36xf32> -> vector<15x36xf32>
    %237 = arith.addf %232, %236 : vector<15x36xf32>
    %c9_253 = arith.constant 9 : index
    %c0_254 = arith.constant 0 : index
    %c0_255 = arith.constant 0 : index
    %238 = vector.load %arg4[%c9_253, %c0_254, %c0_255] : memref<16x15x10xbf16, #tpu.memory_space<vmem>>, vector<1x15x10xbf16>
    %239 = vector.shape_cast %238 : vector<1x15x10xbf16> to vector<15x10xbf16>
    %c0_256 = arith.constant 0 : index
    %c13_257 = arith.constant 13 : index
    %240 = vector.load %arg24[%c0_256, %c13_257] : memref<10x128xbf16, #tpu.memory_space<vmem>>, vector<10x36xbf16>
    %cst_258 = arith.constant dense<0.000000e+00> : vector<15x36xf32>
    %241 = tpu.matmul %239, %240, %cst_258 {dimension_numbers = #tpu.dot_dimension_numbers<[1], [0], [0], [1], [0, 0, 1, 1], [], []>} : vector<15x10xbf16>, vector<10x36xbf16>, vector<15x36xf32> -> vector<15x36xf32>
    %242 = arith.addf %237, %241 : vector<15x36xf32>
    %c10_259 = arith.constant 10 : index
    %c0_260 = arith.constant 0 : index
    %c0_261 = arith.constant 0 : index
    %243 = vector.load %arg4[%c10_259, %c0_260, %c0_261] : memref<16x15x10xbf16, #tpu.memory_space<vmem>>, vector<1x15x10xbf16>
    %244 = vector.shape_cast %243 : vector<1x15x10xbf16> to vector<15x10xbf16>
    %c0_262 = arith.constant 0 : index
    %c14_263 = arith.constant 14 : index
    %245 = vector.load %arg24[%c0_262, %c14_263] : memref<10x128xbf16, #tpu.memory_space<vmem>>, vector<10x36xbf16>
    %cst_264 = arith.constant dense<0.000000e+00> : vector<15x36xf32>
    %246 = tpu.matmul %244, %245, %cst_264 {dimension_numbers = #tpu.dot_dimension_numbers<[1], [0], [0], [1], [0, 0, 1, 1], [], []>} : vector<15x10xbf16>, vector<10x36xbf16>, vector<15x36xf32> -> vector<15x36xf32>
    %247 = arith.addf %242, %246 : vector<15x36xf32>
    %c11_265 = arith.constant 11 : index
    %c0_266 = arith.constant 0 : index
    %c0_267 = arith.constant 0 : index
    %248 = vector.load %arg4[%c11_265, %c0_266, %c0_267] : memref<16x15x10xbf16, #tpu.memory_space<vmem>>, vector<1x15x10xbf16>
    %249 = vector.shape_cast %248 : vector<1x15x10xbf16> to vector<15x10xbf16>
    %c0_268 = arith.constant 0 : index
    %c15_269 = arith.constant 15 : index
    %250 = vector.load %arg24[%c0_268, %c15_269] : memref<10x128xbf16, #tpu.memory_space<vmem>>, vector<10x36xbf16>
    %cst_270 = arith.constant dense<0.000000e+00> : vector<15x36xf32>
    %251 = tpu.matmul %249, %250, %cst_270 {dimension_numbers = #tpu.dot_dimension_numbers<[1], [0], [0], [1], [0, 0, 1, 1], [], []>} : vector<15x10xbf16>, vector<10x36xbf16>, vector<15x36xf32> -> vector<15x36xf32>
    %252 = arith.addf %247, %251 : vector<15x36xf32>
    %c12_271 = arith.constant 12 : index
    %c0_272 = arith.constant 0 : index
    %c0_273 = arith.constant 0 : index
    %253 = vector.load %arg4[%c12_271, %c0_272, %c0_273] : memref<16x15x10xbf16, #tpu.memory_space<vmem>>, vector<1x15x10xbf16>
    %254 = vector.shape_cast %253 : vector<1x15x10xbf16> to vector<15x10xbf16>
    %c0_274 = arith.constant 0 : index
    %c18_275 = arith.constant 18 : index
    %255 = vector.load %arg24[%c0_274, %c18_275] : memref<10x128xbf16, #tpu.memory_space<vmem>>, vector<10x36xbf16>
    %cst_276 = arith.constant dense<0.000000e+00> : vector<15x36xf32>
    %256 = tpu.matmul %254, %255, %cst_276 {dimension_numbers = #tpu.dot_dimension_numbers<[1], [0], [0], [1], [0, 0, 1, 1], [], []>} : vector<15x10xbf16>, vector<10x36xbf16>, vector<15x36xf32> -> vector<15x36xf32>
    %257 = arith.addf %252, %256 : vector<15x36xf32>
    %c13_277 = arith.constant 13 : index
    %c0_278 = arith.constant 0 : index
    %c0_279 = arith.constant 0 : index
    %258 = vector.load %arg4[%c13_277, %c0_278, %c0_279] : memref<16x15x10xbf16, #tpu.memory_space<vmem>>, vector<1x15x10xbf16>
    %259 = vector.shape_cast %258 : vector<1x15x10xbf16> to vector<15x10xbf16>
    %c0_280 = arith.constant 0 : index
    %c19_281 = arith.constant 19 : index
    %260 = vector.load %arg24[%c0_280, %c19_281] : memref<10x128xbf16, #tpu.memory_space<vmem>>, vector<10x36xbf16>
    %cst_282 = arith.constant dense<0.000000e+00> : vector<15x36xf32>
    %261 = tpu.matmul %259, %260, %cst_282 {dimension_numbers = #tpu.dot_dimension_numbers<[1], [0], [0], [1], [0, 0, 1, 1], [], []>} : vector<15x10xbf16>, vector<10x36xbf16>, vector<15x36xf32> -> vector<15x36xf32>
    %262 = arith.addf %257, %261 : vector<15x36xf32>
    %c14_283 = arith.constant 14 : index
    %c0_284 = arith.constant 0 : index
    %c0_285 = arith.constant 0 : index
    %263 = vector.load %arg4[%c14_283, %c0_284, %c0_285] : memref<16x15x10xbf16, #tpu.memory_space<vmem>>, vector<1x15x10xbf16>
    %264 = vector.shape_cast %263 : vector<1x15x10xbf16> to vector<15x10xbf16>
    %c0_286 = arith.constant 0 : index
    %c20_287 = arith.constant 20 : index
    %265 = vector.load %arg24[%c0_286, %c20_287] : memref<10x128xbf16, #tpu.memory_space<vmem>>, vector<10x36xbf16>
    %cst_288 = arith.constant dense<0.000000e+00> : vector<15x36xf32>
    %266 = tpu.matmul %264, %265, %cst_288 {dimension_numbers = #tpu.dot_dimension_numbers<[1], [0], [0], [1], [0, 0, 1, 1], [], []>} : vector<15x10xbf16>, vector<10x36xbf16>, vector<15x36xf32> -> vector<15x36xf32>
    %267 = arith.addf %262, %266 : vector<15x36xf32>
    %c15_289 = arith.constant 15 : index
    %c0_290 = arith.constant 0 : index
    %c0_291 = arith.constant 0 : index
    %268 = vector.load %arg4[%c15_289, %c0_290, %c0_291] : memref<16x15x10xbf16, #tpu.memory_space<vmem>>, vector<1x15x10xbf16>
    %269 = vector.shape_cast %268 : vector<1x15x10xbf16> to vector<15x10xbf16>
    %c0_292 = arith.constant 0 : index
    %c21_293 = arith.constant 21 : index
    %270 = vector.load %arg24[%c0_292, %c21_293] : memref<10x128xbf16, #tpu.memory_space<vmem>>, vector<10x36xbf16>
    %cst_294 = arith.constant dense<0.000000e+00> : vector<15x36xf32>
    %271 = tpu.matmul %269, %270, %cst_294 {dimension_numbers = #tpu.dot_dimension_numbers<[1], [0], [0], [1], [0, 0, 1, 1], [], []>} : vector<15x10xbf16>, vector<10x36xbf16>, vector<15x36xf32> -> vector<15x36xf32>
    %272 = arith.addf %267, %271 : vector<15x36xf32>
    %c0_295 = arith.constant 0 : index
    %c0_296 = arith.constant 0 : index
    %273 = vector.load %arg10[%c0_295, %c0_296] : memref<15x1xf32, #tpu.memory_space<vmem>>, vector<15x1xf32>
    %274 = vector.broadcast %273 : vector<15x1xf32> to vector<15x36xf32>
    %275 = arith.addf %272, %274 : vector<15x36xf32>
    %c0_297 = arith.constant 0 : index
    %c0_298 = arith.constant 0 : index
    %276 = vector.load %arg17[%c0_297, %c0_298] : memref<36x49xf32, #tpu.memory_space<vmem>>, vector<36x49xf32>
    %cst_299 = arith.constant 0.000000e+00 : f32
    %277 = vector.broadcast %cst_299 : f32 to vector<15x36xf32>
    %278 = arith.maximumf %275, %277 : vector<15x36xf32>
    %cst_300 = arith.constant dense<0.000000e+00> : vector<15x49xf32>
    %279 = tpu.matmul %278, %276, %cst_300 {dimension_numbers = #tpu.dot_dimension_numbers<[1], [0], [0], [1], [0, 0, 1, 1], [], []>} : vector<15x36xf32>, vector<36x49xf32>, vector<15x49xf32> -> vector<15x49xf32>
    %280 = arith.truncf %279 : vector<15x49xf32> to vector<15x49xbf16>
    %c0_301 = arith.constant 0 : index
    %c0_302 = arith.constant 0 : index
    %281 = vector.load %arg25[%c0_301, %c0_302] : memref<15x128xbf16, #tpu.memory_space<vmem>>, vector<15x49xbf16>
    tpu.vector_store %arg25[%c0_301, %c0_302], %280 {strides = array<i32>} : memref<15x128xbf16, #tpu.memory_space<vmem>>, vector<15x49xbf16>,
    %c0_303 = arith.constant 0 : index
    %c0_304 = arith.constant 0 : index
    %c0_305 = arith.constant 0 : index
    %282 = vector.load %arg5[%c0_303, %c0_304, %c0_305] : memref<16x10x15xbf16, #tpu.memory_space<vmem>>, vector<1x10x15xbf16>
    %283 = vector.shape_cast %282 : vector<1x10x15xbf16> to vector<10x15xbf16>
    %c0_306 = arith.constant 0 : index
    %c0_307 = arith.constant 0 : index
    %284 = vector.load %arg25[%c0_306, %c0_307] : memref<15x128xbf16, #tpu.memory_space<vmem>>, vector<15x49xbf16>
    %cst_308 = arith.constant dense<0.000000e+00> : vector<10x49xf32>
    %285 = tpu.matmul %283, %284, %cst_308 {dimension_numbers = #tpu.dot_dimension_numbers<[1], [0], [0], [1], [0, 0, 1, 1], [], []>} : vector<10x15xbf16>, vector<15x49xbf16>, vector<10x49xf32> -> vector<10x49xf32>
    %c1_309 = arith.constant 1 : index
    %c0_310 = arith.constant 0 : index
    %c0_311 = arith.constant 0 : index
    %286 = vector.load %arg5[%c1_309, %c0_310, %c0_311] : memref<16x10x15xbf16, #tpu.memory_space<vmem>>, vector<1x10x15xbf16>
    %287 = vector.shape_cast %286 : vector<1x10x15xbf16> to vector<10x15xbf16>
    %c0_312 = arith.constant 0 : index
    %c1_313 = arith.constant 1 : index
    %288 = vector.load %arg25[%c0_312, %c1_313] : memref<15x128xbf16, #tpu.memory_space<vmem>>, vector<15x49xbf16>
    %cst_314 = arith.constant dense<0.000000e+00> : vector<10x49xf32>
    %289 = tpu.matmul %287, %288, %cst_314 {dimension_numbers = #tpu.dot_dimension_numbers<[1], [0], [0], [1], [0, 0, 1, 1], [], []>} : vector<10x15xbf16>, vector<15x49xbf16>, vector<10x49xf32> -> vector<10x49xf32>
    %290 = arith.addf %285, %289 : vector<10x49xf32>
    %c2_315 = arith.constant 2 : index
    %c0_316 = arith.constant 0 : index
    %c0_317 = arith.constant 0 : index
    %291 = vector.load %arg5[%c2_315, %c0_316, %c0_317] : memref<16x10x15xbf16, #tpu.memory_space<vmem>>, vector<1x10x15xbf16>
    %292 = vector.shape_cast %291 : vector<1x10x15xbf16> to vector<10x15xbf16>
    %c0_318 = arith.constant 0 : index
    %c2_319 = arith.constant 2 : index
    %293 = vector.load %arg25[%c0_318, %c2_319] : memref<15x128xbf16, #tpu.memory_space<vmem>>, vector<15x49xbf16>
    %cst_320 = arith.constant dense<0.000000e+00> : vector<10x49xf32>
    %294 = tpu.matmul %292, %293, %cst_320 {dimension_numbers = #tpu.dot_dimension_numbers<[1], [0], [0], [1], [0, 0, 1, 1], [], []>} : vector<10x15xbf16>, vector<15x49xbf16>, vector<10x49xf32> -> vector<10x49xf32>
    %295 = arith.addf %290, %294 : vector<10x49xf32>
    %c3_321 = arith.constant 3 : index
    %c0_322 = arith.constant 0 : index
    %c0_323 = arith.constant 0 : index
    %296 = vector.load %arg5[%c3_321, %c0_322, %c0_323] : memref<16x10x15xbf16, #tpu.memory_space<vmem>>, vector<1x10x15xbf16>
    %297 = vector.shape_cast %296 : vector<1x10x15xbf16> to vector<10x15xbf16>
    %c0_324 = arith.constant 0 : index
    %c3_325 = arith.constant 3 : index
    %298 = vector.load %arg25[%c0_324, %c3_325] : memref<15x128xbf16, #tpu.memory_space<vmem>>, vector<15x49xbf16>
    %cst_326 = arith.constant dense<0.000000e+00> : vector<10x49xf32>
    %299 = tpu.matmul %297, %298, %cst_326 {dimension_numbers = #tpu.dot_dimension_numbers<[1], [0], [0], [1], [0, 0, 1, 1], [], []>} : vector<10x15xbf16>, vector<15x49xbf16>, vector<10x49xf32> -> vector<10x49xf32>
    %300 = arith.addf %295, %299 : vector<10x49xf32>
    %c4_327 = arith.constant 4 : index
    %c0_328 = arith.constant 0 : index
    %c0_329 = arith.constant 0 : index
    %301 = vector.load %arg5[%c4_327, %c0_328, %c0_329] : memref<16x10x15xbf16, #tpu.memory_space<vmem>>, vector<1x10x15xbf16>
    %302 = vector.shape_cast %301 : vector<1x10x15xbf16> to vector<10x15xbf16>
    %c0_330 = arith.constant 0 : index
    %c7_331 = arith.constant 7 : index
    %303 = vector.load %arg25[%c0_330, %c7_331] : memref<15x128xbf16, #tpu.memory_space<vmem>>, vector<15x49xbf16>
    %cst_332 = arith.constant dense<0.000000e+00> : vector<10x49xf32>
    %304 = tpu.matmul %302, %303, %cst_332 {dimension_numbers = #tpu.dot_dimension_numbers<[1], [0], [0], [1], [0, 0, 1, 1], [], []>} : vector<10x15xbf16>, vector<15x49xbf16>, vector<10x49xf32> -> vector<10x49xf32>
    %305 = arith.addf %300, %304 : vector<10x49xf32>
    %c5_333 = arith.constant 5 : index
    %c0_334 = arith.constant 0 : index
    %c0_335 = arith.constant 0 : index
    %306 = vector.load %arg5[%c5_333, %c0_334, %c0_335] : memref<16x10x15xbf16, #tpu.memory_space<vmem>>, vector<1x10x15xbf16>
    %307 = vector.shape_cast %306 : vector<1x10x15xbf16> to vector<10x15xbf16>
    %c0_336 = arith.constant 0 : index
    %c8_337 = arith.constant 8 : index
    %308 = vector.load %arg25[%c0_336, %c8_337] : memref<15x128xbf16, #tpu.memory_space<vmem>>, vector<15x49xbf16>
    %cst_338 = arith.constant dense<0.000000e+00> : vector<10x49xf32>
    %309 = tpu.matmul %307, %308, %cst_338 {dimension_numbers = #tpu.dot_dimension_numbers<[1], [0], [0], [1], [0, 0, 1, 1], [], []>} : vector<10x15xbf16>, vector<15x49xbf16>, vector<10x49xf32> -> vector<10x49xf32>
    %310 = arith.addf %305, %309 : vector<10x49xf32>
    %c6_339 = arith.constant 6 : index
    %c0_340 = arith.constant 0 : index
    %c0_341 = arith.constant 0 : index
    %311 = vector.load %arg5[%c6_339, %c0_340, %c0_341] : memref<16x10x15xbf16, #tpu.memory_space<vmem>>, vector<1x10x15xbf16>
    %312 = vector.shape_cast %311 : vector<1x10x15xbf16> to vector<10x15xbf16>
    %c0_342 = arith.constant 0 : index
    %c9_343 = arith.constant 9 : index
    %313 = vector.load %arg25[%c0_342, %c9_343] : memref<15x128xbf16, #tpu.memory_space<vmem>>, vector<15x49xbf16>
    %cst_344 = arith.constant dense<0.000000e+00> : vector<10x49xf32>
    %314 = tpu.matmul %312, %313, %cst_344 {dimension_numbers = #tpu.dot_dimension_numbers<[1], [0], [0], [1], [0, 0, 1, 1], [], []>} : vector<10x15xbf16>, vector<15x49xbf16>, vector<10x49xf32> -> vector<10x49xf32>
    %315 = arith.addf %310, %314 : vector<10x49xf32>
    %c7_345 = arith.constant 7 : index
    %c0_346 = arith.constant 0 : index
    %c0_347 = arith.constant 0 : index
    %316 = vector.load %arg5[%c7_345, %c0_346, %c0_347] : memref<16x10x15xbf16, #tpu.memory_space<vmem>>, vector<1x10x15xbf16>
    %317 = vector.shape_cast %316 : vector<1x10x15xbf16> to vector<10x15xbf16>
    %c0_348 = arith.constant 0 : index
    %c10_349 = arith.constant 10 : index
    %318 = vector.load %arg25[%c0_348, %c10_349] : memref<15x128xbf16, #tpu.memory_space<vmem>>, vector<15x49xbf16>
    %cst_350 = arith.constant dense<0.000000e+00> : vector<10x49xf32>
    %319 = tpu.matmul %317, %318, %cst_350 {dimension_numbers = #tpu.dot_dimension_numbers<[1], [0], [0], [1], [0, 0, 1, 1], [], []>} : vector<10x15xbf16>, vector<15x49xbf16>, vector<10x49xf32> -> vector<10x49xf32>
    %320 = arith.addf %315, %319 : vector<10x49xf32>
    %c8_351 = arith.constant 8 : index
    %c0_352 = arith.constant 0 : index
    %c0_353 = arith.constant 0 : index
    %321 = vector.load %arg5[%c8_351, %c0_352, %c0_353] : memref<16x10x15xbf16, #tpu.memory_space<vmem>>, vector<1x10x15xbf16>
    %322 = vector.shape_cast %321 : vector<1x10x15xbf16> to vector<10x15xbf16>
    %c0_354 = arith.constant 0 : index
    %c14_355 = arith.constant 14 : index
    %323 = vector.load %arg25[%c0_354, %c14_355] : memref<15x128xbf16, #tpu.memory_space<vmem>>, vector<15x49xbf16>
    %cst_356 = arith.constant dense<0.000000e+00> : vector<10x49xf32>
    %324 = tpu.matmul %322, %323, %cst_356 {dimension_numbers = #tpu.dot_dimension_numbers<[1], [0], [0], [1], [0, 0, 1, 1], [], []>} : vector<10x15xbf16>, vector<15x49xbf16>, vector<10x49xf32> -> vector<10x49xf32>
    %325 = arith.addf %320, %324 : vector<10x49xf32>
    %c9_357 = arith.constant 9 : index
    %c0_358 = arith.constant 0 : index
    %c0_359 = arith.constant 0 : index
    %326 = vector.load %arg5[%c9_357, %c0_358, %c0_359] : memref<16x10x15xbf16, #tpu.memory_space<vmem>>, vector<1x10x15xbf16>
    %327 = vector.shape_cast %326 : vector<1x10x15xbf16> to vector<10x15xbf16>
    %c0_360 = arith.constant 0 : index
    %c15_361 = arith.constant 15 : index
    %328 = vector.load %arg25[%c0_360, %c15_361] : memref<15x128xbf16, #tpu.memory_space<vmem>>, vector<15x49xbf16>
    %cst_362 = arith.constant dense<0.000000e+00> : vector<10x49xf32>
    %329 = tpu.matmul %327, %328, %cst_362 {dimension_numbers = #tpu.dot_dimension_numbers<[1], [0], [0], [1], [0, 0, 1, 1], [], []>} : vector<10x15xbf16>, vector<15x49xbf16>, vector<10x49xf32> -> vector<10x49xf32>
    %330 = arith.addf %325, %329 : vector<10x49xf32>
    %c10_363 = arith.constant 10 : index
    %c0_364 = arith.constant 0 : index
    %c0_365 = arith.constant 0 : index
    %331 = vector.load %arg5[%c10_363, %c0_364, %c0_365] : memref<16x10x15xbf16, #tpu.memory_space<vmem>>, vector<1x10x15xbf16>
    %332 = vector.shape_cast %331 : vector<1x10x15xbf16> to vector<10x15xbf16>
    %c0_366 = arith.constant 0 : index
    %c16 = arith.constant 16 : index
    %333 = vector.load %arg25[%c0_366, %c16] : memref<15x128xbf16, #tpu.memory_space<vmem>>, vector<15x49xbf16>
    %cst_367 = arith.constant dense<0.000000e+00> : vector<10x49xf32>
    %334 = tpu.matmul %332, %333, %cst_367 {dimension_numbers = #tpu.dot_dimension_numbers<[1], [0], [0], [1], [0, 0, 1, 1], [], []>} : vector<10x15xbf16>, vector<15x49xbf16>, vector<10x49xf32> -> vector<10x49xf32>
    %335 = arith.addf %330, %334 : vector<10x49xf32>
    %c11_368 = arith.constant 11 : index
    %c0_369 = arith.constant 0 : index
    %c0_370 = arith.constant 0 : index
    %336 = vector.load %arg5[%c11_368, %c0_369, %c0_370] : memref<16x10x15xbf16, #tpu.memory_space<vmem>>, vector<1x10x15xbf16>
    %337 = vector.shape_cast %336 : vector<1x10x15xbf16> to vector<10x15xbf16>
    %c0_371 = arith.constant 0 : index
    %c17 = arith.constant 17 : index
    %338 = vector.load %arg25[%c0_371, %c17] : memref<15x128xbf16, #tpu.memory_space<vmem>>, vector<15x49xbf16>
    %cst_372 = arith.constant dense<0.000000e+00> : vector<10x49xf32>
    %339 = tpu.matmul %337, %338, %cst_372 {dimension_numbers = #tpu.dot_dimension_numbers<[1], [0], [0], [1], [0, 0, 1, 1], [], []>} : vector<10x15xbf16>, vector<15x49xbf16>, vector<10x49xf32> -> vector<10x49xf32>
    %340 = arith.addf %335, %339 : vector<10x49xf32>
    %c12_373 = arith.constant 12 : index
    %c0_374 = arith.constant 0 : index
    %c0_375 = arith.constant 0 : index
    %341 = vector.load %arg5[%c12_373, %c0_374, %c0_375] : memref<16x10x15xbf16, #tpu.memory_space<vmem>>, vector<1x10x15xbf16>
    %342 = vector.shape_cast %341 : vector<1x10x15xbf16> to vector<10x15xbf16>
    %c0_376 = arith.constant 0 : index
    %c21_377 = arith.constant 21 : index
    %343 = vector.load %arg25[%c0_376, %c21_377] : memref<15x128xbf16, #tpu.memory_space<vmem>>, vector<15x49xbf16>
    %cst_378 = arith.constant dense<0.000000e+00> : vector<10x49xf32>
    %344 = tpu.matmul %342, %343, %cst_378 {dimension_numbers = #tpu.dot_dimension_numbers<[1], [0], [0], [1], [0, 0, 1, 1], [], []>} : vector<10x15xbf16>, vector<15x49xbf16>, vector<10x49xf32> -> vector<10x49xf32>
    %345 = arith.addf %340, %344 : vector<10x49xf32>
    %c13_379 = arith.constant 13 : index
    %c0_380 = arith.constant 0 : index
    %c0_381 = arith.constant 0 : index
    %346 = vector.load %arg5[%c13_379, %c0_380, %c0_381] : memref<16x10x15xbf16, #tpu.memory_space<vmem>>, vector<1x10x15xbf16>
    %347 = vector.shape_cast %346 : vector<1x10x15xbf16> to vector<10x15xbf16>
    %c0_382 = arith.constant 0 : index
    %c22_383 = arith.constant 22 : index
    %348 = vector.load %arg25[%c0_382, %c22_383] : memref<15x128xbf16, #tpu.memory_space<vmem>>, vector<15x49xbf16>
    %cst_384 = arith.constant dense<0.000000e+00> : vector<10x49xf32>
    %349 = tpu.matmul %347, %348, %cst_384 {dimension_numbers = #tpu.dot_dimension_numbers<[1], [0], [0], [1], [0, 0, 1, 1], [], []>} : vector<10x15xbf16>, vector<15x49xbf16>, vector<10x49xf32> -> vector<10x49xf32>
    %350 = arith.addf %345, %349 : vector<10x49xf32>
    %c14_385 = arith.constant 14 : index
    %c0_386 = arith.constant 0 : index
    %c0_387 = arith.constant 0 : index
    %351 = vector.load %arg5[%c14_385, %c0_386, %c0_387] : memref<16x10x15xbf16, #tpu.memory_space<vmem>>, vector<1x10x15xbf16>
    %352 = vector.shape_cast %351 : vector<1x10x15xbf16> to vector<10x15xbf16>
    %c0_388 = arith.constant 0 : index
    %c23_389 = arith.constant 23 : index
    %353 = vector.load %arg25[%c0_388, %c23_389] : memref<15x128xbf16, #tpu.memory_space<vmem>>, vector<15x49xbf16>
    %cst_390 = arith.constant dense<0.000000e+00> : vector<10x49xf32>
    %354 = tpu.matmul %352, %353, %cst_390 {dimension_numbers = #tpu.dot_dimension_numbers<[1], [0], [0], [1], [0, 0, 1, 1], [], []>} : vector<10x15xbf16>, vector<15x49xbf16>, vector<10x49xf32> -> vector<10x49xf32>
    %355 = arith.addf %350, %354 : vector<10x49xf32>
    %c15_391 = arith.constant 15 : index
    %c0_392 = arith.constant 0 : index
    %c0_393 = arith.constant 0 : index
    %356 = vector.load %arg5[%c15_391, %c0_392, %c0_393] : memref<16x10x15xbf16, #tpu.memory_space<vmem>>, vector<1x10x15xbf16>
    %357 = vector.shape_cast %356 : vector<1x10x15xbf16> to vector<10x15xbf16>
    %c0_394 = arith.constant 0 : index
    %c24 = arith.constant 24 : index
    %358 = vector.load %arg25[%c0_394, %c24] : memref<15x128xbf16, #tpu.memory_space<vmem>>, vector<15x49xbf16>
    %cst_395 = arith.constant dense<0.000000e+00> : vector<10x49xf32>
    %359 = tpu.matmul %357, %358, %cst_395 {dimension_numbers = #tpu.dot_dimension_numbers<[1], [0], [0], [1], [0, 0, 1, 1], [], []>} : vector<10x15xbf16>, vector<15x49xbf16>, vector<10x49xf32> -> vector<10x49xf32>
    %360 = arith.addf %355, %359 : vector<10x49xf32>
    %c0_396 = arith.constant 0 : index
    %c0_397 = arith.constant 0 : index
    %361 = vector.load %arg11[%c0_396, %c0_397] : memref<10x1xf32, #tpu.memory_space<vmem>>, vector<10x1xf32>
    %362 = vector.broadcast %361 : vector<10x1xf32> to vector<10x49xf32>
    %363 = arith.addf %360, %362 : vector<10x49xf32>
    %c0_398 = arith.constant 0 : index
    %c0_399 = arith.constant 0 : index
    %364 = vector.load %arg18[%c0_398, %c0_399] : memref<49x121xf32, #tpu.memory_space<vmem>>, vector<49x121xf32>
    %cst_400 = arith.constant 0.000000e+00 : f32
    %365 = vector.broadcast %cst_400 : f32 to vector<10x49xf32>
    %366 = arith.maximumf %363, %365 : vector<10x49xf32>
    %cst_401 = arith.constant dense<0.000000e+00> : vector<10x121xf32>
    %367 = tpu.matmul %366, %364, %cst_401 {dimension_numbers = #tpu.dot_dimension_numbers<[1], [0], [0], [1], [0, 0, 1, 1], [], []>} : vector<10x49xf32>, vector<49x121xf32>, vector<10x121xf32> -> vector<10x121xf32>
    %368 = arith.truncf %367 : vector<10x121xf32> to vector<10x121xbf16>
    %c0_402 = arith.constant 0 : index
    %c0_403 = arith.constant 0 : index
    %369 = vector.load %arg26[%c0_402, %c0_403] : memref<10x256xbf16, #tpu.memory_space<vmem>>, vector<10x121xbf16>
    tpu.vector_store %arg26[%c0_402, %c0_403], %368 {strides = array<i32>} : memref<10x256xbf16, #tpu.memory_space<vmem>>, vector<10x121xbf16>,
    %c0_404 = arith.constant 0 : index
    %c0_405 = arith.constant 0 : index
    %c0_406 = arith.constant 0 : index
    %370 = vector.load %arg6[%c0_404, %c0_405, %c0_406] : memref<16x6x10xbf16, #tpu.memory_space<vmem>>, vector<1x6x10xbf16>
    %371 = vector.shape_cast %370 : vector<1x6x10xbf16> to vector<6x10xbf16>
    %c0_407 = arith.constant 0 : index
    %c0_408 = arith.constant 0 : index
    %372 = vector.load %arg26[%c0_407, %c0_408] : memref<10x256xbf16, #tpu.memory_space<vmem>>, vector<10x121xbf16>
    %cst_409 = arith.constant dense<0.000000e+00> : vector<6x121xf32>
    %373 = tpu.matmul %371, %372, %cst_409 {dimension_numbers = #tpu.dot_dimension_numbers<[1], [0], [0], [1], [0, 0, 1, 1], [], []>} : vector<6x10xbf16>, vector<10x121xbf16>, vector<6x121xf32> -> vector<6x121xf32>
    %c1_410 = arith.constant 1 : index
    %c0_411 = arith.constant 0 : index
    %c0_412 = arith.constant 0 : index
    %374 = vector.load %arg6[%c1_410, %c0_411, %c0_412] : memref<16x6x10xbf16, #tpu.memory_space<vmem>>, vector<1x6x10xbf16>
    %375 = vector.shape_cast %374 : vector<1x6x10xbf16> to vector<6x10xbf16>
    %c0_413 = arith.constant 0 : index
    %c1_414 = arith.constant 1 : index
    %376 = vector.load %arg26[%c0_413, %c1_414] : memref<10x256xbf16, #tpu.memory_space<vmem>>, vector<10x121xbf16>
    %cst_415 = arith.constant dense<0.000000e+00> : vector<6x121xf32>
    %377 = tpu.matmul %375, %376, %cst_415 {dimension_numbers = #tpu.dot_dimension_numbers<[1], [0], [0], [1], [0, 0, 1, 1], [], []>} : vector<6x10xbf16>, vector<10x121xbf16>, vector<6x121xf32> -> vector<6x121xf32>
    %378 = arith.addf %373, %377 : vector<6x121xf32>
    %c2_416 = arith.constant 2 : index
    %c0_417 = arith.constant 0 : index
    %c0_418 = arith.constant 0 : index
    %379 = vector.load %arg6[%c2_416, %c0_417, %c0_418] : memref<16x6x10xbf16, #tpu.memory_space<vmem>>, vector<1x6x10xbf16>
    %380 = vector.shape_cast %379 : vector<1x6x10xbf16> to vector<6x10xbf16>
    %c0_419 = arith.constant 0 : index
    %c2_420 = arith.constant 2 : index
    %381 = vector.load %arg26[%c0_419, %c2_420] : memref<10x256xbf16, #tpu.memory_space<vmem>>, vector<10x121xbf16>
    %cst_421 = arith.constant dense<0.000000e+00> : vector<6x121xf32>
    %382 = tpu.matmul %380, %381, %cst_421 {dimension_numbers = #tpu.dot_dimension_numbers<[1], [0], [0], [1], [0, 0, 1, 1], [], []>} : vector<6x10xbf16>, vector<10x121xbf16>, vector<6x121xf32> -> vector<6x121xf32>
    %383 = arith.addf %378, %382 : vector<6x121xf32>
    %c3_422 = arith.constant 3 : index
    %c0_423 = arith.constant 0 : index
    %c0_424 = arith.constant 0 : index
    %384 = vector.load %arg6[%c3_422, %c0_423, %c0_424] : memref<16x6x10xbf16, #tpu.memory_space<vmem>>, vector<1x6x10xbf16>
    %385 = vector.shape_cast %384 : vector<1x6x10xbf16> to vector<6x10xbf16>
    %c0_425 = arith.constant 0 : index
    %c3_426 = arith.constant 3 : index
    %386 = vector.load %arg26[%c0_425, %c3_426] : memref<10x256xbf16, #tpu.memory_space<vmem>>, vector<10x121xbf16>
    %cst_427 = arith.constant dense<0.000000e+00> : vector<6x121xf32>
    %387 = tpu.matmul %385, %386, %cst_427 {dimension_numbers = #tpu.dot_dimension_numbers<[1], [0], [0], [1], [0, 0, 1, 1], [], []>} : vector<6x10xbf16>, vector<10x121xbf16>, vector<6x121xf32> -> vector<6x121xf32>
    %388 = arith.addf %383, %387 : vector<6x121xf32>
    %c4_428 = arith.constant 4 : index
    %c0_429 = arith.constant 0 : index
    %c0_430 = arith.constant 0 : index
    %389 = vector.load %arg6[%c4_428, %c0_429, %c0_430] : memref<16x6x10xbf16, #tpu.memory_space<vmem>>, vector<1x6x10xbf16>
    %390 = vector.shape_cast %389 : vector<1x6x10xbf16> to vector<6x10xbf16>
    %c0_431 = arith.constant 0 : index
    %c11_432 = arith.constant 11 : index
    %391 = vector.load %arg26[%c0_431, %c11_432] : memref<10x256xbf16, #tpu.memory_space<vmem>>, vector<10x121xbf16>
    %cst_433 = arith.constant dense<0.000000e+00> : vector<6x121xf32>
    %392 = tpu.matmul %390, %391, %cst_433 {dimension_numbers = #tpu.dot_dimension_numbers<[1], [0], [0], [1], [0, 0, 1, 1], [], []>} : vector<6x10xbf16>, vector<10x121xbf16>, vector<6x121xf32> -> vector<6x121xf32>
    %393 = arith.addf %388, %392 : vector<6x121xf32>
    %c5_434 = arith.constant 5 : index
    %c0_435 = arith.constant 0 : index
    %c0_436 = arith.constant 0 : index
    %394 = vector.load %arg6[%c5_434, %c0_435, %c0_436] : memref<16x6x10xbf16, #tpu.memory_space<vmem>>, vector<1x6x10xbf16>
    %395 = vector.shape_cast %394 : vector<1x6x10xbf16> to vector<6x10xbf16>
    %c0_437 = arith.constant 0 : index
    %c12_438 = arith.constant 12 : index
    %396 = vector.load %arg26[%c0_437, %c12_438] : memref<10x256xbf16, #tpu.memory_space<vmem>>, vector<10x121xbf16>
    %cst_439 = arith.constant dense<0.000000e+00> : vector<6x121xf32>
    %397 = tpu.matmul %395, %396, %cst_439 {dimension_numbers = #tpu.dot_dimension_numbers<[1], [0], [0], [1], [0, 0, 1, 1], [], []>} : vector<6x10xbf16>, vector<10x121xbf16>, vector<6x121xf32> -> vector<6x121xf32>
    %398 = arith.addf %393, %397 : vector<6x121xf32>
    %c6_440 = arith.constant 6 : index
    %c0_441 = arith.constant 0 : index
    %c0_442 = arith.constant 0 : index
    %399 = vector.load %arg6[%c6_440, %c0_441, %c0_442] : memref<16x6x10xbf16, #tpu.memory_space<vmem>>, vector<1x6x10xbf16>
    %400 = vector.shape_cast %399 : vector<1x6x10xbf16> to vector<6x10xbf16>
    %c0_443 = arith.constant 0 : index
    %c13_444 = arith.constant 13 : index
    %401 = vector.load %arg26[%c0_443, %c13_444] : memref<10x256xbf16, #tpu.memory_space<vmem>>, vector<10x121xbf16>
    %cst_445 = arith.constant dense<0.000000e+00> : vector<6x121xf32>
    %402 = tpu.matmul %400, %401, %cst_445 {dimension_numbers = #tpu.dot_dimension_numbers<[1], [0], [0], [1], [0, 0, 1, 1], [], []>} : vector<6x10xbf16>, vector<10x121xbf16>, vector<6x121xf32> -> vector<6x121xf32>
    %403 = arith.addf %398, %402 : vector<6x121xf32>
    %c7_446 = arith.constant 7 : index
    %c0_447 = arith.constant 0 : index
    %c0_448 = arith.constant 0 : index
    %404 = vector.load %arg6[%c7_446, %c0_447, %c0_448] : memref<16x6x10xbf16, #tpu.memory_space<vmem>>, vector<1x6x10xbf16>
    %405 = vector.shape_cast %404 : vector<1x6x10xbf16> to vector<6x10xbf16>
    %c0_449 = arith.constant 0 : index
    %c14_450 = arith.constant 14 : index
    %406 = vector.load %arg26[%c0_449, %c14_450] : memref<10x256xbf16, #tpu.memory_space<vmem>>, vector<10x121xbf16>
    %cst_451 = arith.constant dense<0.000000e+00> : vector<6x121xf32>
    %407 = tpu.matmul %405, %406, %cst_451 {dimension_numbers = #tpu.dot_dimension_numbers<[1], [0], [0], [1], [0, 0, 1, 1], [], []>} : vector<6x10xbf16>, vector<10x121xbf16>, vector<6x121xf32> -> vector<6x121xf32>
    %408 = arith.addf %403, %407 : vector<6x121xf32>
    %c8_452 = arith.constant 8 : index
    %c0_453 = arith.constant 0 : index
    %c0_454 = arith.constant 0 : index
    %409 = vector.load %arg6[%c8_452, %c0_453, %c0_454] : memref<16x6x10xbf16, #tpu.memory_space<vmem>>, vector<1x6x10xbf16>
    %410 = vector.shape_cast %409 : vector<1x6x10xbf16> to vector<6x10xbf16>
    %c0_455 = arith.constant 0 : index
    %c22_456 = arith.constant 22 : index
    %411 = vector.load %arg26[%c0_455, %c22_456] : memref<10x256xbf16, #tpu.memory_space<vmem>>, vector<10x121xbf16>
    %cst_457 = arith.constant dense<0.000000e+00> : vector<6x121xf32>
    %412 = tpu.matmul %410, %411, %cst_457 {dimension_numbers = #tpu.dot_dimension_numbers<[1], [0], [0], [1], [0, 0, 1, 1], [], []>} : vector<6x10xbf16>, vector<10x121xbf16>, vector<6x121xf32> -> vector<6x121xf32>
    %413 = arith.addf %408, %412 : vector<6x121xf32>
    %c9_458 = arith.constant 9 : index
    %c0_459 = arith.constant 0 : index
    %c0_460 = arith.constant 0 : index
    %414 = vector.load %arg6[%c9_458, %c0_459, %c0_460] : memref<16x6x10xbf16, #tpu.memory_space<vmem>>, vector<1x6x10xbf16>
    %415 = vector.shape_cast %414 : vector<1x6x10xbf16> to vector<6x10xbf16>
    %c0_461 = arith.constant 0 : index
    %c23_462 = arith.constant 23 : index
    %416 = vector.load %arg26[%c0_461, %c23_462] : memref<10x256xbf16, #tpu.memory_space<vmem>>, vector<10x121xbf16>
    %cst_463 = arith.constant dense<0.000000e+00> : vector<6x121xf32>
    %417 = tpu.matmul %415, %416, %cst_463 {dimension_numbers = #tpu.dot_dimension_numbers<[1], [0], [0], [1], [0, 0, 1, 1], [], []>} : vector<6x10xbf16>, vector<10x121xbf16>, vector<6x121xf32> -> vector<6x121xf32>
    %418 = arith.addf %413, %417 : vector<6x121xf32>
    %c10_464 = arith.constant 10 : index
    %c0_465 = arith.constant 0 : index
    %c0_466 = arith.constant 0 : index
    %419 = vector.load %arg6[%c10_464, %c0_465, %c0_466] : memref<16x6x10xbf16, #tpu.memory_space<vmem>>, vector<1x6x10xbf16>
    %420 = vector.shape_cast %419 : vector<1x6x10xbf16> to vector<6x10xbf16>
    %c0_467 = arith.constant 0 : index
    %c24_468 = arith.constant 24 : index
    %421 = vector.load %arg26[%c0_467, %c24_468] : memref<10x256xbf16, #tpu.memory_space<vmem>>, vector<10x121xbf16>
    %cst_469 = arith.constant dense<0.000000e+00> : vector<6x121xf32>
    %422 = tpu.matmul %420, %421, %cst_469 {dimension_numbers = #tpu.dot_dimension_numbers<[1], [0], [0], [1], [0, 0, 1, 1], [], []>} : vector<6x10xbf16>, vector<10x121xbf16>, vector<6x121xf32> -> vector<6x121xf32>
    %423 = arith.addf %418, %422 : vector<6x121xf32>
    %c11_470 = arith.constant 11 : index
    %c0_471 = arith.constant 0 : index
    %c0_472 = arith.constant 0 : index
    %424 = vector.load %arg6[%c11_470, %c0_471, %c0_472] : memref<16x6x10xbf16, #tpu.memory_space<vmem>>, vector<1x6x10xbf16>
    %425 = vector.shape_cast %424 : vector<1x6x10xbf16> to vector<6x10xbf16>
    %c0_473 = arith.constant 0 : index
    %c25 = arith.constant 25 : index
    %426 = vector.load %arg26[%c0_473, %c25] : memref<10x256xbf16, #tpu.memory_space<vmem>>, vector<10x121xbf16>
    %cst_474 = arith.constant dense<0.000000e+00> : vector<6x121xf32>
    %427 = tpu.matmul %425, %426, %cst_474 {dimension_numbers = #tpu.dot_dimension_numbers<[1], [0], [0], [1], [0, 0, 1, 1], [], []>} : vector<6x10xbf16>, vector<10x121xbf16>, vector<6x121xf32> -> vector<6x121xf32>
    %428 = arith.addf %423, %427 : vector<6x121xf32>
    %c12_475 = arith.constant 12 : index
    %c0_476 = arith.constant 0 : index
    %c0_477 = arith.constant 0 : index
    %429 = vector.load %arg6[%c12_475, %c0_476, %c0_477] : memref<16x6x10xbf16, #tpu.memory_space<vmem>>, vector<1x6x10xbf16>
    %430 = vector.shape_cast %429 : vector<1x6x10xbf16> to vector<6x10xbf16>
    %c0_478 = arith.constant 0 : index
    %c33_479 = arith.constant 33 : index
    %431 = vector.load %arg26[%c0_478, %c33_479] : memref<10x256xbf16, #tpu.memory_space<vmem>>, vector<10x121xbf16>
    %cst_480 = arith.constant dense<0.000000e+00> : vector<6x121xf32>
    %432 = tpu.matmul %430, %431, %cst_480 {dimension_numbers = #tpu.dot_dimension_numbers<[1], [0], [0], [1], [0, 0, 1, 1], [], []>} : vector<6x10xbf16>, vector<10x121xbf16>, vector<6x121xf32> -> vector<6x121xf32>
    %433 = arith.addf %428, %432 : vector<6x121xf32>
    %c13_481 = arith.constant 13 : index
    %c0_482 = arith.constant 0 : index
    %c0_483 = arith.constant 0 : index
    %434 = vector.load %arg6[%c13_481, %c0_482, %c0_483] : memref<16x6x10xbf16, #tpu.memory_space<vmem>>, vector<1x6x10xbf16>
    %435 = vector.shape_cast %434 : vector<1x6x10xbf16> to vector<6x10xbf16>
    %c0_484 = arith.constant 0 : index
    %c34 = arith.constant 34 : index
    %436 = vector.load %arg26[%c0_484, %c34] : memref<10x256xbf16, #tpu.memory_space<vmem>>, vector<10x121xbf16>
    %cst_485 = arith.constant dense<0.000000e+00> : vector<6x121xf32>
    %437 = tpu.matmul %435, %436, %cst_485 {dimension_numbers = #tpu.dot_dimension_numbers<[1], [0], [0], [1], [0, 0, 1, 1], [], []>} : vector<6x10xbf16>, vector<10x121xbf16>, vector<6x121xf32> -> vector<6x121xf32>
    %438 = arith.addf %433, %437 : vector<6x121xf32>
    %c14_486 = arith.constant 14 : index
    %c0_487 = arith.constant 0 : index
    %c0_488 = arith.constant 0 : index
    %439 = vector.load %arg6[%c14_486, %c0_487, %c0_488] : memref<16x6x10xbf16, #tpu.memory_space<vmem>>, vector<1x6x10xbf16>
    %440 = vector.shape_cast %439 : vector<1x6x10xbf16> to vector<6x10xbf16>
    %c0_489 = arith.constant 0 : index
    %c35 = arith.constant 35 : index
    %441 = vector.load %arg26[%c0_489, %c35] : memref<10x256xbf16, #tpu.memory_space<vmem>>, vector<10x121xbf16>
    %cst_490 = arith.constant dense<0.000000e+00> : vector<6x121xf32>
    %442 = tpu.matmul %440, %441, %cst_490 {dimension_numbers = #tpu.dot_dimension_numbers<[1], [0], [0], [1], [0, 0, 1, 1], [], []>} : vector<6x10xbf16>, vector<10x121xbf16>, vector<6x121xf32> -> vector<6x121xf32>
    %443 = arith.addf %438, %442 : vector<6x121xf32>
    %c15_491 = arith.constant 15 : index
    %c0_492 = arith.constant 0 : index
    %c0_493 = arith.constant 0 : index
    %444 = vector.load %arg6[%c15_491, %c0_492, %c0_493] : memref<16x6x10xbf16, #tpu.memory_space<vmem>>, vector<1x6x10xbf16>
    %445 = vector.shape_cast %444 : vector<1x6x10xbf16> to vector<6x10xbf16>
    %c0_494 = arith.constant 0 : index
    %c36_495 = arith.constant 36 : index
    %446 = vector.load %arg26[%c0_494, %c36_495] : memref<10x256xbf16, #tpu.memory_space<vmem>>, vector<10x121xbf16>
    %cst_496 = arith.constant dense<0.000000e+00> : vector<6x121xf32>
    %447 = tpu.matmul %445, %446, %cst_496 {dimension_numbers = #tpu.dot_dimension_numbers<[1], [0], [0], [1], [0, 0, 1, 1], [], []>} : vector<6x10xbf16>, vector<10x121xbf16>, vector<6x121xf32> -> vector<6x121xf32>
    %448 = arith.addf %443, %447 : vector<6x121xf32>
    %c0_497 = arith.constant 0 : index
    %c0_498 = arith.constant 0 : index
    %449 = vector.load %arg12[%c0_497, %c0_498] : memref<6x1xf32, #tpu.memory_space<vmem>>, vector<6x1xf32>
    %450 = vector.broadcast %449 : vector<6x1xf32> to vector<6x121xf32>
    %451 = arith.addf %448, %450 : vector<6x121xf32>
    %c0_499 = arith.constant 0 : index
    %c0_500 = arith.constant 0 : index
    %452 = vector.load %arg19[%c0_499, %c0_500] : memref<121x361xf32, #tpu.memory_space<vmem>>, vector<121x361xf32>
    %cst_501 = arith.constant 0.000000e+00 : f32
    %453 = vector.broadcast %cst_501 : f32 to vector<6x121xf32>
    %454 = arith.maximumf %451, %453 : vector<6x121xf32>
    %cst_502 = arith.constant dense<0.000000e+00> : vector<6x361xf32>
    %455 = tpu.matmul %454, %452, %cst_502 {dimension_numbers = #tpu.dot_dimension_numbers<[1], [0], [0], [1], [0, 0, 1, 1], [], []>} : vector<6x121xf32>, vector<121x361xf32>, vector<6x361xf32> -> vector<6x361xf32>
    %456 = arith.truncf %455 : vector<6x361xf32> to vector<6x361xbf16>
    %c0_503 = arith.constant 0 : index
    %c0_504 = arith.constant 0 : index
    %457 = vector.load %arg27[%c0_503, %c0_504] : memref<6x512xbf16, #tpu.memory_space<vmem>>, vector<6x361xbf16>
    tpu.vector_store %arg27[%c0_503, %c0_504], %456 {strides = array<i32>} : memref<6x512xbf16, #tpu.memory_space<vmem>>, vector<6x361xbf16>,
    %c0_505 = arith.constant 0 : index
    %c0_506 = arith.constant 0 : index
    %c0_507 = arith.constant 0 : index
    %458 = vector.load %arg7[%c0_505, %c0_506, %c0_507] : memref<16x2x6xbf16, #tpu.memory_space<vmem>>, vector<1x2x6xbf16>
    %459 = vector.shape_cast %458 : vector<1x2x6xbf16> to vector<2x6xbf16>
    %c0_508 = arith.constant 0 : index
    %c0_509 = arith.constant 0 : index
    %460 = vector.load %arg27[%c0_508, %c0_509] : memref<6x512xbf16, #tpu.memory_space<vmem>>, vector<6x361xbf16>
    %cst_510 = arith.constant dense<0.000000e+00> : vector<2x361xf32>
    %461 = tpu.matmul %459, %460, %cst_510 {dimension_numbers = #tpu.dot_dimension_numbers<[1], [0], [0], [1], [0, 0, 1, 1], [], []>} : vector<2x6xbf16>, vector<6x361xbf16>, vector<2x361xf32> -> vector<2x361xf32>
    %c1_511 = arith.constant 1 : index
    %c0_512 = arith.constant 0 : index
    %c0_513 = arith.constant 0 : index
    %462 = vector.load %arg7[%c1_511, %c0_512, %c0_513] : memref<16x2x6xbf16, #tpu.memory_space<vmem>>, vector<1x2x6xbf16>
    %463 = vector.shape_cast %462 : vector<1x2x6xbf16> to vector<2x6xbf16>
    %c0_514 = arith.constant 0 : index
    %c1_515 = arith.constant 1 : index
    %464 = vector.load %arg27[%c0_514, %c1_515] : memref<6x512xbf16, #tpu.memory_space<vmem>>, vector<6x361xbf16>
    %cst_516 = arith.constant dense<0.000000e+00> : vector<2x361xf32>
    %465 = tpu.matmul %463, %464, %cst_516 {dimension_numbers = #tpu.dot_dimension_numbers<[1], [0], [0], [1], [0, 0, 1, 1], [], []>} : vector<2x6xbf16>, vector<6x361xbf16>, vector<2x361xf32> -> vector<2x361xf32>
    %466 = arith.addf %461, %465 : vector<2x361xf32>
    %c2_517 = arith.constant 2 : index
    %c0_518 = arith.constant 0 : index
    %c0_519 = arith.constant 0 : index
    %467 = vector.load %arg7[%c2_517, %c0_518, %c0_519] : memref<16x2x6xbf16, #tpu.memory_space<vmem>>, vector<1x2x6xbf16>
    %468 = vector.shape_cast %467 : vector<1x2x6xbf16> to vector<2x6xbf16>
    %c0_520 = arith.constant 0 : index
    %c2_521 = arith.constant 2 : index
    %469 = vector.load %arg27[%c0_520, %c2_521] : memref<6x512xbf16, #tpu.memory_space<vmem>>, vector<6x361xbf16>
    %cst_522 = arith.constant dense<0.000000e+00> : vector<2x361xf32>
    %470 = tpu.matmul %468, %469, %cst_522 {dimension_numbers = #tpu.dot_dimension_numbers<[1], [0], [0], [1], [0, 0, 1, 1], [], []>} : vector<2x6xbf16>, vector<6x361xbf16>, vector<2x361xf32> -> vector<2x361xf32>
    %471 = arith.addf %466, %470 : vector<2x361xf32>
    %c3_523 = arith.constant 3 : index
    %c0_524 = arith.constant 0 : index
    %c0_525 = arith.constant 0 : index
    %472 = vector.load %arg7[%c3_523, %c0_524, %c0_525] : memref<16x2x6xbf16, #tpu.memory_space<vmem>>, vector<1x2x6xbf16>
    %473 = vector.shape_cast %472 : vector<1x2x6xbf16> to vector<2x6xbf16>
    %c0_526 = arith.constant 0 : index
    %c3_527 = arith.constant 3 : index
    %474 = vector.load %arg27[%c0_526, %c3_527] : memref<6x512xbf16, #tpu.memory_space<vmem>>, vector<6x361xbf16>
    %cst_528 = arith.constant dense<0.000000e+00> : vector<2x361xf32>
    %475 = tpu.matmul %473, %474, %cst_528 {dimension_numbers = #tpu.dot_dimension_numbers<[1], [0], [0], [1], [0, 0, 1, 1], [], []>} : vector<2x6xbf16>, vector<6x361xbf16>, vector<2x361xf32> -> vector<2x361xf32>
    %476 = arith.addf %471, %475 : vector<2x361xf32>
    %c4_529 = arith.constant 4 : index
    %c0_530 = arith.constant 0 : index
    %c0_531 = arith.constant 0 : index
    %477 = vector.load %arg7[%c4_529, %c0_530, %c0_531] : memref<16x2x6xbf16, #tpu.memory_space<vmem>>, vector<1x2x6xbf16>
    %478 = vector.shape_cast %477 : vector<1x2x6xbf16> to vector<2x6xbf16>
    %c0_532 = arith.constant 0 : index
    %c19_533 = arith.constant 19 : index
    %479 = vector.load %arg27[%c0_532, %c19_533] : memref<6x512xbf16, #tpu.memory_space<vmem>>, vector<6x361xbf16>
    %cst_534 = arith.constant dense<0.000000e+00> : vector<2x361xf32>
    %480 = tpu.matmul %478, %479, %cst_534 {dimension_numbers = #tpu.dot_dimension_numbers<[1], [0], [0], [1], [0, 0, 1, 1], [], []>} : vector<2x6xbf16>, vector<6x361xbf16>, vector<2x361xf32> -> vector<2x361xf32>
    %481 = arith.addf %476, %480 : vector<2x361xf32>
    %c5_535 = arith.constant 5 : index
    %c0_536 = arith.constant 0 : index
    %c0_537 = arith.constant 0 : index
    %482 = vector.load %arg7[%c5_535, %c0_536, %c0_537] : memref<16x2x6xbf16, #tpu.memory_space<vmem>>, vector<1x2x6xbf16>
    %483 = vector.shape_cast %482 : vector<1x2x6xbf16> to vector<2x6xbf16>
    %c0_538 = arith.constant 0 : index
    %c20_539 = arith.constant 20 : index
    %484 = vector.load %arg27[%c0_538, %c20_539] : memref<6x512xbf16, #tpu.memory_space<vmem>>, vector<6x361xbf16>
    %cst_540 = arith.constant dense<0.000000e+00> : vector<2x361xf32>
    %485 = tpu.matmul %483, %484, %cst_540 {dimension_numbers = #tpu.dot_dimension_numbers<[1], [0], [0], [1], [0, 0, 1, 1], [], []>} : vector<2x6xbf16>, vector<6x361xbf16>, vector<2x361xf32> -> vector<2x361xf32>
    %486 = arith.addf %481, %485 : vector<2x361xf32>
    %c6_541 = arith.constant 6 : index
    %c0_542 = arith.constant 0 : index
    %c0_543 = arith.constant 0 : index
    %487 = vector.load %arg7[%c6_541, %c0_542, %c0_543] : memref<16x2x6xbf16, #tpu.memory_space<vmem>>, vector<1x2x6xbf16>
    %488 = vector.shape_cast %487 : vector<1x2x6xbf16> to vector<2x6xbf16>
    %c0_544 = arith.constant 0 : index
    %c21_545 = arith.constant 21 : index
    %489 = vector.load %arg27[%c0_544, %c21_545] : memref<6x512xbf16, #tpu.memory_space<vmem>>, vector<6x361xbf16>
    %cst_546 = arith.constant dense<0.000000e+00> : vector<2x361xf32>
    %490 = tpu.matmul %488, %489, %cst_546 {dimension_numbers = #tpu.dot_dimension_numbers<[1], [0], [0], [1], [0, 0, 1, 1], [], []>} : vector<2x6xbf16>, vector<6x361xbf16>, vector<2x361xf32> -> vector<2x361xf32>
    %491 = arith.addf %486, %490 : vector<2x361xf32>
    %c7_547 = arith.constant 7 : index
    %c0_548 = arith.constant 0 : index
    %c0_549 = arith.constant 0 : index
    %492 = vector.load %arg7[%c7_547, %c0_548, %c0_549] : memref<16x2x6xbf16, #tpu.memory_space<vmem>>, vector<1x2x6xbf16>
    %493 = vector.shape_cast %492 : vector<1x2x6xbf16> to vector<2x6xbf16>
    %c0_550 = arith.constant 0 : index
    %c22_551 = arith.constant 22 : index
    %494 = vector.load %arg27[%c0_550, %c22_551] : memref<6x512xbf16, #tpu.memory_space<vmem>>, vector<6x361xbf16>
    %cst_552 = arith.constant dense<0.000000e+00> : vector<2x361xf32>
    %495 = tpu.matmul %493, %494, %cst_552 {dimension_numbers = #tpu.dot_dimension_numbers<[1], [0], [0], [1], [0, 0, 1, 1], [], []>} : vector<2x6xbf16>, vector<6x361xbf16>, vector<2x361xf32> -> vector<2x361xf32>
    %496 = arith.addf %491, %495 : vector<2x361xf32>
    %c8_553 = arith.constant 8 : index
    %c0_554 = arith.constant 0 : index
    %c0_555 = arith.constant 0 : index
    %497 = vector.load %arg7[%c8_553, %c0_554, %c0_555] : memref<16x2x6xbf16, #tpu.memory_space<vmem>>, vector<1x2x6xbf16>
    %498 = vector.shape_cast %497 : vector<1x2x6xbf16> to vector<2x6xbf16>
    %c0_556 = arith.constant 0 : index
    %c38_557 = arith.constant 38 : index
    %499 = vector.load %arg27[%c0_556, %c38_557] : memref<6x512xbf16, #tpu.memory_space<vmem>>, vector<6x361xbf16>
    %cst_558 = arith.constant dense<0.000000e+00> : vector<2x361xf32>
    %500 = tpu.matmul %498, %499, %cst_558 {dimension_numbers = #tpu.dot_dimension_numbers<[1], [0], [0], [1], [0, 0, 1, 1], [], []>} : vector<2x6xbf16>, vector<6x361xbf16>, vector<2x361xf32> -> vector<2x361xf32>
    %501 = arith.addf %496, %500 : vector<2x361xf32>
    %c9_559 = arith.constant 9 : index
    %c0_560 = arith.constant 0 : index
    %c0_561 = arith.constant 0 : index
    %502 = vector.load %arg7[%c9_559, %c0_560, %c0_561] : memref<16x2x6xbf16, #tpu.memory_space<vmem>>, vector<1x2x6xbf16>
    %503 = vector.shape_cast %502 : vector<1x2x6xbf16> to vector<2x6xbf16>
    %c0_562 = arith.constant 0 : index
    %c39_563 = arith.constant 39 : index
    %504 = vector.load %arg27[%c0_562, %c39_563] : memref<6x512xbf16, #tpu.memory_space<vmem>>, vector<6x361xbf16>
    %cst_564 = arith.constant dense<0.000000e+00> : vector<2x361xf32>
    %505 = tpu.matmul %503, %504, %cst_564 {dimension_numbers = #tpu.dot_dimension_numbers<[1], [0], [0], [1], [0, 0, 1, 1], [], []>} : vector<2x6xbf16>, vector<6x361xbf16>, vector<2x361xf32> -> vector<2x361xf32>
    %506 = arith.addf %501, %505 : vector<2x361xf32>
    %c10_565 = arith.constant 10 : index
    %c0_566 = arith.constant 0 : index
    %c0_567 = arith.constant 0 : index
    %507 = vector.load %arg7[%c10_565, %c0_566, %c0_567] : memref<16x2x6xbf16, #tpu.memory_space<vmem>>, vector<1x2x6xbf16>
    %508 = vector.shape_cast %507 : vector<1x2x6xbf16> to vector<2x6xbf16>
    %c0_568 = arith.constant 0 : index
    %c40 = arith.constant 40 : index
    %509 = vector.load %arg27[%c0_568, %c40] : memref<6x512xbf16, #tpu.memory_space<vmem>>, vector<6x361xbf16>
    %cst_569 = arith.constant dense<0.000000e+00> : vector<2x361xf32>
    %510 = tpu.matmul %508, %509, %cst_569 {dimension_numbers = #tpu.dot_dimension_numbers<[1], [0], [0], [1], [0, 0, 1, 1], [], []>} : vector<2x6xbf16>, vector<6x361xbf16>, vector<2x361xf32> -> vector<2x361xf32>
    %511 = arith.addf %506, %510 : vector<2x361xf32>
    %c11_570 = arith.constant 11 : index
    %c0_571 = arith.constant 0 : index
    %c0_572 = arith.constant 0 : index
    %512 = vector.load %arg7[%c11_570, %c0_571, %c0_572] : memref<16x2x6xbf16, #tpu.memory_space<vmem>>, vector<1x2x6xbf16>
    %513 = vector.shape_cast %512 : vector<1x2x6xbf16> to vector<2x6xbf16>
    %c0_573 = arith.constant 0 : index
    %c41 = arith.constant 41 : index
    %514 = vector.load %arg27[%c0_573, %c41] : memref<6x512xbf16, #tpu.memory_space<vmem>>, vector<6x361xbf16>
    %cst_574 = arith.constant dense<0.000000e+00> : vector<2x361xf32>
    %515 = tpu.matmul %513, %514, %cst_574 {dimension_numbers = #tpu.dot_dimension_numbers<[1], [0], [0], [1], [0, 0, 1, 1], [], []>} : vector<2x6xbf16>, vector<6x361xbf16>, vector<2x361xf32> -> vector<2x361xf32>
    %516 = arith.addf %511, %515 : vector<2x361xf32>
    %c12_575 = arith.constant 12 : index
    %c0_576 = arith.constant 0 : index
    %c0_577 = arith.constant 0 : index
    %517 = vector.load %arg7[%c12_575, %c0_576, %c0_577] : memref<16x2x6xbf16, #tpu.memory_space<vmem>>, vector<1x2x6xbf16>
    %518 = vector.shape_cast %517 : vector<1x2x6xbf16> to vector<2x6xbf16>
    %c0_578 = arith.constant 0 : index
    %c57_579 = arith.constant 57 : index
    %519 = vector.load %arg27[%c0_578, %c57_579] : memref<6x512xbf16, #tpu.memory_space<vmem>>, vector<6x361xbf16>
    %cst_580 = arith.constant dense<0.000000e+00> : vector<2x361xf32>
    %520 = tpu.matmul %518, %519, %cst_580 {dimension_numbers = #tpu.dot_dimension_numbers<[1], [0], [0], [1], [0, 0, 1, 1], [], []>} : vector<2x6xbf16>, vector<6x361xbf16>, vector<2x361xf32> -> vector<2x361xf32>
    %521 = arith.addf %516, %520 : vector<2x361xf32>
    %c13_581 = arith.constant 13 : index
    %c0_582 = arith.constant 0 : index
    %c0_583 = arith.constant 0 : index
    %522 = vector.load %arg7[%c13_581, %c0_582, %c0_583] : memref<16x2x6xbf16, #tpu.memory_space<vmem>>, vector<1x2x6xbf16>
    %523 = vector.shape_cast %522 : vector<1x2x6xbf16> to vector<2x6xbf16>
    %c0_584 = arith.constant 0 : index
    %c58 = arith.constant 58 : index
    %524 = vector.load %arg27[%c0_584, %c58] : memref<6x512xbf16, #tpu.memory_space<vmem>>, vector<6x361xbf16>
    %cst_585 = arith.constant dense<0.000000e+00> : vector<2x361xf32>
    %525 = tpu.matmul %523, %524, %cst_585 {dimension_numbers = #tpu.dot_dimension_numbers<[1], [0], [0], [1], [0, 0, 1, 1], [], []>} : vector<2x6xbf16>, vector<6x361xbf16>, vector<2x361xf32> -> vector<2x361xf32>
    %526 = arith.addf %521, %525 : vector<2x361xf32>
    %c14_586 = arith.constant 14 : index
    %c0_587 = arith.constant 0 : index
    %c0_588 = arith.constant 0 : index
    %527 = vector.load %arg7[%c14_586, %c0_587, %c0_588] : memref<16x2x6xbf16, #tpu.memory_space<vmem>>, vector<1x2x6xbf16>
    %528 = vector.shape_cast %527 : vector<1x2x6xbf16> to vector<2x6xbf16>
    %c0_589 = arith.constant 0 : index
    %c59 = arith.constant 59 : index
    %529 = vector.load %arg27[%c0_589, %c59] : memref<6x512xbf16, #tpu.memory_space<vmem>>, vector<6x361xbf16>
    %cst_590 = arith.constant dense<0.000000e+00> : vector<2x361xf32>
    %530 = tpu.matmul %528, %529, %cst_590 {dimension_numbers = #tpu.dot_dimension_numbers<[1], [0], [0], [1], [0, 0, 1, 1], [], []>} : vector<2x6xbf16>, vector<6x361xbf16>, vector<2x361xf32> -> vector<2x361xf32>
    %531 = arith.addf %526, %530 : vector<2x361xf32>
    %c15_591 = arith.constant 15 : index
    %c0_592 = arith.constant 0 : index
    %c0_593 = arith.constant 0 : index
    %532 = vector.load %arg7[%c15_591, %c0_592, %c0_593] : memref<16x2x6xbf16, #tpu.memory_space<vmem>>, vector<1x2x6xbf16>
    %533 = vector.shape_cast %532 : vector<1x2x6xbf16> to vector<2x6xbf16>
    %c0_594 = arith.constant 0 : index
    %c60 = arith.constant 60 : index
    %534 = vector.load %arg27[%c0_594, %c60] : memref<6x512xbf16, #tpu.memory_space<vmem>>, vector<6x361xbf16>
    %cst_595 = arith.constant dense<0.000000e+00> : vector<2x361xf32>
    %535 = tpu.matmul %533, %534, %cst_595 {dimension_numbers = #tpu.dot_dimension_numbers<[1], [0], [0], [1], [0, 0, 1, 1], [], []>} : vector<2x6xbf16>, vector<6x361xbf16>, vector<2x361xf32> -> vector<2x361xf32>
    %536 = arith.addf %531, %535 : vector<2x361xf32>
    %c0_596 = arith.constant 0 : index
    %c0_597 = arith.constant 0 : index
    %537 = vector.load %arg13[%c0_596, %c0_597] : memref<2x1xf32, #tpu.memory_space<vmem>>, vector<2x1xf32>
    %538 = vector.broadcast %537 : vector<2x1xf32> to vector<2x361xf32>
    %539 = arith.addf %536, %538 : vector<2x361xf32>
    %c0_598 = arith.constant 0 : index
    %c0_599 = arith.constant 0 : index
    %540 = vector.load %arg20[%c0_598, %c0_599] : memref<361x256xf32, #tpu.memory_space<vmem>>, vector<361x256xf32>
    %cst_600 = arith.constant dense<0.000000e+00> : vector<2x256xf32>
    %541 = tpu.matmul %539, %540, %cst_600 {dimension_numbers = #tpu.dot_dimension_numbers<[1], [0], [0], [1], [0, 0, 1, 1], [], []>} : vector<2x361xf32>, vector<361x256xf32>, vector<2x256xf32> -> vector<2x256xf32>
    %c0_601 = arith.constant 0 : index
    %c0_602 = arith.constant 0 : index
    %c0_603 = arith.constant 0 : index
    %542 = vector.load %arg21[%c0_601, %c0_602, %c0_603] : memref<1x2x256xf32, #tpu.memory_space<vmem>>, vector<1x2x256xf32>
    %543 = vector.shape_cast %542 : vector<1x2x256xf32> to vector<2x256xf32>
    %544 = vector.shape_cast %541 : vector<2x256xf32> to vector<1x2x256xf32>
    tpu.vector_store %arg21[%c0_601, %c0_602, %c0_603], %544 {strides = array<i32>} : memref<1x2x256xf32, #tpu.memory_space<vmem>>, vector<1x2x256xf32>,
    return
  }
  func.func @transform_0(%arg0: i32) -> (i32, i32, i32) {
    %c0_i32 = arith.constant 0 : i32
    %c0_i32_0 = arith.constant 0 : i32
    %c0_i32_1 = arith.constant 0 : i32
    return %arg0, %c0_i32, %c0_i32_0 : i32, i32, i32
  }
  func.func @transform_1(%arg0: i32) -> (i32, i32, i32) {
    %c0_i32 = arith.constant 0 : i32
    %c0_i32_0 = arith.constant 0 : i32
    %c0_i32_1 = arith.constant 0 : i32
    %c0_i32_2 = arith.constant 0 : i32
    return %c0_i32, %c0_i32_0, %c0_i32_1 : i32, i32, i32
  }
  func.func @transform_2(%arg0: i32) -> (i32, i32, i32) {
    %c0_i32 = arith.constant 0 : i32
    %c0_i32_0 = arith.constant 0 : i32
    %c0_i32_1 = arith.constant 0 : i32
    %c0_i32_2 = arith.constant 0 : i32
    return %c0_i32, %c0_i32_0, %c0_i32_1 : i32, i32, i32
  }
  func.func @transform_3(%arg0: i32) -> (i32, i32, i32) {
    %c0_i32 = arith.constant 0 : i32
    %c0_i32_0 = arith.constant 0 : i32
    %c0_i32_1 = arith.constant 0 : i32
    %c0_i32_2 = arith.constant 0 : i32
    return %c0_i32, %c0_i32_0, %c0_i32_1 : i32, i32, i32
  }
  func.func @transform_4(%arg0: i32) -> (i32, i32, i32) {
    %c0_i32 = arith.constant 0 : i32
    %c0_i32_0 = arith.constant 0 : i32
    %c0_i32_1 = arith.constant 0 : i32
    %c0_i32_2 = arith.constant 0 : i32
    return %c0_i32, %c0_i32_0, %c0_i32_1 : i32, i32, i32
  }
  func.func @transform_5(%arg0: i32) -> (i32, i32, i32) {
    %c0_i32 = arith.constant 0 : i32
    %c0_i32_0 = arith.constant 0 : i32
    %c0_i32_1 = arith.constant 0 : i32
    %c0_i32_2 = arith.constant 0 : i32
    return %c0_i32, %c0_i32_0, %c0_i32_1 : i32, i32, i32
  }
  func.func @transform_6(%arg0: i32) -> (i32, i32, i32) {
    %c0_i32 = arith.constant 0 : i32
    %c0_i32_0 = arith.constant 0 : i32
    %c0_i32_1 = arith.constant 0 : i32
    %c0_i32_2 = arith.constant 0 : i32
    return %c0_i32, %c0_i32_0, %c0_i32_1 : i32, i32, i32
  }
  func.func @transform_7(%arg0: i32) -> (i32, i32) {
    %c0_i32 = arith.constant 0 : i32
    %c0_i32_0 = arith.constant 0 : i32
    %c0_i32_1 = arith.constant 0 : i32
    return %c0_i32, %c0_i32_0 : i32, i32
  }
  func.func @transform_8(%arg0: i32) -> (i32, i32) {
    %c0_i32 = arith.constant 0 : i32
    %c0_i32_0 = arith.constant 0 : i32
    %c0_i32_1 = arith.constant 0 : i32
    return %c0_i32, %c0_i32_0 : i32, i32
  }
  func.func @transform_9(%arg0: i32) -> (i32, i32) {
    %c0_i32 = arith.constant 0 : i32
    %c0_i32_0 = arith.constant 0 : i32
    %c0_i32_1 = arith.constant 0 : i32
    return %c0_i32, %c0_i32_0 : i32, i32
  }
  func.func @transform_10(%arg0: i32) -> (i32, i32) {
    %c0_i32 = arith.constant 0 : i32
    %c0_i32_0 = arith.constant 0 : i32
    %c0_i32_1 = arith.constant 0 : i32
    return %c0_i32, %c0_i32_0 : i32, i32
  }
  func.func @transform_11(%arg0: i32) -> (i32, i32) {
    %c0_i32 = arith.constant 0 : i32
    %c0_i32_0 = arith.constant 0 : i32
    %c0_i32_1 = arith.constant 0 : i32
    return %c0_i32, %c0_i32_0 : i32, i32
  }
  func.func @transform_12(%arg0: i32) -> (i32, i32) {
    %c0_i32 = arith.constant 0 : i32
    %c0_i32_0 = arith.constant 0 : i32
    %c0_i32_1 = arith.constant 0 : i32
    return %c0_i32, %c0_i32_0 : i32, i32
  }
  func.func @transform_13(%arg0: i32) -> (i32, i32) {
    %c0_i32 = arith.constant 0 : i32
    %c0_i32_0 = arith.constant 0 : i32
    %c0_i32_1 = arith.constant 0 : i32
    return %c0_i32, %c0_i32_0 : i32, i32
  }
  func.func @transform_14(%arg0: i32) -> (i32, i32) {
    %c0_i32 = arith.constant 0 : i32
    %c0_i32_0 = arith.constant 0 : i32
    %c0_i32_1 = arith.constant 0 : i32
    return %c0_i32, %c0_i32_0 : i32, i32
  }
  func.func @transform_15(%arg0: i32) -> (i32, i32) {
    %c0_i32 = arith.constant 0 : i32
    %c0_i32_0 = arith.constant 0 : i32
    %c0_i32_1 = arith.constant 0 : i32
    return %c0_i32, %c0_i32_0 : i32, i32
  }
  func.func @transform_16(%arg0: i32) -> (i32, i32) {
    %c0_i32 = arith.constant 0 : i32
    %c0_i32_0 = arith.constant 0 : i32
    %c0_i32_1 = arith.constant 0 : i32
    return %c0_i32, %c0_i32_0 : i32, i32
  }
  func.func @transform_17(%arg0: i32) -> (i32, i32) {
    %c0_i32 = arith.constant 0 : i32
    %c0_i32_0 = arith.constant 0 : i32
    %c0_i32_1 = arith.constant 0 : i32
    return %c0_i32, %c0_i32_0 : i32, i32
  }
  func.func @transform_18(%arg0: i32) -> (i32, i32) {
    %c0_i32 = arith.constant 0 : i32
    %c0_i32_0 = arith.constant 0 : i32
    %c0_i32_1 = arith.constant 0 : i32
    return %c0_i32, %c0_i32_0 : i32, i32
  }
  func.func @transform_19(%arg0: i32) -> (i32, i32) {
    %c0_i32 = arith.constant 0 : i32
    %c0_i32_0 = arith.constant 0 : i32
    %c0_i32_1 = arith.constant 0 : i32
    return %c0_i32, %c0_i32_0 : i32, i32
  }
  func.func @transform_20(%arg0: i32) -> (i32, i32, i32) {
    %c0_i32 = arith.constant 0 : i32
    %c0_i32_0 = arith.constant 0 : i32
    %c0_i32_1 = arith.constant 0 : i32
    return %arg0, %c0_i32, %c0_i32_0 : i32, i32, i32
  }
}

</mosaic_0001>

<llo_original>
// kernel: aut_enc_d_forward.1
$region0: #{aut_enc_d_forward.1}
  #allocation0 [shape = 'u32[]', space=smem, size = 0x4, offset = 0x4, fixed_abs, tag = 'smem constant byte address 0x4 - core index']
  #allocation1 [shape = 'u32[72,128]{1,0:T(1,128)}', space=vmem, size = 0x9000, scoped, tag = 'internal scratch']
  #allocation2 [shape = 'bf16[3,384]{1,0:T(4,128)(2,1)}', space=vmem, size = 0xc00, scoped, tag = 'scratch operand']
  #allocation3 [shape = 'bf16[6,256]{1,0:T(8,128)(2,1)}', space=vmem, size = 0x1000, scoped, tag = 'scratch operand']
  #allocation4 [shape = 'bf16[10,128]{1,0:T(8,128)(2,1)}', space=vmem, size = 0x1000, scoped, tag = 'scratch operand']
  #allocation5 [shape = 'bf16[15,128]{1,0:T(8,128)(2,1)}', space=vmem, size = 0x1000, scoped, tag = 'scratch operand']
  #allocation6 [shape = 'bf16[10,256]{1,0:T(8,128)(2,1)}', space=vmem, size = 0x2000, scoped, tag = 'scratch operand']
  #allocation7 [shape = 'bf16[6,512]{1,0:T(8,128)(2,1)}', space=vmem, size = 0x2000, scoped, tag = 'scratch operand']
  %s0 = inlined_call_operand.vmem [shape: bf16[2,3,256], index: 0, kind: input, shape index: {}]
  %s1 = inlined_call_operand.vmem [shape: bf16[16,6,3], index: 1, kind: input, shape index: {}]
  %s2 = inlined_call_operand.vmem [shape: bf16[16,10,6], index: 2, kind: input, shape index: {}]
  %s3 = inlined_call_operand.vmem [shape: bf16[16,15,10], index: 3, kind: input, shape index: {}]
  %s4 = inlined_call_operand.vmem [shape: bf16[16,10,15], index: 4, kind: input, shape index: {}]
  %s5 = inlined_call_operand.vmem [shape: bf16[16,6,10], index: 5, kind: input, shape index: {}]
  %s6 = inlined_call_operand.vmem [shape: bf16[16,2,6], index: 6, kind: input, shape index: {}]
  %s7 = inlined_call_operand.vmem [shape: f32[6,1], index: 7, kind: input, shape index: {}]
  %s8 = inlined_call_operand.vmem [shape: f32[10,1], index: 8, kind: input, shape index: {}]
  %s9 = inlined_call_operand.vmem [shape: f32[15,1], index: 9, kind: input, shape index: {}]
  %s10 = inlined_call_operand.vmem [shape: f32[10,1], index: 10, kind: input, shape index: {}]
  %s11 = inlined_call_operand.vmem [shape: f32[6,1], index: 11, kind: input, shape index: {}]
  %s12 = inlined_call_operand.vmem [shape: f32[2,1], index: 12, kind: input, shape index: {}]
  %s13 = inlined_call_operand.hbm [shape: bf16[256,324], index: 13, kind: input, shape index: {}]
  %s14 = inlined_call_operand.hbm [shape: f32[324,100], index: 14, kind: input, shape index: {}]
  %s15 = inlined_call_operand.vmem [shape: f32[100,36], index: 15, kind: input, shape index: {}]
  %s16 = inlined_call_operand.vmem [shape: f32[36,49], index: 16, kind: input, shape index: {}]
  %s17 = inlined_call_operand.vmem [shape: f32[49,121], index: 17, kind: input, shape index: {}]
  %s18 = inlined_call_operand.vmem [shape: f32[121,361], index: 18, kind: input, shape index: {}]
  %s19 = inlined_call_operand.hbm [shape: f32[361,256], index: 19, kind: input, shape index: {}]
  %s20 = inlined_call_operand.vmem [shape: f32[2,2,256], index: 20, kind: output, shape index: {}]
  %s21 = sld [smem:[#allocation0]]
  $region125: #{aut_enc_d_forward.1} parent=0
    _
  %s23 = ssub.s32 1, %s21
  %s24 = scalar_select 0, %s23, %s21
  $region1: #{aut_enc_d_forward.1} parent=0
    #allocation8 [shape = 'u8[196608]{0}', space=vmem, size = 0x30000, scoped, tag = 'input window, operand 13, single buffered']
    #allocation9 [shape = 's32[2]{0}', space=sflag, size = 0x8, scoped, tag = 'scoped memory for aut_enc_d_forward.1']
    #allocation10 [shape = 'u8[167936]{0}', space=vmem, size = 0x29000, scoped, tag = 'input window, operand 14, single buffered']
    #allocation11 [shape = 's32[1]{0}', space=sflag, size = 0x4, scoped, tag = 'scoped memory for aut_enc_d_forward.1']
    #allocation12 [shape = 'u8[376832]{0}', space=vmem, size = 0x5c000, scoped, tag = 'input window, operand 19, single buffered']
    %25 = vsyncpa [#allocation9], 0
    %26 = vsyncpa [#allocation11], 0
    loop: start=0, step=1, limit=4
    $region2: #{aut_enc_d_forward.1} parent=1 // loop_pre_header
      _
    $region3: #{aut_enc_d_forward.1} parent=1 // loop_header
      %s28 = sphi 0, %s32
      %p29 = scmp.ge.s32.totalorder %s28, 4
      %s38 = sphi 0, %s40
      %s41 = sphi 0, %s38
      %s42 = sphi 0, %s41
      %s58 = sphi 0, %s42
      %s62 = sphi 0, %s62
      %s64 = sphi 0, %s62
      %s65 = sphi 0, %s64
      %s79 = sphi 0, %s65
      %s83 = sphi 0, %s83
      %s85 = sphi 0, %s83
      %s86 = sphi 0, %s85
      %s100 = sphi 0, %s86
      %s104 = sphi 0, %s104
      %s106 = sphi 0, %s104
      %s107 = sphi 0, %s106
      %s121 = sphi 0, %s107
      %s125 = sphi 0, %s125
      %s127 = sphi 0, %s125
      %s128 = sphi 0, %s127
      %s142 = sphi 0, %s128
      %s146 = sphi 0, %s146
      %s148 = sphi 0, %s146
      %s149 = sphi 0, %s148
      %s163 = sphi 0, %s149
      %s167 = sphi 0, %s167
      %s169 = sphi 0, %s167
      %s170 = sphi 0, %s169
      %s184 = sphi 0, %s170
      %s188 = sphi 0, %s188
      %s190 = sphi 0, %s188
      %s191 = sphi 0, %s190
      %s205 = sphi 0, %s191
      %s209 = sphi 0, %s209
      %s211 = sphi 0, %s209
      %s212 = sphi 0, %s211
      %s226 = sphi 0, %s212
      %s230 = sphi 0, %s230
      %s232 = sphi 0, %s230
      %s233 = sphi 0, %s232
      %s247 = sphi 0, %s233
      %s251 = sphi 0, %s251
      %s253 = sphi 0, %s251
      %s254 = sphi 0, %s253
      %s268 = sphi 0, %s254
      %s272 = sphi 0, %s272
      %s274 = sphi 0, %s272
      %s275 = sphi 0, %s274
      %s289 = sphi 0, %s275
      %s293 = sphi 0, %s293
      %s295 = sphi 0, %s293
      %s296 = sphi 0, %s295
      %s310 = sphi 0, %s296
      %s314 = sphi 0, %s314
      %s316 = sphi 0, %s314
      %s317 = sphi 0, %s316
      %s331 = sphi 0, %s317
      %s335 = sphi 0, %s335
      %s337 = sphi 0, %s335
      %s338 = sphi 0, %s337
      %s352 = sphi 0, %s338
      %s356 = sphi 0, %s356
      %s358 = sphi 0, %s356
      %s359 = sphi 0, %s358
      %s373 = sphi 0, %s359
      %s377 = sphi 0, %s377
      %s379 = sphi 0, %s377
      %s380 = sphi 0, %s379
      %s394 = sphi 0, %s380
      %s398 = sphi 0, %s398
      %s400 = sphi 0, %s398
      %s401 = sphi 0, %s400
      %s415 = sphi 0, %s401
      %s419 = sphi 0, %s419
      %s421 = sphi 0, %s419
      %s422 = sphi 0, %s421
      %s436 = sphi 0, %s422
      %s440 = sphi 0, %s440
      %s442 = sphi 0, %s440
      %s443 = sphi 0, %s442
      %s457 = sphi 0, %s443
      %s463 = sphi 0, %s465
      %s466 = sphi 0, %s463
      %s467 = sphi 0, %s466
      %s483 = sphi 0, %s467
    $region4: #{aut_enc_d_forward.1} parent=1 // loop_header_branch
      %31 = sbr.rel (%p29) target = $region8
    $region5: #{aut_enc_d_forward.1} parent=1 // loop_body
      %s33 = ssub.s32 %s28, 1
      %s34 = ssub.s32 %s28, 2
      %s35 = sadd.s32 %s28, 1
      %s36 = ssub.s32 %s28, %s35
      %p37 = scmp.eq.s32.totalorder %s36, 0
      %s39 = sadd.s32 %s38, 1
      %s40 = scalar_select %p37, %s38, %s39
      %p43 = pneg %p37
      %p44 = scmp.eq.s32.totalorder %s28, 1
      %p45 = por %p43, %p44
      %p46 = scmp.ne.s32.totalorder %s38, %s41
      %p47 = scmp.eq.s32.totalorder %s28, 0
      %p48 = por %p46, %p47
      %p49 = scmp.ne.s32.totalorder %s38, %s41
      %p50 = scmp.eq.s32.totalorder %s33, 1
      %p51 = por %p49, %p50
      %p52 = scmp.ne.s32.totalorder %s41, %s42
      %p53 = scmp.eq.s32.totalorder %s33, 0
      %p54 = por %p52, %p53
      %p55 = scmp.ne.s32.totalorder %s41, %s42
      %p56 = scmp.eq.s32.totalorder %s34, 1
      %p57 = por %p55, %p56
      %p59 = scmp.ne.s32.totalorder %s42, %s58
      %p60 = scmp.eq.s32.totalorder %s34, 0
      %p61 = por %p59, %p60
      %s63 = sadd.s32 %s62, 1
      %p66 = scmp.eq.s32.totalorder %s28, 1
      %p67 = scmp.ne.s32.totalorder %s62, %s64
      %p68 = scmp.eq.s32.totalorder %s28, 0
      %p69 = por %p67, %p68
      %p70 = scmp.ne.s32.totalorder %s62, %s64
      %p71 = scmp.eq.s32.totalorder %s33, 1
      %p72 = por %p70, %p71
      %p73 = scmp.ne.s32.totalorder %s64, %s65
      %p74 = scmp.eq.s32.totalorder %s33, 0
      %p75 = por %p73, %p74
      %p76 = scmp.ne.s32.totalorder %s64, %s65
      %p77 = scmp.eq.s32.totalorder %s34, 1
      %p78 = por %p76, %p77
      %p80 = scmp.ne.s32.totalorder %s65, %s79
      %p81 = scmp.eq.s32.totalorder %s34, 0
      %p82 = por %p80, %p81
      %s84 = sadd.s32 %s83, 1
      %p87 = scmp.eq.s32.totalorder %s28, 1
      %p88 = scmp.ne.s32.totalorder %s83, %s85
      %p89 = scmp.eq.s32.totalorder %s28, 0
      %p90 = por %p88, %p89
      %p91 = scmp.ne.s32.totalorder %s83, %s85
      %p92 = scmp.eq.s32.totalorder %s33, 1
      %p93 = por %p91, %p92
      %p94 = scmp.ne.s32.totalorder %s85, %s86
      %p95 = scmp.eq.s32.totalorder %s33, 0
      %p96 = por %p94, %p95
      %p97 = scmp.ne.s32.totalorder %s85, %s86
      %p98 = scmp.eq.s32.totalorder %s34, 1
      %p99 = por %p97, %p98
      %p101 = scmp.ne.s32.totalorder %s86, %s100
      %p102 = scmp.eq.s32.totalorder %s34, 0
      %p103 = por %p101, %p102
      %s105 = sadd.s32 %s104, 1
      %p108 = scmp.eq.s32.totalorder %s28, 1
      %p109 = scmp.ne.s32.totalorder %s104, %s106
      %p110 = scmp.eq.s32.totalorder %s28, 0
      %p111 = por %p109, %p110
      %p112 = scmp.ne.s32.totalorder %s104, %s106
      %p113 = scmp.eq.s32.totalorder %s33, 1
      %p114 = por %p112, %p113
      %p115 = scmp.ne.s32.totalorder %s106, %s107
      %p116 = scmp.eq.s32.totalorder %s33, 0
      %p117 = por %p115, %p116
      %p118 = scmp.ne.s32.totalorder %s106, %s107
      %p119 = scmp.eq.s32.totalorder %s34, 1
      %p120 = por %p118, %p119
      %p122 = scmp.ne.s32.totalorder %s107, %s121
      %p123 = scmp.eq.s32.totalorder %s34, 0
      %p124 = por %p122, %p123
      %s126 = sadd.s32 %s125, 1
      %p129 = scmp.eq.s32.totalorder %s28, 1
      %p130 = scmp.ne.s32.totalorder %s125, %s127
      %p131 = scmp.eq.s32.totalorder %s28, 0
      %p132 = por %p130, %p131
      %p133 = scmp.ne.s32.totalorder %s125, %s127
      %p134 = scmp.eq.s32.totalorder %s33, 1
      %p135 = por %p133, %p134
      %p136 = scmp.ne.s32.totalorder %s127, %s128
      %p137 = scmp.eq.s32.totalorder %s33, 0
      %p138 = por %p136, %p137
      %p139 = scmp.ne.s32.totalorder %s127, %s128
      %p140 = scmp.eq.s32.totalorder %s34, 1
      %p141 = por %p139, %p140
      %p143 = scmp.ne.s32.totalorder %s128, %s142
      %p144 = scmp.eq.s32.totalorder %s34, 0
      %p145 = por %p143, %p144
      %s147 = sadd.s32 %s146, 1
      %p150 = scmp.eq.s32.totalorder %s28, 1
      %p151 = scmp.ne.s32.totalorder %s146, %s148
      %p152 = scmp.eq.s32.totalorder %s28, 0
      %p153 = por %p151, %p152
      %p154 = scmp.ne.s32.totalorder %s146, %s148
      %p155 = scmp.eq.s32.totalorder %s33, 1
      %p156 = por %p154, %p155
      %p157 = scmp.ne.s32.totalorder %s148, %s149
      %p158 = scmp.eq.s32.totalorder %s33, 0
      %p159 = por %p157, %p158
      %p160 = scmp.ne.s32.totalorder %s148, %s149
      %p161 = scmp.eq.s32.totalorder %s34, 1
      %p162 = por %p160, %p161
      %p164 = scmp.ne.s32.totalorder %s149, %s163
      %p165 = scmp.eq.s32.totalorder %s34, 0
      %p166 = por %p164, %p165
      %s168 = sadd.s32 %s167, 1
      %p171 = scmp.eq.s32.totalorder %s28, 1
      %p172 = scmp.ne.s32.totalorder %s167, %s169
      %p173 = scmp.eq.s32.totalorder %s28, 0
      %p174 = por %p172, %p173
      %p175 = scmp.ne.s32.totalorder %s167, %s169
      %p176 = scmp.eq.s32.totalorder %s33, 1
      %p177 = por %p175, %p176
      %p178 = scmp.ne.s32.totalorder %s169, %s170
      %p179 = scmp.eq.s32.totalorder %s33, 0
      %p180 = por %p178, %p179
      %p181 = scmp.ne.s32.totalorder %s169, %s170
      %p182 = scmp.eq.s32.totalorder %s34, 1
      %p183 = por %p181, %p182
      %p185 = scmp.ne.s32.totalorder %s170, %s184
      %p186 = scmp.eq.s32.totalorder %s34, 0
      %p187 = por %p185, %p186
      %s189 = sadd.s32 %s188, 1
      %p192 = scmp.eq.s32.totalorder %s28, 1
      %p193 = scmp.ne.s32.totalorder %s188, %s190
      %p194 = scmp.eq.s32.totalorder %s28, 0
      %p195 = por %p193, %p194
      %p196 = scmp.ne.s32.totalorder %s188, %s190
      %p197 = scmp.eq.s32.totalorder %s33, 1
      %p198 = por %p196, %p197
      %p199 = scmp.ne.s32.totalorder %s190, %s191
      %p200 = scmp.eq.s32.totalorder %s33, 0
      %p201 = por %p199, %p200
      %p202 = scmp.ne.s32.totalorder %s190, %s191
      %p203 = scmp.eq.s32.totalorder %s34, 1
      %p204 = por %p202, %p203
      %p206 = scmp.ne.s32.totalorder %s191, %s205
      %p207 = scmp.eq.s32.totalorder %s34, 0
      %p208 = por %p206, %p207
      %s210 = sadd.s32 %s209, 1
      %p213 = scmp.eq.s32.totalorder %s28, 1
      %p214 = scmp.ne.s32.totalorder %s209, %s211
      %p215 = scmp.eq.s32.totalorder %s28, 0
      %p216 = por %p214, %p215
      %p217 = scmp.ne.s32.totalorder %s209, %s211
      %p218 = scmp.eq.s32.totalorder %s33, 1
      %p219 = por %p217, %p218
      %p220 = scmp.ne.s32.totalorder %s211, %s212
      %p221 = scmp.eq.s32.totalorder %s33, 0
      %p222 = por %p220, %p221
      %p223 = scmp.ne.s32.totalorder %s211, %s212
      %p224 = scmp.eq.s32.totalorder %s34, 1
      %p225 = por %p223, %p224
      %p227 = scmp.ne.s32.totalorder %s212, %s226
      %p228 = scmp.eq.s32.totalorder %s34, 0
      %p229 = por %p227, %p228
      %s231 = sadd.s32 %s230, 1
      %p234 = scmp.eq.s32.totalorder %s28, 1
      %p235 = scmp.ne.s32.totalorder %s230, %s232
      %p236 = scmp.eq.s32.totalorder %s28, 0
      %p237 = por %p235, %p236
      %p238 = scmp.ne.s32.totalorder %s230, %s232
      %p239 = scmp.eq.s32.totalorder %s33, 1
      %p240 = por %p238, %p239
      %p241 = scmp.ne.s32.totalorder %s232, %s233
      %p242 = scmp.eq.s32.totalorder %s33, 0
      %p243 = por %p241, %p242
      %p244 = scmp.ne.s32.totalorder %s232, %s233
      %p245 = scmp.eq.s32.totalorder %s34, 1
      %p246 = por %p244, %p245
      %p248 = scmp.ne.s32.totalorder %s233, %s247
      %p249 = scmp.eq.s32.totalorder %s34, 0
      %p250 = por %p248, %p249
      %s252 = sadd.s32 %s251, 1
      %p255 = scmp.eq.s32.totalorder %s28, 1
      %p256 = scmp.ne.s32.totalorder %s251, %s253
      %p257 = scmp.eq.s32.totalorder %s28, 0
      %p258 = por %p256, %p257
      %p259 = scmp.ne.s32.totalorder %s251, %s253
      %p260 = scmp.eq.s32.totalorder %s33, 1
      %p261 = por %p259, %p260
      %p262 = scmp.ne.s32.totalorder %s253, %s254
      %p263 = scmp.eq.s32.totalorder %s33, 0
      %p264 = por %p262, %p263
      %p265 = scmp.ne.s32.totalorder %s253, %s254
      %p266 = scmp.eq.s32.totalorder %s34, 1
      %p267 = por %p265, %p266
      %p269 = scmp.ne.s32.totalorder %s254, %s268
      %p270 = scmp.eq.s32.totalorder %s34, 0
      %p271 = por %p269, %p270
      %s273 = sadd.s32 %s272, 1
      %p276 = scmp.eq.s32.totalorder %s28, 1
      %p277 = scmp.ne.s32.totalorder %s272, %s274
      %p278 = scmp.eq.s32.totalorder %s28, 0
      %p279 = por %p277, %p278
      %p280 = scmp.ne.s32.totalorder %s272, %s274
      %p281 = scmp.eq.s32.totalorder %s33, 1
      %p282 = por %p280, %p281
      %p283 = scmp.ne.s32.totalorder %s274, %s275
      %p284 = scmp.eq.s32.totalorder %s33, 0
      %p285 = por %p283, %p284
      %p286 = scmp.ne.s32.totalorder %s274, %s275
      %p287 = scmp.eq.s32.totalorder %s34, 1
      %p288 = por %p286, %p287
      %p290 = scmp.ne.s32.totalorder %s275, %s289
      %p291 = scmp.eq.s32.totalorder %s34, 0
      %p292 = por %p290, %p291
      %s294 = sadd.s32 %s293, 1
      %p297 = scmp.eq.s32.totalorder %s28, 1
      %p298 = scmp.ne.s32.totalorder %s293, %s295
      %p299 = scmp.eq.s32.totalorder %s28, 0
      %p300 = por %p298, %p299
      %p301 = scmp.ne.s32.totalorder %s293, %s295
      %p302 = scmp.eq.s32.totalorder %s33, 1
      %p303 = por %p301, %p302
      %p304 = scmp.ne.s32.totalorder %s295, %s296
      %p305 = scmp.eq.s32.totalorder %s33, 0
      %p306 = por %p304, %p305
      %p307 = scmp.ne.s32.totalorder %s295, %s296
      %p308 = scmp.eq.s32.totalorder %s34, 1
      %p309 = por %p307, %p308
      %p311 = scmp.ne.s32.totalorder %s296, %s310
      %p312 = scmp.eq.s32.totalorder %s34, 0
      %p313 = por %p311, %p312
      %s315 = sadd.s32 %s314, 1
      %p318 = scmp.eq.s32.totalorder %s28, 1
      %p319 = scmp.ne.s32.totalorder %s314, %s316
      %p320 = scmp.eq.s32.totalorder %s28, 0
      %p321 = por %p319, %p320
      %p322 = scmp.ne.s32.totalorder %s314, %s316
      %p323 = scmp.eq.s32.totalorder %s33, 1
      %p324 = por %p322, %p323
      %p325 = scmp.ne.s32.totalorder %s316, %s317
      %p326 = scmp.eq.s32.totalorder %s33, 0
      %p327 = por %p325, %p326
      %p328 = scmp.ne.s32.totalorder %s316, %s317
      %p329 = scmp.eq.s32.totalorder %s34, 1
      %p330 = por %p328, %p329
      %p332 = scmp.ne.s32.totalorder %s317, %s331
      %p333 = scmp.eq.s32.totalorder %s34, 0
      %p334 = por %p332, %p333
      %s336 = sadd.s32 %s335, 1
      %p339 = scmp.eq.s32.totalorder %s28, 1
      %p340 = scmp.ne.s32.totalorder %s335, %s337
      %p341 = scmp.eq.s32.totalorder %s28, 0
      %p342 = por %p340, %p341
      %p343 = scmp.ne.s32.totalorder %s335, %s337
      %p344 = scmp.eq.s32.totalorder %s33, 1
      %p345 = por %p343, %p344
      %p346 = scmp.ne.s32.totalorder %s337, %s338
      %p347 = scmp.eq.s32.totalorder %s33, 0
      %p348 = por %p346, %p347
      %p349 = scmp.ne.s32.totalorder %s337, %s338
      %p350 = scmp.eq.s32.totalorder %s34, 1
      %p351 = por %p349, %p350
      %p353 = scmp.ne.s32.totalorder %s338, %s352
      %p354 = scmp.eq.s32.totalorder %s34, 0
      %p355 = por %p353, %p354
      %s357 = sadd.s32 %s356, 1
      %p360 = scmp.eq.s32.totalorder %s28, 1
      %p361 = scmp.ne.s32.totalorder %s356, %s358
      %p362 = scmp.eq.s32.totalorder %s28, 0
      %p363 = por %p361, %p362
      %p364 = scmp.ne.s32.totalorder %s356, %s358
      %p365 = scmp.eq.s32.totalorder %s33, 1
      %p366 = por %p364, %p365
      %p367 = scmp.ne.s32.totalorder %s358, %s359
      %p368 = scmp.eq.s32.totalorder %s33, 0
      %p369 = por %p367, %p368
      %p370 = scmp.ne.s32.totalorder %s358, %s359
      %p371 = scmp.eq.s32.totalorder %s34, 1
      %p372 = por %p370, %p371
      %p374 = scmp.ne.s32.totalorder %s359, %s373
      %p375 = scmp.eq.s32.totalorder %s34, 0
      %p376 = por %p374, %p375
      %s378 = sadd.s32 %s377, 1
      %p381 = scmp.eq.s32.totalorder %s28, 1
      %p382 = scmp.ne.s32.totalorder %s377, %s379
      %p383 = scmp.eq.s32.totalorder %s28, 0
      %p384 = por %p382, %p383
      %p385 = scmp.ne.s32.totalorder %s377, %s379
      %p386 = scmp.eq.s32.totalorder %s33, 1
      %p387 = por %p385, %p386
      %p388 = scmp.ne.s32.totalorder %s379, %s380
      %p389 = scmp.eq.s32.totalorder %s33, 0
      %p390 = por %p388, %p389
      %p391 = scmp.ne.s32.totalorder %s379, %s380
      %p392 = scmp.eq.s32.totalorder %s34, 1
      %p393 = por %p391, %p392
      %p395 = scmp.ne.s32.totalorder %s380, %s394
      %p396 = scmp.eq.s32.totalorder %s34, 0
      %p397 = por %p395, %p396
      %s399 = sadd.s32 %s398, 1
      %p402 = scmp.eq.s32.totalorder %s28, 1
      %p403 = scmp.ne.s32.totalorder %s398, %s400
      %p404 = scmp.eq.s32.totalorder %s28, 0
      %p405 = por %p403, %p404
      %p406 = scmp.ne.s32.totalorder %s398, %s400
      %p407 = scmp.eq.s32.totalorder %s33, 1
      %p408 = por %p406, %p407
      %p409 = scmp.ne.s32.totalorder %s400, %s401
      %p410 = scmp.eq.s32.totalorder %s33, 0
      %p411 = por %p409, %p410
      %p412 = scmp.ne.s32.totalorder %s400, %s401
      %p413 = scmp.eq.s32.totalorder %s34, 1
      %p414 = por %p412, %p413
      %p416 = scmp.ne.s32.totalorder %s401, %s415
      %p417 = scmp.eq.s32.totalorder %s34, 0
      %p418 = por %p416, %p417
      %s420 = sadd.s32 %s419, 1
      %p423 = scmp.eq.s32.totalorder %s28, 1
      %p424 = scmp.ne.s32.totalorder %s419, %s421
      %p425 = scmp.eq.s32.totalorder %s28, 0
      %p426 = por %p424, %p425
      %p427 = scmp.ne.s32.totalorder %s419, %s421
      %p428 = scmp.eq.s32.totalorder %s33, 1
      %p429 = por %p427, %p428
      %p430 = scmp.ne.s32.totalorder %s421, %s422
      %p431 = scmp.eq.s32.totalorder %s33, 0
      %p432 = por %p430, %p431
      %p433 = scmp.ne.s32.totalorder %s421, %s422
      %p434 = scmp.eq.s32.totalorder %s34, 1
      %p435 = por %p433, %p434
      %p437 = scmp.ne.s32.totalorder %s422, %s436
      %p438 = scmp.eq.s32.totalorder %s34, 0
      %p439 = por %p437, %p438
      %s441 = sadd.s32 %s440, 1
      %p444 = scmp.eq.s32.totalorder %s28, 1
      %p445 = scmp.ne.s32.totalorder %s440, %s442
      %p446 = scmp.eq.s32.totalorder %s28, 0
      %p447 = por %p445, %p446
      %p448 = scmp.ne.s32.totalorder %s440, %s442
      %p449 = scmp.eq.s32.totalorder %s33, 1
      %p450 = por %p448, %p449
      %p451 = scmp.ne.s32.totalorder %s442, %s443
      %p452 = scmp.eq.s32.totalorder %s33, 0
      %p453 = por %p451, %p452
      %p454 = scmp.ne.s32.totalorder %s442, %s443
      %p455 = scmp.eq.s32.totalorder %s34, 1
      %p456 = por %p454, %p455
      %p458 = scmp.ne.s32.totalorder %s443, %s457
      %p459 = scmp.eq.s32.totalorder %s34, 0
      %p460 = por %p458, %p459
      %s461 = ssub.s32 %s28, %s35
      %p462 = scmp.eq.s32.totalorder %s461, 0
      %s464 = sadd.s32 %s463, 1
      %s465 = scalar_select %p462, %s463, %s464
      %p468 = pneg %p462
      %p469 = scmp.eq.s32.totalorder %s28, 1
      %p470 = por %p468, %p469
      %p471 = scmp.ne.s32.totalorder %s463, %s466
      %p472 = scmp.eq.s32.totalorder %s28, 0
      %p473 = por %p471, %p472
      %p474 = scmp.ne.s32.totalorder %s463, %s466
      %p475 = scmp.eq.s32.totalorder %s33, 1
      %p476 = por %p474, %p475
      %p477 = scmp.ne.s32.totalorder %s466, %s467
      %p478 = scmp.eq.s32.totalorder %s33, 0
      %p479 = por %p477, %p478
      %p480 = scmp.ne.s32.totalorder %s466, %s467
      %p481 = scmp.eq.s32.totalorder %s34, 1
      %p482 = por %p480, %p481
      %p484 = scmp.ne.s32.totalorder %s467, %s483
      %p485 = scmp.eq.s32.totalorder %s34, 0
      %p486 = por %p484, %p485
      %p487 = scmp.le.s32.totalorder 1, %s28
      %p488 = scmp.lt.s32.totalorder %s28, 3
      %p489 = pnand %p487, %p488
      %p490 = pneg %p489
      // Predicated region
      $region9: #{aut_enc_d_forward.1} parent=5 // pred_check
        _
      $region10: #{aut_enc_d_forward.1} parent=5 // pred_check_branch
        %492 = sbr.rel (%p489) target = $region12
      $region11: #{aut_enc_d_forward.1} parent=5 // pred_region
        %s493 = ssub.s32 %s28, 1
        // Predicated region
        $region13: #{aut_enc_d_forward.1} parent=11 // pred_check
          %p494 = pneg %p75
        $region14: #{aut_enc_d_forward.1} parent=11 // pred_check_branch
          %496 = sbr.rel (%p494) target = $region16
        $region15: #{aut_enc_d_forward.1} parent=11 // pred_region
          _
        $region16: #{aut_enc_d_forward.1} parent=11 // pred_fallthru
          _
        // Predicated region
        $region17: #{aut_enc_d_forward.1} parent=11 // pred_check
          %p497 = pneg %p96
        $region18: #{aut_enc_d_forward.1} parent=11 // pred_check_branch
          %499 = sbr.rel (%p497) target = $region20
        $region19: #{aut_enc_d_forward.1} parent=11 // pred_region
          _
        $region20: #{aut_enc_d_forward.1} parent=11 // pred_fallthru
          _
        // Predicated region
        $region21: #{aut_enc_d_forward.1} parent=11 // pred_check
          %p500 = pneg %p117
        $region22: #{aut_enc_d_forward.1} parent=11 // pred_check_branch
          %502 = sbr.rel (%p500) target = $region24
        $region23: #{aut_enc_d_forward.1} parent=11 // pred_region
          _
        $region24: #{aut_enc_d_forward.1} parent=11 // pred_fallthru
          _
        // Predicated region
        $region25: #{aut_enc_d_forward.1} parent=11 // pred_check
          %p503 = pneg %p138
        $region26: #{aut_enc_d_forward.1} parent=11 // pred_check_branch
          %505 = sbr.rel (%p503) target = $region28
        $region27: #{aut_enc_d_forward.1} parent=11 // pred_region
          _
        $region28: #{aut_enc_d_forward.1} parent=11 // pred_fallthru
          _
        // Predicated region
        $region29: #{aut_enc_d_forward.1} parent=11 // pred_check
          %p506 = pneg %p159
        $region30: #{aut_enc_d_forward.1} parent=11 // pred_check_branch
          %508 = sbr.rel (%p506) target = $region32
        $region31: #{aut_enc_d_forward.1} parent=11 // pred_region
          _
        $region32: #{aut_enc_d_forward.1} parent=11 // pred_fallthru
          _
        // Predicated region
        $region33: #{aut_enc_d_forward.1} parent=11 // pred_check
          %p509 = pneg %p180
        $region34: #{aut_enc_d_forward.1} parent=11 // pred_check_branch
          %511 = sbr.rel (%p509) target = $region36
        $region35: #{aut_enc_d_forward.1} parent=11 // pred_region
          _
        $region36: #{aut_enc_d_forward.1} parent=11 // pred_fallthru
          _
        // Predicated region
        $region37: #{aut_enc_d_forward.1} parent=11 // pred_check
          %p512 = pneg %p201
        $region38: #{aut_enc_d_forward.1} parent=11 // pred_check_branch
          %514 = sbr.rel (%p512) target = $region40
        $region39: #{aut_enc_d_forward.1} parent=11 // pred_region
          _
        $region40: #{aut_enc_d_forward.1} parent=11 // pred_fallthru
          _
        // Predicated region
        $region41: #{aut_enc_d_forward.1} parent=11 // pred_check
          %p515 = pneg %p222
        $region42: #{aut_enc_d_forward.1} parent=11 // pred_check_branch
          %517 = sbr.rel (%p515) target = $region44
        $region43: #{aut_enc_d_forward.1} parent=11 // pred_region
          _
        $region44: #{aut_enc_d_forward.1} parent=11 // pred_fallthru
          _
        // Predicated region
        $region45: #{aut_enc_d_forward.1} parent=11 // pred_check
          %p518 = pneg %p243
        $region46: #{aut_enc_d_forward.1} parent=11 // pred_check_branch
          %520 = sbr.rel (%p518) target = $region48
        $region47: #{aut_enc_d_forward.1} parent=11 // pred_region
          _
        $region48: #{aut_enc_d_forward.1} parent=11 // pred_fallthru
          _
        // Predicated region
        $region49: #{aut_enc_d_forward.1} parent=11 // pred_check
          %p521 = pneg %p264
        $region50: #{aut_enc_d_forward.1} parent=11 // pred_check_branch
          %523 = sbr.rel (%p521) target = $region52
        $region51: #{aut_enc_d_forward.1} parent=11 // pred_region
          _
        $region52: #{aut_enc_d_forward.1} parent=11 // pred_fallthru
          _
        // Predicated region
        $region53: #{aut_enc_d_forward.1} parent=11 // pred_check
          %p524 = pneg %p285
        $region54: #{aut_enc_d_forward.1} parent=11 // pred_check_branch
          %526 = sbr.rel (%p524) target = $region56
        $region55: #{aut_enc_d_forward.1} parent=11 // pred_region
          _
        $region56: #{aut_enc_d_forward.1} parent=11 // pred_fallthru
          _
        // Predicated region
        $region57: #{aut_enc_d_forward.1} parent=11 // pred_check
          %p527 = pneg %p306
        $region58: #{aut_enc_d_forward.1} parent=11 // pred_check_branch
          %529 = sbr.rel (%p527) target = $region60
        $region59: #{aut_enc_d_forward.1} parent=11 // pred_region
          _
        $region60: #{aut_enc_d_forward.1} parent=11 // pred_fallthru
          _
        // Predicated region
        $region61: #{aut_enc_d_forward.1} parent=11 // pred_check
          %p530 = pneg %p327
        $region62: #{aut_enc_d_forward.1} parent=11 // pred_check_branch
          %532 = sbr.rel (%p530) target = $region64
        $region63: #{aut_enc_d_forward.1} parent=11 // pred_region
          %534 = vsyncadd [#allocation9], 0
          %s535 = sshll.u32 %s13, 4
          %s536 = int_to_ptr.hbm [resolvable:$true] %s535
          %s537 = sshll.u32 [#allocation8], 4
          %s538 = int_to_ptr.vmem [resolvable:$true] %s537
          %543 = dma.hbm_to_vmem [thread:$0]  %s536, 6144, %s538, [#allocation9], 192, 192, 12
        $region64: #{aut_enc_d_forward.1} parent=11 // pred_fallthru
          _
        // Predicated region
        $region65: #{aut_enc_d_forward.1} parent=11 // pred_check
          %p544 = pneg %p348
        $region66: #{aut_enc_d_forward.1} parent=11 // pred_check_branch
          %546 = sbr.rel (%p544) target = $region68
        $region67: #{aut_enc_d_forward.1} parent=11 // pred_region
          %548 = vsyncadd [#allocation11], 0
          %s549 = sshll.u32 %s14, 4
          %s550 = int_to_ptr.hbm [resolvable:$true] %s549
          %s551 = sshll.u32 [#allocation10], 4
          %s552 = int_to_ptr.vmem [resolvable:$true] %s551
          %557 = dma.hbm_to_vmem [thread:$0]  %s550, 5248, %s552, [#allocation11], 128, 128, 8
        $region68: #{aut_enc_d_forward.1} parent=11 // pred_fallthru
          _
        // Predicated region
        $region69: #{aut_enc_d_forward.1} parent=11 // pred_check
          %p558 = pneg %p369
        $region70: #{aut_enc_d_forward.1} parent=11 // pred_check_branch
          %560 = sbr.rel (%p558) target = $region72
        $region71: #{aut_enc_d_forward.1} parent=11 // pred_region
          _
        $region72: #{aut_enc_d_forward.1} parent=11 // pred_fallthru
          _
        // Predicated region
        $region73: #{aut_enc_d_forward.1} parent=11 // pred_check
          %p561 = pneg %p390
        $region74: #{aut_enc_d_forward.1} parent=11 // pred_check_branch
          %563 = sbr.rel (%p561) target = $region76
        $region75: #{aut_enc_d_forward.1} parent=11 // pred_region
          _
        $region76: #{aut_enc_d_forward.1} parent=11 // pred_fallthru
          _
        // Predicated region
        $region77: #{aut_enc_d_forward.1} parent=11 // pred_check
          %p564 = pneg %p411
        $region78: #{aut_enc_d_forward.1} parent=11 // pred_check_branch
          %566 = sbr.rel (%p564) target = $region80
        $region79: #{aut_enc_d_forward.1} parent=11 // pred_region
          _
        $region80: #{aut_enc_d_forward.1} parent=11 // pred_fallthru
          _
        // Predicated region
        $region81: #{aut_enc_d_forward.1} parent=11 // pred_check
          %p567 = pneg %p432
        $region82: #{aut_enc_d_forward.1} parent=11 // pred_check_branch
          %569 = sbr.rel (%p567) target = $region84
        $region83: #{aut_enc_d_forward.1} parent=11 // pred_region
          _
        $region84: #{aut_enc_d_forward.1} parent=11 // pred_fallthru
          _
        // Predicated region
        $region85: #{aut_enc_d_forward.1} parent=11 // pred_check
          %p570 = pneg %p453
        $region86: #{aut_enc_d_forward.1} parent=11 // pred_check_branch
          %572 = sbr.rel (%p570) target = $region88
        $region87: #{aut_enc_d_forward.1} parent=11 // pred_region
          %574 = vsyncadd [#allocation11], 0
          %s575 = sshll.u32 %s19, 4
          %s576 = int_to_ptr.hbm [resolvable:$true] %s575
          %s577 = sshll.u32 [#allocation12], 4
          %s578 = int_to_ptr.vmem [resolvable:$true] %s577
          %583 = dma.hbm_to_vmem [thread:$0]  %s576, 11776, %s578, [#allocation11], 256, 256, 16
        $region88: #{aut_enc_d_forward.1} parent=11 // pred_fallthru
          _
      $region12: #{aut_enc_d_forward.1} parent=5 // pred_fallthru
        _
      %p584 = scmp.lt.s32.totalorder %s28, 2
      // Predicated region
      $region89: #{aut_enc_d_forward.1} parent=5 // pred_check
        %p585 = pneg %p584
      $region90: #{aut_enc_d_forward.1} parent=5 // pred_check_branch
        %587 = sbr.rel (%p585) target = $region92
      $region91: #{aut_enc_d_forward.1} parent=5 // pred_region
        // Predicated region
        $region93: #{aut_enc_d_forward.1} parent=91 // pred_check
          %p588 = pneg %p48
        $region94: #{aut_enc_d_forward.1} parent=91 // pred_check_branch
          %590 = sbr.rel (%p588) target = $region96
        $region95: #{aut_enc_d_forward.1} parent=91 // pred_region
          %p591 = scmp.lt.s32.totalorder %s28, 1
          %s592 = scalar_select %p591, %s28, 1
          %s593 = smul.addr %s592, 2
          %s594 = smul.addr %s593, 2
          %s595 = scalar_lea.vmem %s0, %s594
        $region96: #{aut_enc_d_forward.1} parent=91 // pred_fallthru
          _
      $region92: #{aut_enc_d_forward.1} parent=5 // pred_fallthru
        _
      %p596 = scmp.le.s32.totalorder 1, %s28
      %p597 = scmp.lt.s32.totalorder %s28, 3
      %p598 = pnand %p596, %p597
      %p599 = pneg %p598
      // Predicated region
      $region97: #{aut_enc_d_forward.1} parent=5 // pred_check
        _
      $region98: #{aut_enc_d_forward.1} parent=5 // pred_check_branch
        %601 = sbr.rel (%p598) target = $region100
      $region99: #{aut_enc_d_forward.1} parent=5 // pred_region
        %s602 = ssub.s32 %s28, 1
        // Predicated region
        $region101: #{aut_enc_d_forward.1} parent=99 // pred_check
          %p603 = pneg %p327
        $region102: #{aut_enc_d_forward.1} parent=99 // pred_check_branch
          %605 = sbr.rel (%p603) target = $region104
        $region103: #{aut_enc_d_forward.1} parent=99 // pred_region
          %607 = dma.done [#allocation9], 6144
        $region104: #{aut_enc_d_forward.1} parent=99 // pred_fallthru
          _
        // Predicated region
        $region105: #{aut_enc_d_forward.1} parent=99 // pred_check
          %p608 = pneg %p348
        $region106: #{aut_enc_d_forward.1} parent=99 // pred_check_branch
          %610 = sbr.rel (%p608) target = $region108
        $region107: #{aut_enc_d_forward.1} parent=99 // pred_region
          %612 = dma.done [#allocation11], 5248
        $region108: #{aut_enc_d_forward.1} parent=99 // pred_fallthru
          _
        // Predicated region
        $region109: #{aut_enc_d_forward.1} parent=99 // pred_check
          %p613 = pneg %p453
        $region110: #{aut_enc_d_forward.1} parent=99 // pred_check_branch
          %615 = sbr.rel (%p613) target = $region112
        $region111: #{aut_enc_d_forward.1} parent=99 // pred_region
          %617 = dma.done [#allocation11], 11776
        $region112: #{aut_enc_d_forward.1} parent=99 // pred_fallthru
          _
        %p618 = scmp.lt.s32.totalorder %s33, 1
        %s619 = scalar_select %p618, %s33, 1
        %s620 = smul.addr %s619, 2
        %s621 = smul.addr %s620, 2
        %s622 = scalar_lea.vmem %s0, %s621
        %p623 = pneg %p54
        %p624 = pneg %p51
        %p625 = pneg %p75
        %p626 = pneg %p72
        %p627 = pneg %p96
        %p628 = pneg %p93
        %p629 = pneg %p117
        %p630 = pneg %p114
        %p631 = pneg %p138
        %p632 = pneg %p135
        %p633 = pneg %p159
        %p634 = pneg %p156
        %p635 = pneg %p180
        %p636 = pneg %p177
        %p637 = pneg %p201
        %p638 = pneg %p198
        %p639 = pneg %p222
        %p640 = pneg %p219
        %p641 = pneg %p243
        %p642 = pneg %p240
        %p643 = pneg %p264
        %p644 = pneg %p261
        %p645 = pneg %p285
        %p646 = pneg %p282
        %p647 = pneg %p306
        %p648 = pneg %p303
        %p649 = pneg %p327
        %p650 = pneg %p324
        %p651 = pneg %p348
        %p652 = pneg %p345
        %p653 = pneg %p369
        %p654 = pneg %p366
        %p655 = pneg %p390
        %p656 = pneg %p387
        %p657 = pneg %p411
        %p658 = pneg %p408
        %p659 = pneg %p432
        %p660 = pneg %p429
        %p661 = pneg %p453
        %p662 = pneg %p450
        %p663 = pneg %p479
        %p664 = pneg %p476
        %p665 = scmp.lt.s32.totalorder %s33, 1
        %s666 = scalar_select %p665, %s33, 1
        %s667 = smul.addr %s666, 2
        %s668 = smul.addr %s667, 2
        %s669 = scalar_lea.vmem %s20, %s668
        %p670 = scmp.lt.s32.totalorder %s33, 1
        %s671 = scalar_select %p670, %s33, 1
        %s672 = smul.addr %s671, 2
        %s673 = smul.addr %s672, 2
        %s674 = scalar_lea.vmem %s0, %s673
        %p675 = scmp.lt.s32.totalorder %s33, 1
        %s676 = scalar_select %p675, %s33, 1
        %s677 = smul.addr %s676, 2
        %s678 = smul.addr %s677, 2
        %s679 = scalar_lea.vmem %s20, %s678
        %vm681 = vcmask 1041408
        %vm682 = vsmask.f32 1280
        %vm683 = vmand %vm681, %vm682
        %vm684 = vcmask 1043458
        %vm685 = vsmask.f32 3328
        %vm686 = vmand %vm684, %vm685
        %vm687 = vmor %vm686, %vm683
        %vm688 = vcmask 1045508
        %vm689 = vsmask.f32 5376
        %vm690 = vmand %vm688, %vm689
        %vm691 = vmor %vm690, %vm687
        %v692 = vld [vmem:[#allocation2] sm:$0x3f]
        %v693 = vsel %vm691, 0, %v692
        %694 = vst [vmem:[#allocation2] sm:$0x3f] %v693
        %695 = vst [vmem:[#allocation3] sm:$0x77] 0
        %696 = vst [vmem:[#allocation4] sm:$0xf] 0
        %697 = vst [vmem:[#allocation4 + $0x4] sm:$0x1] 0
        %698 = vst [vmem:[#allocation5] sm:$0xf] 0
        %vm699 = vcmask 1043456
        %vm700 = vmand %vm699, %vm685
        %v701 = vld [vmem:[#allocation5 + $0x4] sm:$0xf]
        %v702 = vsel %vm700, 0, %v701
        %703 = vst [vmem:[#allocation5 + $0x4] sm:$0xf] %v702
        %704 = vst [vmem:[#allocation6] sm:$0xff] 0
        %705 = vst [vmem:[#allocation6 + $0x8] sm:$0x11] 0
        %706 = vst [vmem:[#allocation7] sm:$0x77] 0
        %707 = vst [vmem:[#allocation7 + $0x8] sm:$0x77] 0
        %v708 = vld [vmem:[%s674] sm:$0xf]
        %v709 = vld [vmem:[#allocation8] sm:$0xff]
        %v710 = vld [vmem:[#allocation8 + $0x8] sm:$0xf]
        %v711 = vld [vmem:[#allocation8 + $0xc] sm:$0xff]
        %v712 = vld [vmem:[#allocation8 + $0x14] sm:$0xf]
        %v713 = vld [vmem:[#allocation8 + $0x18] sm:$0xff]
        %v714 = vld [vmem:[#allocation8 + $0x20] sm:$0xf]
        %v715 = vld [vmem:[#allocation8 + $0x24] sm:$0xff]
        %v716 = vld [vmem:[#allocation8 + $0x2c] sm:$0xf]
        %v717 = vld [vmem:[#allocation8 + $0x30] sm:$0xff]
        %v718 = vld [vmem:[#allocation8 + $0x38] sm:$0xf]
        %v719 = vld [vmem:[#allocation8 + $0x3c] sm:$0xff]
        %v720 = vld [vmem:[#allocation8 + $0x44] sm:$0xf]
        %v721 = vld [vmem:[#allocation8 + $0x48] sm:$0xff]
        %v722 = vld [vmem:[#allocation8 + $0x50] sm:$0xf]
        %v723 = vld [vmem:[#allocation8 + $0x54] sm:$0xff]
        %v724 = vld [vmem:[#allocation8 + $0x5c] sm:$0xf]
        %v725 = vld [vmem:[#allocation8 + $0x60] sm:$0xff]
        %v726 = vld [vmem:[#allocation8 + $0x68] sm:$0xf]
        %v727 = vld [vmem:[#allocation8 + $0x6c] sm:$0xff]
        %v728 = vld [vmem:[#allocation8 + $0x74] sm:$0xf]
        %v729 = vld [vmem:[#allocation8 + $0x78] sm:$0xff]
        %v730 = vld [vmem:[#allocation8 + $0x80] sm:$0xf]
        %v731 = vld [vmem:[#allocation8 + $0x84] sm:$0xff]
        %v732 = vld [vmem:[#allocation8 + $0x8c] sm:$0xf]
        %v733 = vld [vmem:[#allocation8 + $0x90] sm:$0xff]
        %v734 = vld [vmem:[#allocation8 + $0x98] sm:$0xf]
        %v735 = vld [vmem:[#allocation8 + $0x9c] sm:$0xff]
        %v736 = vld [vmem:[#allocation8 + $0xa4] sm:$0xf]
        %v737 = vld [vmem:[#allocation8 + $0xa8] sm:$0xff]
        %v738 = vld [vmem:[#allocation8 + $0xb0] sm:$0xf]
        %v739 = vld [vmem:[#allocation8 + $0xb4] sm:$0xff]
        %v740 = vld [vmem:[#allocation8 + $0xbc] sm:$0xf]
        %v741 = vld [vmem:[#allocation8 + $0xc0] sm:$0xff]
        %v742 = vld [vmem:[#allocation8 + $0xc8] sm:$0xf]
        %v743 = vld [vmem:[#allocation8 + $0xcc] sm:$0xff]
        %v744 = vld [vmem:[#allocation8 + $0xd4] sm:$0xf]
        %v745 = vld [vmem:[#allocation8 + $0xd8] sm:$0xff]
        %v746 = vld [vmem:[#allocation8 + $0xe0] sm:$0xf]
        %v747 = vld [vmem:[#allocation8 + $0xe4] sm:$0xff]
        %v748 = vld [vmem:[#allocation8 + $0xec] sm:$0xf]
        %v749 = vld [vmem:[#allocation8 + $0xf0] sm:$0xff]
        %v750 = vld [vmem:[#allocation8 + $0xf8] sm:$0xf]
        %v751 = vld [vmem:[#allocation8 + $0xfc] sm:$0xff]
        %v752 = vld [vmem:[#allocation8 + $0x104] sm:$0xf]
        %v753 = vld [vmem:[#allocation8 + $0x108] sm:$0xff]
        %v754 = vld [vmem:[#allocation8 + $0x110] sm:$0xf]
        %v755 = vld [vmem:[#allocation8 + $0x114] sm:$0xff]
        %v756 = vld [vmem:[#allocation8 + $0x11c] sm:$0xf]
        %v757 = vld [vmem:[#allocation8 + $0x120] sm:$0xff]
        %v758 = vld [vmem:[#allocation8 + $0x128] sm:$0xf]
        %v759 = vld [vmem:[#allocation8 + $0x12c] sm:$0xff]
        %v760 = vld [vmem:[#allocation8 + $0x134] sm:$0xf]
        %v761 = vld [vmem:[#allocation8 + $0x138] sm:$0xff]
        %v762 = vld [vmem:[#allocation8 + $0x140] sm:$0xf]
        %v763 = vld [vmem:[#allocation8 + $0x144] sm:$0xff]
        %v764 = vld [vmem:[#allocation8 + $0x14c] sm:$0xf]
        %v765 = vld [vmem:[#allocation8 + $0x150] sm:$0xff]
        %v766 = vld [vmem:[#allocation8 + $0x158] sm:$0xf]
        %v767 = vld [vmem:[#allocation8 + $0x15c] sm:$0xff]
        %v768 = vld [vmem:[#allocation8 + $0x164] sm:$0xf]
        %v769 = vld [vmem:[#allocation8 + $0x168] sm:$0xff]
        %v770 = vld [vmem:[#allocation8 + $0x170] sm:$0xf]
        %v771 = vld [vmem:[#allocation8 + $0x174] sm:$0xff]
        %v772 = vld [vmem:[#allocation8 + $0x17c] sm:$0xf]
        %774 = vst [vmem:[#allocation1] ss:$4 sm:$0xff] %v708
        %v775 = vld.sshfl [vmem:[#allocation1] sm:$0xff pattern:$0x73625140]
        %v776 = vld.sshfl [vmem:[#allocation1 + $0x8] sm:$0xff pattern:$0x73625140]
        %v843 = vunpack.c.l.b16 %v709
        %v844 = vunpack.c.h.b16 %v709
        %v845 = vunpack.c.l.b16 %v710
        %v846 = vunpack.c.l.b16 %v711
        %v847 = vunpack.c.h.b16 %v711
        %v848 = vunpack.c.l.b16 %v712
        %v849 = vunpack.c.l.b16 %v713
        %v850 = vunpack.c.h.b16 %v713
        %v851 = vunpack.c.l.b16 %v714
        %v852 = vunpack.c.l.b16 %v715
        %v853 = vunpack.c.h.b16 %v715
        %v854 = vunpack.c.l.b16 %v716
        %v855 = vunpack.c.l.b16 %v717
        %v856 = vunpack.c.h.b16 %v717
        %v857 = vunpack.c.l.b16 %v718
        %v858 = vunpack.c.l.b16 %v719
        %v859 = vunpack.c.h.b16 %v719
        %v860 = vunpack.c.l.b16 %v720
        %v861 = vunpack.c.l.b16 %v721
        %v862 = vunpack.c.h.b16 %v721
        %v863 = vunpack.c.l.b16 %v722
        %v864 = vunpack.c.l.b16 %v723
        %v865 = vunpack.c.h.b16 %v723
        %v866 = vunpack.c.l.b16 %v724
        %v867 = vunpack.c.l.b16 %v725
        %v868 = vunpack.c.h.b16 %v725
        %v869 = vunpack.c.l.b16 %v726
        %v870 = vunpack.c.l.b16 %v727
        %v871 = vunpack.c.h.b16 %v727
        %v872 = vunpack.c.l.b16 %v728
        %v873 = vunpack.c.l.b16 %v729
        %v874 = vunpack.c.h.b16 %v729
        %v875 = vunpack.c.l.b16 %v730
        %v876 = vunpack.c.l.b16 %v731
        %v877 = vunpack.c.h.b16 %v731
        %v878 = vunpack.c.l.b16 %v732
        %v879 = vunpack.c.l.b16 %v733
        %v880 = vunpack.c.h.b16 %v733
        %v881 = vunpack.c.l.b16 %v734
        %v882 = vunpack.c.l.b16 %v735
        %v883 = vunpack.c.h.b16 %v735
        %v884 = vunpack.c.l.b16 %v736
        %v885 = vunpack.c.l.b16 %v737
        %v886 = vunpack.c.h.b16 %v737
        %v887 = vunpack.c.l.b16 %v738
        %v888 = vunpack.c.l.b16 %v739
        %v889 = vunpack.c.h.b16 %v739
        %v890 = vunpack.c.l.b16 %v740
        %v891 = vunpack.c.l.b16 %v741
        %v892 = vunpack.c.h.b16 %v741
        %v893 = vunpack.c.l.b16 %v742
        %v894 = vunpack.c.l.b16 %v743
        %v895 = vunpack.c.h.b16 %v743
        %v896 = vunpack.c.l.b16 %v744
        %v897 = vunpack.c.l.b16 %v745
        %v898 = vunpack.c.h.b16 %v745
        %v899 = vunpack.c.l.b16 %v746
        %v900 = vunpack.c.l.b16 %v747
        %v901 = vunpack.c.h.b16 %v747
        %v902 = vunpack.c.l.b16 %v748
        %v903 = vunpack.c.l.b16 %v749
        %v904 = vunpack.c.h.b16 %v749
        %v905 = vunpack.c.l.b16 %v750
        %v906 = vunpack.c.l.b16 %v751
        %v907 = vunpack.c.h.b16 %v751
        %v908 = vunpack.c.l.b16 %v752
        %v909 = vunpack.c.l.b16 %v753
        %v910 = vunpack.c.h.b16 %v753
        %v911 = vunpack.c.l.b16 %v754
        %v912 = vunpack.c.l.b16 %v755
        %v913 = vunpack.c.h.b16 %v755
        %v914 = vunpack.c.l.b16 %v756
        %v915 = vunpack.c.l.b16 %v757
        %v916 = vunpack.c.h.b16 %v757
        %v917 = vunpack.c.l.b16 %v758
        %v918 = vunpack.c.l.b16 %v759
        %v919 = vunpack.c.h.b16 %v759
        %v920 = vunpack.c.l.b16 %v760
        %v921 = vunpack.c.l.b16 %v761
        %v922 = vunpack.c.h.b16 %v761
        %v923 = vunpack.c.l.b16 %v762
        %v924 = vunpack.c.l.b16 %v763
        %v925 = vunpack.c.h.b16 %v763
        %v926 = vunpack.c.l.b16 %v764
        %v927 = vunpack.c.l.b16 %v765
        %v928 = vunpack.c.h.b16 %v765
        %v929 = vunpack.c.l.b16 %v766
        %v930 = vunpack.c.l.b16 %v767
        %v931 = vunpack.c.h.b16 %v767
        %v932 = vunpack.c.l.b16 %v768
        %v933 = vunpack.c.l.b16 %v769
        %v934 = vunpack.c.h.b16 %v769
        %v935 = vunpack.c.l.b16 %v770
        %v936 = vunpack.c.l.b16 %v771
        %v937 = vunpack.c.h.b16 %v771
        %v938 = vunpack.c.l.b16 %v772
        %v939 = vpack.c.b16 %v846, %v843
        %v940 = vpack.c.b16 %v847, %v844
        %v941 = vpack.c.b16 %v848, %v845
        %v942 = vpack.c.b16 %v852, %v849
        %v943 = vpack.c.b16 %v853, %v850
        %v944 = vpack.c.b16 %v854, %v851
        %v945 = vpack.c.b16 %v858, %v855
        %v946 = vpack.c.b16 %v859, %v856
        %v947 = vpack.c.b16 %v860, %v857
        %v948 = vpack.c.b16 %v864, %v861
        %v949 = vpack.c.b16 %v865, %v862
        %v950 = vpack.c.b16 %v866, %v863
        %v951 = vpack.c.b16 %v870, %v867
        %v952 = vpack.c.b16 %v871, %v868
        %v953 = vpack.c.b16 %v872, %v869
        %v954 = vpack.c.b16 %v876, %v873
        %v955 = vpack.c.b16 %v877, %v874
        %v956 = vpack.c.b16 %v878, %v875
        %v957 = vpack.c.b16 %v882, %v879
        %v958 = vpack.c.b16 %v883, %v880
        %v959 = vpack.c.b16 %v884, %v881
        %v960 = vpack.c.b16 %v888, %v885
        %v961 = vpack.c.b16 %v889, %v886
        %v962 = vpack.c.b16 %v890, %v887
        %v963 = vpack.c.b16 %v894, %v891
        %v964 = vpack.c.b16 %v895, %v892
        %v965 = vpack.c.b16 %v896, %v893
        %v966 = vpack.c.b16 %v900, %v897
        %v967 = vpack.c.b16 %v901, %v898
        %v968 = vpack.c.b16 %v902, %v899
        %v969 = vpack.c.b16 %v906, %v903
        %v970 = vpack.c.b16 %v907, %v904
        %v971 = vpack.c.b16 %v908, %v905
        %v972 = vpack.c.b16 %v912, %v909
        %v973 = vpack.c.b16 %v913, %v910
        %v974 = vpack.c.b16 %v914, %v911
        %v975 = vpack.c.b16 %v918, %v915
        %v976 = vpack.c.b16 %v919, %v916
        %v977 = vpack.c.b16 %v920, %v917
        %v978 = vpack.c.b16 %v924, %v921
        %v979 = vpack.c.b16 %v925, %v922
        %v980 = vpack.c.b16 %v926, %v923
        %v981 = vpack.c.b16 %v930, %v927
        %v982 = vpack.c.b16 %v931, %v928
        %v983 = vpack.c.b16 %v932, %v929
        %v984 = vpack.c.b16 %v936, %v933
        %v985 = vpack.c.b16 %v937, %v934
        %v986 = vpack.c.b16 %v938, %v935
        %1035 = vmatpush.bf16.msra.mxu0 %v960
        %1036 = vmatpush.bf16.msra.mxu0 %v957
        %1037 = vmatpush.bf16.msra.mxu0 %v954
        %1038 = vmatpush.bf16.msra.mxu0 %v951
        %1039 = vmatpush.bf16.msra.mxu0 %v948
        %1040 = vmatpush.bf16.msra.mxu0 %v945
        %1041 = vmatpush.bf16.msra.mxu0 %v942
        %1042 = vmatpush.bf16.msra.mxu0 %v939
        %1043 = vmatmul.bf16.gmra.mxu0 %v775
        %v1044 = vpop.f32.mrf.mxu0
        %v1045 = vadd.f32 0.0, %v1044
        %v1046 = vpop.f32.mrf.mxu0
        %1047 = vdwg.mxu0
        %1048 = vmatpush.bf16.msra.mxu0 %v984
        %1049 = vmatpush.bf16.msra.mxu0 %v981
        %1050 = vmatpush.bf16.msra.mxu0 %v978
        %1051 = vmatpush.bf16.msra.mxu0 %v975
        %1052 = vmatpush.bf16.msra.mxu0 %v972
        %1053 = vmatpush.bf16.msra.mxu0 %v969
        %1054 = vmatpush.bf16.msra.mxu0 %v966
        %1055 = vmatpush.bf16.msra.mxu0 %v963
        %1056 = vmatmul.bf16.gmra.mxu0 %v776
        %v1057 = vpop.f32.mrf.mxu0
        %v1058 = vadd.f32 %v1045, %v1057
        %v1059 = vpop.f32.mrf.mxu0
        %1060 = vdwg.mxu0
        %1061 = vmatpush.bf16.msra.mxu0 %v961
        %1062 = vmatpush.bf16.msra.mxu0 %v958
        %1063 = vmatpush.bf16.msra.mxu0 %v955
        %1064 = vmatpush.bf16.msra.mxu0 %v952
        %1065 = vmatpush.bf16.msra.mxu0 %v949
        %1066 = vmatpush.bf16.msra.mxu0 %v946
        %1067 = vmatpush.bf16.msra.mxu0 %v943
        %1068 = vmatpush.bf16.msra.mxu0 %v940
        %1069 = vmatmul.bf16.gmra.mxu0 %v775
        %v1070 = vpop.f32.mrf.mxu0
        %v1071 = vadd.f32 0.0, %v1070
        %v1072 = vpop.f32.mrf.mxu0
        %1073 = vdwg.mxu0
        %1074 = vmatpush.bf16.msra.mxu0 %v985
        %1075 = vmatpush.bf16.msra.mxu0 %v982
        %1076 = vmatpush.bf16.msra.mxu0 %v979
        %1077 = vmatpush.bf16.msra.mxu0 %v976
        %1078 = vmatpush.bf16.msra.mxu0 %v973
        %1079 = vmatpush.bf16.msra.mxu0 %v970
        %1080 = vmatpush.bf16.msra.mxu0 %v967
        %1081 = vmatpush.bf16.msra.mxu0 %v964
        %1082 = vmatmul.bf16.gmra.mxu0 %v776
        %v1083 = vpop.f32.mrf.mxu0
        %v1084 = vadd.f32 %v1071, %v1083
        %v1085 = vpop.f32.mrf.mxu0
        %1086 = vdwg.mxu0
        %1087 = vmatpush.bf16.msra.mxu0 %v962
        %1088 = vmatpush.bf16.msra.mxu0 %v959
        %1089 = vmatpush.bf16.msra.mxu0 %v956
        %1090 = vmatpush.bf16.msra.mxu0 %v953
        %1091 = vmatpush.bf16.msra.mxu0 %v950
        %1092 = vmatpush.bf16.msra.mxu0 %v947
        %1093 = vmatpush.bf16.msra.mxu0 %v944
        %1094 = vmatpush.bf16.msra.mxu0 %v941
        %1095 = vmatmul.bf16.gmra.mxu0 %v775
        %v1096 = vpop.f32.mrf.mxu0
        %v1097 = vadd.f32 0.0, %v1096
        %v1098 = vpop.f32.mrf.mxu0
        %1099 = vdwg.mxu0
        %1100 = vmatpush.bf16.msra.mxu0 %v986
        %1101 = vmatpush.bf16.msra.mxu0 %v983
        %1102 = vmatpush.bf16.msra.mxu0 %v980
        %1103 = vmatpush.bf16.msra.mxu0 %v977
        %1104 = vmatpush.bf16.msra.mxu0 %v974
        %1105 = vmatpush.bf16.msra.mxu0 %v971
        %1106 = vmatpush.bf16.msra.mxu0 %v968
        %1107 = vmatpush.bf16.msra.mxu0 %v965
        %1108 = vmatmul.bf16.gmra.mxu0 %v776
        %v1109 = vpop.f32.mrf.mxu0
        %v1110 = vadd.f32 %v1097, %v1109
        %v1111 = vpop.f32.mrf.mxu0
        %1112 = vdwg.mxu0
        %v1113 = vpack.c.bf16 %v1084, %v1058
        %v1114 = vpack.c.bf16 %v1110, %v1110
        %v1117 = vrot.slane %v1113, 2
        %v1118 = vrot.slane %v1114, 4
        %v1119 = vrot.slane %v1114, 6
        %vm1120 = vcmask 1041408
        %v1123 = vsel %vm1120, %v1113, %v1117
        %vm1124 = vcmask 1045508
        %v1127 = vsel %vm1124, %v1118, %v1119
        %vm1128 = vcmask 1043456
        %v1129 = vsel %vm1128, %v1123, %v1127
        %vm1131 = vcmask 553988
        %vm1132 = vmand %vm1131, %vm689
        %vm1133 = vmor %vm1132, %vm687
        %v1134 = vld [vmem:[#allocation2] sm:$0x3f]
        %v1135 = vsel %vm1133, %v1129, %v1134
        %1136 = vst [vmem:[#allocation2] sm:$0x3f] %v1135
        %v1137 = vld [vmem:[%s1] sm:$0x7]
        %v1138 = vld [vmem:[#allocation2] sm:$0x3f]
        %s1139 = scalar_lea.vmem %s1, 4
        %v1140 = vld [vmem:[%s1139] sm:$0x7]
        %1142 = vst [vmem:[#allocation1] ss:$4 sm:$0xff] %v1138
        %v1143 = vld.sshfl [vmem:[#allocation1] sm:$0xff pattern:$0x73625140]
        %v1145 = vld.sshfl [vmem:[#allocation1 + $0x8] sm:$0xff pattern:$0x73625140]
        %v1147 = vld.sshfl [vmem:[#allocation1 + $0x10] sm:$0xff pattern:$0x73625140]
        %1149 = vrot.lane.b32.xlu0 %v1143, 127
        %v1150 = vpop.permute.xlu0 %1149
        %1151 = vrot.lane.b32.xlu0 %v1145, 127
        %v1152 = vpop.permute.xlu0 %1151
        %1153 = vrot.lane.b32.xlu0 %v1147, 127
        %v1154 = vpop.permute.xlu0 %1153
        %vm1155 = vcmask 1039360
        %v1156 = vsel %vm1155, %v1150, %v1152
        %v1157 = vsel %vm1155, %v1152, %v1154
        %vm1158 = vcmask 23552
        %v1160 = vsel %vm1158, %v1140, 0
        %vm1162 = vcmask 1040384
        %v1163 = vsel %vm1162, 4294967295, 65535
        %v1164 = vsel %vm1120, %v1163, 0
        %v1166 = vand.u32 %v1156, %v1164
        %v1169 = vand.u32 %v1157, %v1164
        %v1172 = vand.u32 %v1154, %v1164
        %1174 = vmatpush.bf16.msra.mxu0 0
        %1175 = vmatpush.bf16.msra.mxu0 0
        %1176 = vmatpush.bf16.msra.mxu0 0
        %1177 = vmatpush.bf16.msra.mxu0 0
        %1178 = vmatpush.bf16.msra.mxu0 0
        %1179 = vmatpush.bf16.msra.mxu0 0
        %1180 = vmatpush.bf16.msra.mxu0 0
        %1181 = vmatpush.bf16.msra.mxu0 %v1166
        %1182 = vmatmul.bf16.gmra.mxu0 %v1160
        %v1183 = vpop.f32.mrf.mxu0
        %v1184 = vadd.f32 0.0, %v1183
        %v1185 = vpop.f32.mrf.mxu0
        %1186 = vdwg.mxu0
        %1187 = vmatpush.bf16.msra.mxu0 0
        %1188 = vmatpush.bf16.msra.mxu0 0
        %1189 = vmatpush.bf16.msra.mxu0 0
        %1190 = vmatpush.bf16.msra.mxu0 0
        %1191 = vmatpush.bf16.msra.mxu0 0
        %1192 = vmatpush.bf16.msra.mxu0 0
        %1193 = vmatpush.bf16.msra.mxu0 0
        %1194 = vmatpush.bf16.msra.mxu0 %v1169
        %1195 = vmatmul.bf16.gmra.mxu0 %v1160
        %v1196 = vpop.f32.mrf.mxu0
        %v1197 = vadd.f32 0.0, %v1196
        %v1198 = vpop.f32.mrf.mxu0
        %1199 = vdwg.mxu0
        %1200 = vmatpush.bf16.msra.mxu0 0
        %1201 = vmatpush.bf16.msra.mxu0 0
        %1202 = vmatpush.bf16.msra.mxu0 0
        %1203 = vmatpush.bf16.msra.mxu0 0
        %1204 = vmatpush.bf16.msra.mxu0 0
        %1205 = vmatpush.bf16.msra.mxu0 0
        %1206 = vmatpush.bf16.msra.mxu0 0
        %1207 = vmatpush.bf16.msra.mxu0 %v1172
        %1208 = vmatmul.bf16.gmra.mxu0 %v1160
        %v1209 = vpop.f32.mrf.mxu0
        %v1210 = vadd.f32 0.0, %v1209
        %v1211 = vpop.f32.mrf.mxu0
        %1212 = vdwg.mxu0
        %1213 = vst [vmem:[#allocation1] ss:$4 sm:$0xff] %v1138
        %v1214 = vld.sshfl [vmem:[#allocation1] sm:$0xff pattern:$0x73625140]
        %v1215 = vld.sshfl [vmem:[#allocation1 + $0x8] sm:$0xff pattern:$0x73625140]
        %v1216 = vld.sshfl [vmem:[#allocation1 + $0x10] sm:$0xff pattern:$0x73625140]
        %v1218 = vsel %vm1158, %v1137, 0
        %v1220 = vand.u32 %v1214, %v1164
        %v1222 = vand.u32 %v1215, %v1164
        %v1224 = vand.u32 %v1216, %v1164
        %1226 = vmatpush.bf16.msra.mxu0 0
        %1227 = vmatpush.bf16.msra.mxu0 0
        %1228 = vmatpush.bf16.msra.mxu0 0
        %1229 = vmatpush.bf16.msra.mxu0 0
        %1230 = vmatpush.bf16.msra.mxu0 0
        %1231 = vmatpush.bf16.msra.mxu0 0
        %1232 = vmatpush.bf16.msra.mxu0 0
        %1233 = vmatpush.bf16.msra.mxu0 %v1220
        %1234 = vmatmul.bf16.gmra.mxu0 %v1218
        %v1235 = vpop.f32.mrf.mxu0
        %v1236 = vadd.f32 %v1184, %v1235
        %v1237 = vpop.f32.mrf.mxu0
        %1238 = vdwg.mxu0
        %1239 = vmatpush.bf16.msra.mxu0 0
        %1240 = vmatpush.bf16.msra.mxu0 0
        %1241 = vmatpush.bf16.msra.mxu0 0
        %1242 = vmatpush.bf16.msra.mxu0 0
        %1243 = vmatpush.bf16.msra.mxu0 0
        %1244 = vmatpush.bf16.msra.mxu0 0
        %1245 = vmatpush.bf16.msra.mxu0 0
        %1246 = vmatpush.bf16.msra.mxu0 %v1222
        %1247 = vmatmul.bf16.gmra.mxu0 %v1218
        %v1248 = vpop.f32.mrf.mxu0
        %v1249 = vadd.f32 %v1197, %v1248
        %v1250 = vpop.f32.mrf.mxu0
        %1251 = vdwg.mxu0
        %1252 = vmatpush.bf16.msra.mxu0 0
        %1253 = vmatpush.bf16.msra.mxu0 0
        %1254 = vmatpush.bf16.msra.mxu0 0
        %1255 = vmatpush.bf16.msra.mxu0 0
        %1256 = vmatpush.bf16.msra.mxu0 0
        %1257 = vmatpush.bf16.msra.mxu0 0
        %1258 = vmatpush.bf16.msra.mxu0 0
        %1259 = vmatpush.bf16.msra.mxu0 %v1224
        %1260 = vmatmul.bf16.gmra.mxu0 %v1218
        %v1261 = vpop.f32.mrf.mxu0
        %v1262 = vadd.f32 %v1210, %v1261
        %v1263 = vpop.f32.mrf.mxu0
        %1264 = vdwg.mxu0
        %s1265 = scalar_lea.vmem %s1, 8
        %v1266 = vld [vmem:[%s1265] sm:$0x7]
        %v1267 = vld [vmem:[#allocation2] sm:$0x3f]
        %1269 = vst [vmem:[#allocation1] ss:$4 sm:$0xff] %v1267
        %v1270 = vld.sshfl [vmem:[#allocation1] sm:$0xff pattern:$0x73625140]
        %v1272 = vld.sshfl [vmem:[#allocation1 + $0x8] sm:$0xff pattern:$0x73625140]
        %v1274 = vld.sshfl [vmem:[#allocation1 + $0x10] sm:$0xff pattern:$0x73625140]
        %1276 = vrot.lane.b32.xlu0 %v1270, 126
        %v1277 = vpop.permute.xlu0 %1276
        %1278 = vrot.lane.b32.xlu0 %v1272, 126
        %v1279 = vpop.permute.xlu0 %1278
        %1280 = vrot.lane.b32.xlu0 %v1274, 126
        %v1281 = vpop.permute.xlu0 %1280
        %vm1282 = vcmask 1031168
        %v1283 = vsel %vm1282, %v1277, %v1279
        %v1284 = vsel %vm1282, %v1279, %v1281
        %v1286 = vsel %vm1158, %v1266, 0
        %v1289 = vand.u32 %v1283, %v1164
        %v1292 = vand.u32 %v1284, %v1164
        %v1295 = vand.u32 %v1281, %v1164
        %1297 = vmatpush.bf16.msra.mxu0 0
        %1298 = vmatpush.bf16.msra.mxu0 0
        %1299 = vmatpush.bf16.msra.mxu0 0
        %1300 = vmatpush.bf16.msra.mxu0 0
        %1301 = vmatpush.bf16.msra.mxu0 0
        %1302 = vmatpush.bf16.msra.mxu0 0
        %1303 = vmatpush.bf16.msra.mxu0 0
        %1304 = vmatpush.bf16.msra.mxu0 %v1289
        %1305 = vmatmul.bf16.gmra.mxu0 %v1286
        %v1306 = vpop.f32.mrf.mxu0
        %v1307 = vadd.f32 0.0, %v1306
        %v1308 = vpop.f32.mrf.mxu0
        %1309 = vdwg.mxu0
        %1310 = vmatpush.bf16.msra.mxu0 0
        %1311 = vmatpush.bf16.msra.mxu0 0
        %1312 = vmatpush.bf16.msra.mxu0 0
        %1313 = vmatpush.bf16.msra.mxu0 0
        %1314 = vmatpush.bf16.msra.mxu0 0
        %1315 = vmatpush.bf16.msra.mxu0 0
        %1316 = vmatpush.bf16.msra.mxu0 0
        %1317 = vmatpush.bf16.msra.mxu0 %v1292
        %1318 = vmatmul.bf16.gmra.mxu0 %v1286
        %v1319 = vpop.f32.mrf.mxu0
        %v1320 = vadd.f32 0.0, %v1319
        %v1321 = vpop.f32.mrf.mxu0
        %1322 = vdwg.mxu0
        %1323 = vmatpush.bf16.msra.mxu0 0
        %1324 = vmatpush.bf16.msra.mxu0 0
        %1325 = vmatpush.bf16.msra.mxu0 0
        %1326 = vmatpush.bf16.msra.mxu0 0
        %1327 = vmatpush.bf16.msra.mxu0 0
        %1328 = vmatpush.bf16.msra.mxu0 0
        %1329 = vmatpush.bf16.msra.mxu0 0
        %1330 = vmatpush.bf16.msra.mxu0 %v1295
        %1331 = vmatmul.bf16.gmra.mxu0 %v1286
        %v1332 = vpop.f32.mrf.mxu0
        %v1333 = vadd.f32 0.0, %v1332
        %v1334 = vpop.f32.mrf.mxu0
        %1335 = vdwg.mxu0
        %v1336 = vadd.f32 %v1236, %v1307
        %v1337 = vadd.f32 %v1249, %v1320
        %v1338 = vadd.f32 %v1262, %v1333
        %s1339 = scalar_lea.vmem %s1, 12
        %v1340 = vld [vmem:[%s1339] sm:$0x7]
        %v1341 = vld [vmem:[#allocation2] sm:$0x3f]
        %1343 = vst [vmem:[#allocation1] ss:$4 sm:$0xff] %v1341
        %v1344 = vld.sshfl [vmem:[#allocation1] sm:$0xff pattern:$0x73625140]
        %v1346 = vld.sshfl [vmem:[#allocation1 + $0x8] sm:$0xff pattern:$0x73625140]
        %v1348 = vld.sshfl [vmem:[#allocation1 + $0x10] sm:$0xff pattern:$0x73625140]
        %1350 = vrot.lane.b32.xlu0 %v1344, 125
        %v1351 = vpop.permute.xlu0 %1350
        %1352 = vrot.lane.b32.xlu0 %v1346, 125
        %v1353 = vpop.permute.xlu0 %1352
        %1354 = vrot.lane.b32.xlu0 %v1348, 125
        %v1355 = vpop.permute.xlu0 %1354
        %vm1356 = vcmask 1022976
        %v1357 = vsel %vm1356, %v1351, %v1353
        %v1358 = vsel %vm1356, %v1353, %v1355
        %v1360 = vsel %vm1158, %v1340, 0
        %v1363 = vand.u32 %v1357, %v1164
        %v1366 = vand.u32 %v1358, %v1164
        %v1369 = vand.u32 %v1355, %v1164
        %1371 = vmatpush.bf16.msra.mxu0 0
        %1372 = vmatpush.bf16.msra.mxu0 0
        %1373 = vmatpush.bf16.msra.mxu0 0
        %1374 = vmatpush.bf16.msra.mxu0 0
        %1375 = vmatpush.bf16.msra.mxu0 0
        %1376 = vmatpush.bf16.msra.mxu0 0
        %1377 = vmatpush.bf16.msra.mxu0 0
        %1378 = vmatpush.bf16.msra.mxu0 %v1363
        %1379 = vmatmul.bf16.gmra.mxu0 %v1360
        %v1380 = vpop.f32.mrf.mxu0
        %v1381 = vadd.f32 0.0, %v1380
        %v1382 = vpop.f32.mrf.mxu0
        %1383 = vdwg.mxu0
        %1384 = vmatpush.bf16.msra.mxu0 0
        %1385 = vmatpush.bf16.msra.mxu0 0
        %1386 = vmatpush.bf16.msra.mxu0 0
        %1387 = vmatpush.bf16.msra.mxu0 0
        %1388 = vmatpush.bf16.msra.mxu0 0
        %1389 = vmatpush.bf16.msra.mxu0 0
        %1390 = vmatpush.bf16.msra.mxu0 0
        %1391 = vmatpush.bf16.msra.mxu0 %v1366
        %1392 = vmatmul.bf16.gmra.mxu0 %v1360
        %v1393 = vpop.f32.mrf.mxu0
        %v1394 = vadd.f32 0.0, %v1393
        %v1395 = vpop.f32.mrf.mxu0
        %1396 = vdwg.mxu0
        %1397 = vmatpush.bf16.msra.mxu0 0
        %1398 = vmatpush.bf16.msra.mxu0 0
        %1399 = vmatpush.bf16.msra.mxu0 0
        %1400 = vmatpush.bf16.msra.mxu0 0
        %1401 = vmatpush.bf16.msra.mxu0 0
        %1402 = vmatpush.bf16.msra.mxu0 0
        %1403 = vmatpush.bf16.msra.mxu0 0
        %1404 = vmatpush.bf16.msra.mxu0 %v1369
        %1405 = vmatmul.bf16.gmra.mxu0 %v1360
        %v1406 = vpop.f32.mrf.mxu0
        %v1407 = vadd.f32 0.0, %v1406
        %v1408 = vpop.f32.mrf.mxu0
        %1409 = vdwg.mxu0
        %v1410 = vadd.f32 %v1336, %v1381
        %v1411 = vadd.f32 %v1337, %v1394
        %v1412 = vadd.f32 %v1338, %v1407
        %s1413 = scalar_lea.vmem %s1, 16
        %v1414 = vld [vmem:[%s1413] sm:$0x7]
        %v1415 = vld [vmem:[#allocation2] sm:$0x3f]
        %1417 = vst [vmem:[#allocation1] ss:$4 sm:$0xff] %v1415
        %v1418 = vld.sshfl [vmem:[#allocation1] sm:$0xff pattern:$0x73625140]
        %v1420 = vld.sshfl [vmem:[#allocation1 + $0x8] sm:$0xff pattern:$0x73625140]
        %v1422 = vld.sshfl [vmem:[#allocation1 + $0x10] sm:$0xff pattern:$0x73625140]
        %1424 = vrot.lane.b32.xlu0 %v1418, 110
        %v1425 = vpop.permute.xlu0 %1424
        %1426 = vrot.lane.b32.xlu0 %v1420, 110
        %v1427 = vpop.permute.xlu0 %1426
        %1428 = vrot.lane.b32.xlu0 %v1422, 110
        %v1429 = vpop.permute.xlu0 %1428
        %vm1430 = vcmask 900096
        %v1431 = vsel %vm1430, %v1425, %v1427
        %v1432 = vsel %vm1430, %v1427, %v1429
        %v1434 = vsel %vm1158, %v1414, 0
        %v1437 = vand.u32 %v1431, %v1164
        %v1440 = vand.u32 %v1432, %v1164
        %v1443 = vand.u32 %v1429, %v1164
        %1445 = vmatpush.bf16.msra.mxu0 0
        %1446 = vmatpush.bf16.msra.mxu0 0
        %1447 = vmatpush.bf16.msra.mxu0 0
        %1448 = vmatpush.bf16.msra.mxu0 0
        %1449 = vmatpush.bf16.msra.mxu0 0
        %1450 = vmatpush.bf16.msra.mxu0 0
        %1451 = vmatpush.bf16.msra.mxu0 0
        %1452 = vmatpush.bf16.msra.mxu0 %v1437
        %1453 = vmatmul.bf16.gmra.mxu0 %v1434
        %v1454 = vpop.f32.mrf.mxu0
        %v1455 = vadd.f32 0.0, %v1454
        %v1456 = vpop.f32.mrf.mxu0
        %1457 = vdwg.mxu0
        %1458 = vmatpush.bf16.msra.mxu0 0
        %1459 = vmatpush.bf16.msra.mxu0 0
        %1460 = vmatpush.bf16.msra.mxu0 0
        %1461 = vmatpush.bf16.msra.mxu0 0
        %1462 = vmatpush.bf16.msra.mxu0 0
        %1463 = vmatpush.bf16.msra.mxu0 0
        %1464 = vmatpush.bf16.msra.mxu0 0
        %1465 = vmatpush.bf16.msra.mxu0 %v1440
        %1466 = vmatmul.bf16.gmra.mxu0 %v1434
        %v1467 = vpop.f32.mrf.mxu0
        %v1468 = vadd.f32 0.0, %v1467
        %v1469 = vpop.f32.mrf.mxu0
        %1470 = vdwg.mxu0
        %1471 = vmatpush.bf16.msra.mxu0 0
        %1472 = vmatpush.bf16.msra.mxu0 0
        %1473 = vmatpush.bf16.msra.mxu0 0
        %1474 = vmatpush.bf16.msra.mxu0 0
        %1475 = vmatpush.bf16.msra.mxu0 0
        %1476 = vmatpush.bf16.msra.mxu0 0
        %1477 = vmatpush.bf16.msra.mxu0 0
        %1478 = vmatpush.bf16.msra.mxu0 %v1443
        %1479 = vmatmul.bf16.gmra.mxu0 %v1434
        %v1480 = vpop.f32.mrf.mxu0
        %v1481 = vadd.f32 0.0, %v1480
        %v1482 = vpop.f32.mrf.mxu0
        %1483 = vdwg.mxu0
        %v1484 = vadd.f32 %v1410, %v1455
        %v1485 = vadd.f32 %v1411, %v1468
        %v1486 = vadd.f32 %v1412, %v1481
        %s1487 = scalar_lea.vmem %s1, 20
        %v1488 = vld [vmem:[%s1487] sm:$0x7]
        %v1489 = vld [vmem:[#allocation2] sm:$0x3f]
        %1491 = vst [vmem:[#allocation1] ss:$4 sm:$0xff] %v1489
        %v1492 = vld.sshfl [vmem:[#allocation1] sm:$0xff pattern:$0x73625140]
        %v1494 = vld.sshfl [vmem:[#allocation1 + $0x8] sm:$0xff pattern:$0x73625140]
        %v1496 = vld.sshfl [vmem:[#allocation1 + $0x10] sm:$0xff pattern:$0x73625140]
        %1498 = vrot.lane.b32.xlu0 %v1492, 109
        %v1499 = vpop.permute.xlu0 %1498
        %1500 = vrot.lane.b32.xlu0 %v1494, 109
        %v1501 = vpop.permute.xlu0 %1500
        %1502 = vrot.lane.b32.xlu0 %v1496, 109
        %v1503 = vpop.permute.xlu0 %1502
        %vm1504 = vcmask 891904
        %v1505 = vsel %vm1504, %v1499, %v1501
        %v1506 = vsel %vm1504, %v1501, %v1503
        %v1508 = vsel %vm1158, %v1488, 0
        %v1511 = vand.u32 %v1505, %v1164
        %v1514 = vand.u32 %v1506, %v1164
        %v1517 = vand.u32 %v1503, %v1164
        %1519 = vmatpush.bf16.msra.mxu0 0
        %1520 = vmatpush.bf16.msra.mxu0 0
        %1521 = vmatpush.bf16.msra.mxu0 0
        %1522 = vmatpush.bf16.msra.mxu0 0
        %1523 = vmatpush.bf16.msra.mxu0 0
        %1524 = vmatpush.bf16.msra.mxu0 0
        %1525 = vmatpush.bf16.msra.mxu0 0
        %1526 = vmatpush.bf16.msra.mxu0 %v1511
        %1527 = vmatmul.bf16.gmra.mxu0 %v1508
        %v1528 = vpop.f32.mrf.mxu0
        %v1529 = vadd.f32 0.0, %v1528
        %v1530 = vpop.f32.mrf.mxu0
        %1531 = vdwg.mxu0
        %1532 = vmatpush.bf16.msra.mxu0 0
        %1533 = vmatpush.bf16.msra.mxu0 0
        %1534 = vmatpush.bf16.msra.mxu0 0
        %1535 = vmatpush.bf16.msra.mxu0 0
        %1536 = vmatpush.bf16.msra.mxu0 0
        %1537 = vmatpush.bf16.msra.mxu0 0
        %1538 = vmatpush.bf16.msra.mxu0 0
        %1539 = vmatpush.bf16.msra.mxu0 %v1514
        %1540 = vmatmul.bf16.gmra.mxu0 %v1508
        %v1541 = vpop.f32.mrf.mxu0
        %v1542 = vadd.f32 0.0, %v1541
        %v1543 = vpop.f32.mrf.mxu0
        %1544 = vdwg.mxu0
        %1545 = vmatpush.bf16.msra.mxu0 0
        %1546 = vmatpush.bf16.msra.mxu0 0
        %1547 = vmatpush.bf16.msra.mxu0 0
        %1548 = vmatpush.bf16.msra.mxu0 0
        %1549 = vmatpush.bf16.msra.mxu0 0
        %1550 = vmatpush.bf16.msra.mxu0 0
        %1551 = vmatpush.bf16.msra.mxu0 0
        %1552 = vmatpush.bf16.msra.mxu0 %v1517
        %1553 = vmatmul.bf16.gmra.mxu0 %v1508
        %v1554 = vpop.f32.mrf.mxu0
        %v1555 = vadd.f32 0.0, %v1554
        %v1556 = vpop.f32.mrf.mxu0
        %1557 = vdwg.mxu0
        %v1558 = vadd.f32 %v1484, %v1529
        %v1559 = vadd.f32 %v1485, %v1542
        %v1560 = vadd.f32 %v1486, %v1555
        %s1561 = scalar_lea.vmem %s1, 24
        %v1562 = vld [vmem:[%s1561] sm:$0x7]
        %v1563 = vld [vmem:[#allocation2] sm:$0x3f]
        %1565 = vst [vmem:[#allocation1] ss:$4 sm:$0xff] %v1563
        %v1566 = vld.sshfl [vmem:[#allocation1] sm:$0xff pattern:$0x73625140]
        %v1568 = vld.sshfl [vmem:[#allocation1 + $0x8] sm:$0xff pattern:$0x73625140]
        %v1570 = vld.sshfl [vmem:[#allocation1 + $0x10] sm:$0xff pattern:$0x73625140]
        %1572 = vrot.lane.b32.xlu0 %v1566, 108
        %v1573 = vpop.permute.xlu0 %1572
        %1574 = vrot.lane.b32.xlu0 %v1568, 108
        %v1575 = vpop.permute.xlu0 %1574
        %1576 = vrot.lane.b32.xlu0 %v1570, 108
        %v1577 = vpop.permute.xlu0 %1576
        %vm1578 = vcmask 883712
        %v1579 = vsel %vm1578, %v1573, %v1575
        %v1580 = vsel %vm1578, %v1575, %v1577
        %v1582 = vsel %vm1158, %v1562, 0
        %v1585 = vand.u32 %v1579, %v1164
        %v1588 = vand.u32 %v1580, %v1164
        %v1591 = vand.u32 %v1577, %v1164
        %1593 = vmatpush.bf16.msra.mxu0 0
        %1594 = vmatpush.bf16.msra.mxu0 0
        %1595 = vmatpush.bf16.msra.mxu0 0
        %1596 = vmatpush.bf16.msra.mxu0 0
        %1597 = vmatpush.bf16.msra.mxu0 0
        %1598 = vmatpush.bf16.msra.mxu0 0
        %1599 = vmatpush.bf16.msra.mxu0 0
        %1600 = vmatpush.bf16.msra.mxu0 %v1585
        %1601 = vmatmul.bf16.gmra.mxu0 %v1582
        %v1602 = vpop.f32.mrf.mxu0
        %v1603 = vadd.f32 0.0, %v1602
        %v1604 = vpop.f32.mrf.mxu0
        %1605 = vdwg.mxu0
        %1606 = vmatpush.bf16.msra.mxu0 0
        %1607 = vmatpush.bf16.msra.mxu0 0
        %1608 = vmatpush.bf16.msra.mxu0 0
        %1609 = vmatpush.bf16.msra.mxu0 0
        %1610 = vmatpush.bf16.msra.mxu0 0
        %1611 = vmatpush.bf16.msra.mxu0 0
        %1612 = vmatpush.bf16.msra.mxu0 0
        %1613 = vmatpush.bf16.msra.mxu0 %v1588
        %1614 = vmatmul.bf16.gmra.mxu0 %v1582
        %v1615 = vpop.f32.mrf.mxu0
        %v1616 = vadd.f32 0.0, %v1615
        %v1617 = vpop.f32.mrf.mxu0
        %1618 = vdwg.mxu0
        %1619 = vmatpush.bf16.msra.mxu0 0
        %1620 = vmatpush.bf16.msra.mxu0 0
        %1621 = vmatpush.bf16.msra.mxu0 0
        %1622 = vmatpush.bf16.msra.mxu0 0
        %1623 = vmatpush.bf16.msra.mxu0 0
        %1624 = vmatpush.bf16.msra.mxu0 0
        %1625 = vmatpush.bf16.msra.mxu0 0
        %1626 = vmatpush.bf16.msra.mxu0 %v1591
        %1627 = vmatmul.bf16.gmra.mxu0 %v1582
        %v1628 = vpop.f32.mrf.mxu0
        %v1629 = vadd.f32 0.0, %v1628
        %v1630 = vpop.f32.mrf.mxu0
        %1631 = vdwg.mxu0
        %v1632 = vadd.f32 %v1558, %v1603
        %v1633 = vadd.f32 %v1559, %v1616
        %v1634 = vadd.f32 %v1560, %v1629
        %s1635 = scalar_lea.vmem %s1, 28
        %v1636 = vld [vmem:[%s1635] sm:$0x7]
        %v1637 = vld [vmem:[#allocation2] sm:$0x3f]
        %1639 = vst [vmem:[#allocation1] ss:$4 sm:$0xff] %v1637
        %v1640 = vld.sshfl [vmem:[#allocation1] sm:$0xff pattern:$0x73625140]
        %v1642 = vld.sshfl [vmem:[#allocation1 + $0x8] sm:$0xff pattern:$0x73625140]
        %v1644 = vld.sshfl [vmem:[#allocation1 + $0x10] sm:$0xff pattern:$0x73625140]
        %1646 = vrot.lane.b32.xlu0 %v1640, 107
        %v1647 = vpop.permute.xlu0 %1646
        %1648 = vrot.lane.b32.xlu0 %v1642, 107
        %v1649 = vpop.permute.xlu0 %1648
        %1650 = vrot.lane.b32.xlu0 %v1644, 107
        %v1651 = vpop.permute.xlu0 %1650
        %vm1652 = vcmask 875520
        %v1653 = vsel %vm1652, %v1647, %v1649
        %v1654 = vsel %vm1652, %v1649, %v1651
        %v1656 = vsel %vm1158, %v1636, 0
        %v1659 = vand.u32 %v1653, %v1164
        %v1662 = vand.u32 %v1654, %v1164
        %v1665 = vand.u32 %v1651, %v1164
        %1667 = vmatpush.bf16.msra.mxu0 0
        %1668 = vmatpush.bf16.msra.mxu0 0
        %1669 = vmatpush.bf16.msra.mxu0 0
        %1670 = vmatpush.bf16.msra.mxu0 0
        %1671 = vmatpush.bf16.msra.mxu0 0
        %1672 = vmatpush.bf16.msra.mxu0 0
        %1673 = vmatpush.bf16.msra.mxu0 0
        %1674 = vmatpush.bf16.msra.mxu0 %v1659
        %1675 = vmatmul.bf16.gmra.mxu0 %v1656
        %v1676 = vpop.f32.mrf.mxu0
        %v1677 = vadd.f32 0.0, %v1676
        %v1678 = vpop.f32.mrf.mxu0
        %1679 = vdwg.mxu0
        %1680 = vmatpush.bf16.msra.mxu0 0
        %1681 = vmatpush.bf16.msra.mxu0 0
        %1682 = vmatpush.bf16.msra.mxu0 0
        %1683 = vmatpush.bf16.msra.mxu0 0
        %1684 = vmatpush.bf16.msra.mxu0 0
        %1685 = vmatpush.bf16.msra.mxu0 0
        %1686 = vmatpush.bf16.msra.mxu0 0
        %1687 = vmatpush.bf16.msra.mxu0 %v1662
        %1688 = vmatmul.bf16.gmra.mxu0 %v1656
        %v1689 = vpop.f32.mrf.mxu0
        %v1690 = vadd.f32 0.0, %v1689
        %v1691 = vpop.f32.mrf.mxu0
        %1692 = vdwg.mxu0
        %1693 = vmatpush.bf16.msra.mxu0 0
        %1694 = vmatpush.bf16.msra.mxu0 0
        %1695 = vmatpush.bf16.msra.mxu0 0
        %1696 = vmatpush.bf16.msra.mxu0 0
        %1697 = vmatpush.bf16.msra.mxu0 0
        %1698 = vmatpush.bf16.msra.mxu0 0
        %1699 = vmatpush.bf16.msra.mxu0 0
        %1700 = vmatpush.bf16.msra.mxu0 %v1665
        %1701 = vmatmul.bf16.gmra.mxu0 %v1656
        %v1702 = vpop.f32.mrf.mxu0
        %v1703 = vadd.f32 0.0, %v1702
        %v1704 = vpop.f32.mrf.mxu0
        %1705 = vdwg.mxu0
        %v1706 = vadd.f32 %v1632, %v1677
        %v1707 = vadd.f32 %v1633, %v1690
        %v1708 = vadd.f32 %v1634, %v1703
        %s1709 = scalar_lea.vmem %s1, 32
        %v1710 = vld [vmem:[%s1709] sm:$0x7]
        %v1711 = vld [vmem:[#allocation2] sm:$0x3f]
        %1713 = vst [vmem:[#allocation1] ss:$4 sm:$0xff] %v1711
        %v1714 = vld.sshfl [vmem:[#allocation1] sm:$0xff pattern:$0x73625140]
        %v1716 = vld.sshfl [vmem:[#allocation1 + $0x8] sm:$0xff pattern:$0x73625140]
        %v1718 = vld.sshfl [vmem:[#allocation1 + $0x10] sm:$0xff pattern:$0x73625140]
        %1720 = vrot.lane.b32.xlu0 %v1714, 92
        %v1721 = vpop.permute.xlu0 %1720
        %1722 = vrot.lane.b32.xlu0 %v1716, 92
        %v1723 = vpop.permute.xlu0 %1722
        %1724 = vrot.lane.b32.xlu0 %v1718, 92
        %v1725 = vpop.permute.xlu0 %1724
        %vm1726 = vcmask 752640
        %v1727 = vsel %vm1726, %v1721, %v1723
        %v1728 = vsel %vm1726, %v1723, %v1725
        %v1730 = vsel %vm1158, %v1710, 0
        %v1733 = vand.u32 %v1727, %v1164
        %v1736 = vand.u32 %v1728, %v1164
        %v1739 = vand.u32 %v1725, %v1164
        %1741 = vmatpush.bf16.msra.mxu0 0
        %1742 = vmatpush.bf16.msra.mxu0 0
        %1743 = vmatpush.bf16.msra.mxu0 0
        %1744 = vmatpush.bf16.msra.mxu0 0
        %1745 = vmatpush.bf16.msra.mxu0 0
        %1746 = vmatpush.bf16.msra.mxu0 0
        %1747 = vmatpush.bf16.msra.mxu0 0
        %1748 = vmatpush.bf16.msra.mxu0 %v1733
        %1749 = vmatmul.bf16.gmra.mxu0 %v1730
        %v1750 = vpop.f32.mrf.mxu0
        %v1751 = vadd.f32 0.0, %v1750
        %v1752 = vpop.f32.mrf.mxu0
        %1753 = vdwg.mxu0
        %1754 = vmatpush.bf16.msra.mxu0 0
        %1755 = vmatpush.bf16.msra.mxu0 0
        %1756 = vmatpush.bf16.msra.mxu0 0
        %1757 = vmatpush.bf16.msra.mxu0 0
        %1758 = vmatpush.bf16.msra.mxu0 0
        %1759 = vmatpush.bf16.msra.mxu0 0
        %1760 = vmatpush.bf16.msra.mxu0 0
        %1761 = vmatpush.bf16.msra.mxu0 %v1736
        %1762 = vmatmul.bf16.gmra.mxu0 %v1730
        %v1763 = vpop.f32.mrf.mxu0
        %v1764 = vadd.f32 0.0, %v1763
        %v1765 = vpop.f32.mrf.mxu0
        %1766 = vdwg.mxu0
        %1767 = vmatpush.bf16.msra.mxu0 0
        %1768 = vmatpush.bf16.msra.mxu0 0
        %1769 = vmatpush.bf16.msra.mxu0 0
        %1770 = vmatpush.bf16.msra.mxu0 0
        %1771 = vmatpush.bf16.msra.mxu0 0
        %1772 = vmatpush.bf16.msra.mxu0 0
        %1773 = vmatpush.bf16.msra.mxu0 0
        %1774 = vmatpush.bf16.msra.mxu0 %v1739
        %1775 = vmatmul.bf16.gmra.mxu0 %v1730
        %v1776 = vpop.f32.mrf.mxu0
        %v1777 = vadd.f32 0.0, %v1776
        %v1778 = vpop.f32.mrf.mxu0
        %1779 = vdwg.mxu0
        %v1780 = vadd.f32 %v1706, %v1751
        %v1781 = vadd.f32 %v1707, %v1764
        %v1782 = vadd.f32 %v1708, %v1777
        %s1783 = scalar_lea.vmem %s1, 36
        %v1784 = vld [vmem:[%s1783] sm:$0x7]
        %v1785 = vld [vmem:[#allocation2] sm:$0x3f]
        %1787 = vst [vmem:[#allocation1] ss:$4 sm:$0xff] %v1785
        %v1788 = vld.sshfl [vmem:[#allocation1] sm:$0xff pattern:$0x73625140]
        %v1790 = vld.sshfl [vmem:[#allocation1 + $0x8] sm:$0xff pattern:$0x73625140]
        %v1792 = vld.sshfl [vmem:[#allocation1 + $0x10] sm:$0xff pattern:$0x73625140]
        %1794 = vrot.lane.b32.xlu0 %v1788, 91
        %v1795 = vpop.permute.xlu0 %1794
        %1796 = vrot.lane.b32.xlu0 %v1790, 91
        %v1797 = vpop.permute.xlu0 %1796
        %1798 = vrot.lane.b32.xlu0 %v1792, 91
        %v1799 = vpop.permute.xlu0 %1798
        %vm1800 = vcmask 744448
        %v1801 = vsel %vm1800, %v1795, %v1797
        %v1802 = vsel %vm1800, %v1797, %v1799
        %v1804 = vsel %vm1158, %v1784, 0
        %v1807 = vand.u32 %v1801, %v1164
        %v1810 = vand.u32 %v1802, %v1164
        %v1813 = vand.u32 %v1799, %v1164
        %1815 = vmatpush.bf16.msra.mxu0 0
        %1816 = vmatpush.bf16.msra.mxu0 0
        %1817 = vmatpush.bf16.msra.mxu0 0
        %1818 = vmatpush.bf16.msra.mxu0 0
        %1819 = vmatpush.bf16.msra.mxu0 0
        %1820 = vmatpush.bf16.msra.mxu0 0
        %1821 = vmatpush.bf16.msra.mxu0 0
        %1822 = vmatpush.bf16.msra.mxu0 %v1807
        %1823 = vmatmul.bf16.gmra.mxu0 %v1804
        %v1824 = vpop.f32.mrf.mxu0
        %v1825 = vadd.f32 0.0, %v1824
        %v1826 = vpop.f32.mrf.mxu0
        %1827 = vdwg.mxu0
        %1828 = vmatpush.bf16.msra.mxu0 0
        %1829 = vmatpush.bf16.msra.mxu0 0
        %1830 = vmatpush.bf16.msra.mxu0 0
        %1831 = vmatpush.bf16.msra.mxu0 0
        %1832 = vmatpush.bf16.msra.mxu0 0
        %1833 = vmatpush.bf16.msra.mxu0 0
        %1834 = vmatpush.bf16.msra.mxu0 0
        %1835 = vmatpush.bf16.msra.mxu0 %v1810
        %1836 = vmatmul.bf16.gmra.mxu0 %v1804
        %v1837 = vpop.f32.mrf.mxu0
        %v1838 = vadd.f32 0.0, %v1837
        %v1839 = vpop.f32.mrf.mxu0
        %1840 = vdwg.mxu0
        %1841 = vmatpush.bf16.msra.mxu0 0
        %1842 = vmatpush.bf16.msra.mxu0 0
        %1843 = vmatpush.bf16.msra.mxu0 0
        %1844 = vmatpush.bf16.msra.mxu0 0
        %1845 = vmatpush.bf16.msra.mxu0 0
        %1846 = vmatpush.bf16.msra.mxu0 0
        %1847 = vmatpush.bf16.msra.mxu0 0
        %1848 = vmatpush.bf16.msra.mxu0 %v1813
        %1849 = vmatmul.bf16.gmra.mxu0 %v1804
        %v1850 = vpop.f32.mrf.mxu0
        %v1851 = vadd.f32 0.0, %v1850
        %v1852 = vpop.f32.mrf.mxu0
        %1853 = vdwg.mxu0
        %v1854 = vadd.f32 %v1780, %v1825
        %v1855 = vadd.f32 %v1781, %v1838
        %v1856 = vadd.f32 %v1782, %v1851
        %s1857 = scalar_lea.vmem %s1, 40
        %v1858 = vld [vmem:[%s1857] sm:$0x7]
        %v1859 = vld [vmem:[#allocation2] sm:$0x3f]
        %1861 = vst [vmem:[#allocation1] ss:$4 sm:$0xff] %v1859
        %v1862 = vld.sshfl [vmem:[#allocation1] sm:$0xff pattern:$0x73625140]
        %v1864 = vld.sshfl [vmem:[#allocation1 + $0x8] sm:$0xff pattern:$0x73625140]
        %v1866 = vld.sshfl [vmem:[#allocation1 + $0x10] sm:$0xff pattern:$0x73625140]
        %1868 = vrot.lane.b32.xlu0 %v1862, 90
        %v1869 = vpop.permute.xlu0 %1868
        %1870 = vrot.lane.b32.xlu0 %v1864, 90
        %v1871 = vpop.permute.xlu0 %1870
        %1872 = vrot.lane.b32.xlu0 %v1866, 90
        %v1873 = vpop.permute.xlu0 %1872
        %vm1874 = vcmask 736256
        %v1875 = vsel %vm1874, %v1869, %v1871
        %v1876 = vsel %vm1874, %v1871, %v1873
        %v1878 = vsel %vm1158, %v1858, 0
        %v1881 = vand.u32 %v1875, %v1164
        %v1884 = vand.u32 %v1876, %v1164
        %v1887 = vand.u32 %v1873, %v1164
        %1889 = vmatpush.bf16.msra.mxu0 0
        %1890 = vmatpush.bf16.msra.mxu0 0
        %1891 = vmatpush.bf16.msra.mxu0 0
        %1892 = vmatpush.bf16.msra.mxu0 0
        %1893 = vmatpush.bf16.msra.mxu0 0
        %1894 = vmatpush.bf16.msra.mxu0 0
        %1895 = vmatpush.bf16.msra.mxu0 0
        %1896 = vmatpush.bf16.msra.mxu0 %v1881
        %1897 = vmatmul.bf16.gmra.mxu0 %v1878
        %v1898 = vpop.f32.mrf.mxu0
        %v1899 = vadd.f32 0.0, %v1898
        %v1900 = vpop.f32.mrf.mxu0
        %1901 = vdwg.mxu0
        %1902 = vmatpush.bf16.msra.mxu0 0
        %1903 = vmatpush.bf16.msra.mxu0 0
        %1904 = vmatpush.bf16.msra.mxu0 0
        %1905 = vmatpush.bf16.msra.mxu0 0
        %1906 = vmatpush.bf16.msra.mxu0 0
        %1907 = vmatpush.bf16.msra.mxu0 0
        %1908 = vmatpush.bf16.msra.mxu0 0
        %1909 = vmatpush.bf16.msra.mxu0 %v1884
        %1910 = vmatmul.bf16.gmra.mxu0 %v1878
        %v1911 = vpop.f32.mrf.mxu0
        %v1912 = vadd.f32 0.0, %v1911
        %v1913 = vpop.f32.mrf.mxu0
        %1914 = vdwg.mxu0
        %1915 = vmatpush.bf16.msra.mxu0 0
        %1916 = vmatpush.bf16.msra.mxu0 0
        %1917 = vmatpush.bf16.msra.mxu0 0
        %1918 = vmatpush.bf16.msra.mxu0 0
        %1919 = vmatpush.bf16.msra.mxu0 0
        %1920 = vmatpush.bf16.msra.mxu0 0
        %1921 = vmatpush.bf16.msra.mxu0 0
        %1922 = vmatpush.bf16.msra.mxu0 %v1887
        %1923 = vmatmul.bf16.gmra.mxu0 %v1878
        %v1924 = vpop.f32.mrf.mxu0
        %v1925 = vadd.f32 0.0, %v1924
        %v1926 = vpop.f32.mrf.mxu0
        %1927 = vdwg.mxu0
        %v1928 = vadd.f32 %v1854, %v1899
        %v1929 = vadd.f32 %v1855, %v1912
        %v1930 = vadd.f32 %v1856, %v1925
        %s1931 = scalar_lea.vmem %s1, 44
        %v1932 = vld [vmem:[%s1931] sm:$0x7]
        %v1933 = vld [vmem:[#allocation2] sm:$0x3f]
        %1935 = vst [vmem:[#allocation1] ss:$4 sm:$0xff] %v1933
        %v1936 = vld.sshfl [vmem:[#allocation1] sm:$0xff pattern:$0x73625140]
        %v1938 = vld.sshfl [vmem:[#allocation1 + $0x8] sm:$0xff pattern:$0x73625140]
        %v1940 = vld.sshfl [vmem:[#allocation1 + $0x10] sm:$0xff pattern:$0x73625140]
        %1942 = vrot.lane.b32.xlu0 %v1936, 89
        %v1943 = vpop.permute.xlu0 %1942
        %1944 = vrot.lane.b32.xlu0 %v1938, 89
        %v1945 = vpop.permute.xlu0 %1944
        %1946 = vrot.lane.b32.xlu0 %v1940, 89
        %v1947 = vpop.permute.xlu0 %1946
        %vm1948 = vcmask 728064
        %v1949 = vsel %vm1948, %v1943, %v1945
        %v1950 = vsel %vm1948, %v1945, %v1947
        %v1952 = vsel %vm1158, %v1932, 0
        %v1955 = vand.u32 %v1949, %v1164
        %v1958 = vand.u32 %v1950, %v1164
        %v1961 = vand.u32 %v1947, %v1164
        %1963 = vmatpush.bf16.msra.mxu0 0
        %1964 = vmatpush.bf16.msra.mxu0 0
        %1965 = vmatpush.bf16.msra.mxu0 0
        %1966 = vmatpush.bf16.msra.mxu0 0
        %1967 = vmatpush.bf16.msra.mxu0 0
        %1968 = vmatpush.bf16.msra.mxu0 0
        %1969 = vmatpush.bf16.msra.mxu0 0
        %1970 = vmatpush.bf16.msra.mxu0 %v1955
        %1971 = vmatmul.bf16.gmra.mxu0 %v1952
        %v1972 = vpop.f32.mrf.mxu0
        %v1973 = vadd.f32 0.0, %v1972
        %v1974 = vpop.f32.mrf.mxu0
        %1975 = vdwg.mxu0
        %1976 = vmatpush.bf16.msra.mxu0 0
        %1977 = vmatpush.bf16.msra.mxu0 0
        %1978 = vmatpush.bf16.msra.mxu0 0
        %1979 = vmatpush.bf16.msra.mxu0 0
        %1980 = vmatpush.bf16.msra.mxu0 0
        %1981 = vmatpush.bf16.msra.mxu0 0
        %1982 = vmatpush.bf16.msra.mxu0 0
        %1983 = vmatpush.bf16.msra.mxu0 %v1958
        %1984 = vmatmul.bf16.gmra.mxu0 %v1952
        %v1985 = vpop.f32.mrf.mxu0
        %v1986 = vadd.f32 0.0, %v1985
        %v1987 = vpop.f32.mrf.mxu0
        %1988 = vdwg.mxu0
        %1989 = vmatpush.bf16.msra.mxu0 0
        %1990 = vmatpush.bf16.msra.mxu0 0
        %1991 = vmatpush.bf16.msra.mxu0 0
        %1992 = vmatpush.bf16.msra.mxu0 0
        %1993 = vmatpush.bf16.msra.mxu0 0
        %1994 = vmatpush.bf16.msra.mxu0 0
        %1995 = vmatpush.bf16.msra.mxu0 0
        %1996 = vmatpush.bf16.msra.mxu0 %v1961
        %1997 = vmatmul.bf16.gmra.mxu0 %v1952
        %v1998 = vpop.f32.mrf.mxu0
        %v1999 = vadd.f32 0.0, %v1998
        %v2000 = vpop.f32.mrf.mxu0
        %2001 = vdwg.mxu0
        %v2002 = vadd.f32 %v1928, %v1973
        %v2003 = vadd.f32 %v1929, %v1986
        %v2004 = vadd.f32 %v1930, %v1999
        %s2005 = scalar_lea.vmem %s1, 48
        %v2006 = vld [vmem:[%s2005] sm:$0x7]
        %v2007 = vld [vmem:[#allocation2] sm:$0x3f]
        %2009 = vst [vmem:[#allocation1] ss:$4 sm:$0xff] %v2007
        %v2010 = vld.sshfl [vmem:[#allocation1] sm:$0xff pattern:$0x73625140]
        %v2012 = vld.sshfl [vmem:[#allocation1 + $0x8] sm:$0xff pattern:$0x73625140]
        %v2014 = vld.sshfl [vmem:[#allocation1 + $0x10] sm:$0xff pattern:$0x73625140]
        %2016 = vrot.lane.b32.xlu0 %v2010, 74
        %v2017 = vpop.permute.xlu0 %2016
        %2018 = vrot.lane.b32.xlu0 %v2012, 74
        %v2019 = vpop.permute.xlu0 %2018
        %2020 = vrot.lane.b32.xlu0 %v2014, 74
        %v2021 = vpop.permute.xlu0 %2020
        %vm2022 = vcmask 605184
        %v2023 = vsel %vm2022, %v2017, %v2019
        %v2024 = vsel %vm2022, %v2019, %v2021
        %v2026 = vsel %vm1158, %v2006, 0
        %v2029 = vand.u32 %v2023, %v1164
        %v2032 = vand.u32 %v2024, %v1164
        %v2035 = vand.u32 %v2021, %v1164
        %2037 = vmatpush.bf16.msra.mxu0 0
        %2038 = vmatpush.bf16.msra.mxu0 0
        %2039 = vmatpush.bf16.msra.mxu0 0
        %2040 = vmatpush.bf16.msra.mxu0 0
        %2041 = vmatpush.bf16.msra.mxu0 0
        %2042 = vmatpush.bf16.msra.mxu0 0
        %2043 = vmatpush.bf16.msra.mxu0 0
        %2044 = vmatpush.bf16.msra.mxu0 %v2029
        %2045 = vmatmul.bf16.gmra.mxu0 %v2026
        %v2046 = vpop.f32.mrf.mxu0
        %v2047 = vadd.f32 0.0, %v2046
        %v2048 = vpop.f32.mrf.mxu0
        %2049 = vdwg.mxu0
        %2050 = vmatpush.bf16.msra.mxu0 0
        %2051 = vmatpush.bf16.msra.mxu0 0
        %2052 = vmatpush.bf16.msra.mxu0 0
        %2053 = vmatpush.bf16.msra.mxu0 0
        %2054 = vmatpush.bf16.msra.mxu0 0
        %2055 = vmatpush.bf16.msra.mxu0 0
        %2056 = vmatpush.bf16.msra.mxu0 0
        %2057 = vmatpush.bf16.msra.mxu0 %v2032
        %2058 = vmatmul.bf16.gmra.mxu0 %v2026
        %v2059 = vpop.f32.mrf.mxu0
        %v2060 = vadd.f32 0.0, %v2059
        %v2061 = vpop.f32.mrf.mxu0
        %2062 = vdwg.mxu0
        %2063 = vmatpush.bf16.msra.mxu0 0
        %2064 = vmatpush.bf16.msra.mxu0 0
        %2065 = vmatpush.bf16.msra.mxu0 0
        %2066 = vmatpush.bf16.msra.mxu0 0
        %2067 = vmatpush.bf16.msra.mxu0 0
        %2068 = vmatpush.bf16.msra.mxu0 0
        %2069 = vmatpush.bf16.msra.mxu0 0
        %2070 = vmatpush.bf16.msra.mxu0 %v2035
        %2071 = vmatmul.bf16.gmra.mxu0 %v2026
        %v2072 = vpop.f32.mrf.mxu0
        %v2073 = vadd.f32 0.0, %v2072
        %v2074 = vpop.f32.mrf.mxu0
        %2075 = vdwg.mxu0
        %v2076 = vadd.f32 %v2002, %v2047
        %v2077 = vadd.f32 %v2003, %v2060
        %v2078 = vadd.f32 %v2004, %v2073
        %s2079 = scalar_lea.vmem %s1, 52
        %v2080 = vld [vmem:[%s2079] sm:$0x7]
        %v2081 = vld [vmem:[#allocation2] sm:$0x3f]
        %2083 = vst [vmem:[#allocation1] ss:$4 sm:$0xff] %v2081
        %v2084 = vld.sshfl [vmem:[#allocation1] sm:$0xff pattern:$0x73625140]
        %v2086 = vld.sshfl [vmem:[#allocation1 + $0x8] sm:$0xff pattern:$0x73625140]
        %v2088 = vld.sshfl [vmem:[#allocation1 + $0x10] sm:$0xff pattern:$0x73625140]
        %2090 = vrot.lane.b32.xlu0 %v2084, 73
        %v2091 = vpop.permute.xlu0 %2090
        %2092 = vrot.lane.b32.xlu0 %v2086, 73
        %v2093 = vpop.permute.xlu0 %2092
        %2094 = vrot.lane.b32.xlu0 %v2088, 73
        %v2095 = vpop.permute.xlu0 %2094
        %vm2096 = vcmask 596992
        %v2097 = vsel %vm2096, %v2091, %v2093
        %v2098 = vsel %vm2096, %v2093, %v2095
        %v2100 = vsel %vm1158, %v2080, 0
        %v2103 = vand.u32 %v2097, %v1164
        %v2106 = vand.u32 %v2098, %v1164
        %v2109 = vand.u32 %v2095, %v1164
        %2111 = vmatpush.bf16.msra.mxu0 0
        %2112 = vmatpush.bf16.msra.mxu0 0
        %2113 = vmatpush.bf16.msra.mxu0 0
        %2114 = vmatpush.bf16.msra.mxu0 0
        %2115 = vmatpush.bf16.msra.mxu0 0
        %2116 = vmatpush.bf16.msra.mxu0 0
        %2117 = vmatpush.bf16.msra.mxu0 0
        %2118 = vmatpush.bf16.msra.mxu0 %v2103
        %2119 = vmatmul.bf16.gmra.mxu0 %v2100
        %v2120 = vpop.f32.mrf.mxu0
        %v2121 = vadd.f32 0.0, %v2120
        %v2122 = vpop.f32.mrf.mxu0
        %2123 = vdwg.mxu0
        %2124 = vmatpush.bf16.msra.mxu0 0
        %2125 = vmatpush.bf16.msra.mxu0 0
        %2126 = vmatpush.bf16.msra.mxu0 0
        %2127 = vmatpush.bf16.msra.mxu0 0
        %2128 = vmatpush.bf16.msra.mxu0 0
        %2129 = vmatpush.bf16.msra.mxu0 0
        %2130 = vmatpush.bf16.msra.mxu0 0
        %2131 = vmatpush.bf16.msra.mxu0 %v2106
        %2132 = vmatmul.bf16.gmra.mxu0 %v2100
        %v2133 = vpop.f32.mrf.mxu0
        %v2134 = vadd.f32 0.0, %v2133
        %v2135 = vpop.f32.mrf.mxu0
        %2136 = vdwg.mxu0
        %2137 = vmatpush.bf16.msra.mxu0 0
        %2138 = vmatpush.bf16.msra.mxu0 0
        %2139 = vmatpush.bf16.msra.mxu0 0
        %2140 = vmatpush.bf16.msra.mxu0 0
        %2141 = vmatpush.bf16.msra.mxu0 0
        %2142 = vmatpush.bf16.msra.mxu0 0
        %2143 = vmatpush.bf16.msra.mxu0 0
        %2144 = vmatpush.bf16.msra.mxu0 %v2109
        %2145 = vmatmul.bf16.gmra.mxu0 %v2100
        %v2146 = vpop.f32.mrf.mxu0
        %v2147 = vadd.f32 0.0, %v2146
        %v2148 = vpop.f32.mrf.mxu0
        %2149 = vdwg.mxu0
        %v2150 = vadd.f32 %v2076, %v2121
        %v2151 = vadd.f32 %v2077, %v2134
        %v2152 = vadd.f32 %v2078, %v2147
        %s2153 = scalar_lea.vmem %s1, 56
        %v2154 = vld [vmem:[%s2153] sm:$0x7]
        %v2155 = vld [vmem:[#allocation2] sm:$0x3f]
        %2157 = vst [vmem:[#allocation1] ss:$4 sm:$0xff] %v2155
        %v2158 = vld.sshfl [vmem:[#allocation1] sm:$0xff pattern:$0x73625140]
        %v2160 = vld.sshfl [vmem:[#allocation1 + $0x8] sm:$0xff pattern:$0x73625140]
        %v2162 = vld.sshfl [vmem:[#allocation1 + $0x10] sm:$0xff pattern:$0x73625140]
        %2164 = vrot.lane.b32.xlu0 %v2158, 72
        %v2165 = vpop.permute.xlu0 %2164
        %2166 = vrot.lane.b32.xlu0 %v2160, 72
        %v2167 = vpop.permute.xlu0 %2166
        %2168 = vrot.lane.b32.xlu0 %v2162, 72
        %v2169 = vpop.permute.xlu0 %2168
        %vm2170 = vcmask 588800
        %v2171 = vsel %vm2170, %v2165, %v2167
        %v2172 = vsel %vm2170, %v2167, %v2169
        %v2174 = vsel %vm1158, %v2154, 0
        %v2177 = vand.u32 %v2171, %v1164
        %v2180 = vand.u32 %v2172, %v1164
        %v2183 = vand.u32 %v2169, %v1164
        %2185 = vmatpush.bf16.msra.mxu0 0
        %2186 = vmatpush.bf16.msra.mxu0 0
        %2187 = vmatpush.bf16.msra.mxu0 0
        %2188 = vmatpush.bf16.msra.mxu0 0
        %2189 = vmatpush.bf16.msra.mxu0 0
        %2190 = vmatpush.bf16.msra.mxu0 0
        %2191 = vmatpush.bf16.msra.mxu0 0
        %2192 = vmatpush.bf16.msra.mxu0 %v2177
        %2193 = vmatmul.bf16.gmra.mxu0 %v2174
        %v2194 = vpop.f32.mrf.mxu0
        %v2195 = vadd.f32 0.0, %v2194
        %v2196 = vpop.f32.mrf.mxu0
        %2197 = vdwg.mxu0
        %2198 = vmatpush.bf16.msra.mxu0 0
        %2199 = vmatpush.bf16.msra.mxu0 0
        %2200 = vmatpush.bf16.msra.mxu0 0
        %2201 = vmatpush.bf16.msra.mxu0 0
        %2202 = vmatpush.bf16.msra.mxu0 0
        %2203 = vmatpush.bf16.msra.mxu0 0
        %2204 = vmatpush.bf16.msra.mxu0 0
        %2205 = vmatpush.bf16.msra.mxu0 %v2180
        %2206 = vmatmul.bf16.gmra.mxu0 %v2174
        %v2207 = vpop.f32.mrf.mxu0
        %v2208 = vadd.f32 0.0, %v2207
        %v2209 = vpop.f32.mrf.mxu0
        %2210 = vdwg.mxu0
        %2211 = vmatpush.bf16.msra.mxu0 0
        %2212 = vmatpush.bf16.msra.mxu0 0
        %2213 = vmatpush.bf16.msra.mxu0 0
        %2214 = vmatpush.bf16.msra.mxu0 0
        %2215 = vmatpush.bf16.msra.mxu0 0
        %2216 = vmatpush.bf16.msra.mxu0 0
        %2217 = vmatpush.bf16.msra.mxu0 0
        %2218 = vmatpush.bf16.msra.mxu0 %v2183
        %2219 = vmatmul.bf16.gmra.mxu0 %v2174
        %v2220 = vpop.f32.mrf.mxu0
        %v2221 = vadd.f32 0.0, %v2220
        %v2222 = vpop.f32.mrf.mxu0
        %2223 = vdwg.mxu0
        %v2224 = vadd.f32 %v2150, %v2195
        %v2225 = vadd.f32 %v2151, %v2208
        %v2226 = vadd.f32 %v2152, %v2221
        %s2227 = scalar_lea.vmem %s1, 60
        %v2228 = vld [vmem:[%s2227] sm:$0x7]
        %v2229 = vld [vmem:[#allocation2] sm:$0x3f]
        %2231 = vst [vmem:[#allocation1] ss:$4 sm:$0xff] %v2229
        %v2232 = vld.sshfl [vmem:[#allocation1] sm:$0xff pattern:$0x73625140]
        %v2234 = vld.sshfl [vmem:[#allocation1 + $0x8] sm:$0xff pattern:$0x73625140]
        %v2236 = vld.sshfl [vmem:[#allocation1 + $0x10] sm:$0xff pattern:$0x73625140]
        %2238 = vrot.lane.b32.xlu0 %v2232, 71
        %v2239 = vpop.permute.xlu0 %2238
        %2240 = vrot.lane.b32.xlu0 %v2234, 71
        %v2241 = vpop.permute.xlu0 %2240
        %2242 = vrot.lane.b32.xlu0 %v2236, 71
        %v2243 = vpop.permute.xlu0 %2242
        %vm2244 = vcmask 580608
        %v2245 = vsel %vm2244, %v2239, %v2241
        %v2246 = vsel %vm2244, %v2241, %v2243
        %v2248 = vsel %vm1158, %v2228, 0
        %v2251 = vand.u32 %v2245, %v1164
        %v2254 = vand.u32 %v2246, %v1164
        %v2257 = vand.u32 %v2243, %v1164
        %2259 = vmatpush.bf16.msra.mxu0 0
        %2260 = vmatpush.bf16.msra.mxu0 0
        %2261 = vmatpush.bf16.msra.mxu0 0
        %2262 = vmatpush.bf16.msra.mxu0 0
        %2263 = vmatpush.bf16.msra.mxu0 0
        %2264 = vmatpush.bf16.msra.mxu0 0
        %2265 = vmatpush.bf16.msra.mxu0 0
        %2266 = vmatpush.bf16.msra.mxu0 %v2251
        %2267 = vmatmul.bf16.gmra.mxu0 %v2248
        %v2268 = vpop.f32.mrf.mxu0
        %v2269 = vadd.f32 0.0, %v2268
        %v2270 = vpop.f32.mrf.mxu0
        %2271 = vdwg.mxu0
        %2272 = vmatpush.bf16.msra.mxu0 0
        %2273 = vmatpush.bf16.msra.mxu0 0
        %2274 = vmatpush.bf16.msra.mxu0 0
        %2275 = vmatpush.bf16.msra.mxu0 0
        %2276 = vmatpush.bf16.msra.mxu0 0
        %2277 = vmatpush.bf16.msra.mxu0 0
        %2278 = vmatpush.bf16.msra.mxu0 0
        %2279 = vmatpush.bf16.msra.mxu0 %v2254
        %2280 = vmatmul.bf16.gmra.mxu0 %v2248
        %v2281 = vpop.f32.mrf.mxu0
        %v2282 = vadd.f32 0.0, %v2281
        %v2283 = vpop.f32.mrf.mxu0
        %2284 = vdwg.mxu0
        %2285 = vmatpush.bf16.msra.mxu0 0
        %2286 = vmatpush.bf16.msra.mxu0 0
        %2287 = vmatpush.bf16.msra.mxu0 0
        %2288 = vmatpush.bf16.msra.mxu0 0
        %2289 = vmatpush.bf16.msra.mxu0 0
        %2290 = vmatpush.bf16.msra.mxu0 0
        %2291 = vmatpush.bf16.msra.mxu0 0
        %2292 = vmatpush.bf16.msra.mxu0 %v2257
        %2293 = vmatmul.bf16.gmra.mxu0 %v2248
        %v2294 = vpop.f32.mrf.mxu0
        %v2295 = vadd.f32 0.0, %v2294
        %v2296 = vpop.f32.mrf.mxu0
        %2297 = vdwg.mxu0
        %v2298 = vadd.f32 %v2224, %v2269
        %v2299 = vadd.f32 %v2225, %v2282
        %v2300 = vadd.f32 %v2226, %v2295
        %v2301 = vld [vmem:[%s7] sm:$0x3f]
        %2303 = vset.pattern.permute.xlu0 0
        %2304 = vperm.xlu0 %2303, %v2301
        %v2305 = vpop.permute.xlu0 %2304
        %v2307 = vadd.f32 %v2298, %v2305
        %v2308 = vadd.f32 %v2299, %v2305
        %v2309 = vadd.f32 %v2300, %v2305
        %v2310 = vld [vmem:[#allocation10] sm:$0xff]
        %v2311 = vld [vmem:[#allocation10 + $0x8] sm:$0xff]
        %v2312 = vld [vmem:[#allocation10 + $0x10] sm:$0xff]
        %v2313 = vld [vmem:[#allocation10 + $0x18] sm:$0xff]
        %v2314 = vld [vmem:[#allocation10 + $0x20] sm:$0xff]
        %v2315 = vld [vmem:[#allocation10 + $0x28] sm:$0xff]
        %v2316 = vld [vmem:[#allocation10 + $0x30] sm:$0xff]
        %v2317 = vld [vmem:[#allocation10 + $0x38] sm:$0xff]
        %v2318 = vld [vmem:[#allocation10 + $0x40] sm:$0xff]
        %v2319 = vld [vmem:[#allocation10 + $0x48] sm:$0xff]
        %v2320 = vld [vmem:[#allocation10 + $0x50] sm:$0xff]
        %v2321 = vld [vmem:[#allocation10 + $0x58] sm:$0xff]
        %v2322 = vld [vmem:[#allocation10 + $0x60] sm:$0xff]
        %v2323 = vld [vmem:[#allocation10 + $0x68] sm:$0xff]
        %v2324 = vld [vmem:[#allocation10 + $0x70] sm:$0xff]
        %v2325 = vld [vmem:[#allocation10 + $0x78] sm:$0xff]
        %v2326 = vld [vmem:[#allocation10 + $0x80] sm:$0xff]
        %v2327 = vld [vmem:[#allocation10 + $0x88] sm:$0xff]
        %v2328 = vld [vmem:[#allocation10 + $0x90] sm:$0xff]
        %v2329 = vld [vmem:[#allocation10 + $0x98] sm:$0xff]
        %v2330 = vld [vmem:[#allocation10 + $0xa0] sm:$0xff]
        %v2331 = vld [vmem:[#allocation10 + $0xa8] sm:$0xff]
        %v2332 = vld [vmem:[#allocation10 + $0xb0] sm:$0xff]
        %v2333 = vld [vmem:[#allocation10 + $0xb8] sm:$0xff]
        %v2334 = vld [vmem:[#allocation10 + $0xc0] sm:$0xff]
        %v2335 = vld [vmem:[#allocation10 + $0xc8] sm:$0xff]
        %v2336 = vld [vmem:[#allocation10 + $0xd0] sm:$0xff]
        %v2337 = vld [vmem:[#allocation10 + $0xd8] sm:$0xff]
        %v2338 = vld [vmem:[#allocation10 + $0xe0] sm:$0xff]
        %v2339 = vld [vmem:[#allocation10 + $0xe8] sm:$0xff]
        %v2340 = vld [vmem:[#allocation10 + $0xf0] sm:$0xff]
        %v2341 = vld [vmem:[#allocation10 + $0xf8] sm:$0xff]
        %v2342 = vld [vmem:[#allocation10 + $0x100] sm:$0xff]
        %v2343 = vld [vmem:[#allocation10 + $0x108] sm:$0xff]
        %v2344 = vld [vmem:[#allocation10 + $0x110] sm:$0xff]
        %v2345 = vld [vmem:[#allocation10 + $0x118] sm:$0xff]
        %v2346 = vld [vmem:[#allocation10 + $0x120] sm:$0xff]
        %v2347 = vld [vmem:[#allocation10 + $0x128] sm:$0xff]
        %v2348 = vld [vmem:[#allocation10 + $0x130] sm:$0xff]
        %v2349 = vld [vmem:[#allocation10 + $0x138] sm:$0xff]
        %v2350 = vld [vmem:[#allocation10 + $0x140] sm:$0xf]
        %v2351 = vmax.f32 %v2307, 0.0
        %v2352 = vmax.f32 %v2308, 0.0
        %v2353 = vmax.f32 %v2309, 0.0
        %vm2354 = vcmask 556032
        %v2356 = vsel %vm2354, %v2353, 0
        %v2359 = vsel %vm1128, %v2350, 0
        %2361 = vmatpush.msra.mxu0 %v2325
        %2362 = vmatpush.msra.mxu0 %v2324
        %2363 = vmatpush.msra.mxu0 %v2323
        %2364 = vmatpush.msra.mxu0 %v2322
        %2365 = vmatpush.msra.mxu0 %v2321
        %2366 = vmatpush.msra.mxu0 %v2320
        %2367 = vmatpush.msra.mxu0 %v2319
        %2368 = vmatpush.msra.mxu0 %v2318
        %2369 = vmatpush.msra.mxu0 %v2317
        %2370 = vmatpush.msra.mxu0 %v2316
        %2371 = vmatpush.msra.mxu0 %v2315
        %2372 = vmatpush.msra.mxu0 %v2314
        %2373 = vmatpush.msra.mxu0 %v2313
        %2374 = vmatpush.msra.mxu0 %v2312
        %2375 = vmatpush.msra.mxu0 %v2311
        %2376 = vmatpush.msra.mxu0 %v2310
        %2377 = vmatmul.f32.gmra.mxu0 %v2351
        %v2378 = vpop.f32.mrf.mxu0
        %v2379 = vadd.f32 0.0, %v2378
        %2380 = vdwg.mxu0
        %2381 = vmatpush.msra.mxu0 %v2341
        %2382 = vmatpush.msra.mxu0 %v2340
        %2383 = vmatpush.msra.mxu0 %v2339
        %2384 = vmatpush.msra.mxu0 %v2338
        %2385 = vmatpush.msra.mxu0 %v2337
        %2386 = vmatpush.msra.mxu0 %v2336
        %2387 = vmatpush.msra.mxu0 %v2335
        %2388 = vmatpush.msra.mxu0 %v2334
        %2389 = vmatpush.msra.mxu0 %v2333
        %2390 = vmatpush.msra.mxu0 %v2332
        %2391 = vmatpush.msra.mxu0 %v2331
        %2392 = vmatpush.msra.mxu0 %v2330
        %2393 = vmatpush.msra.mxu0 %v2329
        %2394 = vmatpush.msra.mxu0 %v2328
        %2395 = vmatpush.msra.mxu0 %v2327
        %2396 = vmatpush.msra.mxu0 %v2326
        %2397 = vmatmul.f32.gmra.mxu0 %v2352
        %v2398 = vpop.f32.mrf.mxu0
        %v2399 = vadd.f32 %v2379, %v2398
        %2400 = vdwg.mxu0
        %2401 = vmatpush.msra.mxu0 0.0
        %2402 = vmatpush.msra.mxu0 0.0
        %2403 = vmatpush.msra.mxu0 0.0
        %2404 = vmatpush.msra.mxu0 0.0
        %2405 = vmatpush.msra.mxu0 0.0
        %2406 = vmatpush.msra.mxu0 0.0
        %2407 = vmatpush.msra.mxu0 0.0
        %2408 = vmatpush.msra.mxu0 %v2359
        %2409 = vmatpush.msra.mxu0 %v2349
        %2410 = vmatpush.msra.mxu0 %v2348
        %2411 = vmatpush.msra.mxu0 %v2347
        %2412 = vmatpush.msra.mxu0 %v2346
        %2413 = vmatpush.msra.mxu0 %v2345
        %2414 = vmatpush.msra.mxu0 %v2344
        %2415 = vmatpush.msra.mxu0 %v2343
        %2416 = vmatpush.msra.mxu0 %v2342
        %2417 = vmatmul.f32.gmra.mxu0 %v2356
        %v2418 = vpop.f32.mrf.mxu0
        %v2419 = vadd.f32 %v2399, %v2418
        %2420 = vdwg.mxu0
        %v2421 = vpack.c.bf16 %v2419, %v2419
        %vm2422 = vcmask 813056
        %2423 = vst.msk [vmem:[#allocation3] sm:$0x7] %vm2422, %v2421
        %v2424 = vld [vmem:[%s2] sm:$0xf]
        %v2425 = vld [vmem:[%s2 + $0x4] sm:$0x1]
        %v2426 = vld [vmem:[#allocation3] sm:$0x7]
        %s2427 = scalar_lea.vmem %s2, 8
        %v2428 = vld [vmem:[%s2427] sm:$0xf]
        %v2429 = vld [vmem:[%s2427 + $0x4] sm:$0x1]
        %v2432 = vunpack.c.l.b16 %v2428
        %v2433 = vunpack.c.l.b16 %v2429
        %v2434 = vpack.c.b16 %v2433, %v2432
        %v2436 = vunpack.c.l.b16 %v2426
        %v2437 = vpack.c.b16 %v2436, %v2436
        %2438 = vrot.lane.b32.xlu0 %v2437, 127
        %v2439 = vpop.permute.xlu0 %2438
        %vm2440 = vcmask 48128
        %v2442 = vsel %vm2440, %v2434, 0
        %vm2444 = vcmask 1042432
        %v2446 = vsel %vm2444, %v2439, 0
        %2448 = vmatpush.bf16.msra.mxu0 0
        %2449 = vmatpush.bf16.msra.mxu0 0
        %2450 = vmatpush.bf16.msra.mxu0 0
        %2451 = vmatpush.bf16.msra.mxu0 0
        %2452 = vmatpush.bf16.msra.mxu0 0
        %2453 = vmatpush.bf16.msra.mxu0 0
        %2454 = vmatpush.bf16.msra.mxu0 0
        %2455 = vmatpush.bf16.msra.mxu0 %v2446
        %2456 = vmatmul.bf16.gmra.mxu0 %v2442
        %v2457 = vpop.f32.mrf.mxu0
        %v2458 = vadd.f32 0.0, %v2457
        %v2459 = vpop.f32.mrf.mxu0
        %v2460 = vadd.f32 0.0, %v2459
        %2461 = vdwg.mxu0
        %v2464 = vunpack.c.l.b16 %v2424
        %v2465 = vunpack.c.l.b16 %v2425
        %v2466 = vpack.c.b16 %v2465, %v2464
        %v2468 = vsel %vm2440, %v2466, 0
        %v2471 = vsel %vm2444, %v2426, 0
        %2473 = vmatpush.bf16.msra.mxu0 0
        %2474 = vmatpush.bf16.msra.mxu0 0
        %2475 = vmatpush.bf16.msra.mxu0 0
        %2476 = vmatpush.bf16.msra.mxu0 0
        %2477 = vmatpush.bf16.msra.mxu0 0
        %2478 = vmatpush.bf16.msra.mxu0 0
        %2479 = vmatpush.bf16.msra.mxu0 0
        %2480 = vmatpush.bf16.msra.mxu0 %v2471
        %2481 = vmatmul.bf16.gmra.mxu0 %v2468
        %v2482 = vpop.f32.mrf.mxu0
        %v2483 = vadd.f32 %v2458, %v2482
        %v2484 = vpop.f32.mrf.mxu0
        %v2485 = vadd.f32 %v2460, %v2484
        %2486 = vdwg.mxu0
        %s2487 = scalar_lea.vmem %s2, 16
        %v2488 = vld [vmem:[%s2487] sm:$0xf]
        %v2489 = vld [vmem:[%s2487 + $0x4] sm:$0x1]
        %v2492 = vunpack.c.l.b16 %v2488
        %v2493 = vunpack.c.l.b16 %v2489
        %v2494 = vpack.c.b16 %v2493, %v2492
        %2495 = vrot.lane.b32.xlu0 %v2437, 126
        %v2496 = vpop.permute.xlu0 %2495
        %v2498 = vsel %vm2440, %v2494, 0
        %v2501 = vsel %vm2444, %v2496, 0
        %2503 = vmatpush.bf16.msra.mxu0 0
        %2504 = vmatpush.bf16.msra.mxu0 0
        %2505 = vmatpush.bf16.msra.mxu0 0
        %2506 = vmatpush.bf16.msra.mxu0 0
        %2507 = vmatpush.bf16.msra.mxu0 0
        %2508 = vmatpush.bf16.msra.mxu0 0
        %2509 = vmatpush.bf16.msra.mxu0 0
        %2510 = vmatpush.bf16.msra.mxu0 %v2501
        %2511 = vmatmul.bf16.gmra.mxu0 %v2498
        %v2512 = vpop.f32.mrf.mxu0
        %v2513 = vadd.f32 0.0, %v2512
        %v2514 = vpop.f32.mrf.mxu0
        %v2515 = vadd.f32 0.0, %v2514
        %2516 = vdwg.mxu0
        %v2517 = vadd.f32 %v2483, %v2513
        %v2518 = vadd.f32 %v2485, %v2515
        %s2519 = scalar_lea.vmem %s2, 24
        %v2520 = vld [vmem:[%s2519] sm:$0xf]
        %v2521 = vld [vmem:[%s2519 + $0x4] sm:$0x1]
        %v2524 = vunpack.c.l.b16 %v2520
        %v2525 = vunpack.c.l.b16 %v2521
        %v2526 = vpack.c.b16 %v2525, %v2524
        %2527 = vrot.lane.b32.xlu0 %v2437, 125
        %v2528 = vpop.permute.xlu0 %2527
        %v2530 = vsel %vm2440, %v2526, 0
        %v2533 = vsel %vm2444, %v2528, 0
        %2535 = vmatpush.bf16.msra.mxu0 0
        %2536 = vmatpush.bf16.msra.mxu0 0
        %2537 = vmatpush.bf16.msra.mxu0 0
        %2538 = vmatpush.bf16.msra.mxu0 0
        %2539 = vmatpush.bf16.msra.mxu0 0
        %2540 = vmatpush.bf16.msra.mxu0 0
        %2541 = vmatpush.bf16.msra.mxu0 0
        %2542 = vmatpush.bf16.msra.mxu0 %v2533
        %2543 = vmatmul.bf16.gmra.mxu0 %v2530
        %v2544 = vpop.f32.mrf.mxu0
        %v2545 = vadd.f32 0.0, %v2544
        %v2546 = vpop.f32.mrf.mxu0
        %v2547 = vadd.f32 0.0, %v2546
        %2548 = vdwg.mxu0
        %v2549 = vadd.f32 %v2517, %v2545
        %v2550 = vadd.f32 %v2518, %v2547
        %s2551 = scalar_lea.vmem %s2, 32
        %v2552 = vld [vmem:[%s2551] sm:$0xf]
        %v2553 = vld [vmem:[%s2551 + $0x4] sm:$0x1]
        %v2556 = vunpack.c.l.b16 %v2552
        %v2557 = vunpack.c.l.b16 %v2553
        %v2558 = vpack.c.b16 %v2557, %v2556
        %2559 = vrot.lane.b32.xlu0 %v2437, 118
        %v2560 = vpop.permute.xlu0 %2559
        %v2562 = vsel %vm2440, %v2558, 0
        %v2565 = vsel %vm2444, %v2560, 0
        %2567 = vmatpush.bf16.msra.mxu0 0
        %2568 = vmatpush.bf16.msra.mxu0 0
        %2569 = vmatpush.bf16.msra.mxu0 0
        %2570 = vmatpush.bf16.msra.mxu0 0
        %2571 = vmatpush.bf16.msra.mxu0 0
        %2572 = vmatpush.bf16.msra.mxu0 0
        %2573 = vmatpush.bf16.msra.mxu0 0
        %2574 = vmatpush.bf16.msra.mxu0 %v2565
        %2575 = vmatmul.bf16.gmra.mxu0 %v2562
        %v2576 = vpop.f32.mrf.mxu0
        %v2577 = vadd.f32 0.0, %v2576
        %v2578 = vpop.f32.mrf.mxu0
        %v2579 = vadd.f32 0.0, %v2578
        %2580 = vdwg.mxu0
        %v2581 = vadd.f32 %v2549, %v2577
        %v2582 = vadd.f32 %v2550, %v2579
        %s2583 = scalar_lea.vmem %s2, 40
        %v2584 = vld [vmem:[%s2583] sm:$0xf]
        %v2585 = vld [vmem:[%s2583 + $0x4] sm:$0x1]
        %v2588 = vunpack.c.l.b16 %v2584
        %v2589 = vunpack.c.l.b16 %v2585
        %v2590 = vpack.c.b16 %v2589, %v2588
        %2591 = vrot.lane.b32.xlu0 %v2437, 117
        %v2592 = vpop.permute.xlu0 %2591
        %v2594 = vsel %vm2440, %v2590, 0
        %v2597 = vsel %vm2444, %v2592, 0
        %2599 = vmatpush.bf16.msra.mxu0 0
        %2600 = vmatpush.bf16.msra.mxu0 0
        %2601 = vmatpush.bf16.msra.mxu0 0
        %2602 = vmatpush.bf16.msra.mxu0 0
        %2603 = vmatpush.bf16.msra.mxu0 0
        %2604 = vmatpush.bf16.msra.mxu0 0
        %2605 = vmatpush.bf16.msra.mxu0 0
        %2606 = vmatpush.bf16.msra.mxu0 %v2597
        %2607 = vmatmul.bf16.gmra.mxu0 %v2594
        %v2608 = vpop.f32.mrf.mxu0
        %v2609 = vadd.f32 0.0, %v2608
        %v2610 = vpop.f32.mrf.mxu0
        %v2611 = vadd.f32 0.0, %v2610
        %2612 = vdwg.mxu0
        %v2613 = vadd.f32 %v2581, %v2609
        %v2614 = vadd.f32 %v2582, %v2611
        %s2615 = scalar_lea.vmem %s2, 48
        %v2616 = vld [vmem:[%s2615] sm:$0xf]
        %v2617 = vld [vmem:[%s2615 + $0x4] sm:$0x1]
        %v2620 = vunpack.c.l.b16 %v2616
        %v2621 = vunpack.c.l.b16 %v2617
        %v2622 = vpack.c.b16 %v2621, %v2620
        %2623 = vrot.lane.b32.xlu0 %v2437, 116
        %v2624 = vpop.permute.xlu0 %2623
        %v2626 = vsel %vm2440, %v2622, 0
        %v2629 = vsel %vm2444, %v2624, 0
        %2631 = vmatpush.bf16.msra.mxu0 0
        %2632 = vmatpush.bf16.msra.mxu0 0
        %2633 = vmatpush.bf16.msra.mxu0 0
        %2634 = vmatpush.bf16.msra.mxu0 0
        %2635 = vmatpush.bf16.msra.mxu0 0
        %2636 = vmatpush.bf16.msra.mxu0 0
        %2637 = vmatpush.bf16.msra.mxu0 0
        %2638 = vmatpush.bf16.msra.mxu0 %v2629
        %2639 = vmatmul.bf16.gmra.mxu0 %v2626
        %v2640 = vpop.f32.mrf.mxu0
        %v2641 = vadd.f32 0.0, %v2640
        %v2642 = vpop.f32.mrf.mxu0
        %v2643 = vadd.f32 0.0, %v2642
        %2644 = vdwg.mxu0
        %v2645 = vadd.f32 %v2613, %v2641
        %v2646 = vadd.f32 %v2614, %v2643
        %s2647 = scalar_lea.vmem %s2, 56
        %v2648 = vld [vmem:[%s2647] sm:$0xf]
        %v2649 = vld [vmem:[%s2647 + $0x4] sm:$0x1]
        %v2652 = vunpack.c.l.b16 %v2648
        %v2653 = vunpack.c.l.b16 %v2649
        %v2654 = vpack.c.b16 %v2653, %v2652
        %2655 = vrot.lane.b32.xlu0 %v2437, 115
        %v2656 = vpop.permute.xlu0 %2655
        %v2658 = vsel %vm2440, %v2654, 0
        %v2661 = vsel %vm2444, %v2656, 0
        %2663 = vmatpush.bf16.msra.mxu0 0
        %2664 = vmatpush.bf16.msra.mxu0 0
        %2665 = vmatpush.bf16.msra.mxu0 0
        %2666 = vmatpush.bf16.msra.mxu0 0
        %2667 = vmatpush.bf16.msra.mxu0 0
        %2668 = vmatpush.bf16.msra.mxu0 0
        %2669 = vmatpush.bf16.msra.mxu0 0
        %2670 = vmatpush.bf16.msra.mxu0 %v2661
        %2671 = vmatmul.bf16.gmra.mxu0 %v2658
        %v2672 = vpop.f32.mrf.mxu0
        %v2673 = vadd.f32 0.0, %v2672
        %v2674 = vpop.f32.mrf.mxu0
        %v2675 = vadd.f32 0.0, %v2674
        %2676 = vdwg.mxu0
        %v2677 = vadd.f32 %v2645, %v2673
        %v2678 = vadd.f32 %v2646, %v2675
        %s2679 = scalar_lea.vmem %s2, 64
        %v2680 = vld [vmem:[%s2679] sm:$0xf]
        %v2681 = vld [vmem:[%s2679 + $0x4] sm:$0x1]
        %v2684 = vunpack.c.l.b16 %v2680
        %v2685 = vunpack.c.l.b16 %v2681
        %v2686 = vpack.c.b16 %v2685, %v2684
        %2687 = vrot.lane.b32.xlu0 %v2437, 108
        %v2688 = vpop.permute.xlu0 %2687
        %v2690 = vsel %vm2440, %v2686, 0
        %v2693 = vsel %vm2444, %v2688, 0
        %2695 = vmatpush.bf16.msra.mxu0 0
        %2696 = vmatpush.bf16.msra.mxu0 0
        %2697 = vmatpush.bf16.msra.mxu0 0
        %2698 = vmatpush.bf16.msra.mxu0 0
        %2699 = vmatpush.bf16.msra.mxu0 0
        %2700 = vmatpush.bf16.msra.mxu0 0
        %2701 = vmatpush.bf16.msra.mxu0 0
        %2702 = vmatpush.bf16.msra.mxu0 %v2693
        %2703 = vmatmul.bf16.gmra.mxu0 %v2690
        %v2704 = vpop.f32.mrf.mxu0
        %v2705 = vadd.f32 0.0, %v2704
        %v2706 = vpop.f32.mrf.mxu0
        %v2707 = vadd.f32 0.0, %v2706
        %2708 = vdwg.mxu0
        %v2709 = vadd.f32 %v2677, %v2705
        %v2710 = vadd.f32 %v2678, %v2707
        %s2711 = scalar_lea.vmem %s2, 72
        %v2712 = vld [vmem:[%s2711] sm:$0xf]
        %v2713 = vld [vmem:[%s2711 + $0x4] sm:$0x1]
        %v2716 = vunpack.c.l.b16 %v2712
        %v2717 = vunpack.c.l.b16 %v2713
        %v2718 = vpack.c.b16 %v2717, %v2716
        %2719 = vrot.lane.b32.xlu0 %v2437, 107
        %v2720 = vpop.permute.xlu0 %2719
        %v2722 = vsel %vm2440, %v2718, 0
        %v2725 = vsel %vm2444, %v2720, 0
        %2727 = vmatpush.bf16.msra.mxu0 0
        %2728 = vmatpush.bf16.msra.mxu0 0
        %2729 = vmatpush.bf16.msra.mxu0 0
        %2730 = vmatpush.bf16.msra.mxu0 0
        %2731 = vmatpush.bf16.msra.mxu0 0
        %2732 = vmatpush.bf16.msra.mxu0 0
        %2733 = vmatpush.bf16.msra.mxu0 0
        %2734 = vmatpush.bf16.msra.mxu0 %v2725
        %2735 = vmatmul.bf16.gmra.mxu0 %v2722
        %v2736 = vpop.f32.mrf.mxu0
        %v2737 = vadd.f32 0.0, %v2736
        %v2738 = vpop.f32.mrf.mxu0
        %v2739 = vadd.f32 0.0, %v2738
        %2740 = vdwg.mxu0
        %v2741 = vadd.f32 %v2709, %v2737
        %v2742 = vadd.f32 %v2710, %v2739
        %s2743 = scalar_lea.vmem %s2, 80
        %v2744 = vld [vmem:[%s2743] sm:$0xf]
        %v2745 = vld [vmem:[%s2743 + $0x4] sm:$0x1]
        %v2748 = vunpack.c.l.b16 %v2744
        %v2749 = vunpack.c.l.b16 %v2745
        %v2750 = vpack.c.b16 %v2749, %v2748
        %2751 = vrot.lane.b32.xlu0 %v2437, 106
        %v2752 = vpop.permute.xlu0 %2751
        %v2754 = vsel %vm2440, %v2750, 0
        %v2757 = vsel %vm2444, %v2752, 0
        %2759 = vmatpush.bf16.msra.mxu0 0
        %2760 = vmatpush.bf16.msra.mxu0 0
        %2761 = vmatpush.bf16.msra.mxu0 0
        %2762 = vmatpush.bf16.msra.mxu0 0
        %2763 = vmatpush.bf16.msra.mxu0 0
        %2764 = vmatpush.bf16.msra.mxu0 0
        %2765 = vmatpush.bf16.msra.mxu0 0
        %2766 = vmatpush.bf16.msra.mxu0 %v2757
        %2767 = vmatmul.bf16.gmra.mxu0 %v2754
        %v2768 = vpop.f32.mrf.mxu0
        %v2769 = vadd.f32 0.0, %v2768
        %v2770 = vpop.f32.mrf.mxu0
        %v2771 = vadd.f32 0.0, %v2770
        %2772 = vdwg.mxu0
        %v2773 = vadd.f32 %v2741, %v2769
        %v2774 = vadd.f32 %v2742, %v2771
        %s2775 = scalar_lea.vmem %s2, 88
        %v2776 = vld [vmem:[%s2775] sm:$0xf]
        %v2777 = vld [vmem:[%s2775 + $0x4] sm:$0x1]
        %v2780 = vunpack.c.l.b16 %v2776
        %v2781 = vunpack.c.l.b16 %v2777
        %v2782 = vpack.c.b16 %v2781, %v2780
        %2783 = vrot.lane.b32.xlu0 %v2437, 105
        %v2784 = vpop.permute.xlu0 %2783
        %v2786 = vsel %vm2440, %v2782, 0
        %v2789 = vsel %vm2444, %v2784, 0
        %2791 = vmatpush.bf16.msra.mxu0 0
        %2792 = vmatpush.bf16.msra.mxu0 0
        %2793 = vmatpush.bf16.msra.mxu0 0
        %2794 = vmatpush.bf16.msra.mxu0 0
        %2795 = vmatpush.bf16.msra.mxu0 0
        %2796 = vmatpush.bf16.msra.mxu0 0
        %2797 = vmatpush.bf16.msra.mxu0 0
        %2798 = vmatpush.bf16.msra.mxu0 %v2789
        %2799 = vmatmul.bf16.gmra.mxu0 %v2786
        %v2800 = vpop.f32.mrf.mxu0
        %v2801 = vadd.f32 0.0, %v2800
        %v2802 = vpop.f32.mrf.mxu0
        %v2803 = vadd.f32 0.0, %v2802
        %2804 = vdwg.mxu0
        %v2805 = vadd.f32 %v2773, %v2801
        %v2806 = vadd.f32 %v2774, %v2803
        %s2807 = scalar_lea.vmem %s2, 96
        %v2808 = vld [vmem:[%s2807] sm:$0xf]
        %v2809 = vld [vmem:[%s2807 + $0x4] sm:$0x1]
        %v2810 = vld [vmem:[#allocation3] sm:$0x77]
        %v2813 = vunpack.c.l.b16 %v2808
        %v2814 = vunpack.c.l.b16 %v2809
        %v2815 = vpack.c.b16 %v2814, %v2813
        %v2817 = vunpack.c.l.b16 %v2810
        %v2818 = vunpack.c.h.b16 %v2810
        %v2819 = vpack.c.b16 %v2817, %v2817
        %v2820 = vpack.c.b16 %v2818, %v2818
        %2821 = vrot.lane.b32.xlu0 %v2819, 98
        %v2822 = vpop.permute.xlu0 %2821
        %2823 = vrot.lane.b32.xlu0 %v2820, 98
        %v2824 = vpop.permute.xlu0 %2823
        %vm2825 = vcmask 801792
        %v2826 = vsel %vm2825, %v2822, %v2824
        %v2828 = vsel %vm2440, %v2815, 0
        %v2831 = vsel %vm2444, %v2826, 0
        %2833 = vmatpush.bf16.msra.mxu0 0
        %2834 = vmatpush.bf16.msra.mxu0 0
        %2835 = vmatpush.bf16.msra.mxu0 0
        %2836 = vmatpush.bf16.msra.mxu0 0
        %2837 = vmatpush.bf16.msra.mxu0 0
        %2838 = vmatpush.bf16.msra.mxu0 0
        %2839 = vmatpush.bf16.msra.mxu0 0
        %2840 = vmatpush.bf16.msra.mxu0 %v2831
        %2841 = vmatmul.bf16.gmra.mxu0 %v2828
        %v2842 = vpop.f32.mrf.mxu0
        %v2843 = vadd.f32 0.0, %v2842
        %v2844 = vpop.f32.mrf.mxu0
        %v2845 = vadd.f32 0.0, %v2844
        %2846 = vdwg.mxu0
        %v2847 = vadd.f32 %v2805, %v2843
        %v2848 = vadd.f32 %v2806, %v2845
        %s2849 = scalar_lea.vmem %s2, 104
        %v2850 = vld [vmem:[%s2849] sm:$0xf]
        %v2851 = vld [vmem:[%s2849 + $0x4] sm:$0x1]
        %v2854 = vunpack.c.l.b16 %v2850
        %v2855 = vunpack.c.l.b16 %v2851
        %v2856 = vpack.c.b16 %v2855, %v2854
        %2857 = vrot.lane.b32.xlu0 %v2819, 97
        %v2858 = vpop.permute.xlu0 %2857
        %2859 = vrot.lane.b32.xlu0 %v2820, 97
        %v2860 = vpop.permute.xlu0 %2859
        %vm2861 = vcmask 793600
        %v2862 = vsel %vm2861, %v2858, %v2860
        %v2864 = vsel %vm2440, %v2856, 0
        %v2867 = vsel %vm2444, %v2862, 0
        %2869 = vmatpush.bf16.msra.mxu0 0
        %2870 = vmatpush.bf16.msra.mxu0 0
        %2871 = vmatpush.bf16.msra.mxu0 0
        %2872 = vmatpush.bf16.msra.mxu0 0
        %2873 = vmatpush.bf16.msra.mxu0 0
        %2874 = vmatpush.bf16.msra.mxu0 0
        %2875 = vmatpush.bf16.msra.mxu0 0
        %2876 = vmatpush.bf16.msra.mxu0 %v2867
        %2877 = vmatmul.bf16.gmra.mxu0 %v2864
        %v2878 = vpop.f32.mrf.mxu0
        %v2879 = vadd.f32 0.0, %v2878
        %v2880 = vpop.f32.mrf.mxu0
        %v2881 = vadd.f32 0.0, %v2880
        %2882 = vdwg.mxu0
        %v2883 = vadd.f32 %v2847, %v2879
        %v2884 = vadd.f32 %v2848, %v2881
        %s2885 = scalar_lea.vmem %s2, 112
        %v2886 = vld [vmem:[%s2885] sm:$0xf]
        %v2887 = vld [vmem:[%s2885 + $0x4] sm:$0x1]
        %v2890 = vunpack.c.l.b16 %v2886
        %v2891 = vunpack.c.l.b16 %v2887
        %v2892 = vpack.c.b16 %v2891, %v2890
        %2893 = vrot.lane.b32.xlu0 %v2819, 96
        %v2894 = vpop.permute.xlu0 %2893
        %2895 = vrot.lane.b32.xlu0 %v2820, 96
        %v2896 = vpop.permute.xlu0 %2895
        %vm2897 = vcmask 785408
        %v2898 = vsel %vm2897, %v2894, %v2896
        %v2900 = vsel %vm2440, %v2892, 0
        %v2903 = vsel %vm2444, %v2898, 0
        %2905 = vmatpush.bf16.msra.mxu0 0
        %2906 = vmatpush.bf16.msra.mxu0 0
        %2907 = vmatpush.bf16.msra.mxu0 0
        %2908 = vmatpush.bf16.msra.mxu0 0
        %2909 = vmatpush.bf16.msra.mxu0 0
        %2910 = vmatpush.bf16.msra.mxu0 0
        %2911 = vmatpush.bf16.msra.mxu0 0
        %2912 = vmatpush.bf16.msra.mxu0 %v2903
        %2913 = vmatmul.bf16.gmra.mxu0 %v2900
        %v2914 = vpop.f32.mrf.mxu0
        %v2915 = vadd.f32 0.0, %v2914
        %v2916 = vpop.f32.mrf.mxu0
        %v2917 = vadd.f32 0.0, %v2916
        %2918 = vdwg.mxu0
        %v2919 = vadd.f32 %v2883, %v2915
        %v2920 = vadd.f32 %v2884, %v2917
        %s2921 = scalar_lea.vmem %s2, 120
        %v2922 = vld [vmem:[%s2921] sm:$0xf]
        %v2923 = vld [vmem:[%s2921 + $0x4] sm:$0x1]
        %v2926 = vunpack.c.l.b16 %v2922
        %v2927 = vunpack.c.l.b16 %v2923
        %v2928 = vpack.c.b16 %v2927, %v2926
        %2929 = vrot.lane.b32.xlu0 %v2819, 95
        %v2930 = vpop.permute.xlu0 %2929
        %2931 = vrot.lane.b32.xlu0 %v2820, 95
        %v2932 = vpop.permute.xlu0 %2931
        %vm2933 = vcmask 777216
        %v2934 = vsel %vm2933, %v2930, %v2932
        %v2936 = vsel %vm2440, %v2928, 0
        %v2939 = vsel %vm2444, %v2934, 0
        %2941 = vmatpush.bf16.msra.mxu0 0
        %2942 = vmatpush.bf16.msra.mxu0 0
        %2943 = vmatpush.bf16.msra.mxu0 0
        %2944 = vmatpush.bf16.msra.mxu0 0
        %2945 = vmatpush.bf16.msra.mxu0 0
        %2946 = vmatpush.bf16.msra.mxu0 0
        %2947 = vmatpush.bf16.msra.mxu0 0
        %2948 = vmatpush.bf16.msra.mxu0 %v2939
        %2949 = vmatmul.bf16.gmra.mxu0 %v2936
        %v2950 = vpop.f32.mrf.mxu0
        %v2951 = vadd.f32 0.0, %v2950
        %v2952 = vpop.f32.mrf.mxu0
        %v2953 = vadd.f32 0.0, %v2952
        %2954 = vdwg.mxu0
        %v2955 = vadd.f32 %v2919, %v2951
        %v2956 = vadd.f32 %v2920, %v2953
        %v2957 = vld [vmem:[%s8] sm:$0xff]
        %v2958 = vld [vmem:[%s8 + $0x8] sm:$0x3]
        %2960 = vset.pattern.permute.xlu0 0
        %2961 = vperm.xlu0 %2960, %v2957
        %v2962 = vpop.permute.xlu0 %2961
        %2965 = vset.pattern.permute.xlu0 0
        %2966 = vperm.xlu0 %2965, %v2958
        %v2967 = vpop.permute.xlu0 %2966
        %v2969 = vadd.f32 %v2955, %v2962
        %v2970 = vadd.f32 %v2956, %v2967
        %v2971 = vld [vmem:[%s15] sm:$0xff]
        %v2972 = vld [vmem:[%s15 + $0x8] sm:$0xff]
        %v2973 = vld [vmem:[%s15 + $0x10] sm:$0xff]
        %v2974 = vld [vmem:[%s15 + $0x18] sm:$0xff]
        %v2975 = vld [vmem:[%s15 + $0x20] sm:$0xff]
        %v2976 = vld [vmem:[%s15 + $0x28] sm:$0xff]
        %v2977 = vld [vmem:[%s15 + $0x30] sm:$0xff]
        %v2978 = vld [vmem:[%s15 + $0x38] sm:$0xff]
        %v2979 = vld [vmem:[%s15 + $0x40] sm:$0xff]
        %v2980 = vld [vmem:[%s15 + $0x48] sm:$0xff]
        %v2981 = vld [vmem:[%s15 + $0x50] sm:$0xff]
        %v2982 = vld [vmem:[%s15 + $0x58] sm:$0xff]
        %v2983 = vld [vmem:[%s15 + $0x60] sm:$0xf]
        %v2984 = vmax.f32 %v2969, 0.0
        %v2985 = vmax.f32 %v2970, 0.0
        %vm2986 = vcmask 818176
        %v2988 = vsel %vm2986, %v2984, 0
        %v2991 = vsel %vm2986, %v2985, 0
        %v2994 = vsel %vm1128, %v2983, 0
        %2996 = vmatpush.msra.mxu0 0.0
        %2997 = vmatpush.msra.mxu0 0.0
        %2998 = vmatpush.msra.mxu0 0.0
        %2999 = vmatpush.msra.mxu0 %v2994
        %3000 = vmatpush.msra.mxu0 %v2982
        %3001 = vmatpush.msra.mxu0 %v2981
        %3002 = vmatpush.msra.mxu0 %v2980
        %3003 = vmatpush.msra.mxu0 %v2979
        %3004 = vmatpush.msra.mxu0 %v2978
        %3005 = vmatpush.msra.mxu0 %v2977
        %3006 = vmatpush.msra.mxu0 %v2976
        %3007 = vmatpush.msra.mxu0 %v2975
        %3008 = vmatpush.msra.mxu0 %v2974
        %3009 = vmatpush.msra.mxu0 %v2973
        %3010 = vmatpush.msra.mxu0 %v2972
        %3011 = vmatpush.msra.mxu0 %v2971
        %3012 = vmatmul.f32.gmra.mxu0 %v2988
        %v3013 = vpop.f32.mrf.mxu0
        %v3014 = vadd.f32 0.0, %v3013
        %3015 = vmatmul.f32.gmra.mxu0 %v2991
        %v3016 = vpop.f32.mrf.mxu0
        %v3017 = vadd.f32 0.0, %v3016
        %3018 = vdwg.mxu0
        %v3019 = vpack.c.bf16 %v3014, %v3014
        %v3020 = vpack.c.bf16 %v3017, %v3017
        %vm3021 = vcmask 289792
        %3022 = vst.msk [vmem:[#allocation4] sm:$0xf] %vm3021, %v3019
        %vm3023 = vcmask 286720
        %3024 = vst.msk [vmem:[#allocation4 + $0x4] sm:$0x1] %vm3023, %v3020
        %v3025 = vld [vmem:[%s3] sm:$0xf]
        %v3026 = vld [vmem:[%s3 + $0x4] sm:$0xf]
        %v3027 = vld [vmem:[#allocation4] sm:$0xf]
        %v3028 = vld [vmem:[#allocation4 + $0x4] sm:$0x1]
        %s3029 = scalar_lea.vmem %s3, 8
        %v3030 = vld [vmem:[%s3029] sm:$0xf]
        %v3031 = vld [vmem:[%s3029 + $0x4] sm:$0xf]
        %v3034 = vunpack.c.l.b16 %v3030
        %v3035 = vunpack.c.l.b16 %v3031
        %v3036 = vpack.c.b16 %v3035, %v3034
        %v3039 = vunpack.c.l.b16 %v3027
        %v3040 = vunpack.c.l.b16 %v3028
        %v3041 = vpack.c.b16 %v3040, %v3039
        %3042 = vrot.lane.b32.xlu0 %v3041, 127
        %v3043 = vpop.permute.xlu0 %3042
        %vm3044 = vcmask 80896
        %v3046 = vsel %vm3044, %v3036, 0
        %vm3048 = vcmask 1044480
        %v3050 = vsel %vm3048, %v3043, 0
        %3052 = vmatpush.bf16.msra.mxu0 0
        %3053 = vmatpush.bf16.msra.mxu0 0
        %3054 = vmatpush.bf16.msra.mxu0 0
        %3055 = vmatpush.bf16.msra.mxu0 0
        %3056 = vmatpush.bf16.msra.mxu0 0
        %3057 = vmatpush.bf16.msra.mxu0 0
        %3058 = vmatpush.bf16.msra.mxu0 0
        %3059 = vmatpush.bf16.msra.mxu0 %v3050
        %3060 = vmatmul.bf16.gmra.mxu0 %v3046
        %v3061 = vpop.f32.mrf.mxu0
        %v3062 = vadd.f32 0.0, %v3061
        %v3063 = vpop.f32.mrf.mxu0
        %v3064 = vadd.f32 0.0, %v3063
        %3065 = vdwg.mxu0
        %v3068 = vunpack.c.l.b16 %v3025
        %v3069 = vunpack.c.l.b16 %v3026
        %v3070 = vpack.c.b16 %v3069, %v3068
        %v3072 = vsel %vm3044, %v3070, 0
        %v3075 = vsel %vm3048, %v3041, 0
        %3077 = vmatpush.bf16.msra.mxu0 0
        %3078 = vmatpush.bf16.msra.mxu0 0
        %3079 = vmatpush.bf16.msra.mxu0 0
        %3080 = vmatpush.bf16.msra.mxu0 0
        %3081 = vmatpush.bf16.msra.mxu0 0
        %3082 = vmatpush.bf16.msra.mxu0 0
        %3083 = vmatpush.bf16.msra.mxu0 0
        %3084 = vmatpush.bf16.msra.mxu0 %v3075
        %3085 = vmatmul.bf16.gmra.mxu0 %v3072
        %v3086 = vpop.f32.mrf.mxu0
        %v3087 = vadd.f32 %v3062, %v3086
        %v3088 = vpop.f32.mrf.mxu0
        %v3089 = vadd.f32 %v3064, %v3088
        %3090 = vdwg.mxu0
        %s3091 = scalar_lea.vmem %s3, 16
        %v3092 = vld [vmem:[%s3091] sm:$0xf]
        %v3093 = vld [vmem:[%s3091 + $0x4] sm:$0xf]
        %v3096 = vunpack.c.l.b16 %v3092
        %v3097 = vunpack.c.l.b16 %v3093
        %v3098 = vpack.c.b16 %v3097, %v3096
        %3099 = vrot.lane.b32.xlu0 %v3041, 126
        %v3100 = vpop.permute.xlu0 %3099
        %v3102 = vsel %vm3044, %v3098, 0
        %v3105 = vsel %vm3048, %v3100, 0
        %3107 = vmatpush.bf16.msra.mxu0 0
        %3108 = vmatpush.bf16.msra.mxu0 0
        %3109 = vmatpush.bf16.msra.mxu0 0
        %3110 = vmatpush.bf16.msra.mxu0 0
        %3111 = vmatpush.bf16.msra.mxu0 0
        %3112 = vmatpush.bf16.msra.mxu0 0
        %3113 = vmatpush.bf16.msra.mxu0 0
        %3114 = vmatpush.bf16.msra.mxu0 %v3105
        %3115 = vmatmul.bf16.gmra.mxu0 %v3102
        %v3116 = vpop.f32.mrf.mxu0
        %v3117 = vadd.f32 0.0, %v3116
        %v3118 = vpop.f32.mrf.mxu0
        %v3119 = vadd.f32 0.0, %v3118
        %3120 = vdwg.mxu0
        %v3121 = vadd.f32 %v3087, %v3117
        %v3122 = vadd.f32 %v3089, %v3119
        %s3123 = scalar_lea.vmem %s3, 24
        %v3124 = vld [vmem:[%s3123] sm:$0xf]
        %v3125 = vld [vmem:[%s3123 + $0x4] sm:$0xf]
        %v3128 = vunpack.c.l.b16 %v3124
        %v3129 = vunpack.c.l.b16 %v3125
        %v3130 = vpack.c.b16 %v3129, %v3128
        %3131 = vrot.lane.b32.xlu0 %v3041, 125
        %v3132 = vpop.permute.xlu0 %3131
        %v3134 = vsel %vm3044, %v3130, 0
        %v3137 = vsel %vm3048, %v3132, 0
        %3139 = vmatpush.bf16.msra.mxu0 0
        %3140 = vmatpush.bf16.msra.mxu0 0
        %3141 = vmatpush.bf16.msra.mxu0 0
        %3142 = vmatpush.bf16.msra.mxu0 0
        %3143 = vmatpush.bf16.msra.mxu0 0
        %3144 = vmatpush.bf16.msra.mxu0 0
        %3145 = vmatpush.bf16.msra.mxu0 0
        %3146 = vmatpush.bf16.msra.mxu0 %v3137
        %3147 = vmatmul.bf16.gmra.mxu0 %v3134
        %v3148 = vpop.f32.mrf.mxu0
        %v3149 = vadd.f32 0.0, %v3148
        %v3150 = vpop.f32.mrf.mxu0
        %v3151 = vadd.f32 0.0, %v3150
        %3152 = vdwg.mxu0
        %v3153 = vadd.f32 %v3121, %v3149
        %v3154 = vadd.f32 %v3122, %v3151
        %s3155 = scalar_lea.vmem %s3, 32
        %v3156 = vld [vmem:[%s3155] sm:$0xf]
        %v3157 = vld [vmem:[%s3155 + $0x4] sm:$0xf]
        %v3160 = vunpack.c.l.b16 %v3156
        %v3161 = vunpack.c.l.b16 %v3157
        %v3162 = vpack.c.b16 %v3161, %v3160
        %3163 = vrot.lane.b32.xlu0 %v3041, 122
        %v3164 = vpop.permute.xlu0 %3163
        %v3166 = vsel %vm3044, %v3162, 0
        %v3169 = vsel %vm3048, %v3164, 0
        %3171 = vmatpush.bf16.msra.mxu0 0
        %3172 = vmatpush.bf16.msra.mxu0 0
        %3173 = vmatpush.bf16.msra.mxu0 0
        %3174 = vmatpush.bf16.msra.mxu0 0
        %3175 = vmatpush.bf16.msra.mxu0 0
        %3176 = vmatpush.bf16.msra.mxu0 0
        %3177 = vmatpush.bf16.msra.mxu0 0
        %3178 = vmatpush.bf16.msra.mxu0 %v3169
        %3179 = vmatmul.bf16.gmra.mxu0 %v3166
        %v3180 = vpop.f32.mrf.mxu0
        %v3181 = vadd.f32 0.0, %v3180
        %v3182 = vpop.f32.mrf.mxu0
        %v3183 = vadd.f32 0.0, %v3182
        %3184 = vdwg.mxu0
        %v3185 = vadd.f32 %v3153, %v3181
        %v3186 = vadd.f32 %v3154, %v3183
        %s3187 = scalar_lea.vmem %s3, 40
        %v3188 = vld [vmem:[%s3187] sm:$0xf]
        %v3189 = vld [vmem:[%s3187 + $0x4] sm:$0xf]
        %v3192 = vunpack.c.l.b16 %v3188
        %v3193 = vunpack.c.l.b16 %v3189
        %v3194 = vpack.c.b16 %v3193, %v3192
        %3195 = vrot.lane.b32.xlu0 %v3041, 121
        %v3196 = vpop.permute.xlu0 %3195
        %v3198 = vsel %vm3044, %v3194, 0
        %v3201 = vsel %vm3048, %v3196, 0
        %3203 = vmatpush.bf16.msra.mxu0 0
        %3204 = vmatpush.bf16.msra.mxu0 0
        %3205 = vmatpush.bf16.msra.mxu0 0
        %3206 = vmatpush.bf16.msra.mxu0 0
        %3207 = vmatpush.bf16.msra.mxu0 0
        %3208 = vmatpush.bf16.msra.mxu0 0
        %3209 = vmatpush.bf16.msra.mxu0 0
        %3210 = vmatpush.bf16.msra.mxu0 %v3201
        %3211 = vmatmul.bf16.gmra.mxu0 %v3198
        %v3212 = vpop.f32.mrf.mxu0
        %v3213 = vadd.f32 0.0, %v3212
        %v3214 = vpop.f32.mrf.mxu0
        %v3215 = vadd.f32 0.0, %v3214
        %3216 = vdwg.mxu0
        %v3217 = vadd.f32 %v3185, %v3213
        %v3218 = vadd.f32 %v3186, %v3215
        %s3219 = scalar_lea.vmem %s3, 48
        %v3220 = vld [vmem:[%s3219] sm:$0xf]
        %v3221 = vld [vmem:[%s3219 + $0x4] sm:$0xf]
        %v3224 = vunpack.c.l.b16 %v3220
        %v3225 = vunpack.c.l.b16 %v3221
        %v3226 = vpack.c.b16 %v3225, %v3224
        %3227 = vrot.lane.b32.xlu0 %v3041, 120
        %v3228 = vpop.permute.xlu0 %3227
        %v3230 = vsel %vm3044, %v3226, 0
        %v3233 = vsel %vm3048, %v3228, 0
        %3235 = vmatpush.bf16.msra.mxu0 0
        %3236 = vmatpush.bf16.msra.mxu0 0
        %3237 = vmatpush.bf16.msra.mxu0 0
        %3238 = vmatpush.bf16.msra.mxu0 0
        %3239 = vmatpush.bf16.msra.mxu0 0
        %3240 = vmatpush.bf16.msra.mxu0 0
        %3241 = vmatpush.bf16.msra.mxu0 0
        %3242 = vmatpush.bf16.msra.mxu0 %v3233
        %3243 = vmatmul.bf16.gmra.mxu0 %v3230
        %v3244 = vpop.f32.mrf.mxu0
        %v3245 = vadd.f32 0.0, %v3244
        %v3246 = vpop.f32.mrf.mxu0
        %v3247 = vadd.f32 0.0, %v3246
        %3248 = vdwg.mxu0
        %v3249 = vadd.f32 %v3217, %v3245
        %v3250 = vadd.f32 %v3218, %v3247
        %s3251 = scalar_lea.vmem %s3, 56
        %v3252 = vld [vmem:[%s3251] sm:$0xf]
        %v3253 = vld [vmem:[%s3251 + $0x4] sm:$0xf]
        %v3256 = vunpack.c.l.b16 %v3252
        %v3257 = vunpack.c.l.b16 %v3253
        %v3258 = vpack.c.b16 %v3257, %v3256
        %3259 = vrot.lane.b32.xlu0 %v3041, 119
        %v3260 = vpop.permute.xlu0 %3259
        %v3262 = vsel %vm3044, %v3258, 0
        %v3265 = vsel %vm3048, %v3260, 0
        %3267 = vmatpush.bf16.msra.mxu0 0
        %3268 = vmatpush.bf16.msra.mxu0 0
        %3269 = vmatpush.bf16.msra.mxu0 0
        %3270 = vmatpush.bf16.msra.mxu0 0
        %3271 = vmatpush.bf16.msra.mxu0 0
        %3272 = vmatpush.bf16.msra.mxu0 0
        %3273 = vmatpush.bf16.msra.mxu0 0
        %3274 = vmatpush.bf16.msra.mxu0 %v3265
        %3275 = vmatmul.bf16.gmra.mxu0 %v3262
        %v3276 = vpop.f32.mrf.mxu0
        %v3277 = vadd.f32 0.0, %v3276
        %v3278 = vpop.f32.mrf.mxu0
        %v3279 = vadd.f32 0.0, %v3278
        %3280 = vdwg.mxu0
        %v3281 = vadd.f32 %v3249, %v3277
        %v3282 = vadd.f32 %v3250, %v3279
        %s3283 = scalar_lea.vmem %s3, 64
        %v3284 = vld [vmem:[%s3283] sm:$0xf]
        %v3285 = vld [vmem:[%s3283 + $0x4] sm:$0xf]
        %v3288 = vunpack.c.l.b16 %v3284
        %v3289 = vunpack.c.l.b16 %v3285
        %v3290 = vpack.c.b16 %v3289, %v3288
        %3291 = vrot.lane.b32.xlu0 %v3041, 116
        %v3292 = vpop.permute.xlu0 %3291
        %v3294 = vsel %vm3044, %v3290, 0
        %v3297 = vsel %vm3048, %v3292, 0
        %3299 = vmatpush.bf16.msra.mxu0 0
        %3300 = vmatpush.bf16.msra.mxu0 0
        %3301 = vmatpush.bf16.msra.mxu0 0
        %3302 = vmatpush.bf16.msra.mxu0 0
        %3303 = vmatpush.bf16.msra.mxu0 0
        %3304 = vmatpush.bf16.msra.mxu0 0
        %3305 = vmatpush.bf16.msra.mxu0 0
        %3306 = vmatpush.bf16.msra.mxu0 %v3297
        %3307 = vmatmul.bf16.gmra.mxu0 %v3294
        %v3308 = vpop.f32.mrf.mxu0
        %v3309 = vadd.f32 0.0, %v3308
        %v3310 = vpop.f32.mrf.mxu0
        %v3311 = vadd.f32 0.0, %v3310
        %3312 = vdwg.mxu0
        %v3313 = vadd.f32 %v3281, %v3309
        %v3314 = vadd.f32 %v3282, %v3311
        %s3315 = scalar_lea.vmem %s3, 72
        %v3316 = vld [vmem:[%s3315] sm:$0xf]
        %v3317 = vld [vmem:[%s3315 + $0x4] sm:$0xf]
        %v3320 = vunpack.c.l.b16 %v3316
        %v3321 = vunpack.c.l.b16 %v3317
        %v3322 = vpack.c.b16 %v3321, %v3320
        %3323 = vrot.lane.b32.xlu0 %v3041, 115
        %v3324 = vpop.permute.xlu0 %3323
        %v3326 = vsel %vm3044, %v3322, 0
        %v3329 = vsel %vm3048, %v3324, 0
        %3331 = vmatpush.bf16.msra.mxu0 0
        %3332 = vmatpush.bf16.msra.mxu0 0
        %3333 = vmatpush.bf16.msra.mxu0 0
        %3334 = vmatpush.bf16.msra.mxu0 0
        %3335 = vmatpush.bf16.msra.mxu0 0
        %3336 = vmatpush.bf16.msra.mxu0 0
        %3337 = vmatpush.bf16.msra.mxu0 0
        %3338 = vmatpush.bf16.msra.mxu0 %v3329
        %3339 = vmatmul.bf16.gmra.mxu0 %v3326
        %v3340 = vpop.f32.mrf.mxu0
        %v3341 = vadd.f32 0.0, %v3340
        %v3342 = vpop.f32.mrf.mxu0
        %v3343 = vadd.f32 0.0, %v3342
        %3344 = vdwg.mxu0
        %v3345 = vadd.f32 %v3313, %v3341
        %v3346 = vadd.f32 %v3314, %v3343
        %s3347 = scalar_lea.vmem %s3, 80
        %v3348 = vld [vmem:[%s3347] sm:$0xf]
        %v3349 = vld [vmem:[%s3347 + $0x4] sm:$0xf]
        %v3352 = vunpack.c.l.b16 %v3348
        %v3353 = vunpack.c.l.b16 %v3349
        %v3354 = vpack.c.b16 %v3353, %v3352
        %3355 = vrot.lane.b32.xlu0 %v3041, 114
        %v3356 = vpop.permute.xlu0 %3355
        %v3358 = vsel %vm3044, %v3354, 0
        %v3361 = vsel %vm3048, %v3356, 0
        %3363 = vmatpush.bf16.msra.mxu0 0
        %3364 = vmatpush.bf16.msra.mxu0 0
        %3365 = vmatpush.bf16.msra.mxu0 0
        %3366 = vmatpush.bf16.msra.mxu0 0
        %3367 = vmatpush.bf16.msra.mxu0 0
        %3368 = vmatpush.bf16.msra.mxu0 0
        %3369 = vmatpush.bf16.msra.mxu0 0
        %3370 = vmatpush.bf16.msra.mxu0 %v3361
        %3371 = vmatmul.bf16.gmra.mxu0 %v3358
        %v3372 = vpop.f32.mrf.mxu0
        %v3373 = vadd.f32 0.0, %v3372
        %v3374 = vpop.f32.mrf.mxu0
        %v3375 = vadd.f32 0.0, %v3374
        %3376 = vdwg.mxu0
        %v3377 = vadd.f32 %v3345, %v3373
        %v3378 = vadd.f32 %v3346, %v3375
        %s3379 = scalar_lea.vmem %s3, 88
        %v3380 = vld [vmem:[%s3379] sm:$0xf]
        %v3381 = vld [vmem:[%s3379 + $0x4] sm:$0xf]
        %v3384 = vunpack.c.l.b16 %v3380
        %v3385 = vunpack.c.l.b16 %v3381
        %v3386 = vpack.c.b16 %v3385, %v3384
        %3387 = vrot.lane.b32.xlu0 %v3041, 113
        %v3388 = vpop.permute.xlu0 %3387
        %v3390 = vsel %vm3044, %v3386, 0
        %v3393 = vsel %vm3048, %v3388, 0
        %3395 = vmatpush.bf16.msra.mxu0 0
        %3396 = vmatpush.bf16.msra.mxu0 0
        %3397 = vmatpush.bf16.msra.mxu0 0
        %3398 = vmatpush.bf16.msra.mxu0 0
        %3399 = vmatpush.bf16.msra.mxu0 0
        %3400 = vmatpush.bf16.msra.mxu0 0
        %3401 = vmatpush.bf16.msra.mxu0 0
        %3402 = vmatpush.bf16.msra.mxu0 %v3393
        %3403 = vmatmul.bf16.gmra.mxu0 %v3390
        %v3404 = vpop.f32.mrf.mxu0
        %v3405 = vadd.f32 0.0, %v3404
        %v3406 = vpop.f32.mrf.mxu0
        %v3407 = vadd.f32 0.0, %v3406
        %3408 = vdwg.mxu0
        %v3409 = vadd.f32 %v3377, %v3405
        %v3410 = vadd.f32 %v3378, %v3407
        %s3411 = scalar_lea.vmem %s3, 96
        %v3412 = vld [vmem:[%s3411] sm:$0xf]
        %v3413 = vld [vmem:[%s3411 + $0x4] sm:$0xf]
        %v3416 = vunpack.c.l.b16 %v3412
        %v3417 = vunpack.c.l.b16 %v3413
        %v3418 = vpack.c.b16 %v3417, %v3416
        %3419 = vrot.lane.b32.xlu0 %v3041, 110
        %v3420 = vpop.permute.xlu0 %3419
        %v3422 = vsel %vm3044, %v3418, 0
        %v3425 = vsel %vm3048, %v3420, 0
        %3427 = vmatpush.bf16.msra.mxu0 0
        %3428 = vmatpush.bf16.msra.mxu0 0
        %3429 = vmatpush.bf16.msra.mxu0 0
        %3430 = vmatpush.bf16.msra.mxu0 0
        %3431 = vmatpush.bf16.msra.mxu0 0
        %3432 = vmatpush.bf16.msra.mxu0 0
        %3433 = vmatpush.bf16.msra.mxu0 0
        %3434 = vmatpush.bf16.msra.mxu0 %v3425
        %3435 = vmatmul.bf16.gmra.mxu0 %v3422
        %v3436 = vpop.f32.mrf.mxu0
        %v3437 = vadd.f32 0.0, %v3436
        %v3438 = vpop.f32.mrf.mxu0
        %v3439 = vadd.f32 0.0, %v3438
        %3440 = vdwg.mxu0
        %v3441 = vadd.f32 %v3409, %v3437
        %v3442 = vadd.f32 %v3410, %v3439
        %s3443 = scalar_lea.vmem %s3, 104
        %v3444 = vld [vmem:[%s3443] sm:$0xf]
        %v3445 = vld [vmem:[%s3443 + $0x4] sm:$0xf]
        %v3448 = vunpack.c.l.b16 %v3444
        %v3449 = vunpack.c.l.b16 %v3445
        %v3450 = vpack.c.b16 %v3449, %v3448
        %3451 = vrot.lane.b32.xlu0 %v3041, 109
        %v3452 = vpop.permute.xlu0 %3451
        %v3454 = vsel %vm3044, %v3450, 0
        %v3457 = vsel %vm3048, %v3452, 0
        %3459 = vmatpush.bf16.msra.mxu0 0
        %3460 = vmatpush.bf16.msra.mxu0 0
        %3461 = vmatpush.bf16.msra.mxu0 0
        %3462 = vmatpush.bf16.msra.mxu0 0
        %3463 = vmatpush.bf16.msra.mxu0 0
        %3464 = vmatpush.bf16.msra.mxu0 0
        %3465 = vmatpush.bf16.msra.mxu0 0
        %3466 = vmatpush.bf16.msra.mxu0 %v3457
        %3467 = vmatmul.bf16.gmra.mxu0 %v3454
        %v3468 = vpop.f32.mrf.mxu0
        %v3469 = vadd.f32 0.0, %v3468
        %v3470 = vpop.f32.mrf.mxu0
        %v3471 = vadd.f32 0.0, %v3470
        %3472 = vdwg.mxu0
        %v3473 = vadd.f32 %v3441, %v3469
        %v3474 = vadd.f32 %v3442, %v3471
        %s3475 = scalar_lea.vmem %s3, 112
        %v3476 = vld [vmem:[%s3475] sm:$0xf]
        %v3477 = vld [vmem:[%s3475 + $0x4] sm:$0xf]
        %v3480 = vunpack.c.l.b16 %v3476
        %v3481 = vunpack.c.l.b16 %v3477
        %v3482 = vpack.c.b16 %v3481, %v3480
        %3483 = vrot.lane.b32.xlu0 %v3041, 108
        %v3484 = vpop.permute.xlu0 %3483
        %v3486 = vsel %vm3044, %v3482, 0
        %v3489 = vsel %vm3048, %v3484, 0
        %3491 = vmatpush.bf16.msra.mxu0 0
        %3492 = vmatpush.bf16.msra.mxu0 0
        %3493 = vmatpush.bf16.msra.mxu0 0
        %3494 = vmatpush.bf16.msra.mxu0 0
        %3495 = vmatpush.bf16.msra.mxu0 0
        %3496 = vmatpush.bf16.msra.mxu0 0
        %3497 = vmatpush.bf16.msra.mxu0 0
        %3498 = vmatpush.bf16.msra.mxu0 %v3489
        %3499 = vmatmul.bf16.gmra.mxu0 %v3486
        %v3500 = vpop.f32.mrf.mxu0
        %v3501 = vadd.f32 0.0, %v3500
        %v3502 = vpop.f32.mrf.mxu0
        %v3503 = vadd.f32 0.0, %v3502
        %3504 = vdwg.mxu0
        %v3505 = vadd.f32 %v3473, %v3501
        %v3506 = vadd.f32 %v3474, %v3503
        %s3507 = scalar_lea.vmem %s3, 120
        %v3508 = vld [vmem:[%s3507] sm:$0xf]
        %v3509 = vld [vmem:[%s3507 + $0x4] sm:$0xf]
        %v3512 = vunpack.c.l.b16 %v3508
        %v3513 = vunpack.c.l.b16 %v3509
        %v3514 = vpack.c.b16 %v3513, %v3512
        %3515 = vrot.lane.b32.xlu0 %v3041, 107
        %v3516 = vpop.permute.xlu0 %3515
        %v3518 = vsel %vm3044, %v3514, 0
        %v3521 = vsel %vm3048, %v3516, 0
        %3523 = vmatpush.bf16.msra.mxu0 0
        %3524 = vmatpush.bf16.msra.mxu0 0
        %3525 = vmatpush.bf16.msra.mxu0 0
        %3526 = vmatpush.bf16.msra.mxu0 0
        %3527 = vmatpush.bf16.msra.mxu0 0
        %3528 = vmatpush.bf16.msra.mxu0 0
        %3529 = vmatpush.bf16.msra.mxu0 0
        %3530 = vmatpush.bf16.msra.mxu0 %v3521
        %3531 = vmatmul.bf16.gmra.mxu0 %v3518
        %v3532 = vpop.f32.mrf.mxu0
        %v3533 = vadd.f32 0.0, %v3532
        %v3534 = vpop.f32.mrf.mxu0
        %v3535 = vadd.f32 0.0, %v3534
        %3536 = vdwg.mxu0
        %v3537 = vadd.f32 %v3505, %v3533
        %v3538 = vadd.f32 %v3506, %v3535
        %v3539 = vld [vmem:[%s9] sm:$0xff]
        %v3540 = vld [vmem:[%s9 + $0x8] sm:$0x7f]
        %3542 = vset.pattern.permute.xlu0 0
        %3543 = vperm.xlu0 %3542, %v3539
        %v3544 = vpop.permute.xlu0 %3543
        %3547 = vset.pattern.permute.xlu0 0
        %3548 = vperm.xlu0 %3547, %v3540
        %v3549 = vpop.permute.xlu0 %3548
        %v3551 = vadd.f32 %v3537, %v3544
        %v3552 = vadd.f32 %v3538, %v3549
        %v3553 = vld [vmem:[%s16] sm:$0xff]
        %v3554 = vld [vmem:[%s16 + $0x8] sm:$0xff]
        %v3555 = vld [vmem:[%s16 + $0x10] sm:$0xff]
        %v3556 = vld [vmem:[%s16 + $0x18] sm:$0xff]
        %v3557 = vld [vmem:[%s16 + $0x20] sm:$0xf]
        %v3558 = vmax.f32 %v3551, 0.0
        %v3559 = vmax.f32 %v3552, 0.0
        %vm3560 = vcmask 293888
        %v3562 = vsel %vm3560, %v3558, 0
        %v3565 = vsel %vm3560, %v3559, 0
        %v3568 = vsel %vm1128, %v3557, 0
        %3570 = vmatpush.msra.mxu0 0.0
        %3571 = vmatpush.msra.mxu0 0.0
        %3572 = vmatpush.msra.mxu0 0.0
        %3573 = vmatpush.msra.mxu0 0.0
        %3574 = vmatpush.msra.mxu0 0.0
        %3575 = vmatpush.msra.mxu0 0.0
        %3576 = vmatpush.msra.mxu0 0.0
        %3577 = vmatpush.msra.mxu0 0.0
        %3578 = vmatpush.msra.mxu0 0.0
        %3579 = vmatpush.msra.mxu0 0.0
        %3580 = vmatpush.msra.mxu0 0.0
        %3581 = vmatpush.msra.mxu0 %v3568
        %3582 = vmatpush.msra.mxu0 %v3556
        %3583 = vmatpush.msra.mxu0 %v3555
        %3584 = vmatpush.msra.mxu0 %v3554
        %3585 = vmatpush.msra.mxu0 %v3553
        %3586 = vmatmul.f32.gmra.mxu0 %v3562
        %v3587 = vpop.f32.mrf.mxu0
        %v3588 = vadd.f32 0.0, %v3587
        %3589 = vmatmul.f32.gmra.mxu0 %v3565
        %v3590 = vpop.f32.mrf.mxu0
        %v3591 = vadd.f32 0.0, %v3590
        %3592 = vdwg.mxu0
        %v3593 = vpack.c.bf16 %v3588, %v3588
        %v3594 = vpack.c.bf16 %v3591, %v3591
        %vm3595 = vcmask 396288
        %3596 = vst.msk [vmem:[#allocation5] sm:$0xf] %vm3595, %v3593
        %vm3597 = vcmask 396288
        %vm3598 = vmand %vm3597, %vm685
        %v3599 = vld [vmem:[#allocation5 + $0x4] sm:$0xf]
        %v3600 = vsel %vm3598, %v3594, %v3599
        %3601 = vst [vmem:[#allocation5 + $0x4] sm:$0xf] %v3600
        %v3602 = vld [vmem:[%s4] sm:$0xf]
        %v3603 = vld [vmem:[%s4 + $0x4] sm:$0x1]
        %v3604 = vld [vmem:[#allocation5] sm:$0xf]
        %v3605 = vld [vmem:[#allocation5 + $0x4] sm:$0xf]
        %s3606 = scalar_lea.vmem %s4, 8
        %v3607 = vld [vmem:[%s3606] sm:$0xf]
        %v3608 = vld [vmem:[%s3606 + $0x4] sm:$0x1]
        %v3611 = vunpack.c.l.b16 %v3607
        %v3612 = vunpack.c.l.b16 %v3608
        %v3613 = vpack.c.b16 %v3612, %v3611
        %v3616 = vunpack.c.l.b16 %v3604
        %v3617 = vunpack.c.l.b16 %v3605
        %v3618 = vpack.c.b16 %v3617, %v3616
        %3619 = vrot.lane.b32.xlu0 %v3618, 127
        %v3620 = vpop.permute.xlu0 %3619
        %vm3621 = vcmask 121856
        %v3623 = vsel %vm3621, %v3613, 0
        %vm3625 = vcmask 1046528
        %vm3626 = vcmask 1047552
        %v3627 = vsel %vm3625, 4294967295, 65535
        %v3628 = vsel %vm3626, %v3627, 0
        %v3630 = vand.u32 %v3620, %v3628
        %3632 = vmatpush.bf16.msra.mxu0 0
        %3633 = vmatpush.bf16.msra.mxu0 0
        %3634 = vmatpush.bf16.msra.mxu0 0
        %3635 = vmatpush.bf16.msra.mxu0 0
        %3636 = vmatpush.bf16.msra.mxu0 0
        %3637 = vmatpush.bf16.msra.mxu0 0
        %3638 = vmatpush.bf16.msra.mxu0 0
        %3639 = vmatpush.bf16.msra.mxu0 %v3630
        %3640 = vmatmul.bf16.gmra.mxu0 %v3623
        %v3641 = vpop.f32.mrf.mxu0
        %v3642 = vadd.f32 0.0, %v3641
        %v3643 = vpop.f32.mrf.mxu0
        %v3644 = vadd.f32 0.0, %v3643
        %3645 = vdwg.mxu0
        %v3648 = vunpack.c.l.b16 %v3602
        %v3649 = vunpack.c.l.b16 %v3603
        %v3650 = vpack.c.b16 %v3649, %v3648
        %v3652 = vsel %vm3621, %v3650, 0
        %v3655 = vand.u32 %v3618, %v3628
        %3657 = vmatpush.bf16.msra.mxu0 0
        %3658 = vmatpush.bf16.msra.mxu0 0
        %3659 = vmatpush.bf16.msra.mxu0 0
        %3660 = vmatpush.bf16.msra.mxu0 0
        %3661 = vmatpush.bf16.msra.mxu0 0
        %3662 = vmatpush.bf16.msra.mxu0 0
        %3663 = vmatpush.bf16.msra.mxu0 0
        %3664 = vmatpush.bf16.msra.mxu0 %v3655
        %3665 = vmatmul.bf16.gmra.mxu0 %v3652
        %v3666 = vpop.f32.mrf.mxu0
        %v3667 = vadd.f32 %v3642, %v3666
        %v3668 = vpop.f32.mrf.mxu0
        %v3669 = vadd.f32 %v3644, %v3668
        %3670 = vdwg.mxu0
        %s3671 = scalar_lea.vmem %s4, 16
        %v3672 = vld [vmem:[%s3671] sm:$0xf]
        %v3673 = vld [vmem:[%s3671 + $0x4] sm:$0x1]
        %v3676 = vunpack.c.l.b16 %v3672
        %v3677 = vunpack.c.l.b16 %v3673
        %v3678 = vpack.c.b16 %v3677, %v3676
        %3679 = vrot.lane.b32.xlu0 %v3618, 126
        %v3680 = vpop.permute.xlu0 %3679
        %v3682 = vsel %vm3621, %v3678, 0
        %v3685 = vand.u32 %v3680, %v3628
        %3687 = vmatpush.bf16.msra.mxu0 0
        %3688 = vmatpush.bf16.msra.mxu0 0
        %3689 = vmatpush.bf16.msra.mxu0 0
        %3690 = vmatpush.bf16.msra.mxu0 0
        %3691 = vmatpush.bf16.msra.mxu0 0
        %3692 = vmatpush.bf16.msra.mxu0 0
        %3693 = vmatpush.bf16.msra.mxu0 0
        %3694 = vmatpush.bf16.msra.mxu0 %v3685
        %3695 = vmatmul.bf16.gmra.mxu0 %v3682
        %v3696 = vpop.f32.mrf.mxu0
        %v3697 = vadd.f32 0.0, %v3696
        %v3698 = vpop.f32.mrf.mxu0
        %v3699 = vadd.f32 0.0, %v3698
        %3700 = vdwg.mxu0
        %v3701 = vadd.f32 %v3667, %v3697
        %v3702 = vadd.f32 %v3669, %v3699
        %s3703 = scalar_lea.vmem %s4, 24
        %v3704 = vld [vmem:[%s3703] sm:$0xf]
        %v3705 = vld [vmem:[%s3703 + $0x4] sm:$0x1]
        %v3708 = vunpack.c.l.b16 %v3704
        %v3709 = vunpack.c.l.b16 %v3705
        %v3710 = vpack.c.b16 %v3709, %v3708
        %3711 = vrot.lane.b32.xlu0 %v3618, 125
        %v3712 = vpop.permute.xlu0 %3711
        %v3714 = vsel %vm3621, %v3710, 0
        %v3717 = vand.u32 %v3712, %v3628
        %3719 = vmatpush.bf16.msra.mxu0 0
        %3720 = vmatpush.bf16.msra.mxu0 0
        %3721 = vmatpush.bf16.msra.mxu0 0
        %3722 = vmatpush.bf16.msra.mxu0 0
        %3723 = vmatpush.bf16.msra.mxu0 0
        %3724 = vmatpush.bf16.msra.mxu0 0
        %3725 = vmatpush.bf16.msra.mxu0 0
        %3726 = vmatpush.bf16.msra.mxu0 %v3717
        %3727 = vmatmul.bf16.gmra.mxu0 %v3714
        %v3728 = vpop.f32.mrf.mxu0
        %v3729 = vadd.f32 0.0, %v3728
        %v3730 = vpop.f32.mrf.mxu0
        %v3731 = vadd.f32 0.0, %v3730
        %3732 = vdwg.mxu0
        %v3733 = vadd.f32 %v3701, %v3729
        %v3734 = vadd.f32 %v3702, %v3731
        %s3735 = scalar_lea.vmem %s4, 32
        %v3736 = vld [vmem:[%s3735] sm:$0xf]
        %v3737 = vld [vmem:[%s3735 + $0x4] sm:$0x1]
        %v3740 = vunpack.c.l.b16 %v3736
        %v3741 = vunpack.c.l.b16 %v3737
        %v3742 = vpack.c.b16 %v3741, %v3740
        %3743 = vrot.lane.b32.xlu0 %v3618, 121
        %v3744 = vpop.permute.xlu0 %3743
        %v3746 = vsel %vm3621, %v3742, 0
        %v3749 = vand.u32 %v3744, %v3628
        %3751 = vmatpush.bf16.msra.mxu0 0
        %3752 = vmatpush.bf16.msra.mxu0 0
        %3753 = vmatpush.bf16.msra.mxu0 0
        %3754 = vmatpush.bf16.msra.mxu0 0
        %3755 = vmatpush.bf16.msra.mxu0 0
        %3756 = vmatpush.bf16.msra.mxu0 0
        %3757 = vmatpush.bf16.msra.mxu0 0
        %3758 = vmatpush.bf16.msra.mxu0 %v3749
        %3759 = vmatmul.bf16.gmra.mxu0 %v3746
        %v3760 = vpop.f32.mrf.mxu0
        %v3761 = vadd.f32 0.0, %v3760
        %v3762 = vpop.f32.mrf.mxu0
        %v3763 = vadd.f32 0.0, %v3762
        %3764 = vdwg.mxu0
        %v3765 = vadd.f32 %v3733, %v3761
        %v3766 = vadd.f32 %v3734, %v3763
        %s3767 = scalar_lea.vmem %s4, 40
        %v3768 = vld [vmem:[%s3767] sm:$0xf]
        %v3769 = vld [vmem:[%s3767 + $0x4] sm:$0x1]
        %v3772 = vunpack.c.l.b16 %v3768
        %v3773 = vunpack.c.l.b16 %v3769
        %v3774 = vpack.c.b16 %v3773, %v3772
        %3775 = vrot.lane.b32.xlu0 %v3618, 120
        %v3776 = vpop.permute.xlu0 %3775
        %v3778 = vsel %vm3621, %v3774, 0
        %v3781 = vand.u32 %v3776, %v3628
        %3783 = vmatpush.bf16.msra.mxu0 0
        %3784 = vmatpush.bf16.msra.mxu0 0
        %3785 = vmatpush.bf16.msra.mxu0 0
        %3786 = vmatpush.bf16.msra.mxu0 0
        %3787 = vmatpush.bf16.msra.mxu0 0
        %3788 = vmatpush.bf16.msra.mxu0 0
        %3789 = vmatpush.bf16.msra.mxu0 0
        %3790 = vmatpush.bf16.msra.mxu0 %v3781
        %3791 = vmatmul.bf16.gmra.mxu0 %v3778
        %v3792 = vpop.f32.mrf.mxu0
        %v3793 = vadd.f32 0.0, %v3792
        %v3794 = vpop.f32.mrf.mxu0
        %v3795 = vadd.f32 0.0, %v3794
        %3796 = vdwg.mxu0
        %v3797 = vadd.f32 %v3765, %v3793
        %v3798 = vadd.f32 %v3766, %v3795
        %s3799 = scalar_lea.vmem %s4, 48
        %v3800 = vld [vmem:[%s3799] sm:$0xf]
        %v3801 = vld [vmem:[%s3799 + $0x4] sm:$0x1]
        %v3804 = vunpack.c.l.b16 %v3800
        %v3805 = vunpack.c.l.b16 %v3801
        %v3806 = vpack.c.b16 %v3805, %v3804
        %3807 = vrot.lane.b32.xlu0 %v3618, 119
        %v3808 = vpop.permute.xlu0 %3807
        %v3810 = vsel %vm3621, %v3806, 0
        %v3813 = vand.u32 %v3808, %v3628
        %3815 = vmatpush.bf16.msra.mxu0 0
        %3816 = vmatpush.bf16.msra.mxu0 0
        %3817 = vmatpush.bf16.msra.mxu0 0
        %3818 = vmatpush.bf16.msra.mxu0 0
        %3819 = vmatpush.bf16.msra.mxu0 0
        %3820 = vmatpush.bf16.msra.mxu0 0
        %3821 = vmatpush.bf16.msra.mxu0 0
        %3822 = vmatpush.bf16.msra.mxu0 %v3813
        %3823 = vmatmul.bf16.gmra.mxu0 %v3810
        %v3824 = vpop.f32.mrf.mxu0
        %v3825 = vadd.f32 0.0, %v3824
        %v3826 = vpop.f32.mrf.mxu0
        %v3827 = vadd.f32 0.0, %v3826
        %3828 = vdwg.mxu0
        %v3829 = vadd.f32 %v3797, %v3825
        %v3830 = vadd.f32 %v3798, %v3827
        %s3831 = scalar_lea.vmem %s4, 56
        %v3832 = vld [vmem:[%s3831] sm:$0xf]
        %v3833 = vld [vmem:[%s3831 + $0x4] sm:$0x1]
        %v3836 = vunpack.c.l.b16 %v3832
        %v3837 = vunpack.c.l.b16 %v3833
        %v3838 = vpack.c.b16 %v3837, %v3836
        %3839 = vrot.lane.b32.xlu0 %v3618, 118
        %v3840 = vpop.permute.xlu0 %3839
        %v3842 = vsel %vm3621, %v3838, 0
        %v3845 = vand.u32 %v3840, %v3628
        %3847 = vmatpush.bf16.msra.mxu0 0
        %3848 = vmatpush.bf16.msra.mxu0 0
        %3849 = vmatpush.bf16.msra.mxu0 0
        %3850 = vmatpush.bf16.msra.mxu0 0
        %3851 = vmatpush.bf16.msra.mxu0 0
        %3852 = vmatpush.bf16.msra.mxu0 0
        %3853 = vmatpush.bf16.msra.mxu0 0
        %3854 = vmatpush.bf16.msra.mxu0 %v3845
        %3855 = vmatmul.bf16.gmra.mxu0 %v3842
        %v3856 = vpop.f32.mrf.mxu0
        %v3857 = vadd.f32 0.0, %v3856
        %v3858 = vpop.f32.mrf.mxu0
        %v3859 = vadd.f32 0.0, %v3858
        %3860 = vdwg.mxu0
        %v3861 = vadd.f32 %v3829, %v3857
        %v3862 = vadd.f32 %v3830, %v3859
        %s3863 = scalar_lea.vmem %s4, 64
        %v3864 = vld [vmem:[%s3863] sm:$0xf]
        %v3865 = vld [vmem:[%s3863 + $0x4] sm:$0x1]
        %v3868 = vunpack.c.l.b16 %v3864
        %v3869 = vunpack.c.l.b16 %v3865
        %v3870 = vpack.c.b16 %v3869, %v3868
        %3871 = vrot.lane.b32.xlu0 %v3618, 114
        %v3872 = vpop.permute.xlu0 %3871
        %v3874 = vsel %vm3621, %v3870, 0
        %v3877 = vand.u32 %v3872, %v3628
        %3879 = vmatpush.bf16.msra.mxu0 0
        %3880 = vmatpush.bf16.msra.mxu0 0
        %3881 = vmatpush.bf16.msra.mxu0 0
        %3882 = vmatpush.bf16.msra.mxu0 0
        %3883 = vmatpush.bf16.msra.mxu0 0
        %3884 = vmatpush.bf16.msra.mxu0 0
        %3885 = vmatpush.bf16.msra.mxu0 0
        %3886 = vmatpush.bf16.msra.mxu0 %v3877
        %3887 = vmatmul.bf16.gmra.mxu0 %v3874
        %v3888 = vpop.f32.mrf.mxu0
        %v3889 = vadd.f32 0.0, %v3888
        %v3890 = vpop.f32.mrf.mxu0
        %v3891 = vadd.f32 0.0, %v3890
        %3892 = vdwg.mxu0
        %v3893 = vadd.f32 %v3861, %v3889
        %v3894 = vadd.f32 %v3862, %v3891
        %s3895 = scalar_lea.vmem %s4, 72
        %v3896 = vld [vmem:[%s3895] sm:$0xf]
        %v3897 = vld [vmem:[%s3895 + $0x4] sm:$0x1]
        %v3900 = vunpack.c.l.b16 %v3896
        %v3901 = vunpack.c.l.b16 %v3897
        %v3902 = vpack.c.b16 %v3901, %v3900
        %3903 = vrot.lane.b32.xlu0 %v3618, 113
        %v3904 = vpop.permute.xlu0 %3903
        %v3906 = vsel %vm3621, %v3902, 0
        %v3909 = vand.u32 %v3904, %v3628
        %3911 = vmatpush.bf16.msra.mxu0 0
        %3912 = vmatpush.bf16.msra.mxu0 0
        %3913 = vmatpush.bf16.msra.mxu0 0
        %3914 = vmatpush.bf16.msra.mxu0 0
        %3915 = vmatpush.bf16.msra.mxu0 0
        %3916 = vmatpush.bf16.msra.mxu0 0
        %3917 = vmatpush.bf16.msra.mxu0 0
        %3918 = vmatpush.bf16.msra.mxu0 %v3909
        %3919 = vmatmul.bf16.gmra.mxu0 %v3906
        %v3920 = vpop.f32.mrf.mxu0
        %v3921 = vadd.f32 0.0, %v3920
        %v3922 = vpop.f32.mrf.mxu0
        %v3923 = vadd.f32 0.0, %v3922
        %3924 = vdwg.mxu0
        %v3925 = vadd.f32 %v3893, %v3921
        %v3926 = vadd.f32 %v3894, %v3923
        %s3927 = scalar_lea.vmem %s4, 80
        %v3928 = vld [vmem:[%s3927] sm:$0xf]
        %v3929 = vld [vmem:[%s3927 + $0x4] sm:$0x1]
        %v3932 = vunpack.c.l.b16 %v3928
        %v3933 = vunpack.c.l.b16 %v3929
        %v3934 = vpack.c.b16 %v3933, %v3932
        %3935 = vrot.lane.b32.xlu0 %v3618, 112
        %v3936 = vpop.permute.xlu0 %3935
        %v3938 = vsel %vm3621, %v3934, 0
        %v3941 = vand.u32 %v3936, %v3628
        %3943 = vmatpush.bf16.msra.mxu0 0
        %3944 = vmatpush.bf16.msra.mxu0 0
        %3945 = vmatpush.bf16.msra.mxu0 0
        %3946 = vmatpush.bf16.msra.mxu0 0
        %3947 = vmatpush.bf16.msra.mxu0 0
        %3948 = vmatpush.bf16.msra.mxu0 0
        %3949 = vmatpush.bf16.msra.mxu0 0
        %3950 = vmatpush.bf16.msra.mxu0 %v3941
        %3951 = vmatmul.bf16.gmra.mxu0 %v3938
        %v3952 = vpop.f32.mrf.mxu0
        %v3953 = vadd.f32 0.0, %v3952
        %v3954 = vpop.f32.mrf.mxu0
        %v3955 = vadd.f32 0.0, %v3954
        %3956 = vdwg.mxu0
        %v3957 = vadd.f32 %v3925, %v3953
        %v3958 = vadd.f32 %v3926, %v3955
        %s3959 = scalar_lea.vmem %s4, 88
        %v3960 = vld [vmem:[%s3959] sm:$0xf]
        %v3961 = vld [vmem:[%s3959 + $0x4] sm:$0x1]
        %v3964 = vunpack.c.l.b16 %v3960
        %v3965 = vunpack.c.l.b16 %v3961
        %v3966 = vpack.c.b16 %v3965, %v3964
        %3967 = vrot.lane.b32.xlu0 %v3618, 111
        %v3968 = vpop.permute.xlu0 %3967
        %v3970 = vsel %vm3621, %v3966, 0
        %v3973 = vand.u32 %v3968, %v3628
        %3975 = vmatpush.bf16.msra.mxu0 0
        %3976 = vmatpush.bf16.msra.mxu0 0
        %3977 = vmatpush.bf16.msra.mxu0 0
        %3978 = vmatpush.bf16.msra.mxu0 0
        %3979 = vmatpush.bf16.msra.mxu0 0
        %3980 = vmatpush.bf16.msra.mxu0 0
        %3981 = vmatpush.bf16.msra.mxu0 0
        %3982 = vmatpush.bf16.msra.mxu0 %v3973
        %3983 = vmatmul.bf16.gmra.mxu0 %v3970
        %v3984 = vpop.f32.mrf.mxu0
        %v3985 = vadd.f32 0.0, %v3984
        %v3986 = vpop.f32.mrf.mxu0
        %v3987 = vadd.f32 0.0, %v3986
        %3988 = vdwg.mxu0
        %v3989 = vadd.f32 %v3957, %v3985
        %v3990 = vadd.f32 %v3958, %v3987
        %s3991 = scalar_lea.vmem %s4, 96
        %v3992 = vld [vmem:[%s3991] sm:$0xf]
        %v3993 = vld [vmem:[%s3991 + $0x4] sm:$0x1]
        %v3996 = vunpack.c.l.b16 %v3992
        %v3997 = vunpack.c.l.b16 %v3993
        %v3998 = vpack.c.b16 %v3997, %v3996
        %3999 = vrot.lane.b32.xlu0 %v3618, 107
        %v4000 = vpop.permute.xlu0 %3999
        %v4002 = vsel %vm3621, %v3998, 0
        %v4005 = vand.u32 %v4000, %v3628
        %4007 = vmatpush.bf16.msra.mxu0 0
        %4008 = vmatpush.bf16.msra.mxu0 0
        %4009 = vmatpush.bf16.msra.mxu0 0
        %4010 = vmatpush.bf16.msra.mxu0 0
        %4011 = vmatpush.bf16.msra.mxu0 0
        %4012 = vmatpush.bf16.msra.mxu0 0
        %4013 = vmatpush.bf16.msra.mxu0 0
        %4014 = vmatpush.bf16.msra.mxu0 %v4005
        %4015 = vmatmul.bf16.gmra.mxu0 %v4002
        %v4016 = vpop.f32.mrf.mxu0
        %v4017 = vadd.f32 0.0, %v4016
        %v4018 = vpop.f32.mrf.mxu0
        %v4019 = vadd.f32 0.0, %v4018
        %4020 = vdwg.mxu0
        %v4021 = vadd.f32 %v3989, %v4017
        %v4022 = vadd.f32 %v3990, %v4019
        %s4023 = scalar_lea.vmem %s4, 104
        %v4024 = vld [vmem:[%s4023] sm:$0xf]
        %v4025 = vld [vmem:[%s4023 + $0x4] sm:$0x1]
        %v4028 = vunpack.c.l.b16 %v4024
        %v4029 = vunpack.c.l.b16 %v4025
        %v4030 = vpack.c.b16 %v4029, %v4028
        %4031 = vrot.lane.b32.xlu0 %v3618, 106
        %v4032 = vpop.permute.xlu0 %4031
        %v4034 = vsel %vm3621, %v4030, 0
        %v4037 = vand.u32 %v4032, %v3628
        %4039 = vmatpush.bf16.msra.mxu0 0
        %4040 = vmatpush.bf16.msra.mxu0 0
        %4041 = vmatpush.bf16.msra.mxu0 0
        %4042 = vmatpush.bf16.msra.mxu0 0
        %4043 = vmatpush.bf16.msra.mxu0 0
        %4044 = vmatpush.bf16.msra.mxu0 0
        %4045 = vmatpush.bf16.msra.mxu0 0
        %4046 = vmatpush.bf16.msra.mxu0 %v4037
        %4047 = vmatmul.bf16.gmra.mxu0 %v4034
        %v4048 = vpop.f32.mrf.mxu0
        %v4049 = vadd.f32 0.0, %v4048
        %v4050 = vpop.f32.mrf.mxu0
        %v4051 = vadd.f32 0.0, %v4050
        %4052 = vdwg.mxu0
        %v4053 = vadd.f32 %v4021, %v4049
        %v4054 = vadd.f32 %v4022, %v4051
        %s4055 = scalar_lea.vmem %s4, 112
        %v4056 = vld [vmem:[%s4055] sm:$0xf]
        %v4057 = vld [vmem:[%s4055 + $0x4] sm:$0x1]
        %v4060 = vunpack.c.l.b16 %v4056
        %v4061 = vunpack.c.l.b16 %v4057
        %v4062 = vpack.c.b16 %v4061, %v4060
        %4063 = vrot.lane.b32.xlu0 %v3618, 105
        %v4064 = vpop.permute.xlu0 %4063
        %v4066 = vsel %vm3621, %v4062, 0
        %v4069 = vand.u32 %v4064, %v3628
        %4071 = vmatpush.bf16.msra.mxu0 0
        %4072 = vmatpush.bf16.msra.mxu0 0
        %4073 = vmatpush.bf16.msra.mxu0 0
        %4074 = vmatpush.bf16.msra.mxu0 0
        %4075 = vmatpush.bf16.msra.mxu0 0
        %4076 = vmatpush.bf16.msra.mxu0 0
        %4077 = vmatpush.bf16.msra.mxu0 0
        %4078 = vmatpush.bf16.msra.mxu0 %v4069
        %4079 = vmatmul.bf16.gmra.mxu0 %v4066
        %v4080 = vpop.f32.mrf.mxu0
        %v4081 = vadd.f32 0.0, %v4080
        %v4082 = vpop.f32.mrf.mxu0
        %v4083 = vadd.f32 0.0, %v4082
        %4084 = vdwg.mxu0
        %v4085 = vadd.f32 %v4053, %v4081
        %v4086 = vadd.f32 %v4054, %v4083
        %s4087 = scalar_lea.vmem %s4, 120
        %v4088 = vld [vmem:[%s4087] sm:$0xf]
        %v4089 = vld [vmem:[%s4087 + $0x4] sm:$0x1]
        %v4092 = vunpack.c.l.b16 %v4088
        %v4093 = vunpack.c.l.b16 %v4089
        %v4094 = vpack.c.b16 %v4093, %v4092
        %4095 = vrot.lane.b32.xlu0 %v3618, 104
        %v4096 = vpop.permute.xlu0 %4095
        %v4098 = vsel %vm3621, %v4094, 0
        %v4101 = vand.u32 %v4096, %v3628
        %4103 = vmatpush.bf16.msra.mxu0 0
        %4104 = vmatpush.bf16.msra.mxu0 0
        %4105 = vmatpush.bf16.msra.mxu0 0
        %4106 = vmatpush.bf16.msra.mxu0 0
        %4107 = vmatpush.bf16.msra.mxu0 0
        %4108 = vmatpush.bf16.msra.mxu0 0
        %4109 = vmatpush.bf16.msra.mxu0 0
        %4110 = vmatpush.bf16.msra.mxu0 %v4101
        %4111 = vmatmul.bf16.gmra.mxu0 %v4098
        %v4112 = vpop.f32.mrf.mxu0
        %v4113 = vadd.f32 0.0, %v4112
        %v4114 = vpop.f32.mrf.mxu0
        %v4115 = vadd.f32 0.0, %v4114
        %4116 = vdwg.mxu0
        %v4117 = vadd.f32 %v4085, %v4113
        %v4118 = vadd.f32 %v4086, %v4115
        %v4119 = vld [vmem:[%s10] sm:$0xff]
        %v4120 = vld [vmem:[%s10 + $0x8] sm:$0x3]
        %4122 = vset.pattern.permute.xlu0 0
        %4123 = vperm.xlu0 %4122, %v4119
        %v4124 = vpop.permute.xlu0 %4123
        %4127 = vset.pattern.permute.xlu0 0
        %4128 = vperm.xlu0 %4127, %v4120
        %v4129 = vpop.permute.xlu0 %4128
        %v4131 = vadd.f32 %v4117, %v4124
        %v4132 = vadd.f32 %v4118, %v4129
        %v4133 = vld [vmem:[%s17] sm:$0xff]
        %v4134 = vld [vmem:[%s17 + $0x8] sm:$0xff]
        %v4135 = vld [vmem:[%s17 + $0x10] sm:$0xff]
        %v4136 = vld [vmem:[%s17 + $0x18] sm:$0xff]
        %v4137 = vld [vmem:[%s17 + $0x20] sm:$0xff]
        %v4138 = vld [vmem:[%s17 + $0x28] sm:$0xff]
        %v4139 = vld [vmem:[%s17 + $0x30] sm:$0x1]
        %v4140 = vmax.f32 %v4131, 0.0
        %v4141 = vmax.f32 %v4132, 0.0
        %vm4142 = vcmask 400384
        %v4144 = vsel %vm4142, %v4140, 0
        %v4147 = vsel %vm4142, %v4141, 0
        %v4150 = vsel %vm1162, %v4139, 0
        %4152 = vmatpush.msra.mxu0 0.0
        %4153 = vmatpush.msra.mxu0 0.0
        %4154 = vmatpush.msra.mxu0 0.0
        %4155 = vmatpush.msra.mxu0 0.0
        %4156 = vmatpush.msra.mxu0 0.0
        %4157 = vmatpush.msra.mxu0 0.0
        %4158 = vmatpush.msra.mxu0 0.0
        %4159 = vmatpush.msra.mxu0 0.0
        %4160 = vmatpush.msra.mxu0 0.0
        %4161 = vmatpush.msra.mxu0 %v4150
        %4162 = vmatpush.msra.mxu0 %v4138
        %4163 = vmatpush.msra.mxu0 %v4137
        %4164 = vmatpush.msra.mxu0 %v4136
        %4165 = vmatpush.msra.mxu0 %v4135
        %4166 = vmatpush.msra.mxu0 %v4134
        %4167 = vmatpush.msra.mxu0 %v4133
        %4168 = vmatmul.f32.gmra.mxu0 %v4144
        %v4169 = vpop.f32.mrf.mxu0
        %v4170 = vadd.f32 0.0, %v4169
        %4171 = vmatmul.f32.gmra.mxu0 %v4147
        %v4172 = vpop.f32.mrf.mxu0
        %v4173 = vadd.f32 0.0, %v4172
        %4174 = vdwg.mxu0
        %v4175 = vpack.c.bf16 %v4170, %v4170
        %v4176 = vpack.c.bf16 %v4173, %v4173
        %vm4177 = vcmask 986112
        %4178 = vst.msk [vmem:[#allocation6] sm:$0xf] %vm4177, %v4175
        %vm4179 = vcmask 983040
        %4180 = vst.msk [vmem:[#allocation6 + $0x8] sm:$0x1] %vm4179, %v4176
        %v4181 = vld [vmem:[%s5] sm:$0x7]
        %v4182 = vld [vmem:[#allocation6] sm:$0xf]
        %v4183 = vld [vmem:[#allocation6 + $0x8] sm:$0x1]
        %s4184 = scalar_lea.vmem %s5, 4
        %v4185 = vld [vmem:[%s4184] sm:$0x7]
        %v4188 = vunpack.c.l.b16 %v4182
        %v4189 = vunpack.c.l.b16 %v4183
        %v4190 = vpack.c.b16 %v4189, %v4188
        %4191 = vrot.lane.b32.xlu0 %v4190, 127
        %v4192 = vpop.permute.xlu0 %4191
        %v4194 = vsel %vm3044, %v4185, 0
        %v4197 = vsel %vm3048, %v4192, 0
        %4199 = vmatpush.bf16.msra.mxu0 0
        %4200 = vmatpush.bf16.msra.mxu0 0
        %4201 = vmatpush.bf16.msra.mxu0 0
        %4202 = vmatpush.bf16.msra.mxu0 0
        %4203 = vmatpush.bf16.msra.mxu0 0
        %4204 = vmatpush.bf16.msra.mxu0 0
        %4205 = vmatpush.bf16.msra.mxu0 0
        %4206 = vmatpush.bf16.msra.mxu0 %v4197
        %4207 = vmatmul.bf16.gmra.mxu0 %v4194
        %v4208 = vpop.f32.mrf.mxu0
        %v4209 = vadd.f32 0.0, %v4208
        %v4210 = vpop.f32.mrf.mxu0
        %4211 = vdwg.mxu0
        %v4213 = vsel %vm3044, %v4181, 0
        %v4216 = vsel %vm3048, %v4190, 0
        %4218 = vmatpush.bf16.msra.mxu0 0
        %4219 = vmatpush.bf16.msra.mxu0 0
        %4220 = vmatpush.bf16.msra.mxu0 0
        %4221 = vmatpush.bf16.msra.mxu0 0
        %4222 = vmatpush.bf16.msra.mxu0 0
        %4223 = vmatpush.bf16.msra.mxu0 0
        %4224 = vmatpush.bf16.msra.mxu0 0
        %4225 = vmatpush.bf16.msra.mxu0 %v4216
        %4226 = vmatmul.bf16.gmra.mxu0 %v4213
        %v4227 = vpop.f32.mrf.mxu0
        %v4228 = vadd.f32 %v4209, %v4227
        %v4229 = vpop.f32.mrf.mxu0
        %4230 = vdwg.mxu0
        %s4231 = scalar_lea.vmem %s5, 8
        %v4232 = vld [vmem:[%s4231] sm:$0x7]
        %4233 = vrot.lane.b32.xlu0 %v4190, 126
        %v4234 = vpop.permute.xlu0 %4233
        %v4236 = vsel %vm3044, %v4232, 0
        %v4239 = vsel %vm3048, %v4234, 0
        %4241 = vmatpush.bf16.msra.mxu0 0
        %4242 = vmatpush.bf16.msra.mxu0 0
        %4243 = vmatpush.bf16.msra.mxu0 0
        %4244 = vmatpush.bf16.msra.mxu0 0
        %4245 = vmatpush.bf16.msra.mxu0 0
        %4246 = vmatpush.bf16.msra.mxu0 0
        %4247 = vmatpush.bf16.msra.mxu0 0
        %4248 = vmatpush.bf16.msra.mxu0 %v4239
        %4249 = vmatmul.bf16.gmra.mxu0 %v4236
        %v4250 = vpop.f32.mrf.mxu0
        %v4251 = vadd.f32 0.0, %v4250
        %v4252 = vpop.f32.mrf.mxu0
        %4253 = vdwg.mxu0
        %v4254 = vadd.f32 %v4228, %v4251
        %s4255 = scalar_lea.vmem %s5, 12
        %v4256 = vld [vmem:[%s4255] sm:$0x7]
        %4257 = vrot.lane.b32.xlu0 %v4190, 125
        %v4258 = vpop.permute.xlu0 %4257
        %v4260 = vsel %vm3044, %v4256, 0
        %v4263 = vsel %vm3048, %v4258, 0
        %4265 = vmatpush.bf16.msra.mxu0 0
        %4266 = vmatpush.bf16.msra.mxu0 0
        %4267 = vmatpush.bf16.msra.mxu0 0
        %4268 = vmatpush.bf16.msra.mxu0 0
        %4269 = vmatpush.bf16.msra.mxu0 0
        %4270 = vmatpush.bf16.msra.mxu0 0
        %4271 = vmatpush.bf16.msra.mxu0 0
        %4272 = vmatpush.bf16.msra.mxu0 %v4263
        %4273 = vmatmul.bf16.gmra.mxu0 %v4260
        %v4274 = vpop.f32.mrf.mxu0
        %v4275 = vadd.f32 0.0, %v4274
        %v4276 = vpop.f32.mrf.mxu0
        %4277 = vdwg.mxu0
        %v4278 = vadd.f32 %v4254, %v4275
        %s4279 = scalar_lea.vmem %s5, 16
        %v4280 = vld [vmem:[%s4279] sm:$0x7]
        %v4281 = vld [vmem:[#allocation6] sm:$0xff]
        %v4282 = vld [vmem:[#allocation6 + $0x8] sm:$0x11]
        %v4285 = vunpack.c.l.b16 %v4281
        %v4286 = vunpack.c.h.b16 %v4281
        %v4287 = vunpack.c.l.b16 %v4282
        %v4288 = vunpack.c.h.b16 %v4282
        %v4289 = vpack.c.b16 %v4287, %v4285
        %v4290 = vpack.c.b16 %v4288, %v4286
        %4291 = vrot.lane.b32.xlu0 %v4289, 117
        %v4292 = vpop.permute.xlu0 %4291
        %4293 = vrot.lane.b32.xlu0 %v4290, 117
        %v4294 = vpop.permute.xlu0 %4293
        %vm4295 = vcmask 957440
        %v4296 = vsel %vm4295, %v4292, %v4294
        %v4298 = vsel %vm3044, %v4280, 0
        %v4301 = vsel %vm3048, %v4296, 0
        %4303 = vmatpush.bf16.msra.mxu0 0
        %4304 = vmatpush.bf16.msra.mxu0 0
        %4305 = vmatpush.bf16.msra.mxu0 0
        %4306 = vmatpush.bf16.msra.mxu0 0
        %4307 = vmatpush.bf16.msra.mxu0 0
        %4308 = vmatpush.bf16.msra.mxu0 0
        %4309 = vmatpush.bf16.msra.mxu0 0
        %4310 = vmatpush.bf16.msra.mxu0 %v4301
        %4311 = vmatmul.bf16.gmra.mxu0 %v4298
        %v4312 = vpop.f32.mrf.mxu0
        %v4313 = vadd.f32 0.0, %v4312
        %v4314 = vpop.f32.mrf.mxu0
        %4315 = vdwg.mxu0
        %v4316 = vadd.f32 %v4278, %v4313
        %s4317 = scalar_lea.vmem %s5, 20
        %v4318 = vld [vmem:[%s4317] sm:$0x7]
        %4319 = vrot.lane.b32.xlu0 %v4289, 116
        %v4320 = vpop.permute.xlu0 %4319
        %4321 = vrot.lane.b32.xlu0 %v4290, 116
        %v4322 = vpop.permute.xlu0 %4321
        %vm4323 = vcmask 949248
        %v4324 = vsel %vm4323, %v4320, %v4322
        %v4326 = vsel %vm3044, %v4318, 0
        %v4329 = vsel %vm3048, %v4324, 0
        %4331 = vmatpush.bf16.msra.mxu0 0
        %4332 = vmatpush.bf16.msra.mxu0 0
        %4333 = vmatpush.bf16.msra.mxu0 0
        %4334 = vmatpush.bf16.msra.mxu0 0
        %4335 = vmatpush.bf16.msra.mxu0 0
        %4336 = vmatpush.bf16.msra.mxu0 0
        %4337 = vmatpush.bf16.msra.mxu0 0
        %4338 = vmatpush.bf16.msra.mxu0 %v4329
        %4339 = vmatmul.bf16.gmra.mxu0 %v4326
        %v4340 = vpop.f32.mrf.mxu0
        %v4341 = vadd.f32 0.0, %v4340
        %v4342 = vpop.f32.mrf.mxu0
        %4343 = vdwg.mxu0
        %v4344 = vadd.f32 %v4316, %v4341
        %s4345 = scalar_lea.vmem %s5, 24
        %v4346 = vld [vmem:[%s4345] sm:$0x7]
        %4347 = vrot.lane.b32.xlu0 %v4289, 115
        %v4348 = vpop.permute.xlu0 %4347
        %4349 = vrot.lane.b32.xlu0 %v4290, 115
        %v4350 = vpop.permute.xlu0 %4349
        %vm4351 = vcmask 941056
        %v4352 = vsel %vm4351, %v4348, %v4350
        %v4354 = vsel %vm3044, %v4346, 0
        %v4357 = vsel %vm3048, %v4352, 0
        %4359 = vmatpush.bf16.msra.mxu0 0
        %4360 = vmatpush.bf16.msra.mxu0 0
        %4361 = vmatpush.bf16.msra.mxu0 0
        %4362 = vmatpush.bf16.msra.mxu0 0
        %4363 = vmatpush.bf16.msra.mxu0 0
        %4364 = vmatpush.bf16.msra.mxu0 0
        %4365 = vmatpush.bf16.msra.mxu0 0
        %4366 = vmatpush.bf16.msra.mxu0 %v4357
        %4367 = vmatmul.bf16.gmra.mxu0 %v4354
        %v4368 = vpop.f32.mrf.mxu0
        %v4369 = vadd.f32 0.0, %v4368
        %v4370 = vpop.f32.mrf.mxu0
        %4371 = vdwg.mxu0
        %v4372 = vadd.f32 %v4344, %v4369
        %s4373 = scalar_lea.vmem %s5, 28
        %v4374 = vld [vmem:[%s4373] sm:$0x7]
        %4375 = vrot.lane.b32.xlu0 %v4289, 114
        %v4376 = vpop.permute.xlu0 %4375
        %4377 = vrot.lane.b32.xlu0 %v4290, 114
        %v4378 = vpop.permute.xlu0 %4377
        %vm4379 = vcmask 932864
        %v4380 = vsel %vm4379, %v4376, %v4378
        %v4382 = vsel %vm3044, %v4374, 0
        %v4385 = vsel %vm3048, %v4380, 0
        %4387 = vmatpush.bf16.msra.mxu0 0
        %4388 = vmatpush.bf16.msra.mxu0 0
        %4389 = vmatpush.bf16.msra.mxu0 0
        %4390 = vmatpush.bf16.msra.mxu0 0
        %4391 = vmatpush.bf16.msra.mxu0 0
        %4392 = vmatpush.bf16.msra.mxu0 0
        %4393 = vmatpush.bf16.msra.mxu0 0
        %4394 = vmatpush.bf16.msra.mxu0 %v4385
        %4395 = vmatmul.bf16.gmra.mxu0 %v4382
        %v4396 = vpop.f32.mrf.mxu0
        %v4397 = vadd.f32 0.0, %v4396
        %v4398 = vpop.f32.mrf.mxu0
        %4399 = vdwg.mxu0
        %v4400 = vadd.f32 %v4372, %v4397
        %s4401 = scalar_lea.vmem %s5, 32
        %v4402 = vld [vmem:[%s4401] sm:$0x7]
        %4403 = vrot.lane.b32.xlu0 %v4289, 106
        %v4404 = vpop.permute.xlu0 %4403
        %4405 = vrot.lane.b32.xlu0 %v4290, 106
        %v4406 = vpop.permute.xlu0 %4405
        %vm4407 = vcmask 867328
        %v4408 = vsel %vm4407, %v4404, %v4406
        %v4410 = vsel %vm3044, %v4402, 0
        %v4413 = vsel %vm3048, %v4408, 0
        %4415 = vmatpush.bf16.msra.mxu0 0
        %4416 = vmatpush.bf16.msra.mxu0 0
        %4417 = vmatpush.bf16.msra.mxu0 0
        %4418 = vmatpush.bf16.msra.mxu0 0
        %4419 = vmatpush.bf16.msra.mxu0 0
        %4420 = vmatpush.bf16.msra.mxu0 0
        %4421 = vmatpush.bf16.msra.mxu0 0
        %4422 = vmatpush.bf16.msra.mxu0 %v4413
        %4423 = vmatmul.bf16.gmra.mxu0 %v4410
        %v4424 = vpop.f32.mrf.mxu0
        %v4425 = vadd.f32 0.0, %v4424
        %v4426 = vpop.f32.mrf.mxu0
        %4427 = vdwg.mxu0
        %v4428 = vadd.f32 %v4400, %v4425
        %s4429 = scalar_lea.vmem %s5, 36
        %v4430 = vld [vmem:[%s4429] sm:$0x7]
        %4431 = vrot.lane.b32.xlu0 %v4289, 105
        %v4432 = vpop.permute.xlu0 %4431
        %4433 = vrot.lane.b32.xlu0 %v4290, 105
        %v4434 = vpop.permute.xlu0 %4433
        %vm4435 = vcmask 859136
        %v4436 = vsel %vm4435, %v4432, %v4434
        %v4438 = vsel %vm3044, %v4430, 0
        %v4441 = vsel %vm3048, %v4436, 0
        %4443 = vmatpush.bf16.msra.mxu0 0
        %4444 = vmatpush.bf16.msra.mxu0 0
        %4445 = vmatpush.bf16.msra.mxu0 0
        %4446 = vmatpush.bf16.msra.mxu0 0
        %4447 = vmatpush.bf16.msra.mxu0 0
        %4448 = vmatpush.bf16.msra.mxu0 0
        %4449 = vmatpush.bf16.msra.mxu0 0
        %4450 = vmatpush.bf16.msra.mxu0 %v4441
        %4451 = vmatmul.bf16.gmra.mxu0 %v4438
        %v4452 = vpop.f32.mrf.mxu0
        %v4453 = vadd.f32 0.0, %v4452
        %v4454 = vpop.f32.mrf.mxu0
        %4455 = vdwg.mxu0
        %v4456 = vadd.f32 %v4428, %v4453
        %s4457 = scalar_lea.vmem %s5, 40
        %v4458 = vld [vmem:[%s4457] sm:$0x7]
        %4459 = vrot.lane.b32.xlu0 %v4289, 104
        %v4460 = vpop.permute.xlu0 %4459
        %4461 = vrot.lane.b32.xlu0 %v4290, 104
        %v4462 = vpop.permute.xlu0 %4461
        %vm4463 = vcmask 850944
        %v4464 = vsel %vm4463, %v4460, %v4462
        %v4466 = vsel %vm3044, %v4458, 0
        %v4469 = vsel %vm3048, %v4464, 0
        %4471 = vmatpush.bf16.msra.mxu0 0
        %4472 = vmatpush.bf16.msra.mxu0 0
        %4473 = vmatpush.bf16.msra.mxu0 0
        %4474 = vmatpush.bf16.msra.mxu0 0
        %4475 = vmatpush.bf16.msra.mxu0 0
        %4476 = vmatpush.bf16.msra.mxu0 0
        %4477 = vmatpush.bf16.msra.mxu0 0
        %4478 = vmatpush.bf16.msra.mxu0 %v4469
        %4479 = vmatmul.bf16.gmra.mxu0 %v4466
        %v4480 = vpop.f32.mrf.mxu0
        %v4481 = vadd.f32 0.0, %v4480
        %v4482 = vpop.f32.mrf.mxu0
        %4483 = vdwg.mxu0
        %v4484 = vadd.f32 %v4456, %v4481
        %s4485 = scalar_lea.vmem %s5, 44
        %v4486 = vld [vmem:[%s4485] sm:$0x7]
        %4487 = vrot.lane.b32.xlu0 %v4289, 103
        %v4488 = vpop.permute.xlu0 %4487
        %4489 = vrot.lane.b32.xlu0 %v4290, 103
        %v4490 = vpop.permute.xlu0 %4489
        %vm4491 = vcmask 842752
        %v4492 = vsel %vm4491, %v4488, %v4490
        %v4494 = vsel %vm3044, %v4486, 0
        %v4497 = vsel %vm3048, %v4492, 0
        %4499 = vmatpush.bf16.msra.mxu0 0
        %4500 = vmatpush.bf16.msra.mxu0 0
        %4501 = vmatpush.bf16.msra.mxu0 0
        %4502 = vmatpush.bf16.msra.mxu0 0
        %4503 = vmatpush.bf16.msra.mxu0 0
        %4504 = vmatpush.bf16.msra.mxu0 0
        %4505 = vmatpush.bf16.msra.mxu0 0
        %4506 = vmatpush.bf16.msra.mxu0 %v4497
        %4507 = vmatmul.bf16.gmra.mxu0 %v4494
        %v4508 = vpop.f32.mrf.mxu0
        %v4509 = vadd.f32 0.0, %v4508
        %v4510 = vpop.f32.mrf.mxu0
        %4511 = vdwg.mxu0
        %v4512 = vadd.f32 %v4484, %v4509
        %s4513 = scalar_lea.vmem %s5, 48
        %v4514 = vld [vmem:[%s4513] sm:$0x7]
        %4515 = vrot.lane.b32.xlu0 %v4289, 95
        %v4516 = vpop.permute.xlu0 %4515
        %4517 = vrot.lane.b32.xlu0 %v4290, 95
        %v4518 = vpop.permute.xlu0 %4517
        %v4519 = vsel %vm2933, %v4516, %v4518
        %v4521 = vsel %vm3044, %v4514, 0
        %v4524 = vsel %vm3048, %v4519, 0
        %4526 = vmatpush.bf16.msra.mxu0 0
        %4527 = vmatpush.bf16.msra.mxu0 0
        %4528 = vmatpush.bf16.msra.mxu0 0
        %4529 = vmatpush.bf16.msra.mxu0 0
        %4530 = vmatpush.bf16.msra.mxu0 0
        %4531 = vmatpush.bf16.msra.mxu0 0
        %4532 = vmatpush.bf16.msra.mxu0 0
        %4533 = vmatpush.bf16.msra.mxu0 %v4524
        %4534 = vmatmul.bf16.gmra.mxu0 %v4521
        %v4535 = vpop.f32.mrf.mxu0
        %v4536 = vadd.f32 0.0, %v4535
        %v4537 = vpop.f32.mrf.mxu0
        %4538 = vdwg.mxu0
        %v4539 = vadd.f32 %v4512, %v4536
        %s4540 = scalar_lea.vmem %s5, 52
        %v4541 = vld [vmem:[%s4540] sm:$0x7]
        %4542 = vrot.lane.b32.xlu0 %v4289, 94
        %v4543 = vpop.permute.xlu0 %4542
        %4544 = vrot.lane.b32.xlu0 %v4290, 94
        %v4545 = vpop.permute.xlu0 %4544
        %vm4546 = vcmask 769024
        %v4547 = vsel %vm4546, %v4543, %v4545
        %v4549 = vsel %vm3044, %v4541, 0
        %v4552 = vsel %vm3048, %v4547, 0
        %4554 = vmatpush.bf16.msra.mxu0 0
        %4555 = vmatpush.bf16.msra.mxu0 0
        %4556 = vmatpush.bf16.msra.mxu0 0
        %4557 = vmatpush.bf16.msra.mxu0 0
        %4558 = vmatpush.bf16.msra.mxu0 0
        %4559 = vmatpush.bf16.msra.mxu0 0
        %4560 = vmatpush.bf16.msra.mxu0 0
        %4561 = vmatpush.bf16.msra.mxu0 %v4552
        %4562 = vmatmul.bf16.gmra.mxu0 %v4549
        %v4563 = vpop.f32.mrf.mxu0
        %v4564 = vadd.f32 0.0, %v4563
        %v4565 = vpop.f32.mrf.mxu0
        %4566 = vdwg.mxu0
        %v4567 = vadd.f32 %v4539, %v4564
        %s4568 = scalar_lea.vmem %s5, 56
        %v4569 = vld [vmem:[%s4568] sm:$0x7]
        %4570 = vrot.lane.b32.xlu0 %v4289, 93
        %v4571 = vpop.permute.xlu0 %4570
        %4572 = vrot.lane.b32.xlu0 %v4290, 93
        %v4573 = vpop.permute.xlu0 %4572
        %vm4574 = vcmask 760832
        %v4575 = vsel %vm4574, %v4571, %v4573
        %v4577 = vsel %vm3044, %v4569, 0
        %v4580 = vsel %vm3048, %v4575, 0
        %4582 = vmatpush.bf16.msra.mxu0 0
        %4583 = vmatpush.bf16.msra.mxu0 0
        %4584 = vmatpush.bf16.msra.mxu0 0
        %4585 = vmatpush.bf16.msra.mxu0 0
        %4586 = vmatpush.bf16.msra.mxu0 0
        %4587 = vmatpush.bf16.msra.mxu0 0
        %4588 = vmatpush.bf16.msra.mxu0 0
        %4589 = vmatpush.bf16.msra.mxu0 %v4580
        %4590 = vmatmul.bf16.gmra.mxu0 %v4577
        %v4591 = vpop.f32.mrf.mxu0
        %v4592 = vadd.f32 0.0, %v4591
        %v4593 = vpop.f32.mrf.mxu0
        %4594 = vdwg.mxu0
        %v4595 = vadd.f32 %v4567, %v4592
        %s4596 = scalar_lea.vmem %s5, 60
        %v4597 = vld [vmem:[%s4596] sm:$0x7]
        %4598 = vrot.lane.b32.xlu0 %v4289, 92
        %v4599 = vpop.permute.xlu0 %4598
        %4600 = vrot.lane.b32.xlu0 %v4290, 92
        %v4601 = vpop.permute.xlu0 %4600
        %v4602 = vsel %vm1726, %v4599, %v4601
        %v4604 = vsel %vm3044, %v4597, 0
        %v4607 = vsel %vm3048, %v4602, 0
        %4609 = vmatpush.bf16.msra.mxu0 0
        %4610 = vmatpush.bf16.msra.mxu0 0
        %4611 = vmatpush.bf16.msra.mxu0 0
        %4612 = vmatpush.bf16.msra.mxu0 0
        %4613 = vmatpush.bf16.msra.mxu0 0
        %4614 = vmatpush.bf16.msra.mxu0 0
        %4615 = vmatpush.bf16.msra.mxu0 0
        %4616 = vmatpush.bf16.msra.mxu0 %v4607
        %4617 = vmatmul.bf16.gmra.mxu0 %v4604
        %v4618 = vpop.f32.mrf.mxu0
        %v4619 = vadd.f32 0.0, %v4618
        %v4620 = vpop.f32.mrf.mxu0
        %4621 = vdwg.mxu0
        %v4622 = vadd.f32 %v4595, %v4619
        %v4623 = vld [vmem:[%s11] sm:$0x3f]
        %4625 = vset.pattern.permute.xlu0 0
        %4626 = vperm.xlu0 %4625, %v4623
        %v4627 = vpop.permute.xlu0 %4626
        %v4629 = vadd.f32 %v4622, %v4627
        %v4630 = vld [vmem:[%s18] sm:$0xff]
        %v4631 = vld [vmem:[%s18 + $0x8] sm:$0xff]
        %v4632 = vld [vmem:[%s18 + $0x10] sm:$0xff]
        %v4633 = vld [vmem:[%s18 + $0x18] sm:$0xff]
        %v4634 = vld [vmem:[%s18 + $0x20] sm:$0xff]
        %v4635 = vld [vmem:[%s18 + $0x28] sm:$0xff]
        %v4636 = vld [vmem:[%s18 + $0x30] sm:$0xff]
        %v4637 = vld [vmem:[%s18 + $0x38] sm:$0xff]
        %v4638 = vld [vmem:[%s18 + $0x40] sm:$0xff]
        %v4639 = vld [vmem:[%s18 + $0x48] sm:$0xff]
        %v4640 = vld [vmem:[%s18 + $0x50] sm:$0xff]
        %v4641 = vld [vmem:[%s18 + $0x58] sm:$0xff]
        %v4642 = vld [vmem:[%s18 + $0x60] sm:$0xff]
        %v4643 = vld [vmem:[%s18 + $0x68] sm:$0xff]
        %v4644 = vld [vmem:[%s18 + $0x70] sm:$0xff]
        %v4645 = vld [vmem:[%s18 + $0x78] sm:$0xff]
        %v4646 = vld [vmem:[%s18 + $0x80] sm:$0xff]
        %v4647 = vld [vmem:[%s18 + $0x88] sm:$0xff]
        %v4648 = vld [vmem:[%s18 + $0x90] sm:$0xff]
        %v4649 = vld [vmem:[%s18 + $0x98] sm:$0xff]
        %v4650 = vld [vmem:[%s18 + $0xa0] sm:$0xff]
        %v4651 = vld [vmem:[%s18 + $0xa8] sm:$0xff]
        %v4652 = vld [vmem:[%s18 + $0xb0] sm:$0xff]
        %v4653 = vld [vmem:[%s18 + $0xb8] sm:$0xff]
        %v4654 = vld [vmem:[%s18 + $0xc0] sm:$0xff]
        %v4655 = vld [vmem:[%s18 + $0xc8] sm:$0xff]
        %v4656 = vld [vmem:[%s18 + $0xd0] sm:$0xff]
        %v4657 = vld [vmem:[%s18 + $0xd8] sm:$0xff]
        %v4658 = vld [vmem:[%s18 + $0xe0] sm:$0xff]
        %v4659 = vld [vmem:[%s18 + $0xe8] sm:$0xff]
        %v4660 = vld [vmem:[%s18 + $0xf0] sm:$0xff]
        %v4661 = vld [vmem:[%s18 + $0xf8] sm:$0xff]
        %v4662 = vld [vmem:[%s18 + $0x100] sm:$0xff]
        %v4663 = vld [vmem:[%s18 + $0x108] sm:$0xff]
        %v4664 = vld [vmem:[%s18 + $0x110] sm:$0xff]
        %v4665 = vld [vmem:[%s18 + $0x118] sm:$0xff]
        %v4666 = vld [vmem:[%s18 + $0x120] sm:$0xff]
        %v4667 = vld [vmem:[%s18 + $0x128] sm:$0xff]
        %v4668 = vld [vmem:[%s18 + $0x130] sm:$0xff]
        %v4669 = vld [vmem:[%s18 + $0x138] sm:$0xff]
        %v4670 = vld [vmem:[%s18 + $0x140] sm:$0xff]
        %v4671 = vld [vmem:[%s18 + $0x148] sm:$0xff]
        %v4672 = vld [vmem:[%s18 + $0x150] sm:$0xff]
        %v4673 = vld [vmem:[%s18 + $0x158] sm:$0xff]
        %v4674 = vld [vmem:[%s18 + $0x160] sm:$0xff]
        %v4675 = vld [vmem:[%s18 + $0x168] sm:$0x1]
        %v4676 = vld [vmem:[%s18 + $0x170] sm:$0x1]
        %v4677 = vld [vmem:[%s18 + $0x178] sm:$0x1]
        %v4678 = vmax.f32 %v4629, 0.0
        %vm4679 = vcmask 990208
        %v4681 = vsel %vm4679, %v4678, 0
        %v4684 = vsel %vm1162, %v4675, 0
        %v4687 = vsel %vm1162, %v4676, 0
        %v4690 = vsel %vm1162, %v4677, 0
        %4692 = vmatpush.msra.mxu0 %v4684
        %4693 = vmatpush.msra.mxu0 %v4672
        %4694 = vmatpush.msra.mxu0 %v4669
        %4695 = vmatpush.msra.mxu0 %v4666
        %4696 = vmatpush.msra.mxu0 %v4663
        %4697 = vmatpush.msra.mxu0 %v4660
        %4698 = vmatpush.msra.mxu0 %v4657
        %4699 = vmatpush.msra.mxu0 %v4654
        %4700 = vmatpush.msra.mxu0 %v4651
        %4701 = vmatpush.msra.mxu0 %v4648
        %4702 = vmatpush.msra.mxu0 %v4645
        %4703 = vmatpush.msra.mxu0 %v4642
        %4704 = vmatpush.msra.mxu0 %v4639
        %4705 = vmatpush.msra.mxu0 %v4636
        %4706 = vmatpush.msra.mxu0 %v4633
        %4707 = vmatpush.msra.mxu0 %v4630
        %4708 = vmatmul.f32.gmra.mxu0 %v4681
        %v4709 = vpop.f32.mrf.mxu0
        %v4710 = vadd.f32 0.0, %v4709
        %4711 = vdwg.mxu0
        %4712 = vmatpush.msra.mxu0 %v4687
        %4713 = vmatpush.msra.mxu0 %v4673
        %4714 = vmatpush.msra.mxu0 %v4670
        %4715 = vmatpush.msra.mxu0 %v4667
        %4716 = vmatpush.msra.mxu0 %v4664
        %4717 = vmatpush.msra.mxu0 %v4661
        %4718 = vmatpush.msra.mxu0 %v4658
        %4719 = vmatpush.msra.mxu0 %v4655
        %4720 = vmatpush.msra.mxu0 %v4652
        %4721 = vmatpush.msra.mxu0 %v4649
        %4722 = vmatpush.msra.mxu0 %v4646
        %4723 = vmatpush.msra.mxu0 %v4643
        %4724 = vmatpush.msra.mxu0 %v4640
        %4725 = vmatpush.msra.mxu0 %v4637
        %4726 = vmatpush.msra.mxu0 %v4634
        %4727 = vmatpush.msra.mxu0 %v4631
        %4728 = vmatmul.f32.gmra.mxu0 %v4681
        %v4729 = vpop.f32.mrf.mxu0
        %v4730 = vadd.f32 0.0, %v4729
        %4731 = vdwg.mxu0
        %4732 = vmatpush.msra.mxu0 %v4690
        %4733 = vmatpush.msra.mxu0 %v4674
        %4734 = vmatpush.msra.mxu0 %v4671
        %4735 = vmatpush.msra.mxu0 %v4668
        %4736 = vmatpush.msra.mxu0 %v4665
        %4737 = vmatpush.msra.mxu0 %v4662
        %4738 = vmatpush.msra.mxu0 %v4659
        %4739 = vmatpush.msra.mxu0 %v4656
        %4740 = vmatpush.msra.mxu0 %v4653
        %4741 = vmatpush.msra.mxu0 %v4650
        %4742 = vmatpush.msra.mxu0 %v4647
        %4743 = vmatpush.msra.mxu0 %v4644
        %4744 = vmatpush.msra.mxu0 %v4641
        %4745 = vmatpush.msra.mxu0 %v4638
        %4746 = vmatpush.msra.mxu0 %v4635
        %4747 = vmatpush.msra.mxu0 %v4632
        %4748 = vmatmul.f32.gmra.mxu0 %v4681
        %v4749 = vpop.f32.mrf.mxu0
        %v4750 = vadd.f32 0.0, %v4749
        %4751 = vdwg.mxu0
        %v4752 = vpack.c.bf16 %v4730, %v4710
        %v4753 = vpack.c.bf16 %v4750, %v4750
        %4754 = vst [vmem:[#allocation7] sm:$0x77] %v4752
        %vm4755 = vcmask 854016
        %4756 = vst.msk [vmem:[#allocation7 + $0x8] sm:$0x7] %vm4755, %v4753
        %v4757 = vld [vmem:[%s6] sm:$0x1]
        %v4758 = vld [vmem:[#allocation7] sm:$0x77]
        %v4759 = vld [vmem:[#allocation7 + $0x8] sm:$0x7]
        %s4760 = scalar_lea.vmem %s6, 1
        %v4761 = vld [vmem:[%s4760] sm:$0x1]
        %v4764 = vunpack.c.l.b16 %v4758
        %v4765 = vunpack.c.h.b16 %v4758
        %v4766 = vunpack.c.l.b16 %v4759
        %v4767 = vpack.c.b16 %v4764, %v4764
        %v4768 = vpack.c.b16 %v4765, %v4765
        %v4769 = vpack.c.b16 %v4766, %v4766
        %4770 = vrot.lane.b32.xlu0 %v4767, 127
        %v4771 = vpop.permute.xlu0 %4770
        %4772 = vrot.lane.b32.xlu0 %v4768, 127
        %v4773 = vpop.permute.xlu0 %4772
        %4774 = vrot.lane.b32.xlu0 %v4769, 127
        %v4775 = vpop.permute.xlu0 %4774
        %v4776 = vsel %vm1155, %v4771, %v4773
        %v4777 = vsel %vm1155, %v4773, %v4775
        %v4779 = vsel %vm2440, %v4761, 0
        %v4782 = vsel %vm2444, %v4776, 0
        %v4785 = vsel %vm2444, %v4777, 0
        %v4788 = vsel %vm2444, %v4775, 0
        %4790 = vmatpush.bf16.msra.mxu0 0
        %4791 = vmatpush.bf16.msra.mxu0 0
        %4792 = vmatpush.bf16.msra.mxu0 0
        %4793 = vmatpush.bf16.msra.mxu0 0
        %4794 = vmatpush.bf16.msra.mxu0 0
        %4795 = vmatpush.bf16.msra.mxu0 0
        %4796 = vmatpush.bf16.msra.mxu0 0
        %4797 = vmatpush.bf16.msra.mxu0 %v4782
        %4798 = vmatmul.bf16.gmra.mxu0 %v4779
        %v4799 = vpop.f32.mrf.mxu0
        %v4800 = vadd.f32 0.0, %v4799
        %v4801 = vpop.f32.mrf.mxu0
        %4802 = vdwg.mxu0
        %4803 = vmatpush.bf16.msra.mxu0 0
        %4804 = vmatpush.bf16.msra.mxu0 0
        %4805 = vmatpush.bf16.msra.mxu0 0
        %4806 = vmatpush.bf16.msra.mxu0 0
        %4807 = vmatpush.bf16.msra.mxu0 0
        %4808 = vmatpush.bf16.msra.mxu0 0
        %4809 = vmatpush.bf16.msra.mxu0 0
        %4810 = vmatpush.bf16.msra.mxu0 %v4785
        %4811 = vmatmul.bf16.gmra.mxu0 %v4779
        %v4812 = vpop.f32.mrf.mxu0
        %v4813 = vadd.f32 0.0, %v4812
        %v4814 = vpop.f32.mrf.mxu0
        %4815 = vdwg.mxu0
        %4816 = vmatpush.bf16.msra.mxu0 0
        %4817 = vmatpush.bf16.msra.mxu0 0
        %4818 = vmatpush.bf16.msra.mxu0 0
        %4819 = vmatpush.bf16.msra.mxu0 0
        %4820 = vmatpush.bf16.msra.mxu0 0
        %4821 = vmatpush.bf16.msra.mxu0 0
        %4822 = vmatpush.bf16.msra.mxu0 0
        %4823 = vmatpush.bf16.msra.mxu0 %v4788
        %4824 = vmatmul.bf16.gmra.mxu0 %v4779
        %v4825 = vpop.f32.mrf.mxu0
        %v4826 = vadd.f32 0.0, %v4825
        %v4827 = vpop.f32.mrf.mxu0
        %4828 = vdwg.mxu0
        %v4830 = vsel %vm2440, %v4757, 0
        %v4833 = vsel %vm2444, %v4767, 0
        %v4836 = vsel %vm2444, %v4768, 0
        %v4839 = vsel %vm2444, %v4769, 0
        %4841 = vmatpush.bf16.msra.mxu0 0
        %4842 = vmatpush.bf16.msra.mxu0 0
        %4843 = vmatpush.bf16.msra.mxu0 0
        %4844 = vmatpush.bf16.msra.mxu0 0
        %4845 = vmatpush.bf16.msra.mxu0 0
        %4846 = vmatpush.bf16.msra.mxu0 0
        %4847 = vmatpush.bf16.msra.mxu0 0
        %4848 = vmatpush.bf16.msra.mxu0 %v4833
        %4849 = vmatmul.bf16.gmra.mxu0 %v4830
        %v4850 = vpop.f32.mrf.mxu0
        %v4851 = vadd.f32 %v4800, %v4850
        %v4852 = vpop.f32.mrf.mxu0
        %4853 = vdwg.mxu0
        %4854 = vmatpush.bf16.msra.mxu0 0
        %4855 = vmatpush.bf16.msra.mxu0 0
        %4856 = vmatpush.bf16.msra.mxu0 0
        %4857 = vmatpush.bf16.msra.mxu0 0
        %4858 = vmatpush.bf16.msra.mxu0 0
        %4859 = vmatpush.bf16.msra.mxu0 0
        %4860 = vmatpush.bf16.msra.mxu0 0
        %4861 = vmatpush.bf16.msra.mxu0 %v4836
        %4862 = vmatmul.bf16.gmra.mxu0 %v4830
        %v4863 = vpop.f32.mrf.mxu0
        %v4864 = vadd.f32 %v4813, %v4863
        %v4865 = vpop.f32.mrf.mxu0
        %4866 = vdwg.mxu0
        %4867 = vmatpush.bf16.msra.mxu0 0
        %4868 = vmatpush.bf16.msra.mxu0 0
        %4869 = vmatpush.bf16.msra.mxu0 0
        %4870 = vmatpush.bf16.msra.mxu0 0
        %4871 = vmatpush.bf16.msra.mxu0 0
        %4872 = vmatpush.bf16.msra.mxu0 0
        %4873 = vmatpush.bf16.msra.mxu0 0
        %4874 = vmatpush.bf16.msra.mxu0 %v4839
        %4875 = vmatmul.bf16.gmra.mxu0 %v4830
        %v4876 = vpop.f32.mrf.mxu0
        %v4877 = vadd.f32 %v4826, %v4876
        %v4878 = vpop.f32.mrf.mxu0
        %4879 = vdwg.mxu0
        %s4880 = scalar_lea.vmem %s6, 2
        %v4881 = vld [vmem:[%s4880] sm:$0x1]
        %4882 = vrot.lane.b32.xlu0 %v4767, 126
        %v4883 = vpop.permute.xlu0 %4882
        %4884 = vrot.lane.b32.xlu0 %v4768, 126
        %v4885 = vpop.permute.xlu0 %4884
        %4886 = vrot.lane.b32.xlu0 %v4769, 126
        %v4887 = vpop.permute.xlu0 %4886
        %v4888 = vsel %vm1282, %v4883, %v4885
        %v4889 = vsel %vm1282, %v4885, %v4887
        %v4891 = vsel %vm2440, %v4881, 0
        %v4894 = vsel %vm2444, %v4888, 0
        %v4897 = vsel %vm2444, %v4889, 0
        %v4900 = vsel %vm2444, %v4887, 0
        %4902 = vmatpush.bf16.msra.mxu0 0
        %4903 = vmatpush.bf16.msra.mxu0 0
        %4904 = vmatpush.bf16.msra.mxu0 0
        %4905 = vmatpush.bf16.msra.mxu0 0
        %4906 = vmatpush.bf16.msra.mxu0 0
        %4907 = vmatpush.bf16.msra.mxu0 0
        %4908 = vmatpush.bf16.msra.mxu0 0
        %4909 = vmatpush.bf16.msra.mxu0 %v4894
        %4910 = vmatmul.bf16.gmra.mxu0 %v4891
        %v4911 = vpop.f32.mrf.mxu0
        %v4912 = vadd.f32 0.0, %v4911
        %v4913 = vpop.f32.mrf.mxu0
        %4914 = vdwg.mxu0
        %4915 = vmatpush.bf16.msra.mxu0 0
        %4916 = vmatpush.bf16.msra.mxu0 0
        %4917 = vmatpush.bf16.msra.mxu0 0
        %4918 = vmatpush.bf16.msra.mxu0 0
        %4919 = vmatpush.bf16.msra.mxu0 0
        %4920 = vmatpush.bf16.msra.mxu0 0
        %4921 = vmatpush.bf16.msra.mxu0 0
        %4922 = vmatpush.bf16.msra.mxu0 %v4897
        %4923 = vmatmul.bf16.gmra.mxu0 %v4891
        %v4924 = vpop.f32.mrf.mxu0
        %v4925 = vadd.f32 0.0, %v4924
        %v4926 = vpop.f32.mrf.mxu0
        %4927 = vdwg.mxu0
        %4928 = vmatpush.bf16.msra.mxu0 0
        %4929 = vmatpush.bf16.msra.mxu0 0
        %4930 = vmatpush.bf16.msra.mxu0 0
        %4931 = vmatpush.bf16.msra.mxu0 0
        %4932 = vmatpush.bf16.msra.mxu0 0
        %4933 = vmatpush.bf16.msra.mxu0 0
        %4934 = vmatpush.bf16.msra.mxu0 0
        %4935 = vmatpush.bf16.msra.mxu0 %v4900
        %4936 = vmatmul.bf16.gmra.mxu0 %v4891
        %v4937 = vpop.f32.mrf.mxu0
        %v4938 = vadd.f32 0.0, %v4937
        %v4939 = vpop.f32.mrf.mxu0
        %4940 = vdwg.mxu0
        %v4941 = vadd.f32 %v4851, %v4912
        %v4942 = vadd.f32 %v4864, %v4925
        %v4943 = vadd.f32 %v4877, %v4938
        %s4944 = scalar_lea.vmem %s6, 3
        %v4945 = vld [vmem:[%s4944] sm:$0x1]
        %4946 = vrot.lane.b32.xlu0 %v4767, 125
        %v4947 = vpop.permute.xlu0 %4946
        %4948 = vrot.lane.b32.xlu0 %v4768, 125
        %v4949 = vpop.permute.xlu0 %4948
        %4950 = vrot.lane.b32.xlu0 %v4769, 125
        %v4951 = vpop.permute.xlu0 %4950
        %v4952 = vsel %vm1356, %v4947, %v4949
        %v4953 = vsel %vm1356, %v4949, %v4951
        %v4955 = vsel %vm2440, %v4945, 0
        %v4958 = vsel %vm2444, %v4952, 0
        %v4961 = vsel %vm2444, %v4953, 0
        %v4964 = vsel %vm2444, %v4951, 0
        %4966 = vmatpush.bf16.msra.mxu0 0
        %4967 = vmatpush.bf16.msra.mxu0 0
        %4968 = vmatpush.bf16.msra.mxu0 0
        %4969 = vmatpush.bf16.msra.mxu0 0
        %4970 = vmatpush.bf16.msra.mxu0 0
        %4971 = vmatpush.bf16.msra.mxu0 0
        %4972 = vmatpush.bf16.msra.mxu0 0
        %4973 = vmatpush.bf16.msra.mxu0 %v4958
        %4974 = vmatmul.bf16.gmra.mxu0 %v4955
        %v4975 = vpop.f32.mrf.mxu0
        %v4976 = vadd.f32 0.0, %v4975
        %v4977 = vpop.f32.mrf.mxu0
        %4978 = vdwg.mxu0
        %4979 = vmatpush.bf16.msra.mxu0 0
        %4980 = vmatpush.bf16.msra.mxu0 0
        %4981 = vmatpush.bf16.msra.mxu0 0
        %4982 = vmatpush.bf16.msra.mxu0 0
        %4983 = vmatpush.bf16.msra.mxu0 0
        %4984 = vmatpush.bf16.msra.mxu0 0
        %4985 = vmatpush.bf16.msra.mxu0 0
        %4986 = vmatpush.bf16.msra.mxu0 %v4961
        %4987 = vmatmul.bf16.gmra.mxu0 %v4955
        %v4988 = vpop.f32.mrf.mxu0
        %v4989 = vadd.f32 0.0, %v4988
        %v4990 = vpop.f32.mrf.mxu0
        %4991 = vdwg.mxu0
        %4992 = vmatpush.bf16.msra.mxu0 0
        %4993 = vmatpush.bf16.msra.mxu0 0
        %4994 = vmatpush.bf16.msra.mxu0 0
        %4995 = vmatpush.bf16.msra.mxu0 0
        %4996 = vmatpush.bf16.msra.mxu0 0
        %4997 = vmatpush.bf16.msra.mxu0 0
        %4998 = vmatpush.bf16.msra.mxu0 0
        %4999 = vmatpush.bf16.msra.mxu0 %v4964
        %5000 = vmatmul.bf16.gmra.mxu0 %v4955
        %v5001 = vpop.f32.mrf.mxu0
        %v5002 = vadd.f32 0.0, %v5001
        %v5003 = vpop.f32.mrf.mxu0
        %5004 = vdwg.mxu0
        %v5005 = vadd.f32 %v4941, %v4976
        %v5006 = vadd.f32 %v4942, %v4989
        %v5007 = vadd.f32 %v4943, %v5002
        %s5008 = scalar_lea.vmem %s6, 4
        %v5009 = vld [vmem:[%s5008] sm:$0x1]
        %5010 = vrot.lane.b32.xlu0 %v4767, 109
        %v5011 = vpop.permute.xlu0 %5010
        %5012 = vrot.lane.b32.xlu0 %v4768, 109
        %v5013 = vpop.permute.xlu0 %5012
        %5014 = vrot.lane.b32.xlu0 %v4769, 109
        %v5015 = vpop.permute.xlu0 %5014
        %v5016 = vsel %vm1504, %v5011, %v5013
        %v5017 = vsel %vm1504, %v5013, %v5015
        %v5019 = vsel %vm2440, %v5009, 0
        %v5022 = vsel %vm2444, %v5016, 0
        %v5025 = vsel %vm2444, %v5017, 0
        %v5028 = vsel %vm2444, %v5015, 0
        %5030 = vmatpush.bf16.msra.mxu0 0
        %5031 = vmatpush.bf16.msra.mxu0 0
        %5032 = vmatpush.bf16.msra.mxu0 0
        %5033 = vmatpush.bf16.msra.mxu0 0
        %5034 = vmatpush.bf16.msra.mxu0 0
        %5035 = vmatpush.bf16.msra.mxu0 0
        %5036 = vmatpush.bf16.msra.mxu0 0
        %5037 = vmatpush.bf16.msra.mxu0 %v5022
        %5038 = vmatmul.bf16.gmra.mxu0 %v5019
        %v5039 = vpop.f32.mrf.mxu0
        %v5040 = vadd.f32 0.0, %v5039
        %v5041 = vpop.f32.mrf.mxu0
        %5042 = vdwg.mxu0
        %5043 = vmatpush.bf16.msra.mxu0 0
        %5044 = vmatpush.bf16.msra.mxu0 0
        %5045 = vmatpush.bf16.msra.mxu0 0
        %5046 = vmatpush.bf16.msra.mxu0 0
        %5047 = vmatpush.bf16.msra.mxu0 0
        %5048 = vmatpush.bf16.msra.mxu0 0
        %5049 = vmatpush.bf16.msra.mxu0 0
        %5050 = vmatpush.bf16.msra.mxu0 %v5025
        %5051 = vmatmul.bf16.gmra.mxu0 %v5019
        %v5052 = vpop.f32.mrf.mxu0
        %v5053 = vadd.f32 0.0, %v5052
        %v5054 = vpop.f32.mrf.mxu0
        %5055 = vdwg.mxu0
        %5056 = vmatpush.bf16.msra.mxu0 0
        %5057 = vmatpush.bf16.msra.mxu0 0
        %5058 = vmatpush.bf16.msra.mxu0 0
        %5059 = vmatpush.bf16.msra.mxu0 0
        %5060 = vmatpush.bf16.msra.mxu0 0
        %5061 = vmatpush.bf16.msra.mxu0 0
        %5062 = vmatpush.bf16.msra.mxu0 0
        %5063 = vmatpush.bf16.msra.mxu0 %v5028
        %5064 = vmatmul.bf16.gmra.mxu0 %v5019
        %v5065 = vpop.f32.mrf.mxu0
        %v5066 = vadd.f32 0.0, %v5065
        %v5067 = vpop.f32.mrf.mxu0
        %5068 = vdwg.mxu0
        %v5069 = vadd.f32 %v5005, %v5040
        %v5070 = vadd.f32 %v5006, %v5053
        %v5071 = vadd.f32 %v5007, %v5066
        %s5072 = scalar_lea.vmem %s6, 5
        %v5073 = vld [vmem:[%s5072] sm:$0x1]
        %5074 = vrot.lane.b32.xlu0 %v4767, 108
        %v5075 = vpop.permute.xlu0 %5074
        %5076 = vrot.lane.b32.xlu0 %v4768, 108
        %v5077 = vpop.permute.xlu0 %5076
        %5078 = vrot.lane.b32.xlu0 %v4769, 108
        %v5079 = vpop.permute.xlu0 %5078
        %v5080 = vsel %vm1578, %v5075, %v5077
        %v5081 = vsel %vm1578, %v5077, %v5079
        %v5083 = vsel %vm2440, %v5073, 0
        %v5086 = vsel %vm2444, %v5080, 0
        %v5089 = vsel %vm2444, %v5081, 0
        %v5092 = vsel %vm2444, %v5079, 0
        %5094 = vmatpush.bf16.msra.mxu0 0
        %5095 = vmatpush.bf16.msra.mxu0 0
        %5096 = vmatpush.bf16.msra.mxu0 0
        %5097 = vmatpush.bf16.msra.mxu0 0
        %5098 = vmatpush.bf16.msra.mxu0 0
        %5099 = vmatpush.bf16.msra.mxu0 0
        %5100 = vmatpush.bf16.msra.mxu0 0
        %5101 = vmatpush.bf16.msra.mxu0 %v5086
        %5102 = vmatmul.bf16.gmra.mxu0 %v5083
        %v5103 = vpop.f32.mrf.mxu0
        %v5104 = vadd.f32 0.0, %v5103
        %v5105 = vpop.f32.mrf.mxu0
        %5106 = vdwg.mxu0
        %5107 = vmatpush.bf16.msra.mxu0 0
        %5108 = vmatpush.bf16.msra.mxu0 0
        %5109 = vmatpush.bf16.msra.mxu0 0
        %5110 = vmatpush.bf16.msra.mxu0 0
        %5111 = vmatpush.bf16.msra.mxu0 0
        %5112 = vmatpush.bf16.msra.mxu0 0
        %5113 = vmatpush.bf16.msra.mxu0 0
        %5114 = vmatpush.bf16.msra.mxu0 %v5089
        %5115 = vmatmul.bf16.gmra.mxu0 %v5083
        %v5116 = vpop.f32.mrf.mxu0
        %v5117 = vadd.f32 0.0, %v5116
        %v5118 = vpop.f32.mrf.mxu0
        %5119 = vdwg.mxu0
        %5120 = vmatpush.bf16.msra.mxu0 0
        %5121 = vmatpush.bf16.msra.mxu0 0
        %5122 = vmatpush.bf16.msra.mxu0 0
        %5123 = vmatpush.bf16.msra.mxu0 0
        %5124 = vmatpush.bf16.msra.mxu0 0
        %5125 = vmatpush.bf16.msra.mxu0 0
        %5126 = vmatpush.bf16.msra.mxu0 0
        %5127 = vmatpush.bf16.msra.mxu0 %v5092
        %5128 = vmatmul.bf16.gmra.mxu0 %v5083
        %v5129 = vpop.f32.mrf.mxu0
        %v5130 = vadd.f32 0.0, %v5129
        %v5131 = vpop.f32.mrf.mxu0
        %5132 = vdwg.mxu0
        %v5133 = vadd.f32 %v5069, %v5104
        %v5134 = vadd.f32 %v5070, %v5117
        %v5135 = vadd.f32 %v5071, %v5130
        %s5136 = scalar_lea.vmem %s6, 6
        %v5137 = vld [vmem:[%s5136] sm:$0x1]
        %5138 = vrot.lane.b32.xlu0 %v4767, 107
        %v5139 = vpop.permute.xlu0 %5138
        %5140 = vrot.lane.b32.xlu0 %v4768, 107
        %v5141 = vpop.permute.xlu0 %5140
        %5142 = vrot.lane.b32.xlu0 %v4769, 107
        %v5143 = vpop.permute.xlu0 %5142
        %v5144 = vsel %vm1652, %v5139, %v5141
        %v5145 = vsel %vm1652, %v5141, %v5143
        %v5147 = vsel %vm2440, %v5137, 0
        %v5150 = vsel %vm2444, %v5144, 0
        %v5153 = vsel %vm2444, %v5145, 0
        %v5156 = vsel %vm2444, %v5143, 0
        %5158 = vmatpush.bf16.msra.mxu0 0
        %5159 = vmatpush.bf16.msra.mxu0 0
        %5160 = vmatpush.bf16.msra.mxu0 0
        %5161 = vmatpush.bf16.msra.mxu0 0
        %5162 = vmatpush.bf16.msra.mxu0 0
        %5163 = vmatpush.bf16.msra.mxu0 0
        %5164 = vmatpush.bf16.msra.mxu0 0
        %5165 = vmatpush.bf16.msra.mxu0 %v5150
        %5166 = vmatmul.bf16.gmra.mxu0 %v5147
        %v5167 = vpop.f32.mrf.mxu0
        %v5168 = vadd.f32 0.0, %v5167
        %v5169 = vpop.f32.mrf.mxu0
        %5170 = vdwg.mxu0
        %5171 = vmatpush.bf16.msra.mxu0 0
        %5172 = vmatpush.bf16.msra.mxu0 0
        %5173 = vmatpush.bf16.msra.mxu0 0
        %5174 = vmatpush.bf16.msra.mxu0 0
        %5175 = vmatpush.bf16.msra.mxu0 0
        %5176 = vmatpush.bf16.msra.mxu0 0
        %5177 = vmatpush.bf16.msra.mxu0 0
        %5178 = vmatpush.bf16.msra.mxu0 %v5153
        %5179 = vmatmul.bf16.gmra.mxu0 %v5147
        %v5180 = vpop.f32.mrf.mxu0
        %v5181 = vadd.f32 0.0, %v5180
        %v5182 = vpop.f32.mrf.mxu0
        %5183 = vdwg.mxu0
        %5184 = vmatpush.bf16.msra.mxu0 0
        %5185 = vmatpush.bf16.msra.mxu0 0
        %5186 = vmatpush.bf16.msra.mxu0 0
        %5187 = vmatpush.bf16.msra.mxu0 0
        %5188 = vmatpush.bf16.msra.mxu0 0
        %5189 = vmatpush.bf16.msra.mxu0 0
        %5190 = vmatpush.bf16.msra.mxu0 0
        %5191 = vmatpush.bf16.msra.mxu0 %v5156
        %5192 = vmatmul.bf16.gmra.mxu0 %v5147
        %v5193 = vpop.f32.mrf.mxu0
        %v5194 = vadd.f32 0.0, %v5193
        %v5195 = vpop.f32.mrf.mxu0
        %5196 = vdwg.mxu0
        %v5197 = vadd.f32 %v5133, %v5168
        %v5198 = vadd.f32 %v5134, %v5181
        %v5199 = vadd.f32 %v5135, %v5194
        %s5200 = scalar_lea.vmem %s6, 7
        %v5201 = vld [vmem:[%s5200] sm:$0x1]
        %5202 = vrot.lane.b32.xlu0 %v4767, 106
        %v5203 = vpop.permute.xlu0 %5202
        %5204 = vrot.lane.b32.xlu0 %v4768, 106
        %v5205 = vpop.permute.xlu0 %5204
        %5206 = vrot.lane.b32.xlu0 %v4769, 106
        %v5207 = vpop.permute.xlu0 %5206
        %v5208 = vsel %vm4407, %v5203, %v5205
        %v5209 = vsel %vm4407, %v5205, %v5207
        %v5211 = vsel %vm2440, %v5201, 0
        %v5214 = vsel %vm2444, %v5208, 0
        %v5217 = vsel %vm2444, %v5209, 0
        %v5220 = vsel %vm2444, %v5207, 0
        %5222 = vmatpush.bf16.msra.mxu0 0
        %5223 = vmatpush.bf16.msra.mxu0 0
        %5224 = vmatpush.bf16.msra.mxu0 0
        %5225 = vmatpush.bf16.msra.mxu0 0
        %5226 = vmatpush.bf16.msra.mxu0 0
        %5227 = vmatpush.bf16.msra.mxu0 0
        %5228 = vmatpush.bf16.msra.mxu0 0
        %5229 = vmatpush.bf16.msra.mxu0 %v5214
        %5230 = vmatmul.bf16.gmra.mxu0 %v5211
        %v5231 = vpop.f32.mrf.mxu0
        %v5232 = vadd.f32 0.0, %v5231
        %v5233 = vpop.f32.mrf.mxu0
        %5234 = vdwg.mxu0
        %5235 = vmatpush.bf16.msra.mxu0 0
        %5236 = vmatpush.bf16.msra.mxu0 0
        %5237 = vmatpush.bf16.msra.mxu0 0
        %5238 = vmatpush.bf16.msra.mxu0 0
        %5239 = vmatpush.bf16.msra.mxu0 0
        %5240 = vmatpush.bf16.msra.mxu0 0
        %5241 = vmatpush.bf16.msra.mxu0 0
        %5242 = vmatpush.bf16.msra.mxu0 %v5217
        %5243 = vmatmul.bf16.gmra.mxu0 %v5211
        %v5244 = vpop.f32.mrf.mxu0
        %v5245 = vadd.f32 0.0, %v5244
        %v5246 = vpop.f32.mrf.mxu0
        %5247 = vdwg.mxu0
        %5248 = vmatpush.bf16.msra.mxu0 0
        %5249 = vmatpush.bf16.msra.mxu0 0
        %5250 = vmatpush.bf16.msra.mxu0 0
        %5251 = vmatpush.bf16.msra.mxu0 0
        %5252 = vmatpush.bf16.msra.mxu0 0
        %5253 = vmatpush.bf16.msra.mxu0 0
        %5254 = vmatpush.bf16.msra.mxu0 0
        %5255 = vmatpush.bf16.msra.mxu0 %v5220
        %5256 = vmatmul.bf16.gmra.mxu0 %v5211
        %v5257 = vpop.f32.mrf.mxu0
        %v5258 = vadd.f32 0.0, %v5257
        %v5259 = vpop.f32.mrf.mxu0
        %5260 = vdwg.mxu0
        %v5261 = vadd.f32 %v5197, %v5232
        %v5262 = vadd.f32 %v5198, %v5245
        %v5263 = vadd.f32 %v5199, %v5258
        %s5264 = scalar_lea.vmem %s6, 8
        %v5265 = vld [vmem:[%s5264] sm:$0x1]
        %v5266 = vld [vmem:[#allocation7] sm:$0x77]
        %v5267 = vld [vmem:[#allocation7 + $0x8] sm:$0x77]
        %v5270 = vunpack.c.l.b16 %v5266
        %v5271 = vunpack.c.h.b16 %v5266
        %v5272 = vunpack.c.l.b16 %v5267
        %v5273 = vunpack.c.h.b16 %v5267
        %v5274 = vpack.c.b16 %v5270, %v5270
        %v5275 = vpack.c.b16 %v5271, %v5271
        %v5276 = vpack.c.b16 %v5272, %v5272
        %v5277 = vpack.c.b16 %v5273, %v5273
        %5278 = vrot.lane.b32.xlu0 %v5274, 90
        %v5279 = vpop.permute.xlu0 %5278
        %5280 = vrot.lane.b32.xlu0 %v5275, 90
        %v5281 = vpop.permute.xlu0 %5280
        %5282 = vrot.lane.b32.xlu0 %v5276, 90
        %v5283 = vpop.permute.xlu0 %5282
        %5284 = vrot.lane.b32.xlu0 %v5277, 90
        %v5285 = vpop.permute.xlu0 %5284
        %v5286 = vsel %vm1874, %v5279, %v5281
        %v5287 = vsel %vm1874, %v5281, %v5283
        %v5288 = vsel %vm1874, %v5283, %v5285
        %v5290 = vsel %vm2440, %v5265, 0
        %v5293 = vsel %vm2444, %v5286, 0
        %v5296 = vsel %vm2444, %v5287, 0
        %v5299 = vsel %vm2444, %v5288, 0
        %5301 = vmatpush.bf16.msra.mxu0 0
        %5302 = vmatpush.bf16.msra.mxu0 0
        %5303 = vmatpush.bf16.msra.mxu0 0
        %5304 = vmatpush.bf16.msra.mxu0 0
        %5305 = vmatpush.bf16.msra.mxu0 0
        %5306 = vmatpush.bf16.msra.mxu0 0
        %5307 = vmatpush.bf16.msra.mxu0 0
        %5308 = vmatpush.bf16.msra.mxu0 %v5293
        %5309 = vmatmul.bf16.gmra.mxu0 %v5290
        %v5310 = vpop.f32.mrf.mxu0
        %v5311 = vadd.f32 0.0, %v5310
        %v5312 = vpop.f32.mrf.mxu0
        %5313 = vdwg.mxu0
        %5314 = vmatpush.bf16.msra.mxu0 0
        %5315 = vmatpush.bf16.msra.mxu0 0
        %5316 = vmatpush.bf16.msra.mxu0 0
        %5317 = vmatpush.bf16.msra.mxu0 0
        %5318 = vmatpush.bf16.msra.mxu0 0
        %5319 = vmatpush.bf16.msra.mxu0 0
        %5320 = vmatpush.bf16.msra.mxu0 0
        %5321 = vmatpush.bf16.msra.mxu0 %v5296
        %5322 = vmatmul.bf16.gmra.mxu0 %v5290
        %v5323 = vpop.f32.mrf.mxu0
        %v5324 = vadd.f32 0.0, %v5323
        %v5325 = vpop.f32.mrf.mxu0
        %5326 = vdwg.mxu0
        %5327 = vmatpush.bf16.msra.mxu0 0
        %5328 = vmatpush.bf16.msra.mxu0 0
        %5329 = vmatpush.bf16.msra.mxu0 0
        %5330 = vmatpush.bf16.msra.mxu0 0
        %5331 = vmatpush.bf16.msra.mxu0 0
        %5332 = vmatpush.bf16.msra.mxu0 0
        %5333 = vmatpush.bf16.msra.mxu0 0
        %5334 = vmatpush.bf16.msra.mxu0 %v5299
        %5335 = vmatmul.bf16.gmra.mxu0 %v5290
        %v5336 = vpop.f32.mrf.mxu0
        %v5337 = vadd.f32 0.0, %v5336
        %v5338 = vpop.f32.mrf.mxu0
        %5339 = vdwg.mxu0
        %v5340 = vadd.f32 %v5261, %v5311
        %v5341 = vadd.f32 %v5262, %v5324
        %v5342 = vadd.f32 %v5263, %v5337
        %s5343 = scalar_lea.vmem %s6, 9
        %v5344 = vld [vmem:[%s5343] sm:$0x1]
        %5345 = vrot.lane.b32.xlu0 %v5274, 89
        %v5346 = vpop.permute.xlu0 %5345
        %5347 = vrot.lane.b32.xlu0 %v5275, 89
        %v5348 = vpop.permute.xlu0 %5347
        %5349 = vrot.lane.b32.xlu0 %v5276, 89
        %v5350 = vpop.permute.xlu0 %5349
        %5351 = vrot.lane.b32.xlu0 %v5277, 89
        %v5352 = vpop.permute.xlu0 %5351
        %v5353 = vsel %vm1948, %v5346, %v5348
        %v5354 = vsel %vm1948, %v5348, %v5350
        %v5355 = vsel %vm1948, %v5350, %v5352
        %v5357 = vsel %vm2440, %v5344, 0
        %v5360 = vsel %vm2444, %v5353, 0
        %v5363 = vsel %vm2444, %v5354, 0
        %v5366 = vsel %vm2444, %v5355, 0
        %5368 = vmatpush.bf16.msra.mxu0 0
        %5369 = vmatpush.bf16.msra.mxu0 0
        %5370 = vmatpush.bf16.msra.mxu0 0
        %5371 = vmatpush.bf16.msra.mxu0 0
        %5372 = vmatpush.bf16.msra.mxu0 0
        %5373 = vmatpush.bf16.msra.mxu0 0
        %5374 = vmatpush.bf16.msra.mxu0 0
        %5375 = vmatpush.bf16.msra.mxu0 %v5360
        %5376 = vmatmul.bf16.gmra.mxu0 %v5357
        %v5377 = vpop.f32.mrf.mxu0
        %v5378 = vadd.f32 0.0, %v5377
        %v5379 = vpop.f32.mrf.mxu0
        %5380 = vdwg.mxu0
        %5381 = vmatpush.bf16.msra.mxu0 0
        %5382 = vmatpush.bf16.msra.mxu0 0
        %5383 = vmatpush.bf16.msra.mxu0 0
        %5384 = vmatpush.bf16.msra.mxu0 0
        %5385 = vmatpush.bf16.msra.mxu0 0
        %5386 = vmatpush.bf16.msra.mxu0 0
        %5387 = vmatpush.bf16.msra.mxu0 0
        %5388 = vmatpush.bf16.msra.mxu0 %v5363
        %5389 = vmatmul.bf16.gmra.mxu0 %v5357
        %v5390 = vpop.f32.mrf.mxu0
        %v5391 = vadd.f32 0.0, %v5390
        %v5392 = vpop.f32.mrf.mxu0
        %5393 = vdwg.mxu0
        %5394 = vmatpush.bf16.msra.mxu0 0
        %5395 = vmatpush.bf16.msra.mxu0 0
        %5396 = vmatpush.bf16.msra.mxu0 0
        %5397 = vmatpush.bf16.msra.mxu0 0
        %5398 = vmatpush.bf16.msra.mxu0 0
        %5399 = vmatpush.bf16.msra.mxu0 0
        %5400 = vmatpush.bf16.msra.mxu0 0
        %5401 = vmatpush.bf16.msra.mxu0 %v5366
        %5402 = vmatmul.bf16.gmra.mxu0 %v5357
        %v5403 = vpop.f32.mrf.mxu0
        %v5404 = vadd.f32 0.0, %v5403
        %v5405 = vpop.f32.mrf.mxu0
        %5406 = vdwg.mxu0
        %v5407 = vadd.f32 %v5340, %v5378
        %v5408 = vadd.f32 %v5341, %v5391
        %v5409 = vadd.f32 %v5342, %v5404
        %s5410 = scalar_lea.vmem %s6, 10
        %v5411 = vld [vmem:[%s5410] sm:$0x1]
        %5412 = vrot.lane.b32.xlu0 %v5274, 88
        %v5413 = vpop.permute.xlu0 %5412
        %5414 = vrot.lane.b32.xlu0 %v5275, 88
        %v5415 = vpop.permute.xlu0 %5414
        %5416 = vrot.lane.b32.xlu0 %v5276, 88
        %v5417 = vpop.permute.xlu0 %5416
        %5418 = vrot.lane.b32.xlu0 %v5277, 88
        %v5419 = vpop.permute.xlu0 %5418
        %vm5420 = vcmask 719872
        %v5421 = vsel %vm5420, %v5413, %v5415
        %v5422 = vsel %vm5420, %v5415, %v5417
        %v5423 = vsel %vm5420, %v5417, %v5419
        %v5425 = vsel %vm2440, %v5411, 0
        %v5428 = vsel %vm2444, %v5421, 0
        %v5431 = vsel %vm2444, %v5422, 0
        %v5434 = vsel %vm2444, %v5423, 0
        %5436 = vmatpush.bf16.msra.mxu0 0
        %5437 = vmatpush.bf16.msra.mxu0 0
        %5438 = vmatpush.bf16.msra.mxu0 0
        %5439 = vmatpush.bf16.msra.mxu0 0
        %5440 = vmatpush.bf16.msra.mxu0 0
        %5441 = vmatpush.bf16.msra.mxu0 0
        %5442 = vmatpush.bf16.msra.mxu0 0
        %5443 = vmatpush.bf16.msra.mxu0 %v5428
        %5444 = vmatmul.bf16.gmra.mxu0 %v5425
        %v5445 = vpop.f32.mrf.mxu0
        %v5446 = vadd.f32 0.0, %v5445
        %v5447 = vpop.f32.mrf.mxu0
        %5448 = vdwg.mxu0
        %5449 = vmatpush.bf16.msra.mxu0 0
        %5450 = vmatpush.bf16.msra.mxu0 0
        %5451 = vmatpush.bf16.msra.mxu0 0
        %5452 = vmatpush.bf16.msra.mxu0 0
        %5453 = vmatpush.bf16.msra.mxu0 0
        %5454 = vmatpush.bf16.msra.mxu0 0
        %5455 = vmatpush.bf16.msra.mxu0 0
        %5456 = vmatpush.bf16.msra.mxu0 %v5431
        %5457 = vmatmul.bf16.gmra.mxu0 %v5425
        %v5458 = vpop.f32.mrf.mxu0
        %v5459 = vadd.f32 0.0, %v5458
        %v5460 = vpop.f32.mrf.mxu0
        %5461 = vdwg.mxu0
        %5462 = vmatpush.bf16.msra.mxu0 0
        %5463 = vmatpush.bf16.msra.mxu0 0
        %5464 = vmatpush.bf16.msra.mxu0 0
        %5465 = vmatpush.bf16.msra.mxu0 0
        %5466 = vmatpush.bf16.msra.mxu0 0
        %5467 = vmatpush.bf16.msra.mxu0 0
        %5468 = vmatpush.bf16.msra.mxu0 0
        %5469 = vmatpush.bf16.msra.mxu0 %v5434
        %5470 = vmatmul.bf16.gmra.mxu0 %v5425
        %v5471 = vpop.f32.mrf.mxu0
        %v5472 = vadd.f32 0.0, %v5471
        %v5473 = vpop.f32.mrf.mxu0
        %5474 = vdwg.mxu0
        %v5475 = vadd.f32 %v5407, %v5446
        %v5476 = vadd.f32 %v5408, %v5459
        %v5477 = vadd.f32 %v5409, %v5472
        %s5478 = scalar_lea.vmem %s6, 11
        %v5479 = vld [vmem:[%s5478] sm:$0x1]
        %5480 = vrot.lane.b32.xlu0 %v5274, 87
        %v5481 = vpop.permute.xlu0 %5480
        %5482 = vrot.lane.b32.xlu0 %v5275, 87
        %v5483 = vpop.permute.xlu0 %5482
        %5484 = vrot.lane.b32.xlu0 %v5276, 87
        %v5485 = vpop.permute.xlu0 %5484
        %5486 = vrot.lane.b32.xlu0 %v5277, 87
        %v5487 = vpop.permute.xlu0 %5486
        %vm5488 = vcmask 711680
        %v5489 = vsel %vm5488, %v5481, %v5483
        %v5490 = vsel %vm5488, %v5483, %v5485
        %v5491 = vsel %vm5488, %v5485, %v5487
        %v5493 = vsel %vm2440, %v5479, 0
        %v5496 = vsel %vm2444, %v5489, 0
        %v5499 = vsel %vm2444, %v5490, 0
        %v5502 = vsel %vm2444, %v5491, 0
        %5504 = vmatpush.bf16.msra.mxu0 0
        %5505 = vmatpush.bf16.msra.mxu0 0
        %5506 = vmatpush.bf16.msra.mxu0 0
        %5507 = vmatpush.bf16.msra.mxu0 0
        %5508 = vmatpush.bf16.msra.mxu0 0
        %5509 = vmatpush.bf16.msra.mxu0 0
        %5510 = vmatpush.bf16.msra.mxu0 0
        %5511 = vmatpush.bf16.msra.mxu0 %v5496
        %5512 = vmatmul.bf16.gmra.mxu0 %v5493
        %v5513 = vpop.f32.mrf.mxu0
        %v5514 = vadd.f32 0.0, %v5513
        %v5515 = vpop.f32.mrf.mxu0
        %5516 = vdwg.mxu0
        %5517 = vmatpush.bf16.msra.mxu0 0
        %5518 = vmatpush.bf16.msra.mxu0 0
        %5519 = vmatpush.bf16.msra.mxu0 0
        %5520 = vmatpush.bf16.msra.mxu0 0
        %5521 = vmatpush.bf16.msra.mxu0 0
        %5522 = vmatpush.bf16.msra.mxu0 0
        %5523 = vmatpush.bf16.msra.mxu0 0
        %5524 = vmatpush.bf16.msra.mxu0 %v5499
        %5525 = vmatmul.bf16.gmra.mxu0 %v5493
        %v5526 = vpop.f32.mrf.mxu0
        %v5527 = vadd.f32 0.0, %v5526
        %v5528 = vpop.f32.mrf.mxu0
        %5529 = vdwg.mxu0
        %5530 = vmatpush.bf16.msra.mxu0 0
        %5531 = vmatpush.bf16.msra.mxu0 0
        %5532 = vmatpush.bf16.msra.mxu0 0
        %5533 = vmatpush.bf16.msra.mxu0 0
        %5534 = vmatpush.bf16.msra.mxu0 0
        %5535 = vmatpush.bf16.msra.mxu0 0
        %5536 = vmatpush.bf16.msra.mxu0 0
        %5537 = vmatpush.bf16.msra.mxu0 %v5502
        %5538 = vmatmul.bf16.gmra.mxu0 %v5493
        %v5539 = vpop.f32.mrf.mxu0
        %v5540 = vadd.f32 0.0, %v5539
        %v5541 = vpop.f32.mrf.mxu0
        %5542 = vdwg.mxu0
        %v5543 = vadd.f32 %v5475, %v5514
        %v5544 = vadd.f32 %v5476, %v5527
        %v5545 = vadd.f32 %v5477, %v5540
        %s5546 = scalar_lea.vmem %s6, 12
        %v5547 = vld [vmem:[%s5546] sm:$0x1]
        %5548 = vrot.lane.b32.xlu0 %v5274, 71
        %v5549 = vpop.permute.xlu0 %5548
        %5550 = vrot.lane.b32.xlu0 %v5275, 71
        %v5551 = vpop.permute.xlu0 %5550
        %5552 = vrot.lane.b32.xlu0 %v5276, 71
        %v5553 = vpop.permute.xlu0 %5552
        %5554 = vrot.lane.b32.xlu0 %v5277, 71
        %v5555 = vpop.permute.xlu0 %5554
        %v5556 = vsel %vm2244, %v5549, %v5551
        %v5557 = vsel %vm2244, %v5551, %v5553
        %v5558 = vsel %vm2244, %v5553, %v5555
        %v5560 = vsel %vm2440, %v5547, 0
        %v5563 = vsel %vm2444, %v5556, 0
        %v5566 = vsel %vm2444, %v5557, 0
        %v5569 = vsel %vm2444, %v5558, 0
        %5571 = vmatpush.bf16.msra.mxu0 0
        %5572 = vmatpush.bf16.msra.mxu0 0
        %5573 = vmatpush.bf16.msra.mxu0 0
        %5574 = vmatpush.bf16.msra.mxu0 0
        %5575 = vmatpush.bf16.msra.mxu0 0
        %5576 = vmatpush.bf16.msra.mxu0 0
        %5577 = vmatpush.bf16.msra.mxu0 0
        %5578 = vmatpush.bf16.msra.mxu0 %v5563
        %5579 = vmatmul.bf16.gmra.mxu0 %v5560
        %v5580 = vpop.f32.mrf.mxu0
        %v5581 = vadd.f32 0.0, %v5580
        %v5582 = vpop.f32.mrf.mxu0
        %5583 = vdwg.mxu0
        %5584 = vmatpush.bf16.msra.mxu0 0
        %5585 = vmatpush.bf16.msra.mxu0 0
        %5586 = vmatpush.bf16.msra.mxu0 0
        %5587 = vmatpush.bf16.msra.mxu0 0
        %5588 = vmatpush.bf16.msra.mxu0 0
        %5589 = vmatpush.bf16.msra.mxu0 0
        %5590 = vmatpush.bf16.msra.mxu0 0
        %5591 = vmatpush.bf16.msra.mxu0 %v5566
        %5592 = vmatmul.bf16.gmra.mxu0 %v5560
        %v5593 = vpop.f32.mrf.mxu0
        %v5594 = vadd.f32 0.0, %v5593
        %v5595 = vpop.f32.mrf.mxu0
        %5596 = vdwg.mxu0
        %5597 = vmatpush.bf16.msra.mxu0 0
        %5598 = vmatpush.bf16.msra.mxu0 0
        %5599 = vmatpush.bf16.msra.mxu0 0
        %5600 = vmatpush.bf16.msra.mxu0 0
        %5601 = vmatpush.bf16.msra.mxu0 0
        %5602 = vmatpush.bf16.msra.mxu0 0
        %5603 = vmatpush.bf16.msra.mxu0 0
        %5604 = vmatpush.bf16.msra.mxu0 %v5569
        %5605 = vmatmul.bf16.gmra.mxu0 %v5560
        %v5606 = vpop.f32.mrf.mxu0
        %v5607 = vadd.f32 0.0, %v5606
        %v5608 = vpop.f32.mrf.mxu0
        %5609 = vdwg.mxu0
        %v5610 = vadd.f32 %v5543, %v5581
        %v5611 = vadd.f32 %v5544, %v5594
        %v5612 = vadd.f32 %v5545, %v5607
        %s5613 = scalar_lea.vmem %s6, 13
        %v5614 = vld [vmem:[%s5613] sm:$0x1]
        %5615 = vrot.lane.b32.xlu0 %v5274, 70
        %v5616 = vpop.permute.xlu0 %5615
        %5617 = vrot.lane.b32.xlu0 %v5275, 70
        %v5618 = vpop.permute.xlu0 %5617
        %5619 = vrot.lane.b32.xlu0 %v5276, 70
        %v5620 = vpop.permute.xlu0 %5619
        %5621 = vrot.lane.b32.xlu0 %v5277, 70
        %v5622 = vpop.permute.xlu0 %5621
        %vm5623 = vcmask 572416
        %v5624 = vsel %vm5623, %v5616, %v5618
        %v5625 = vsel %vm5623, %v5618, %v5620
        %v5626 = vsel %vm5623, %v5620, %v5622
        %v5628 = vsel %vm2440, %v5614, 0
        %v5631 = vsel %vm2444, %v5624, 0
        %v5634 = vsel %vm2444, %v5625, 0
        %v5637 = vsel %vm2444, %v5626, 0
        %5639 = vmatpush.bf16.msra.mxu0 0
        %5640 = vmatpush.bf16.msra.mxu0 0
        %5641 = vmatpush.bf16.msra.mxu0 0
        %5642 = vmatpush.bf16.msra.mxu0 0
        %5643 = vmatpush.bf16.msra.mxu0 0
        %5644 = vmatpush.bf16.msra.mxu0 0
        %5645 = vmatpush.bf16.msra.mxu0 0
        %5646 = vmatpush.bf16.msra.mxu0 %v5631
        %5647 = vmatmul.bf16.gmra.mxu0 %v5628
        %v5648 = vpop.f32.mrf.mxu0
        %v5649 = vadd.f32 0.0, %v5648
        %v5650 = vpop.f32.mrf.mxu0
        %5651 = vdwg.mxu0
        %5652 = vmatpush.bf16.msra.mxu0 0
        %5653 = vmatpush.bf16.msra.mxu0 0
        %5654 = vmatpush.bf16.msra.mxu0 0
        %5655 = vmatpush.bf16.msra.mxu0 0
        %5656 = vmatpush.bf16.msra.mxu0 0
        %5657 = vmatpush.bf16.msra.mxu0 0
        %5658 = vmatpush.bf16.msra.mxu0 0
        %5659 = vmatpush.bf16.msra.mxu0 %v5634
        %5660 = vmatmul.bf16.gmra.mxu0 %v5628
        %v5661 = vpop.f32.mrf.mxu0
        %v5662 = vadd.f32 0.0, %v5661
        %v5663 = vpop.f32.mrf.mxu0
        %5664 = vdwg.mxu0
        %5665 = vmatpush.bf16.msra.mxu0 0
        %5666 = vmatpush.bf16.msra.mxu0 0
        %5667 = vmatpush.bf16.msra.mxu0 0
        %5668 = vmatpush.bf16.msra.mxu0 0
        %5669 = vmatpush.bf16.msra.mxu0 0
        %5670 = vmatpush.bf16.msra.mxu0 0
        %5671 = vmatpush.bf16.msra.mxu0 0
        %5672 = vmatpush.bf16.msra.mxu0 %v5637
        %5673 = vmatmul.bf16.gmra.mxu0 %v5628
        %v5674 = vpop.f32.mrf.mxu0
        %v5675 = vadd.f32 0.0, %v5674
        %v5676 = vpop.f32.mrf.mxu0
        %5677 = vdwg.mxu0
        %v5678 = vadd.f32 %v5610, %v5649
        %v5679 = vadd.f32 %v5611, %v5662
        %v5680 = vadd.f32 %v5612, %v5675
        %s5681 = scalar_lea.vmem %s6, 14
        %v5682 = vld [vmem:[%s5681] sm:$0x1]
        %5683 = vrot.lane.b32.xlu0 %v5274, 69
        %v5684 = vpop.permute.xlu0 %5683
        %5685 = vrot.lane.b32.xlu0 %v5275, 69
        %v5686 = vpop.permute.xlu0 %5685
        %5687 = vrot.lane.b32.xlu0 %v5276, 69
        %v5688 = vpop.permute.xlu0 %5687
        %5689 = vrot.lane.b32.xlu0 %v5277, 69
        %v5690 = vpop.permute.xlu0 %5689
        %vm5691 = vcmask 564224
        %v5692 = vsel %vm5691, %v5684, %v5686
        %v5693 = vsel %vm5691, %v5686, %v5688
        %v5694 = vsel %vm5691, %v5688, %v5690
        %v5696 = vsel %vm2440, %v5682, 0
        %v5699 = vsel %vm2444, %v5692, 0
        %v5702 = vsel %vm2444, %v5693, 0
        %v5705 = vsel %vm2444, %v5694, 0
        %5707 = vmatpush.bf16.msra.mxu0 0
        %5708 = vmatpush.bf16.msra.mxu0 0
        %5709 = vmatpush.bf16.msra.mxu0 0
        %5710 = vmatpush.bf16.msra.mxu0 0
        %5711 = vmatpush.bf16.msra.mxu0 0
        %5712 = vmatpush.bf16.msra.mxu0 0
        %5713 = vmatpush.bf16.msra.mxu0 0
        %5714 = vmatpush.bf16.msra.mxu0 %v5699
        %5715 = vmatmul.bf16.gmra.mxu0 %v5696
        %v5716 = vpop.f32.mrf.mxu0
        %v5717 = vadd.f32 0.0, %v5716
        %v5718 = vpop.f32.mrf.mxu0
        %5719 = vdwg.mxu0
        %5720 = vmatpush.bf16.msra.mxu0 0
        %5721 = vmatpush.bf16.msra.mxu0 0
        %5722 = vmatpush.bf16.msra.mxu0 0
        %5723 = vmatpush.bf16.msra.mxu0 0
        %5724 = vmatpush.bf16.msra.mxu0 0
        %5725 = vmatpush.bf16.msra.mxu0 0
        %5726 = vmatpush.bf16.msra.mxu0 0
        %5727 = vmatpush.bf16.msra.mxu0 %v5702
        %5728 = vmatmul.bf16.gmra.mxu0 %v5696
        %v5729 = vpop.f32.mrf.mxu0
        %v5730 = vadd.f32 0.0, %v5729
        %v5731 = vpop.f32.mrf.mxu0
        %5732 = vdwg.mxu0
        %5733 = vmatpush.bf16.msra.mxu0 0
        %5734 = vmatpush.bf16.msra.mxu0 0
        %5735 = vmatpush.bf16.msra.mxu0 0
        %5736 = vmatpush.bf16.msra.mxu0 0
        %5737 = vmatpush.bf16.msra.mxu0 0
        %5738 = vmatpush.bf16.msra.mxu0 0
        %5739 = vmatpush.bf16.msra.mxu0 0
        %5740 = vmatpush.bf16.msra.mxu0 %v5705
        %5741 = vmatmul.bf16.gmra.mxu0 %v5696
        %v5742 = vpop.f32.mrf.mxu0
        %v5743 = vadd.f32 0.0, %v5742
        %v5744 = vpop.f32.mrf.mxu0
        %5745 = vdwg.mxu0
        %v5746 = vadd.f32 %v5678, %v5717
        %v5747 = vadd.f32 %v5679, %v5730
        %v5748 = vadd.f32 %v5680, %v5743
        %s5749 = scalar_lea.vmem %s6, 15
        %v5750 = vld [vmem:[%s5749] sm:$0x1]
        %5751 = vrot.lane.b32.xlu0 %v5274, 68
        %v5752 = vpop.permute.xlu0 %5751
        %5753 = vrot.lane.b32.xlu0 %v5275, 68
        %v5754 = vpop.permute.xlu0 %5753
        %5755 = vrot.lane.b32.xlu0 %v5276, 68
        %v5756 = vpop.permute.xlu0 %5755
        %5757 = vrot.lane.b32.xlu0 %v5277, 68
        %v5758 = vpop.permute.xlu0 %5757
        %vm5759 = vcmask 556032
        %v5760 = vsel %vm5759, %v5752, %v5754
        %v5761 = vsel %vm5759, %v5754, %v5756
        %v5762 = vsel %vm5759, %v5756, %v5758
        %v5764 = vsel %vm2440, %v5750, 0
        %v5767 = vsel %vm2444, %v5760, 0
        %v5770 = vsel %vm2444, %v5761, 0
        %v5773 = vsel %vm2444, %v5762, 0
        %5775 = vmatpush.bf16.msra.mxu0 0
        %5776 = vmatpush.bf16.msra.mxu0 0
        %5777 = vmatpush.bf16.msra.mxu0 0
        %5778 = vmatpush.bf16.msra.mxu0 0
        %5779 = vmatpush.bf16.msra.mxu0 0
        %5780 = vmatpush.bf16.msra.mxu0 0
        %5781 = vmatpush.bf16.msra.mxu0 0
        %5782 = vmatpush.bf16.msra.mxu0 %v5767
        %5783 = vmatmul.bf16.gmra.mxu0 %v5764
        %v5784 = vpop.f32.mrf.mxu0
        %v5785 = vadd.f32 0.0, %v5784
        %v5786 = vpop.f32.mrf.mxu0
        %5787 = vdwg.mxu0
        %5788 = vmatpush.bf16.msra.mxu0 0
        %5789 = vmatpush.bf16.msra.mxu0 0
        %5790 = vmatpush.bf16.msra.mxu0 0
        %5791 = vmatpush.bf16.msra.mxu0 0
        %5792 = vmatpush.bf16.msra.mxu0 0
        %5793 = vmatpush.bf16.msra.mxu0 0
        %5794 = vmatpush.bf16.msra.mxu0 0
        %5795 = vmatpush.bf16.msra.mxu0 %v5770
        %5796 = vmatmul.bf16.gmra.mxu0 %v5764
        %v5797 = vpop.f32.mrf.mxu0
        %v5798 = vadd.f32 0.0, %v5797
        %v5799 = vpop.f32.mrf.mxu0
        %5800 = vdwg.mxu0
        %5801 = vmatpush.bf16.msra.mxu0 0
        %5802 = vmatpush.bf16.msra.mxu0 0
        %5803 = vmatpush.bf16.msra.mxu0 0
        %5804 = vmatpush.bf16.msra.mxu0 0
        %5805 = vmatpush.bf16.msra.mxu0 0
        %5806 = vmatpush.bf16.msra.mxu0 0
        %5807 = vmatpush.bf16.msra.mxu0 0
        %5808 = vmatpush.bf16.msra.mxu0 %v5773
        %5809 = vmatmul.bf16.gmra.mxu0 %v5764
        %v5810 = vpop.f32.mrf.mxu0
        %v5811 = vadd.f32 0.0, %v5810
        %v5812 = vpop.f32.mrf.mxu0
        %5813 = vdwg.mxu0
        %v5814 = vadd.f32 %v5746, %v5785
        %v5815 = vadd.f32 %v5747, %v5798
        %v5816 = vadd.f32 %v5748, %v5811
        %v5817 = vld [vmem:[%s12] sm:$0x3]
        %5819 = vset.pattern.permute.xlu0 0
        %5820 = vperm.xlu0 %5819, %v5817
        %v5821 = vpop.permute.xlu0 %5820
        %v5823 = vadd.f32 %v5814, %v5821
        %v5824 = vadd.f32 %v5815, %v5821
        %v5825 = vadd.f32 %v5816, %v5821
        %v5826 = vld [vmem:[#allocation12] sm:$0xff]
        %v5827 = vld [vmem:[#allocation12 + $0x8] sm:$0xff]
        %v5828 = vld [vmem:[#allocation12 + $0x10] sm:$0xff]
        %v5829 = vld [vmem:[#allocation12 + $0x18] sm:$0xff]
        %v5830 = vld [vmem:[#allocation12 + $0x20] sm:$0xff]
        %v5831 = vld [vmem:[#allocation12 + $0x28] sm:$0xff]
        %v5832 = vld [vmem:[#allocation12 + $0x30] sm:$0xff]
        %v5833 = vld [vmem:[#allocation12 + $0x38] sm:$0xff]
        %v5834 = vld [vmem:[#allocation12 + $0x40] sm:$0xff]
        %v5835 = vld [vmem:[#allocation12 + $0x48] sm:$0xff]
        %v5836 = vld [vmem:[#allocation12 + $0x50] sm:$0xff]
        %v5837 = vld [vmem:[#allocation12 + $0x58] sm:$0xff]
        %v5838 = vld [vmem:[#allocation12 + $0x60] sm:$0xff]
        %v5839 = vld [vmem:[#allocation12 + $0x68] sm:$0xff]
        %v5840 = vld [vmem:[#allocation12 + $0x70] sm:$0xff]
        %v5841 = vld [vmem:[#allocation12 + $0x78] sm:$0xff]
        %v5842 = vld [vmem:[#allocation12 + $0x80] sm:$0xff]
        %v5843 = vld [vmem:[#allocation12 + $0x88] sm:$0xff]
        %v5844 = vld [vmem:[#allocation12 + $0x90] sm:$0xff]
        %v5845 = vld [vmem:[#allocation12 + $0x98] sm:$0xff]
        %v5846 = vld [vmem:[#allocation12 + $0xa0] sm:$0xff]
        %v5847 = vld [vmem:[#allocation12 + $0xa8] sm:$0xff]
        %v5848 = vld [vmem:[#allocation12 + $0xb0] sm:$0xff]
        %v5849 = vld [vmem:[#allocation12 + $0xb8] sm:$0xff]
        %v5850 = vld [vmem:[#allocation12 + $0xc0] sm:$0xff]
        %v5851 = vld [vmem:[#allocation12 + $0xc8] sm:$0xff]
        %v5852 = vld [vmem:[#allocation12 + $0xd0] sm:$0xff]
        %v5853 = vld [vmem:[#allocation12 + $0xd8] sm:$0xff]
        %v5854 = vld [vmem:[#allocation12 + $0xe0] sm:$0xff]
        %v5855 = vld [vmem:[#allocation12 + $0xe8] sm:$0xff]
        %v5856 = vld [vmem:[#allocation12 + $0xf0] sm:$0xff]
        %v5857 = vld [vmem:[#allocation12 + $0xf8] sm:$0xff]
        %v5858 = vld [vmem:[#allocation12 + $0x100] sm:$0xff]
        %v5859 = vld [vmem:[#allocation12 + $0x108] sm:$0xff]
        %v5860 = vld [vmem:[#allocation12 + $0x110] sm:$0xff]
        %v5861 = vld [vmem:[#allocation12 + $0x118] sm:$0xff]
        %v5862 = vld [vmem:[#allocation12 + $0x120] sm:$0xff]
        %v5863 = vld [vmem:[#allocation12 + $0x128] sm:$0xff]
        %v5864 = vld [vmem:[#allocation12 + $0x130] sm:$0xff]
        %v5865 = vld [vmem:[#allocation12 + $0x138] sm:$0xff]
        %v5866 = vld [vmem:[#allocation12 + $0x140] sm:$0xff]
        %v5867 = vld [vmem:[#allocation12 + $0x148] sm:$0xff]
        %v5868 = vld [vmem:[#allocation12 + $0x150] sm:$0xff]
        %v5869 = vld [vmem:[#allocation12 + $0x158] sm:$0xff]
        %v5870 = vld [vmem:[#allocation12 + $0x160] sm:$0xff]
        %v5871 = vld [vmem:[#allocation12 + $0x168] sm:$0xff]
        %v5872 = vld [vmem:[#allocation12 + $0x170] sm:$0xff]
        %v5873 = vld [vmem:[#allocation12 + $0x178] sm:$0xff]
        %v5874 = vld [vmem:[#allocation12 + $0x180] sm:$0xff]
        %v5875 = vld [vmem:[#allocation12 + $0x188] sm:$0xff]
        %v5876 = vld [vmem:[#allocation12 + $0x190] sm:$0xff]
        %v5877 = vld [vmem:[#allocation12 + $0x198] sm:$0xff]
        %v5878 = vld [vmem:[#allocation12 + $0x1a0] sm:$0xff]
        %v5879 = vld [vmem:[#allocation12 + $0x1a8] sm:$0xff]
        %v5880 = vld [vmem:[#allocation12 + $0x1b0] sm:$0xff]
        %v5881 = vld [vmem:[#allocation12 + $0x1b8] sm:$0xff]
        %v5882 = vld [vmem:[#allocation12 + $0x1c0] sm:$0xff]
        %v5883 = vld [vmem:[#allocation12 + $0x1c8] sm:$0xff]
        %v5884 = vld [vmem:[#allocation12 + $0x1d0] sm:$0xff]
        %v5885 = vld [vmem:[#allocation12 + $0x1d8] sm:$0xff]
        %v5886 = vld [vmem:[#allocation12 + $0x1e0] sm:$0xff]
        %v5887 = vld [vmem:[#allocation12 + $0x1e8] sm:$0xff]
        %v5888 = vld [vmem:[#allocation12 + $0x1f0] sm:$0xff]
        %v5889 = vld [vmem:[#allocation12 + $0x1f8] sm:$0xff]
        %v5890 = vld [vmem:[#allocation12 + $0x200] sm:$0xff]
        %v5891 = vld [vmem:[#allocation12 + $0x208] sm:$0xff]
        %v5892 = vld [vmem:[#allocation12 + $0x210] sm:$0xff]
        %v5893 = vld [vmem:[#allocation12 + $0x218] sm:$0xff]
        %v5894 = vld [vmem:[#allocation12 + $0x220] sm:$0xff]
        %v5895 = vld [vmem:[#allocation12 + $0x228] sm:$0xff]
        %v5896 = vld [vmem:[#allocation12 + $0x230] sm:$0xff]
        %v5897 = vld [vmem:[#allocation12 + $0x238] sm:$0xff]
        %v5898 = vld [vmem:[#allocation12 + $0x240] sm:$0xff]
        %v5899 = vld [vmem:[#allocation12 + $0x248] sm:$0xff]
        %v5900 = vld [vmem:[#allocation12 + $0x250] sm:$0xff]
        %v5901 = vld [vmem:[#allocation12 + $0x258] sm:$0xff]
        %v5902 = vld [vmem:[#allocation12 + $0x260] sm:$0xff]
        %v5903 = vld [vmem:[#allocation12 + $0x268] sm:$0xff]
        %v5904 = vld [vmem:[#allocation12 + $0x270] sm:$0xff]
        %v5905 = vld [vmem:[#allocation12 + $0x278] sm:$0xff]
        %v5906 = vld [vmem:[#allocation12 + $0x280] sm:$0xff]
        %v5907 = vld [vmem:[#allocation12 + $0x288] sm:$0xff]
        %v5908 = vld [vmem:[#allocation12 + $0x290] sm:$0xff]
        %v5909 = vld [vmem:[#allocation12 + $0x298] sm:$0xff]
        %v5910 = vld [vmem:[#allocation12 + $0x2a0] sm:$0xff]
        %v5911 = vld [vmem:[#allocation12 + $0x2a8] sm:$0xff]
        %v5912 = vld [vmem:[#allocation12 + $0x2b0] sm:$0xff]
        %v5913 = vld [vmem:[#allocation12 + $0x2b8] sm:$0xff]
        %v5914 = vld [vmem:[#allocation12 + $0x2c0] sm:$0xff]
        %v5915 = vld [vmem:[#allocation12 + $0x2c8] sm:$0xff]
        %v5916 = vld [vmem:[#allocation12 + $0x2d0] sm:$0x1]
        %v5917 = vld [vmem:[#allocation12 + $0x2d8] sm:$0x1]
        %vm5918 = vcmask 859136
        %v5920 = vsel %vm5918, %v5825, 0
        %v5923 = vsel %vm1162, %v5916, 0
        %v5926 = vsel %vm1162, %v5917, 0
        %5928 = vmatpush.msra.mxu0 %v5856
        %5929 = vmatpush.msra.mxu0 %v5854
        %5930 = vmatpush.msra.mxu0 %v5852
        %5931 = vmatpush.msra.mxu0 %v5850
        %5932 = vmatpush.msra.mxu0 %v5848
        %5933 = vmatpush.msra.mxu0 %v5846
        %5934 = vmatpush.msra.mxu0 %v5844
        %5935 = vmatpush.msra.mxu0 %v5842
        %5936 = vmatpush.msra.mxu0 %v5840
        %5937 = vmatpush.msra.mxu0 %v5838
        %5938 = vmatpush.msra.mxu0 %v5836
        %5939 = vmatpush.msra.mxu0 %v5834
        %5940 = vmatpush.msra.mxu0 %v5832
        %5941 = vmatpush.msra.mxu0 %v5830
        %5942 = vmatpush.msra.mxu0 %v5828
        %5943 = vmatpush.msra.mxu0 %v5826
        %5944 = vmatmul.f32.gmra.mxu0 %v5823
        %v5945 = vpop.f32.mrf.mxu0
        %v5946 = vadd.f32 0.0, %v5945
        %5947 = vdwg.mxu0
        %5948 = vmatpush.msra.mxu0 %v5888
        %5949 = vmatpush.msra.mxu0 %v5886
        %5950 = vmatpush.msra.mxu0 %v5884
        %5951 = vmatpush.msra.mxu0 %v5882
        %5952 = vmatpush.msra.mxu0 %v5880
        %5953 = vmatpush.msra.mxu0 %v5878
        %5954 = vmatpush.msra.mxu0 %v5876
        %5955 = vmatpush.msra.mxu0 %v5874
        %5956 = vmatpush.msra.mxu0 %v5872
        %5957 = vmatpush.msra.mxu0 %v5870
        %5958 = vmatpush.msra.mxu0 %v5868
        %5959 = vmatpush.msra.mxu0 %v5866
        %5960 = vmatpush.msra.mxu0 %v5864
        %5961 = vmatpush.msra.mxu0 %v5862
        %5962 = vmatpush.msra.mxu0 %v5860
        %5963 = vmatpush.msra.mxu0 %v5858
        %5964 = vmatmul.f32.gmra.mxu0 %v5824
        %v5965 = vpop.f32.mrf.mxu0
        %v5966 = vadd.f32 %v5946, %v5965
        %5967 = vdwg.mxu0
        %5968 = vmatpush.msra.mxu0 0.0
        %5969 = vmatpush.msra.mxu0 0.0
        %5970 = vmatpush.msra.mxu0 %v5923
        %5971 = vmatpush.msra.mxu0 %v5914
        %5972 = vmatpush.msra.mxu0 %v5912
        %5973 = vmatpush.msra.mxu0 %v5910
        %5974 = vmatpush.msra.mxu0 %v5908
        %5975 = vmatpush.msra.mxu0 %v5906
        %5976 = vmatpush.msra.mxu0 %v5904
        %5977 = vmatpush.msra.mxu0 %v5902
        %5978 = vmatpush.msra.mxu0 %v5900
        %5979 = vmatpush.msra.mxu0 %v5898
        %5980 = vmatpush.msra.mxu0 %v5896
        %5981 = vmatpush.msra.mxu0 %v5894
        %5982 = vmatpush.msra.mxu0 %v5892
        %5983 = vmatpush.msra.mxu0 %v5890
        %5984 = vmatmul.f32.gmra.mxu0 %v5920
        %v5985 = vpop.f32.mrf.mxu0
        %v5986 = vadd.f32 %v5966, %v5985
        %5987 = vdwg.mxu0
        %5988 = vmatpush.msra.mxu0 %v5857
        %5989 = vmatpush.msra.mxu0 %v5855
        %5990 = vmatpush.msra.mxu0 %v5853
        %5991 = vmatpush.msra.mxu0 %v5851
        %5992 = vmatpush.msra.mxu0 %v5849
        %5993 = vmatpush.msra.mxu0 %v5847
        %5994 = vmatpush.msra.mxu0 %v5845
        %5995 = vmatpush.msra.mxu0 %v5843
        %5996 = vmatpush.msra.mxu0 %v5841
        %5997 = vmatpush.msra.mxu0 %v5839
        %5998 = vmatpush.msra.mxu0 %v5837
        %5999 = vmatpush.msra.mxu0 %v5835
        %6000 = vmatpush.msra.mxu0 %v5833
        %6001 = vmatpush.msra.mxu0 %v5831
        %6002 = vmatpush.msra.mxu0 %v5829
        %6003 = vmatpush.msra.mxu0 %v5827
        %6004 = vmatmul.f32.gmra.mxu0 %v5823
        %v6005 = vpop.f32.mrf.mxu0
        %v6006 = vadd.f32 0.0, %v6005
        %6007 = vdwg.mxu0
        %6008 = vmatpush.msra.mxu0 %v5889
        %6009 = vmatpush.msra.mxu0 %v5887
        %6010 = vmatpush.msra.mxu0 %v5885
        %6011 = vmatpush.msra.mxu0 %v5883
        %6012 = vmatpush.msra.mxu0 %v5881
        %6013 = vmatpush.msra.mxu0 %v5879
        %6014 = vmatpush.msra.mxu0 %v5877
        %6015 = vmatpush.msra.mxu0 %v5875
        %6016 = vmatpush.msra.mxu0 %v5873
        %6017 = vmatpush.msra.mxu0 %v5871
        %6018 = vmatpush.msra.mxu0 %v5869
        %6019 = vmatpush.msra.mxu0 %v5867
        %6020 = vmatpush.msra.mxu0 %v5865
        %6021 = vmatpush.msra.mxu0 %v5863
        %6022 = vmatpush.msra.mxu0 %v5861
        %6023 = vmatpush.msra.mxu0 %v5859
        %6024 = vmatmul.f32.gmra.mxu0 %v5824
        %v6025 = vpop.f32.mrf.mxu0
        %v6026 = vadd.f32 %v6006, %v6025
        %6027 = vdwg.mxu0
        %6028 = vmatpush.msra.mxu0 0.0
        %6029 = vmatpush.msra.mxu0 0.0
        %6030 = vmatpush.msra.mxu0 %v5926
        %6031 = vmatpush.msra.mxu0 %v5915
        %6032 = vmatpush.msra.mxu0 %v5913
        %6033 = vmatpush.msra.mxu0 %v5911
        %6034 = vmatpush.msra.mxu0 %v5909
        %6035 = vmatpush.msra.mxu0 %v5907
        %6036 = vmatpush.msra.mxu0 %v5905
        %6037 = vmatpush.msra.mxu0 %v5903
        %6038 = vmatpush.msra.mxu0 %v5901
        %6039 = vmatpush.msra.mxu0 %v5899
        %6040 = vmatpush.msra.mxu0 %v5897
        %6041 = vmatpush.msra.mxu0 %v5895
        %6042 = vmatpush.msra.mxu0 %v5893
        %6043 = vmatpush.msra.mxu0 %v5891
        %6044 = vmatmul.f32.gmra.mxu0 %v5920
        %v6045 = vpop.f32.mrf.mxu0
        %v6046 = vadd.f32 %v6026, %v6045
        %6047 = vdwg.mxu0
        %v6050 = vrot.slane %v6046, 6
        %v6051 = vsel %vm1120, %v5986, %v6050
        %6053 = vst [vmem:[%s679] sm:$0xf] %v6051
        %p6054 = scmp.lt.s32.totalorder %s33, 1
        %s6055 = scalar_select %p6054, %s33, 1
        %s6056 = smul.addr %s6055, 2
        %s6057 = smul.addr %s6056, 2
        %s6058 = scalar_lea.vmem %s20, %s6057
        // Predicated region
        $region113: #{aut_enc_d_forward.1} parent=99 // pred_check
          %p6059 = pneg %p476
        $region114: #{aut_enc_d_forward.1} parent=99 // pred_check_branch
          %6061 = sbr.rel (%p6059) target = $region116
        $region115: #{aut_enc_d_forward.1} parent=99 // pred_region
          _
        $region116: #{aut_enc_d_forward.1} parent=99 // pred_fallthru
          _
      $region100: #{aut_enc_d_forward.1} parent=5 // pred_fallthru
        _
      %p6062 = scmp.le.s32.totalorder 2, %s28
      // Predicated region
      $region117: #{aut_enc_d_forward.1} parent=5 // pred_check
        %p6063 = pneg %p6062
      $region118: #{aut_enc_d_forward.1} parent=5 // pred_check_branch
        %6065 = sbr.rel (%p6063) target = $region120
      $region119: #{aut_enc_d_forward.1} parent=5 // pred_region
        %s6066 = ssub.s32 %s28, 2
        // Predicated region
        $region121: #{aut_enc_d_forward.1} parent=119 // pred_check
          %p6067 = pneg %p482
        $region122: #{aut_enc_d_forward.1} parent=119 // pred_check_branch
          %6069 = sbr.rel (%p6067) target = $region124
        $region123: #{aut_enc_d_forward.1} parent=119 // pred_region
          %p6070 = scmp.lt.s32.totalorder %s34, 1
          %s6071 = scalar_select %p6070, %s34, 1
          %s6072 = smul.addr %s6071, 2
          %s6073 = smul.addr %s6072, 2
          %s6074 = scalar_lea.vmem %s20, %s6073
        $region124: #{aut_enc_d_forward.1} parent=119 // pred_fallthru
          _
      $region120: #{aut_enc_d_forward.1} parent=5 // pred_fallthru
        _
    $region6: #{aut_enc_d_forward.1} parent=1 // loop_footer
      %s32 = sadd.s32 1, %s28
    $region7: #{aut_enc_d_forward.1} parent=1 // loop_footer_branch
      %27 = sbr.rel target = $region3
    $region8: #{aut_enc_d_forward.1} parent=1 // loop_exit
      _
    %6075 = vsyncpa [#allocation9], 1
    %s6076 = scalar_lea.sflag [#allocation9], 1
    %6077 = vsyncpa %s6076, 1
    %6078 = vsyncpa [#allocation11], 1

</llo_original>
